<compile_context>
chip_gen: v6e
topology: v6e:2x2x1
jax: 0.10.0
libtpu: 0.0.40
codegen_flags: <defaults>
</compile_context>

<pallas_src>
import jax
import jax.numpy as jnp
from jax.experimental import pallas as pl
from jax.experimental.pallas import tpu as pltpu


# ---------------------------- Pallas kernel ----------------------------

def _matmul_bias_relu_kernel(x_ref, w_ref, b_ref, o_ref):
    # x_ref: (TM, K), w_ref: (K, Cout), b_ref: (1, Cout), o_ref: (TM, Cout)
    y = jnp.dot(x_ref[...], w_ref[...], preferred_element_type=jnp.float32)
    o_ref[...] = jnp.maximum(y + b_ref[...], 0.0)


def matmul_bias_relu(x, w, b, *, tm_max=256):
    """relu(x @ w + b).  x: (M, K), w: (K, Cout), b: (Cout,) -> (M, Cout)."""
    M, K = x.shape
    Cout = w.shape[1]
    m8 = ((M + 7) // 8) * 8                 # sublane (8) alignment
    tm = min(tm_max, m8)
    mp = ((m8 + tm - 1) // tm) * tm         # whole number of M-tiles
    if mp != M:
        x = jnp.pad(x, ((0, mp - M), (0, 0)))
    y = pl.pallas_call(
        _matmul_bias_relu_kernel,
        out_shape=jax.ShapeDtypeStruct((mp, Cout), jnp.float32),
        grid=(mp // tm,),
        in_specs=[
            pl.BlockSpec((tm, K), lambda i: (i, 0)),      # activation tile
            pl.BlockSpec((K, Cout), lambda i: (0, 0)),    # full weight, stays resident
            pl.BlockSpec((1, Cout), lambda i: (0, 0)),    # bias (lane-dense row)
        ],
        out_specs=pl.BlockSpec((tm, Cout), lambda i: (i, 0)),
        compiler_params=pltpu.CompilerParams(
            dimension_semantics=("parallel",),
            vmem_limit_bytes=48 * 1024 * 1024,
        ),
    )(x, w, b.reshape(1, Cout).astype(jnp.float32))
    return y[:M] if mp != M else y


# ---------------------------- conv wrappers ----------------------------

def _im2col(x, K, stride, pad):
    """x: (N, H, W, C) NHWC -> (N, Ho, Wo, K*K*C) patches (pure XLA slicing)."""
    n, h, w, c = x.shape
    if pad > 0:
        x = jnp.pad(x, ((0, 0), (pad, pad), (pad, pad), (0, 0)))
    hp, wp = h + 2 * pad, w + 2 * pad
    ho = (hp - K) // stride + 1
    wo = (wp - K) // stride + 1
    cols = []
    for ki in range(K):
        for kj in range(K):
            cols.append(x[:, ki:ki + (ho - 1) * stride + 1:stride,
                            kj:kj + (wo - 1) * stride + 1:stride, :])
    return jnp.concatenate(cols, axis=-1), ho, wo


def conv2d_relu(x_nhwc, w, b, *, stride=1, pad=0):
    """Conv2d(OIHW weight) + bias + ReLU in NHWC, computed by one Pallas kernel."""
    cout, cin, k, _ = w.shape
    n, h, wd, c = x_nhwc.shape
    assert c == cin
    if k == 1 and stride == 1 and pad == 0:
        patches2d = x_nhwc.reshape(n * h * wd, cin)
        ho, wo = h, wd
    else:
        patches, ho, wo = _im2col(x_nhwc, k, stride, pad)
        patches2d = patches.reshape(n * ho * wo, k * k * cin)
    # patch channel order is (ki, kj, cin) -> weight rows must match.
    w_mat = jnp.transpose(w, (2, 3, 1, 0)).reshape(k * k * cin, cout)
    y2d = matmul_bias_relu(patches2d, w_mat, b)
    return y2d.reshape(n, ho, wo, cout)


# ---------------------------- AuxiliaryConvolutions ----------------------------

# (name, Cin, Cout, kernel, stride, pad) — exactly the PyTorch module.
LAYERS = [
    ("conv8_1", 1024, 256, 1, 1, 0),
    ("conv8_2", 256, 512, 3, 2, 1),
    ("conv9_1", 512, 128, 1, 1, 0),
    ("conv9_2", 128, 256, 3, 2, 1),
    ("conv10_1", 256, 128, 1, 1, 0),
    ("conv10_2", 128, 256, 3, 1, 0),
    ("conv11_1", 256, 128, 1, 1, 0),
    ("conv11_2", 128, 256, 3, 1, 0),
]
RETURN_AFTER = ("conv8_2", "conv9_2", "conv10_2", "conv11_2")


def auxiliary_convolutions(conv7_feats, params):
    """conv7_feats: (N, 1024, H, W) NCHW -> (conv8_2, conv9_2, conv10_2, conv11_2) NCHW."""
    x = jnp.transpose(conv7_feats, (0, 2, 3, 1))          # NCHW -> NHWC (lane-dense C)
    feats = []
    for name, cin, cout, k, s, p in LAYERS:
        x = conv2d_relu(x, params[name]["w"], params[name]["b"], stride=s, pad=p)
        if name in RETURN_AFTER:
            feats.append(jnp.transpose(x, (0, 3, 1, 2)))   # back to NCHW for the API
    return tuple(feats)


# ---------------------------- params / reference ----------------------------

def init_params(key):
    """Xavier-uniform weights, zero bias (matches init_conv2d)."""
    params = {}
    keys = jax.random.split(key, len(LAYERS))
    for kk, (name, cin, cout, k, s, p) in zip(keys, LAYERS):
        fan_in, fan_out = cin * k * k, cout * k * k
        a = (6.0 / (fan_in + fan_out)) ** 0.5
        params[name] = {
            "w": jax.random.uniform(kk, (cout, cin, k, k), jnp.float32, -a, a),
            "b": jnp.zeros((cout,), jnp.float32),
        }
    return params


def ref_forward(x_nchw, params):
    """Pure-XLA reference (lax.conv) for correctness checking."""
    feats = []
    out = x_nchw
    for name, cin, cout, k, s, p in LAYERS:
        w, b = params[name]["w"], params[name]["b"]
        out = jax.lax.conv_general_dilated(
            out, w, window_strides=(s, s), padding=((p, p), (p, p)),
            dimension_numbers=("NCHW", "OIHW", "NCHW"))
        out = jax.nn.relu(out + b.reshape(1, -1, 1, 1))
        if name in RETURN_AFTER:
            feats.append(out)
    return tuple(feats)


if __name__ == "__main__":
    key = jax.random.PRNGKey(0)
    kx, kp = jax.random.split(key)

    N = 2
    conv7_feats = jax.random.normal(kx, (N, 1024, 19, 19), jnp.float32)
    params = init_params(kp)

    fwd = jax.jit(auxiliary_convolutions)
    outs = jax.block_until_ready(fwd(conv7_feats, params))

    expected = [(N, 512, 10, 10), (N, 256, 5, 5), (N, 256, 3, 3), (N, 256, 1, 1)]
    for o, es in zip(outs, expected):
        assert o.shape == es, (o.shape, es)
        assert bool(jnp.all(jnp.isfinite(o)))

    refs = jax.block_until_ready(jax.jit(ref_forward)(conv7_feats, params))
    for o, r in zip(outs, refs):
        err = float(jnp.max(jnp.abs(o - r)))
        assert bool(jnp.allclose(o, r, rtol=2e-2, atol=2e-2)), err

    print("KERNEL_OK")
</pallas_src>

<mosaic_0001>
module attributes {stable_mosaic.version = 11 : i64} {
  func.func @_matmul_bias_relu_kernel(%arg0: i32, %arg1: memref<256x1024xf32, #tpu.memory_space<vmem>>, %arg2: memref<1024x256xf32, #tpu.memory_space<vmem>>, %arg3: memref<1x256xf32, #tpu.memory_space<vmem>>, %arg4: memref<256x256xf32, #tpu.memory_space<vmem>>) attributes {dimension_semantics = [#tpu.dimension_semantics<parallel>], iteration_bounds = array<i64: 3>, scalar_prefetch = 0 : i64, scratch_operands = 0 : i64, tpu.core_type = #tpu.core_type<tc>, window_params = [{transform_indices = @transform_0, window_bounds = array<i64: 256, 1024>}, {pipeline_mode = #tpu.pipeline_mode<synchronous>, transform_indices = @transform_1, window_bounds = array<i64: 1024, 256>}, {pipeline_mode = #tpu.pipeline_mode<synchronous>, transform_indices = @transform_2, window_bounds = array<i64: 1, 256>}, {transform_indices = @transform_3, window_bounds = array<i64: 256, 256>}]} {
    %c0 = arith.constant 0 : index
    %c0_0 = arith.constant 0 : index
    %0 = vector.load %arg1[%c0, %c0_0] : memref<256x1024xf32, #tpu.memory_space<vmem>>, vector<256x1024xf32>
    %c0_1 = arith.constant 0 : index
    %c0_2 = arith.constant 0 : index
    %1 = vector.load %arg2[%c0_1, %c0_2] : memref<1024x256xf32, #tpu.memory_space<vmem>>, vector<1024x256xf32>
    %cst = arith.constant dense<0.000000e+00> : vector<256x256xf32>
    %2 = tpu.matmul %0, %1, %cst {dimension_numbers = #tpu.dot_dimension_numbers<[1], [0], [0], [1], [0, 0, 1, 1], [], []>} : vector<256x1024xf32>, vector<1024x256xf32>, vector<256x256xf32> -> vector<256x256xf32>
    %c0_3 = arith.constant 0 : index
    %c0_4 = arith.constant 0 : index
    %3 = vector.load %arg3[%c0_3, %c0_4] : memref<1x256xf32, #tpu.memory_space<vmem>>, vector<1x256xf32>
    %4 = vector.broadcast %3 : vector<1x256xf32> to vector<256x256xf32>
    %5 = arith.addf %2, %4 : vector<256x256xf32>
    %cst_5 = arith.constant 0.000000e+00 : f32
    %6 = vector.broadcast %cst_5 : f32 to vector<256x256xf32>
    %7 = arith.maximumf %5, %6 : vector<256x256xf32>
    %c0_6 = arith.constant 0 : index
    %c0_7 = arith.constant 0 : index
    %8 = vector.load %arg4[%c0_6, %c0_7] : memref<256x256xf32, #tpu.memory_space<vmem>>, vector<256x256xf32>
    tpu.vector_store %arg4[%c0_6, %c0_7], %7 {strides = array<i32>} : memref<256x256xf32, #tpu.memory_space<vmem>>, vector<256x256xf32>,
    return
  }
  func.func @transform_0(%arg0: i32) -> (i32, i32) {
    %c0_i32 = arith.constant 0 : i32
    %c0_i32_0 = arith.constant 0 : i32
    return %arg0, %c0_i32 : i32, i32
  }
  func.func @transform_1(%arg0: i32) -> (i32, i32) {
    %c0_i32 = arith.constant 0 : i32
    %c0_i32_0 = arith.constant 0 : i32
    %c0_i32_1 = arith.constant 0 : i32
    return %c0_i32, %c0_i32_0 : i32, i32
  }
  func.func @transform_2(%arg0: i32) -> (i32, i32) {
    %c0_i32 = arith.constant 0 : i32
    %c0_i32_0 = arith.constant 0 : i32
    %c0_i32_1 = arith.constant 0 : i32
    return %c0_i32, %c0_i32_0 : i32, i32
  }
  func.func @transform_3(%arg0: i32) -> (i32, i32) {
    %c0_i32 = arith.constant 0 : i32
    %c0_i32_0 = arith.constant 0 : i32
    return %arg0, %c0_i32 : i32, i32
  }
}

module attributes {stable_mosaic.version = 11 : i64} {
  func.func @_matmul_bias_relu_kernel(%arg0: i32, %arg1: memref<200x2304xf32, #tpu.memory_space<vmem>>, %arg2: memref<2304x512xf32, #tpu.memory_space<vmem>>, %arg3: memref<1x512xf32, #tpu.memory_space<vmem>>, %arg4: memref<200x512xf32, #tpu.memory_space<vmem>>) attributes {dimension_semantics = [#tpu.dimension_semantics<parallel>], iteration_bounds = array<i64: 1>, scalar_prefetch = 0 : i64, scratch_operands = 0 : i64, tpu.core_type = #tpu.core_type<tc>, window_params = [{transform_indices = @transform_0, window_bounds = array<i64: 200, 2304>}, {pipeline_mode = #tpu.pipeline_mode<synchronous>, transform_indices = @transform_1, window_bounds = array<i64: 2304, 512>}, {pipeline_mode = #tpu.pipeline_mode<synchronous>, transform_indices = @transform_2, window_bounds = array<i64: 1, 512>}, {transform_indices = @transform_3, window_bounds = array<i64: 200, 512>}]} {
    %c0 = arith.constant 0 : index
    %c0_0 = arith.constant 0 : index
    %0 = vector.load %arg1[%c0, %c0_0] : memref<200x2304xf32, #tpu.memory_space<vmem>>, vector<200x2304xf32>
    %c0_1 = arith.constant 0 : index
    %c0_2 = arith.constant 0 : index
    %1 = vector.load %arg2[%c0_1, %c0_2] : memref<2304x512xf32, #tpu.memory_space<vmem>>, vector<2304x512xf32>
    %cst = arith.constant dense<0.000000e+00> : vector<200x512xf32>
    %2 = tpu.matmul %0, %1, %cst {dimension_numbers = #tpu.dot_dimension_numbers<[1], [0], [0], [1], [0, 0, 1, 1], [], []>} : vector<200x2304xf32>, vector<2304x512xf32>, vector<200x512xf32> -> vector<200x512xf32>
    %c0_3 = arith.constant 0 : index
    %c0_4 = arith.constant 0 : index
    %3 = vector.load %arg3[%c0_3, %c0_4] : memref<1x512xf32, #tpu.memory_space<vmem>>, vector<1x512xf32>
    %4 = vector.broadcast %3 : vector<1x512xf32> to vector<200x512xf32>
    %5 = arith.addf %2, %4 : vector<200x512xf32>
    %cst_5 = arith.constant 0.000000e+00 : f32
    %6 = vector.broadcast %cst_5 : f32 to vector<200x512xf32>
    %7 = arith.maximumf %5, %6 : vector<200x512xf32>
    %c0_6 = arith.constant 0 : index
    %c0_7 = arith.constant 0 : index
    %8 = vector.load %arg4[%c0_6, %c0_7] : memref<200x512xf32, #tpu.memory_space<vmem>>, vector<200x512xf32>
    tpu.vector_store %arg4[%c0_6, %c0_7], %7 {strides = array<i32>} : memref<200x512xf32, #tpu.memory_space<vmem>>, vector<200x512xf32>,
    return
  }
  func.func @transform_0(%arg0: i32) -> (i32, i32) {
    %c0_i32 = arith.constant 0 : i32
    %c0_i32_0 = arith.constant 0 : i32
    return %arg0, %c0_i32 : i32, i32
  }
  func.func @transform_1(%arg0: i32) -> (i32, i32) {
    %c0_i32 = arith.constant 0 : i32
    %c0_i32_0 = arith.constant 0 : i32
    %c0_i32_1 = arith.constant 0 : i32
    return %c0_i32, %c0_i32_0 : i32, i32
  }
  func.func @transform_2(%arg0: i32) -> (i32, i32) {
    %c0_i32 = arith.constant 0 : i32
    %c0_i32_0 = arith.constant 0 : i32
    %c0_i32_1 = arith.constant 0 : i32
    return %c0_i32, %c0_i32_0 : i32, i32
  }
  func.func @transform_3(%arg0: i32) -> (i32, i32) {
    %c0_i32 = arith.constant 0 : i32
    %c0_i32_0 = arith.constant 0 : i32
    return %arg0, %c0_i32 : i32, i32
  }
}

module attributes {stable_mosaic.version = 11 : i64} {
  func.func @_matmul_bias_relu_kernel(%arg0: i32, %arg1: memref<200x512xf32, #tpu.memory_space<vmem>>, %arg2: memref<512x128xf32, #tpu.memory_space<vmem>>, %arg3: memref<1x128xf32, #tpu.memory_space<vmem>>, %arg4: memref<200x128xf32, #tpu.memory_space<vmem>>) attributes {dimension_semantics = [#tpu.dimension_semantics<parallel>], iteration_bounds = array<i64: 1>, scalar_prefetch = 0 : i64, scratch_operands = 0 : i64, tpu.core_type = #tpu.core_type<tc>, window_params = [{transform_indices = @transform_0, window_bounds = array<i64: 200, 512>}, {pipeline_mode = #tpu.pipeline_mode<synchronous>, transform_indices = @transform_1, window_bounds = array<i64: 512, 128>}, {pipeline_mode = #tpu.pipeline_mode<synchronous>, transform_indices = @transform_2, window_bounds = array<i64: 1, 128>}, {transform_indices = @transform_3, window_bounds = array<i64: 200, 128>}]} {
    %c0 = arith.constant 0 : index
    %c0_0 = arith.constant 0 : index
    %0 = vector.load %arg1[%c0, %c0_0] : memref<200x512xf32, #tpu.memory_space<vmem>>, vector<200x512xf32>
    %c0_1 = arith.constant 0 : index
    %c0_2 = arith.constant 0 : index
    %1 = vector.load %arg2[%c0_1, %c0_2] : memref<512x128xf32, #tpu.memory_space<vmem>>, vector<512x128xf32>
    %cst = arith.constant dense<0.000000e+00> : vector<200x128xf32>
    %2 = tpu.matmul %0, %1, %cst {dimension_numbers = #tpu.dot_dimension_numbers<[1], [0], [0], [1], [0, 0, 1, 1], [], []>} : vector<200x512xf32>, vector<512x128xf32>, vector<200x128xf32> -> vector<200x128xf32>
    %c0_3 = arith.constant 0 : index
    %c0_4 = arith.constant 0 : index
    %3 = vector.load %arg3[%c0_3, %c0_4] : memref<1x128xf32, #tpu.memory_space<vmem>>, vector<1x128xf32>
    %4 = vector.broadcast %3 : vector<1x128xf32> to vector<200x128xf32>
    %5 = arith.addf %2, %4 : vector<200x128xf32>
    %cst_5 = arith.constant 0.000000e+00 : f32
    %6 = vector.broadcast %cst_5 : f32 to vector<200x128xf32>
    %7 = arith.maximumf %5, %6 : vector<200x128xf32>
    %c0_6 = arith.constant 0 : index
    %c0_7 = arith.constant 0 : index
    %8 = vector.load %arg4[%c0_6, %c0_7] : memref<200x128xf32, #tpu.memory_space<vmem>>, vector<200x128xf32>
    tpu.vector_store %arg4[%c0_6, %c0_7], %7 {strides = array<i32>} : memref<200x128xf32, #tpu.memory_space<vmem>>, vector<200x128xf32>,
    return
  }
  func.func @transform_0(%arg0: i32) -> (i32, i32) {
    %c0_i32 = arith.constant 0 : i32
    %c0_i32_0 = arith.constant 0 : i32
    return %arg0, %c0_i32 : i32, i32
  }
  func.func @transform_1(%arg0: i32) -> (i32, i32) {
    %c0_i32 = arith.constant 0 : i32
    %c0_i32_0 = arith.constant 0 : i32
    %c0_i32_1 = arith.constant 0 : i32
    return %c0_i32, %c0_i32_0 : i32, i32
  }
  func.func @transform_2(%arg0: i32) -> (i32, i32) {
    %c0_i32 = arith.constant 0 : i32
    %c0_i32_0 = arith.constant 0 : i32
    %c0_i32_1 = arith.constant 0 : i32
    return %c0_i32, %c0_i32_0 : i32, i32
  }
  func.func @transform_3(%arg0: i32) -> (i32, i32) {
    %c0_i32 = arith.constant 0 : i32
    %c0_i32_0 = arith.constant 0 : i32
    return %arg0, %c0_i32 : i32, i32
  }
}

module attributes {stable_mosaic.version = 11 : i64} {
  func.func @_matmul_bias_relu_kernel(%arg0: i32, %arg1: memref<56x1152xf32, #tpu.memory_space<vmem>>, %arg2: memref<1152x256xf32, #tpu.memory_space<vmem>>, %arg3: memref<1x256xf32, #tpu.memory_space<vmem>>, %arg4: memref<56x256xf32, #tpu.memory_space<vmem>>) attributes {dimension_semantics = [#tpu.dimension_semantics<parallel>], iteration_bounds = array<i64: 1>, scalar_prefetch = 0 : i64, scratch_operands = 0 : i64, tpu.core_type = #tpu.core_type<tc>, window_params = [{transform_indices = @transform_0, window_bounds = array<i64: 56, 1152>}, {pipeline_mode = #tpu.pipeline_mode<synchronous>, transform_indices = @transform_1, window_bounds = array<i64: 1152, 256>}, {pipeline_mode = #tpu.pipeline_mode<synchronous>, transform_indices = @transform_2, window_bounds = array<i64: 1, 256>}, {transform_indices = @transform_3, window_bounds = array<i64: 56, 256>}]} {
    %c0 = arith.constant 0 : index
    %c0_0 = arith.constant 0 : index
    %0 = vector.load %arg1[%c0, %c0_0] : memref<56x1152xf32, #tpu.memory_space<vmem>>, vector<56x1152xf32>
    %c0_1 = arith.constant 0 : index
    %c0_2 = arith.constant 0 : index
    %1 = vector.load %arg2[%c0_1, %c0_2] : memref<1152x256xf32, #tpu.memory_space<vmem>>, vector<1152x256xf32>
    %cst = arith.constant dense<0.000000e+00> : vector<56x256xf32>
    %2 = tpu.matmul %0, %1, %cst {dimension_numbers = #tpu.dot_dimension_numbers<[1], [0], [0], [1], [0, 0, 1, 1], [], []>} : vector<56x1152xf32>, vector<1152x256xf32>, vector<56x256xf32> -> vector<56x256xf32>
    %c0_3 = arith.constant 0 : index
    %c0_4 = arith.constant 0 : index
    %3 = vector.load %arg3[%c0_3, %c0_4] : memref<1x256xf32, #tpu.memory_space<vmem>>, vector<1x256xf32>
    %4 = vector.broadcast %3 : vector<1x256xf32> to vector<56x256xf32>
    %5 = arith.addf %2, %4 : vector<56x256xf32>
    %cst_5 = arith.constant 0.000000e+00 : f32
    %6 = vector.broadcast %cst_5 : f32 to vector<56x256xf32>
    %7 = arith.maximumf %5, %6 : vector<56x256xf32>
    %c0_6 = arith.constant 0 : index
    %c0_7 = arith.constant 0 : index
    %8 = vector.load %arg4[%c0_6, %c0_7] : memref<56x256xf32, #tpu.memory_space<vmem>>, vector<56x256xf32>
    tpu.vector_store %arg4[%c0_6, %c0_7], %7 {strides = array<i32>} : memref<56x256xf32, #tpu.memory_space<vmem>>, vector<56x256xf32>,
    return
  }
  func.func @transform_0(%arg0: i32) -> (i32, i32) {
    %c0_i32 = arith.constant 0 : i32
    %c0_i32_0 = arith.constant 0 : i32
    return %arg0, %c0_i32 : i32, i32
  }
  func.func @transform_1(%arg0: i32) -> (i32, i32) {
    %c0_i32 = arith.constant 0 : i32
    %c0_i32_0 = arith.constant 0 : i32
    %c0_i32_1 = arith.constant 0 : i32
    return %c0_i32, %c0_i32_0 : i32, i32
  }
  func.func @transform_2(%arg0: i32) -> (i32, i32) {
    %c0_i32 = arith.constant 0 : i32
    %c0_i32_0 = arith.constant 0 : i32
    %c0_i32_1 = arith.constant 0 : i32
    return %c0_i32, %c0_i32_0 : i32, i32
  }
  func.func @transform_3(%arg0: i32) -> (i32, i32) {
    %c0_i32 = arith.constant 0 : i32
    %c0_i32_0 = arith.constant 0 : i32
    return %arg0, %c0_i32 : i32, i32
  }
}

module attributes {stable_mosaic.version = 11 : i64} {
  func.func @_matmul_bias_relu_kernel(%arg0: i32, %arg1: memref<56x256xf32, #tpu.memory_space<vmem>>, %arg2: memref<256x128xf32, #tpu.memory_space<vmem>>, %arg3: memref<1x128xf32, #tpu.memory_space<vmem>>, %arg4: memref<56x128xf32, #tpu.memory_space<vmem>>) attributes {dimension_semantics = [#tpu.dimension_semantics<parallel>], iteration_bounds = array<i64: 1>, scalar_prefetch = 0 : i64, scratch_operands = 0 : i64, tpu.core_type = #tpu.core_type<tc>, window_params = [{transform_indices = @transform_0, window_bounds = array<i64: 56, 256>}, {pipeline_mode = #tpu.pipeline_mode<synchronous>, transform_indices = @transform_1, window_bounds = array<i64: 256, 128>}, {pipeline_mode = #tpu.pipeline_mode<synchronous>, transform_indices = @transform_2, window_bounds = array<i64: 1, 128>}, {transform_indices = @transform_3, window_bounds = array<i64: 56, 128>}]} {
    %c0 = arith.constant 0 : index
    %c0_0 = arith.constant 0 : index
    %0 = vector.load %arg1[%c0, %c0_0] : memref<56x256xf32, #tpu.memory_space<vmem>>, vector<56x256xf32>
    %c0_1 = arith.constant 0 : index
    %c0_2 = arith.constant 0 : index
    %1 = vector.load %arg2[%c0_1, %c0_2] : memref<256x128xf32, #tpu.memory_space<vmem>>, vector<256x128xf32>
    %cst = arith.constant dense<0.000000e+00> : vector<56x128xf32>
    %2 = tpu.matmul %0, %1, %cst {dimension_numbers = #tpu.dot_dimension_numbers<[1], [0], [0], [1], [0, 0, 1, 1], [], []>} : vector<56x256xf32>, vector<256x128xf32>, vector<56x128xf32> -> vector<56x128xf32>
    %c0_3 = arith.constant 0 : index
    %c0_4 = arith.constant 0 : index
    %3 = vector.load %arg3[%c0_3, %c0_4] : memref<1x128xf32, #tpu.memory_space<vmem>>, vector<1x128xf32>
    %4 = vector.broadcast %3 : vector<1x128xf32> to vector<56x128xf32>
    %5 = arith.addf %2, %4 : vector<56x128xf32>
    %cst_5 = arith.constant 0.000000e+00 : f32
    %6 = vector.broadcast %cst_5 : f32 to vector<56x128xf32>
    %7 = arith.maximumf %5, %6 : vector<56x128xf32>
    %c0_6 = arith.constant 0 : index
    %c0_7 = arith.constant 0 : index
    %8 = vector.load %arg4[%c0_6, %c0_7] : memref<56x128xf32, #tpu.memory_space<vmem>>, vector<56x128xf32>
    tpu.vector_store %arg4[%c0_6, %c0_7], %7 {strides = array<i32>} : memref<56x128xf32, #tpu.memory_space<vmem>>, vector<56x128xf32>,
    return
  }
  func.func @transform_0(%arg0: i32) -> (i32, i32) {
    %c0_i32 = arith.constant 0 : i32
    %c0_i32_0 = arith.constant 0 : i32
    return %arg0, %c0_i32 : i32, i32
  }
  func.func @transform_1(%arg0: i32) -> (i32, i32) {
    %c0_i32 = arith.constant 0 : i32
    %c0_i32_0 = arith.constant 0 : i32
    %c0_i32_1 = arith.constant 0 : i32
    return %c0_i32, %c0_i32_0 : i32, i32
  }
  func.func @transform_2(%arg0: i32) -> (i32, i32) {
    %c0_i32 = arith.constant 0 : i32
    %c0_i32_0 = arith.constant 0 : i32
    %c0_i32_1 = arith.constant 0 : i32
    return %c0_i32, %c0_i32_0 : i32, i32
  }
  func.func @transform_3(%arg0: i32) -> (i32, i32) {
    %c0_i32 = arith.constant 0 : i32
    %c0_i32_0 = arith.constant 0 : i32
    return %arg0, %c0_i32 : i32, i32
  }
}

module attributes {stable_mosaic.version = 11 : i64} {
  func.func @_matmul_bias_relu_kernel(%arg0: i32, %arg1: memref<24x1152xf32, #tpu.memory_space<vmem>>, %arg2: memref<1152x256xf32, #tpu.memory_space<vmem>>, %arg3: memref<1x256xf32, #tpu.memory_space<vmem>>, %arg4: memref<24x256xf32, #tpu.memory_space<vmem>>) attributes {dimension_semantics = [#tpu.dimension_semantics<parallel>], iteration_bounds = array<i64: 1>, scalar_prefetch = 0 : i64, scratch_operands = 0 : i64, tpu.core_type = #tpu.core_type<tc>, window_params = [{transform_indices = @transform_0, window_bounds = array<i64: 24, 1152>}, {pipeline_mode = #tpu.pipeline_mode<synchronous>, transform_indices = @transform_1, window_bounds = array<i64: 1152, 256>}, {pipeline_mode = #tpu.pipeline_mode<synchronous>, transform_indices = @transform_2, window_bounds = array<i64: 1, 256>}, {transform_indices = @transform_3, window_bounds = array<i64: 24, 256>}]} {
    %c0 = arith.constant 0 : index
    %c0_0 = arith.constant 0 : index
    %0 = vector.load %arg1[%c0, %c0_0] : memref<24x1152xf32, #tpu.memory_space<vmem>>, vector<24x1152xf32>
    %c0_1 = arith.constant 0 : index
    %c0_2 = arith.constant 0 : index
    %1 = vector.load %arg2[%c0_1, %c0_2] : memref<1152x256xf32, #tpu.memory_space<vmem>>, vector<1152x256xf32>
    %cst = arith.constant dense<0.000000e+00> : vector<24x256xf32>
    %2 = tpu.matmul %0, %1, %cst {dimension_numbers = #tpu.dot_dimension_numbers<[1], [0], [0], [1], [0, 0, 1, 1], [], []>} : vector<24x1152xf32>, vector<1152x256xf32>, vector<24x256xf32> -> vector<24x256xf32>
    %c0_3 = arith.constant 0 : index
    %c0_4 = arith.constant 0 : index
    %3 = vector.load %arg3[%c0_3, %c0_4] : memref<1x256xf32, #tpu.memory_space<vmem>>, vector<1x256xf32>
    %4 = vector.broadcast %3 : vector<1x256xf32> to vector<24x256xf32>
    %5 = arith.addf %2, %4 : vector<24x256xf32>
    %cst_5 = arith.constant 0.000000e+00 : f32
    %6 = vector.broadcast %cst_5 : f32 to vector<24x256xf32>
    %7 = arith.maximumf %5, %6 : vector<24x256xf32>
    %c0_6 = arith.constant 0 : index
    %c0_7 = arith.constant 0 : index
    %8 = vector.load %arg4[%c0_6, %c0_7] : memref<24x256xf32, #tpu.memory_space<vmem>>, vector<24x256xf32>
    tpu.vector_store %arg4[%c0_6, %c0_7], %7 {strides = array<i32>} : memref<24x256xf32, #tpu.memory_space<vmem>>, vector<24x256xf32>,
    return
  }
  func.func @transform_0(%arg0: i32) -> (i32, i32) {
    %c0_i32 = arith.constant 0 : i32
    %c0_i32_0 = arith.constant 0 : i32
    return %arg0, %c0_i32 : i32, i32
  }
  func.func @transform_1(%arg0: i32) -> (i32, i32) {
    %c0_i32 = arith.constant 0 : i32
    %c0_i32_0 = arith.constant 0 : i32
    %c0_i32_1 = arith.constant 0 : i32
    return %c0_i32, %c0_i32_0 : i32, i32
  }
  func.func @transform_2(%arg0: i32) -> (i32, i32) {
    %c0_i32 = arith.constant 0 : i32
    %c0_i32_0 = arith.constant 0 : i32
    %c0_i32_1 = arith.constant 0 : i32
    return %c0_i32, %c0_i32_0 : i32, i32
  }
  func.func @transform_3(%arg0: i32) -> (i32, i32) {
    %c0_i32 = arith.constant 0 : i32
    %c0_i32_0 = arith.constant 0 : i32
    return %arg0, %c0_i32 : i32, i32
  }
}

module attributes {stable_mosaic.version = 11 : i64} {
  func.func @_matmul_bias_relu_kernel(%arg0: i32, %arg1: memref<24x256xf32, #tpu.memory_space<vmem>>, %arg2: memref<256x128xf32, #tpu.memory_space<vmem>>, %arg3: memref<1x128xf32, #tpu.memory_space<vmem>>, %arg4: memref<24x128xf32, #tpu.memory_space<vmem>>) attributes {dimension_semantics = [#tpu.dimension_semantics<parallel>], iteration_bounds = array<i64: 1>, scalar_prefetch = 0 : i64, scratch_operands = 0 : i64, tpu.core_type = #tpu.core_type<tc>, window_params = [{transform_indices = @transform_0, window_bounds = array<i64: 24, 256>}, {pipeline_mode = #tpu.pipeline_mode<synchronous>, transform_indices = @transform_1, window_bounds = array<i64: 256, 128>}, {pipeline_mode = #tpu.pipeline_mode<synchronous>, transform_indices = @transform_2, window_bounds = array<i64: 1, 128>}, {transform_indices = @transform_3, window_bounds = array<i64: 24, 128>}]} {
    %c0 = arith.constant 0 : index
    %c0_0 = arith.constant 0 : index
    %0 = vector.load %arg1[%c0, %c0_0] : memref<24x256xf32, #tpu.memory_space<vmem>>, vector<24x256xf32>
    %c0_1 = arith.constant 0 : index
    %c0_2 = arith.constant 0 : index
    %1 = vector.load %arg2[%c0_1, %c0_2] : memref<256x128xf32, #tpu.memory_space<vmem>>, vector<256x128xf32>
    %cst = arith.constant dense<0.000000e+00> : vector<24x128xf32>
    %2 = tpu.matmul %0, %1, %cst {dimension_numbers = #tpu.dot_dimension_numbers<[1], [0], [0], [1], [0, 0, 1, 1], [], []>} : vector<24x256xf32>, vector<256x128xf32>, vector<24x128xf32> -> vector<24x128xf32>
    %c0_3 = arith.constant 0 : index
    %c0_4 = arith.constant 0 : index
    %3 = vector.load %arg3[%c0_3, %c0_4] : memref<1x128xf32, #tpu.memory_space<vmem>>, vector<1x128xf32>
    %4 = vector.broadcast %3 : vector<1x128xf32> to vector<24x128xf32>
    %5 = arith.addf %2, %4 : vector<24x128xf32>
    %cst_5 = arith.constant 0.000000e+00 : f32
    %6 = vector.broadcast %cst_5 : f32 to vector<24x128xf32>
    %7 = arith.maximumf %5, %6 : vector<24x128xf32>
    %c0_6 = arith.constant 0 : index
    %c0_7 = arith.constant 0 : index
    %8 = vector.load %arg4[%c0_6, %c0_7] : memref<24x128xf32, #tpu.memory_space<vmem>>, vector<24x128xf32>
    tpu.vector_store %arg4[%c0_6, %c0_7], %7 {strides = array<i32>} : memref<24x128xf32, #tpu.memory_space<vmem>>, vector<24x128xf32>,
    return
  }
  func.func @transform_0(%arg0: i32) -> (i32, i32) {
    %c0_i32 = arith.constant 0 : i32
    %c0_i32_0 = arith.constant 0 : i32
    return %arg0, %c0_i32 : i32, i32
  }
  func.func @transform_1(%arg0: i32) -> (i32, i32) {
    %c0_i32 = arith.constant 0 : i32
    %c0_i32_0 = arith.constant 0 : i32
    %c0_i32_1 = arith.constant 0 : i32
    return %c0_i32, %c0_i32_0 : i32, i32
  }
  func.func @transform_2(%arg0: i32) -> (i32, i32) {
    %c0_i32 = arith.constant 0 : i32
    %c0_i32_0 = arith.constant 0 : i32
    %c0_i32_1 = arith.constant 0 : i32
    return %c0_i32, %c0_i32_0 : i32, i32
  }
  func.func @transform_3(%arg0: i32) -> (i32, i32) {
    %c0_i32 = arith.constant 0 : i32
    %c0_i32_0 = arith.constant 0 : i32
    return %arg0, %c0_i32 : i32, i32
  }
}

module attributes {stable_mosaic.version = 11 : i64} {
  func.func @_matmul_bias_relu_kernel(%arg0: i32, %arg1: memref<8x1152xf32, #tpu.memory_space<vmem>>, %arg2: memref<1152x256xf32, #tpu.memory_space<vmem>>, %arg3: memref<1x256xf32, #tpu.memory_space<vmem>>, %arg4: memref<8x256xf32, #tpu.memory_space<vmem>>) attributes {dimension_semantics = [#tpu.dimension_semantics<parallel>], iteration_bounds = array<i64: 1>, scalar_prefetch = 0 : i64, scratch_operands = 0 : i64, tpu.core_type = #tpu.core_type<tc>, window_params = [{transform_indices = @transform_0, window_bounds = array<i64: 8, 1152>}, {pipeline_mode = #tpu.pipeline_mode<synchronous>, transform_indices = @transform_1, window_bounds = array<i64: 1152, 256>}, {pipeline_mode = #tpu.pipeline_mode<synchronous>, transform_indices = @transform_2, window_bounds = array<i64: 1, 256>}, {transform_indices = @transform_3, window_bounds = array<i64: 8, 256>}]} {
    %c0 = arith.constant 0 : index
    %c0_0 = arith.constant 0 : index
    %0 = vector.load %arg1[%c0, %c0_0] : memref<8x1152xf32, #tpu.memory_space<vmem>>, vector<8x1152xf32>
    %c0_1 = arith.constant 0 : index
    %c0_2 = arith.constant 0 : index
    %1 = vector.load %arg2[%c0_1, %c0_2] : memref<1152x256xf32, #tpu.memory_space<vmem>>, vector<1152x256xf32>
    %cst = arith.constant dense<0.000000e+00> : vector<8x256xf32>
    %2 = tpu.matmul %0, %1, %cst {dimension_numbers = #tpu.dot_dimension_numbers<[1], [0], [0], [1], [0, 0, 1, 1], [], []>} : vector<8x1152xf32>, vector<1152x256xf32>, vector<8x256xf32> -> vector<8x256xf32>
    %c0_3 = arith.constant 0 : index
    %c0_4 = arith.constant 0 : index
    %3 = vector.load %arg3[%c0_3, %c0_4] : memref<1x256xf32, #tpu.memory_space<vmem>>, vector<1x256xf32>
    %4 = vector.broadcast %3 : vector<1x256xf32> to vector<8x256xf32>
    %5 = arith.addf %2, %4 : vector<8x256xf32>
    %cst_5 = arith.constant 0.000000e+00 : f32
    %6 = vector.broadcast %cst_5 : f32 to vector<8x256xf32>
    %7 = arith.maximumf %5, %6 : vector<8x256xf32>
    %c0_6 = arith.constant 0 : index
    %c0_7 = arith.constant 0 : index
    %8 = vector.load %arg4[%c0_6, %c0_7] : memref<8x256xf32, #tpu.memory_space<vmem>>, vector<8x256xf32>
    tpu.vector_store %arg4[%c0_6, %c0_7], %7 {strides = array<i32>} : memref<8x256xf32, #tpu.memory_space<vmem>>, vector<8x256xf32>,
    return
  }
  func.func @transform_0(%arg0: i32) -> (i32, i32) {
    %c0_i32 = arith.constant 0 : i32
    %c0_i32_0 = arith.constant 0 : i32
    return %arg0, %c0_i32 : i32, i32
  }
  func.func @transform_1(%arg0: i32) -> (i32, i32) {
    %c0_i32 = arith.constant 0 : i32
    %c0_i32_0 = arith.constant 0 : i32
    %c0_i32_1 = arith.constant 0 : i32
    return %c0_i32, %c0_i32_0 : i32, i32
  }
  func.func @transform_2(%arg0: i32) -> (i32, i32) {
    %c0_i32 = arith.constant 0 : i32
    %c0_i32_0 = arith.constant 0 : i32
    %c0_i32_1 = arith.constant 0 : i32
    return %c0_i32, %c0_i32_0 : i32, i32
  }
  func.func @transform_3(%arg0: i32) -> (i32, i32) {
    %c0_i32 = arith.constant 0 : i32
    %c0_i32_0 = arith.constant 0 : i32
    return %arg0, %c0_i32 : i32, i32
  }
}

</mosaic_0001>

<llo_original>
// kernel: auxiliary_convolutions.8
$region0: #{auxiliary_convolutions.8}
  #allocation0 [shape = 'u32[]', space=smem, size = 0x4, offset = 0x4, fixed_abs, tag = 'smem constant byte address 0x4 - core index']
  #allocation1 [shape = 'u32[144,128]{1,0:T(1,128)}', space=vmem, size = 0x12000, scoped, tag = 'internal scratch']
  %s0 = inlined_call_operand.vmem [shape: f32[768,1024], index: 0, kind: input, shape index: {}]
  %s1 = inlined_call_operand.vmem [shape: f32[1024,256], index: 1, kind: input, shape index: {}]
  %s2 = inlined_call_operand.vmem [shape: f32[1,256], index: 2, kind: input, shape index: {}]
  %s3 = inlined_call_operand.vmem [shape: f32[768,256], index: 3, kind: output, shape index: {}]
  %s4 = sld [smem:[#allocation0]]
  $region45: #{auxiliary_convolutions.8} parent=0
    _
  %s6 = ssub.s32 1, %s4
  %s7 = scalar_select 0, %s6, %s4
  loop: start=0, step=1, limit=5
  $region2: #{auxiliary_convolutions.8} parent=0 // loop_pre_header
    _
  $region3: #{auxiliary_convolutions.8} parent=0 // loop_header
    %s9 = sphi 0, %s13
    %p10 = scmp.ge.s32.totalorder %s9, 5
    %s19 = sphi 0, %s21
    %s22 = sphi 0, %s19
    %s23 = sphi 0, %s22
    %s39 = sphi 0, %s23
    %s43 = sphi 0, %s43
    %s45 = sphi 0, %s43
    %s46 = sphi 0, %s45
    %s60 = sphi 0, %s46
    %s64 = sphi 0, %s64
    %s66 = sphi 0, %s64
    %s67 = sphi 0, %s66
    %s81 = sphi 0, %s67
    %s87 = sphi 0, %s89
    %s90 = sphi 0, %s87
    %s91 = sphi 0, %s90
    %s107 = sphi 0, %s91
  $region4: #{auxiliary_convolutions.8} parent=0 // loop_header_branch
    %12 = sbr.rel (%p10) target = $region8
  $region5: #{auxiliary_convolutions.8} parent=0 // loop_body
    %s14 = ssub.s32 %s9, 1
    %s15 = ssub.s32 %s9, 2
    %s16 = sadd.s32 %s9, 1
    %s17 = ssub.s32 %s9, %s16
    %p18 = scmp.eq.s32.totalorder %s17, 0
    %s20 = sadd.s32 %s19, 1
    %s21 = scalar_select %p18, %s19, %s20
    %p24 = pneg %p18
    %p25 = scmp.eq.s32.totalorder %s9, 2
    %p26 = por %p24, %p25
    %p27 = scmp.ne.s32.totalorder %s19, %s22
    %p28 = scmp.eq.s32.totalorder %s9, 0
    %p29 = por %p27, %p28
    %p30 = scmp.ne.s32.totalorder %s19, %s22
    %p31 = scmp.eq.s32.totalorder %s14, 2
    %p32 = por %p30, %p31
    %p33 = scmp.ne.s32.totalorder %s22, %s23
    %p34 = scmp.eq.s32.totalorder %s14, 0
    %p35 = por %p33, %p34
    %p36 = scmp.ne.s32.totalorder %s22, %s23
    %p37 = scmp.eq.s32.totalorder %s15, 2
    %p38 = por %p36, %p37
    %p40 = scmp.ne.s32.totalorder %s23, %s39
    %p41 = scmp.eq.s32.totalorder %s15, 0
    %p42 = por %p40, %p41
    %s44 = sadd.s32 %s43, 1
    %p47 = scmp.eq.s32.totalorder %s9, 2
    %p48 = scmp.ne.s32.totalorder %s43, %s45
    %p49 = scmp.eq.s32.totalorder %s9, 0
    %p50 = por %p48, %p49
    %p51 = scmp.ne.s32.totalorder %s43, %s45
    %p52 = scmp.eq.s32.totalorder %s14, 2
    %p53 = por %p51, %p52
    %p54 = scmp.ne.s32.totalorder %s45, %s46
    %p55 = scmp.eq.s32.totalorder %s14, 0
    %p56 = por %p54, %p55
    %p57 = scmp.ne.s32.totalorder %s45, %s46
    %p58 = scmp.eq.s32.totalorder %s15, 2
    %p59 = por %p57, %p58
    %p61 = scmp.ne.s32.totalorder %s46, %s60
    %p62 = scmp.eq.s32.totalorder %s15, 0
    %p63 = por %p61, %p62
    %s65 = sadd.s32 %s64, 1
    %p68 = scmp.eq.s32.totalorder %s9, 2
    %p69 = scmp.ne.s32.totalorder %s64, %s66
    %p70 = scmp.eq.s32.totalorder %s9, 0
    %p71 = por %p69, %p70
    %p72 = scmp.ne.s32.totalorder %s64, %s66
    %p73 = scmp.eq.s32.totalorder %s14, 2
    %p74 = por %p72, %p73
    %p75 = scmp.ne.s32.totalorder %s66, %s67
    %p76 = scmp.eq.s32.totalorder %s14, 0
    %p77 = por %p75, %p76
    %p78 = scmp.ne.s32.totalorder %s66, %s67
    %p79 = scmp.eq.s32.totalorder %s15, 2
    %p80 = por %p78, %p79
    %p82 = scmp.ne.s32.totalorder %s67, %s81
    %p83 = scmp.eq.s32.totalorder %s15, 0
    %p84 = por %p82, %p83
    %s85 = ssub.s32 %s9, %s16
    %p86 = scmp.eq.s32.totalorder %s85, 0
    %s88 = sadd.s32 %s87, 1
    %s89 = scalar_select %p86, %s87, %s88
    %p92 = pneg %p86
    %p93 = scmp.eq.s32.totalorder %s9, 2
    %p94 = por %p92, %p93
    %p95 = scmp.ne.s32.totalorder %s87, %s90
    %p96 = scmp.eq.s32.totalorder %s9, 0
    %p97 = por %p95, %p96
    %p98 = scmp.ne.s32.totalorder %s87, %s90
    %p99 = scmp.eq.s32.totalorder %s14, 2
    %p100 = por %p98, %p99
    %p101 = scmp.ne.s32.totalorder %s90, %s91
    %p102 = scmp.eq.s32.totalorder %s14, 0
    %p103 = por %p101, %p102
    %p104 = scmp.ne.s32.totalorder %s90, %s91
    %p105 = scmp.eq.s32.totalorder %s15, 2
    %p106 = por %p104, %p105
    %p108 = scmp.ne.s32.totalorder %s91, %s107
    %p109 = scmp.eq.s32.totalorder %s15, 0
    %p110 = por %p108, %p109
    %p111 = scmp.le.s32.totalorder 1, %s9
    %p112 = scmp.lt.s32.totalorder %s9, 4
    %p113 = pnand %p111, %p112
    %p114 = pneg %p113
    // Predicated region
    $region9: #{auxiliary_convolutions.8} parent=5 // pred_check
      _
    $region10: #{auxiliary_convolutions.8} parent=5 // pred_check_branch
      %116 = sbr.rel (%p113) target = $region12
    $region11: #{auxiliary_convolutions.8} parent=5 // pred_region
      %s117 = ssub.s32 %s9, 1
      // Predicated region
      $region13: #{auxiliary_convolutions.8} parent=11 // pred_check
        %p118 = pneg %p56
      $region14: #{auxiliary_convolutions.8} parent=11 // pred_check_branch
        %120 = sbr.rel (%p118) target = $region16
      $region15: #{auxiliary_convolutions.8} parent=11 // pred_region
        _
      $region16: #{auxiliary_convolutions.8} parent=11 // pred_fallthru
        _
      // Predicated region
      $region17: #{auxiliary_convolutions.8} parent=11 // pred_check
        %p121 = pneg %p77
      $region18: #{auxiliary_convolutions.8} parent=11 // pred_check_branch
        %123 = sbr.rel (%p121) target = $region20
      $region19: #{auxiliary_convolutions.8} parent=11 // pred_region
        _
      $region20: #{auxiliary_convolutions.8} parent=11 // pred_fallthru
        _
    $region12: #{auxiliary_convolutions.8} parent=5 // pred_fallthru
      _
    %p124 = scmp.lt.s32.totalorder %s9, 3
    // Predicated region
    $region21: #{auxiliary_convolutions.8} parent=5 // pred_check
      %p125 = pneg %p124
    $region22: #{auxiliary_convolutions.8} parent=5 // pred_check_branch
      %127 = sbr.rel (%p125) target = $region24
    $region23: #{auxiliary_convolutions.8} parent=5 // pred_region
      // Predicated region
      $region25: #{auxiliary_convolutions.8} parent=23 // pred_check
        %p128 = pneg %p29
      $region26: #{auxiliary_convolutions.8} parent=23 // pred_check_branch
        %130 = sbr.rel (%p128) target = $region28
      $region27: #{auxiliary_convolutions.8} parent=23 // pred_region
        %s131 = smul.u32 32, %s9
        %p132 = scmp.lt.s32.totalorder %s131, 95
        %s133 = scalar_select %p132, %s131, 95
        %s134 = smul.addr %s133, 8
        %s135 = smul.addr %s134, 8
        %s136 = scalar_lea.vmem %s0, %s135
        %s137 = smul.u32 32, %s9
      $region28: #{auxiliary_convolutions.8} parent=23 // pred_fallthru
        _
    $region24: #{auxiliary_convolutions.8} parent=5 // pred_fallthru
      _
    %p138 = scmp.le.s32.totalorder 1, %s9
    %p139 = scmp.lt.s32.totalorder %s9, 4
    %p140 = pnand %p138, %p139
    %p141 = pneg %p140
    // Predicated region
    $region29: #{auxiliary_convolutions.8} parent=5 // pred_check
      _
    $region30: #{auxiliary_convolutions.8} parent=5 // pred_check_branch
      %143 = sbr.rel (%p140) target = $region32
    $region31: #{auxiliary_convolutions.8} parent=5 // pred_region
      %s144 = ssub.s32 %s9, 1
      %s145 = smul.u32 32, %s14
      %p146 = scmp.lt.s32.totalorder %s145, 95
      %s147 = scalar_select %p146, %s145, 95
      %s148 = smul.addr %s147, 8
      %s149 = smul.addr %s148, 8
      %s150 = scalar_lea.vmem %s0, %s149
      %p151 = pneg %p35
      %p152 = pneg %p32
      %p153 = pneg %p56
      %p154 = pneg %p53
      %p155 = pneg %p77
      %p156 = pneg %p74
      %p157 = pneg %p103
      %p158 = pneg %p100
      %s159 = smul.u32 32, %s14
      %p160 = scmp.lt.s32.totalorder %s159, 95
      %s161 = scalar_select %p160, %s159, 95
      %s162 = smul.addr %s161, 2
      %s163 = smul.addr %s162, 8
      %s164 = scalar_lea.vmem %s3, %s163
      %s165 = smul.u32 32, %s14
      %p166 = scmp.lt.s32.totalorder %s165, 95
      %s167 = scalar_select %p166, %s165, 95
      %s168 = smul.addr %s167, 8
      %s169 = smul.addr %s168, 8
      %s170 = scalar_lea.vmem %s0, %s169
      %s171 = smul.u32 32, %s14
      %s172 = smul.u32 32, %s14
      %p173 = scmp.lt.s32.totalorder %s172, 95
      %s174 = scalar_select %p173, %s172, 95
      %s175 = smul.addr %s174, 2
      %s176 = smul.addr %s175, 8
      %s177 = scalar_lea.vmem %s3, %s176
      %s178 = smul.u32 32, %s14
      %v179 = vld [vmem:[%s170] sm:$0xff]
      %v180 = vld [vmem:[%s170 + $0x8] sm:$0xff]
      %v181 = vld [vmem:[%s170 + $0x10] sm:$0xff]
      %v182 = vld [vmem:[%s170 + $0x18] sm:$0xff]
      %v183 = vld [vmem:[%s170 + $0x20] sm:$0xff]
      %v184 = vld [vmem:[%s170 + $0x28] sm:$0xff]
      %v185 = vld [vmem:[%s170 + $0x30] sm:$0xff]
      %v186 = vld [vmem:[%s170 + $0x38] sm:$0xff]
      %v187 = vld [vmem:[%s170 + $0x40] sm:$0xff]
      %v188 = vld [vmem:[%s170 + $0x48] sm:$0xff]
      %v189 = vld [vmem:[%s170 + $0x50] sm:$0xff]
      %v190 = vld [vmem:[%s170 + $0x58] sm:$0xff]
      %v191 = vld [vmem:[%s170 + $0x60] sm:$0xff]
      %v192 = vld [vmem:[%s170 + $0x68] sm:$0xff]
      %v193 = vld [vmem:[%s170 + $0x70] sm:$0xff]
      %v194 = vld [vmem:[%s170 + $0x78] sm:$0xff]
      %v195 = vld [vmem:[%s170 + $0x80] sm:$0xff]
      %v196 = vld [vmem:[%s170 + $0x88] sm:$0xff]
      %v197 = vld [vmem:[%s170 + $0x90] sm:$0xff]
      %v198 = vld [vmem:[%s170 + $0x98] sm:$0xff]
      %v199 = vld [vmem:[%s170 + $0xa0] sm:$0xff]
      %v200 = vld [vmem:[%s170 + $0xa8] sm:$0xff]
      %v201 = vld [vmem:[%s170 + $0xb0] sm:$0xff]
      %v202 = vld [vmem:[%s170 + $0xb8] sm:$0xff]
      %v203 = vld [vmem:[%s170 + $0xc0] sm:$0xff]
      %v204 = vld [vmem:[%s170 + $0xc8] sm:$0xff]
      %v205 = vld [vmem:[%s170 + $0xd0] sm:$0xff]
      %v206 = vld [vmem:[%s170 + $0xd8] sm:$0xff]
      %v207 = vld [vmem:[%s170 + $0xe0] sm:$0xff]
      %v208 = vld [vmem:[%s170 + $0xe8] sm:$0xff]
      %v209 = vld [vmem:[%s170 + $0xf0] sm:$0xff]
      %v210 = vld [vmem:[%s170 + $0xf8] sm:$0xff]
      %v211 = vld [vmem:[%s170 + $0x100] sm:$0xff]
      %v212 = vld [vmem:[%s170 + $0x108] sm:$0xff]
      %v213 = vld [vmem:[%s170 + $0x110] sm:$0xff]
      %v214 = vld [vmem:[%s170 + $0x118] sm:$0xff]
      %v215 = vld [vmem:[%s170 + $0x120] sm:$0xff]
      %v216 = vld [vmem:[%s170 + $0x128] sm:$0xff]
      %v217 = vld [vmem:[%s170 + $0x130] sm:$0xff]
      %v218 = vld [vmem:[%s170 + $0x138] sm:$0xff]
      %v219 = vld [vmem:[%s170 + $0x140] sm:$0xff]
      %v220 = vld [vmem:[%s170 + $0x148] sm:$0xff]
      %v221 = vld [vmem:[%s170 + $0x150] sm:$0xff]
      %v222 = vld [vmem:[%s170 + $0x158] sm:$0xff]
      %v223 = vld [vmem:[%s170 + $0x160] sm:$0xff]
      %v224 = vld [vmem:[%s170 + $0x168] sm:$0xff]
      %v225 = vld [vmem:[%s170 + $0x170] sm:$0xff]
      %v226 = vld [vmem:[%s170 + $0x178] sm:$0xff]
      %v227 = vld [vmem:[%s170 + $0x180] sm:$0xff]
      %v228 = vld [vmem:[%s170 + $0x188] sm:$0xff]
      %v229 = vld [vmem:[%s170 + $0x190] sm:$0xff]
      %v230 = vld [vmem:[%s170 + $0x198] sm:$0xff]
      %v231 = vld [vmem:[%s170 + $0x1a0] sm:$0xff]
      %v232 = vld [vmem:[%s170 + $0x1a8] sm:$0xff]
      %v233 = vld [vmem:[%s170 + $0x1b0] sm:$0xff]
      %v234 = vld [vmem:[%s170 + $0x1b8] sm:$0xff]
      %v235 = vld [vmem:[%s170 + $0x1c0] sm:$0xff]
      %v236 = vld [vmem:[%s170 + $0x1c8] sm:$0xff]
      %v237 = vld [vmem:[%s170 + $0x1d0] sm:$0xff]
      %v238 = vld [vmem:[%s170 + $0x1d8] sm:$0xff]
      %v239 = vld [vmem:[%s170 + $0x1e0] sm:$0xff]
      %v240 = vld [vmem:[%s170 + $0x1e8] sm:$0xff]
      %v241 = vld [vmem:[%s170 + $0x1f0] sm:$0xff]
      %v242 = vld [vmem:[%s170 + $0x1f8] sm:$0xff]
      %v243 = vld [vmem:[%s170 + $0x200] sm:$0xff]
      %v244 = vld [vmem:[%s170 + $0x208] sm:$0xff]
      %v245 = vld [vmem:[%s170 + $0x210] sm:$0xff]
      %v246 = vld [vmem:[%s170 + $0x218] sm:$0xff]
      %v247 = vld [vmem:[%s170 + $0x220] sm:$0xff]
      %v248 = vld [vmem:[%s170 + $0x228] sm:$0xff]
      %v249 = vld [vmem:[%s170 + $0x230] sm:$0xff]
      %v250 = vld [vmem:[%s170 + $0x238] sm:$0xff]
      %v251 = vld [vmem:[%s170 + $0x240] sm:$0xff]
      %v252 = vld [vmem:[%s170 + $0x248] sm:$0xff]
      %v253 = vld [vmem:[%s170 + $0x250] sm:$0xff]
      %v254 = vld [vmem:[%s170 + $0x258] sm:$0xff]
      %v255 = vld [vmem:[%s170 + $0x260] sm:$0xff]
      %v256 = vld [vmem:[%s170 + $0x268] sm:$0xff]
      %v257 = vld [vmem:[%s170 + $0x270] sm:$0xff]
      %v258 = vld [vmem:[%s170 + $0x278] sm:$0xff]
      %v259 = vld [vmem:[%s170 + $0x280] sm:$0xff]
      %v260 = vld [vmem:[%s170 + $0x288] sm:$0xff]
      %v261 = vld [vmem:[%s170 + $0x290] sm:$0xff]
      %v262 = vld [vmem:[%s170 + $0x298] sm:$0xff]
      %v263 = vld [vmem:[%s170 + $0x2a0] sm:$0xff]
      %v264 = vld [vmem:[%s170 + $0x2a8] sm:$0xff]
      %v265 = vld [vmem:[%s170 + $0x2b0] sm:$0xff]
      %v266 = vld [vmem:[%s170 + $0x2b8] sm:$0xff]
      %v267 = vld [vmem:[%s170 + $0x2c0] sm:$0xff]
      %v268 = vld [vmem:[%s170 + $0x2c8] sm:$0xff]
      %v269 = vld [vmem:[%s170 + $0x2d0] sm:$0xff]
      %v270 = vld [vmem:[%s170 + $0x2d8] sm:$0xff]
      %v271 = vld [vmem:[%s170 + $0x2e0] sm:$0xff]
      %v272 = vld [vmem:[%s170 + $0x2e8] sm:$0xff]
      %v273 = vld [vmem:[%s170 + $0x2f0] sm:$0xff]
      %v274 = vld [vmem:[%s170 + $0x2f8] sm:$0xff]
      %v275 = vld [vmem:[%s170 + $0x300] sm:$0xff]
      %v276 = vld [vmem:[%s170 + $0x308] sm:$0xff]
      %v277 = vld [vmem:[%s170 + $0x310] sm:$0xff]
      %v278 = vld [vmem:[%s170 + $0x318] sm:$0xff]
      %v279 = vld [vmem:[%s170 + $0x320] sm:$0xff]
      %v280 = vld [vmem:[%s170 + $0x328] sm:$0xff]
      %v281 = vld [vmem:[%s170 + $0x330] sm:$0xff]
      %v282 = vld [vmem:[%s170 + $0x338] sm:$0xff]
      %v283 = vld [vmem:[%s170 + $0x340] sm:$0xff]
      %v284 = vld [vmem:[%s170 + $0x348] sm:$0xff]
      %v285 = vld [vmem:[%s170 + $0x350] sm:$0xff]
      %v286 = vld [vmem:[%s170 + $0x358] sm:$0xff]
      %v287 = vld [vmem:[%s170 + $0x360] sm:$0xff]
      %v288 = vld [vmem:[%s170 + $0x368] sm:$0xff]
      %v289 = vld [vmem:[%s170 + $0x370] sm:$0xff]
      %v290 = vld [vmem:[%s170 + $0x378] sm:$0xff]
      %v291 = vld [vmem:[%s170 + $0x380] sm:$0xff]
      %v292 = vld [vmem:[%s170 + $0x388] sm:$0xff]
      %v293 = vld [vmem:[%s170 + $0x390] sm:$0xff]
      %v294 = vld [vmem:[%s170 + $0x398] sm:$0xff]
      %v295 = vld [vmem:[%s170 + $0x3a0] sm:$0xff]
      %v296 = vld [vmem:[%s170 + $0x3a8] sm:$0xff]
      %v297 = vld [vmem:[%s170 + $0x3b0] sm:$0xff]
      %v298 = vld [vmem:[%s170 + $0x3b8] sm:$0xff]
      %v299 = vld [vmem:[%s170 + $0x3c0] sm:$0xff]
      %v300 = vld [vmem:[%s170 + $0x3c8] sm:$0xff]
      %v301 = vld [vmem:[%s170 + $0x3d0] sm:$0xff]
      %v302 = vld [vmem:[%s170 + $0x3d8] sm:$0xff]
      %v303 = vld [vmem:[%s170 + $0x3e0] sm:$0xff]
      %v304 = vld [vmem:[%s170 + $0x3e8] sm:$0xff]
      %v305 = vld [vmem:[%s170 + $0x3f0] sm:$0xff]
      %v306 = vld [vmem:[%s170 + $0x3f8] sm:$0xff]
      %v307 = vld [vmem:[%s170 + $0x400] sm:$0xff]
      %v308 = vld [vmem:[%s170 + $0x408] sm:$0xff]
      %v309 = vld [vmem:[%s170 + $0x410] sm:$0xff]
      %v310 = vld [vmem:[%s170 + $0x418] sm:$0xff]
      %v311 = vld [vmem:[%s170 + $0x420] sm:$0xff]
      %v312 = vld [vmem:[%s170 + $0x428] sm:$0xff]
      %v313 = vld [vmem:[%s170 + $0x430] sm:$0xff]
      %v314 = vld [vmem:[%s170 + $0x438] sm:$0xff]
      %v315 = vld [vmem:[%s170 + $0x440] sm:$0xff]
      %v316 = vld [vmem:[%s170 + $0x448] sm:$0xff]
      %v317 = vld [vmem:[%s170 + $0x450] sm:$0xff]
      %v318 = vld [vmem:[%s170 + $0x458] sm:$0xff]
      %v319 = vld [vmem:[%s170 + $0x460] sm:$0xff]
      %v320 = vld [vmem:[%s170 + $0x468] sm:$0xff]
      %v321 = vld [vmem:[%s170 + $0x470] sm:$0xff]
      %v322 = vld [vmem:[%s170 + $0x478] sm:$0xff]
      %v323 = vld [vmem:[%s170 + $0x480] sm:$0xff]
      %v324 = vld [vmem:[%s170 + $0x488] sm:$0xff]
      %v325 = vld [vmem:[%s170 + $0x490] sm:$0xff]
      %v326 = vld [vmem:[%s170 + $0x498] sm:$0xff]
      %v327 = vld [vmem:[%s170 + $0x4a0] sm:$0xff]
      %v328 = vld [vmem:[%s170 + $0x4a8] sm:$0xff]
      %v329 = vld [vmem:[%s170 + $0x4b0] sm:$0xff]
      %v330 = vld [vmem:[%s170 + $0x4b8] sm:$0xff]
      %v331 = vld [vmem:[%s170 + $0x4c0] sm:$0xff]
      %v332 = vld [vmem:[%s170 + $0x4c8] sm:$0xff]
      %v333 = vld [vmem:[%s170 + $0x4d0] sm:$0xff]
      %v334 = vld [vmem:[%s170 + $0x4d8] sm:$0xff]
      %v335 = vld [vmem:[%s170 + $0x4e0] sm:$0xff]
      %v336 = vld [vmem:[%s170 + $0x4e8] sm:$0xff]
      %v337 = vld [vmem:[%s170 + $0x4f0] sm:$0xff]
      %v338 = vld [vmem:[%s170 + $0x4f8] sm:$0xff]
      %v339 = vld [vmem:[%s170 + $0x500] sm:$0xff]
      %v340 = vld [vmem:[%s170 + $0x508] sm:$0xff]
      %v341 = vld [vmem:[%s170 + $0x510] sm:$0xff]
      %v342 = vld [vmem:[%s170 + $0x518] sm:$0xff]
      %v343 = vld [vmem:[%s170 + $0x520] sm:$0xff]
      %v344 = vld [vmem:[%s170 + $0x528] sm:$0xff]
      %v345 = vld [vmem:[%s170 + $0x530] sm:$0xff]
      %v346 = vld [vmem:[%s170 + $0x538] sm:$0xff]
      %v347 = vld [vmem:[%s170 + $0x540] sm:$0xff]
      %v348 = vld [vmem:[%s170 + $0x548] sm:$0xff]
      %v349 = vld [vmem:[%s170 + $0x550] sm:$0xff]
      %v350 = vld [vmem:[%s170 + $0x558] sm:$0xff]
      %v351 = vld [vmem:[%s170 + $0x560] sm:$0xff]
      %v352 = vld [vmem:[%s170 + $0x568] sm:$0xff]
      %v353 = vld [vmem:[%s170 + $0x570] sm:$0xff]
      %v354 = vld [vmem:[%s170 + $0x578] sm:$0xff]
      %v355 = vld [vmem:[%s170 + $0x580] sm:$0xff]
      %v356 = vld [vmem:[%s170 + $0x588] sm:$0xff]
      %v357 = vld [vmem:[%s170 + $0x590] sm:$0xff]
      %v358 = vld [vmem:[%s170 + $0x598] sm:$0xff]
      %v359 = vld [vmem:[%s170 + $0x5a0] sm:$0xff]
      %v360 = vld [vmem:[%s170 + $0x5a8] sm:$0xff]
      %v361 = vld [vmem:[%s170 + $0x5b0] sm:$0xff]
      %v362 = vld [vmem:[%s170 + $0x5b8] sm:$0xff]
      %v363 = vld [vmem:[%s170 + $0x5c0] sm:$0xff]
      %v364 = vld [vmem:[%s170 + $0x5c8] sm:$0xff]
      %v365 = vld [vmem:[%s170 + $0x5d0] sm:$0xff]
      %v366 = vld [vmem:[%s170 + $0x5d8] sm:$0xff]
      %v367 = vld [vmem:[%s170 + $0x5e0] sm:$0xff]
      %v368 = vld [vmem:[%s170 + $0x5e8] sm:$0xff]
      %v369 = vld [vmem:[%s170 + $0x5f0] sm:$0xff]
      %v370 = vld [vmem:[%s170 + $0x5f8] sm:$0xff]
      %v371 = vld [vmem:[%s170 + $0x600] sm:$0xff]
      %v372 = vld [vmem:[%s170 + $0x608] sm:$0xff]
      %v373 = vld [vmem:[%s170 + $0x610] sm:$0xff]
      %v374 = vld [vmem:[%s170 + $0x618] sm:$0xff]
      %v375 = vld [vmem:[%s170 + $0x620] sm:$0xff]
      %v376 = vld [vmem:[%s170 + $0x628] sm:$0xff]
      %v377 = vld [vmem:[%s170 + $0x630] sm:$0xff]
      %v378 = vld [vmem:[%s170 + $0x638] sm:$0xff]
      %v379 = vld [vmem:[%s170 + $0x640] sm:$0xff]
      %v380 = vld [vmem:[%s170 + $0x648] sm:$0xff]
      %v381 = vld [vmem:[%s170 + $0x650] sm:$0xff]
      %v382 = vld [vmem:[%s170 + $0x658] sm:$0xff]
      %v383 = vld [vmem:[%s170 + $0x660] sm:$0xff]
      %v384 = vld [vmem:[%s170 + $0x668] sm:$0xff]
      %v385 = vld [vmem:[%s170 + $0x670] sm:$0xff]
      %v386 = vld [vmem:[%s170 + $0x678] sm:$0xff]
      %v387 = vld [vmem:[%s170 + $0x680] sm:$0xff]
      %v388 = vld [vmem:[%s170 + $0x688] sm:$0xff]
      %v389 = vld [vmem:[%s170 + $0x690] sm:$0xff]
      %v390 = vld [vmem:[%s170 + $0x698] sm:$0xff]
      %v391 = vld [vmem:[%s170 + $0x6a0] sm:$0xff]
      %v392 = vld [vmem:[%s170 + $0x6a8] sm:$0xff]
      %v393 = vld [vmem:[%s170 + $0x6b0] sm:$0xff]
      %v394 = vld [vmem:[%s170 + $0x6b8] sm:$0xff]
      %v395 = vld [vmem:[%s170 + $0x6c0] sm:$0xff]
      %v396 = vld [vmem:[%s170 + $0x6c8] sm:$0xff]
      %v397 = vld [vmem:[%s170 + $0x6d0] sm:$0xff]
      %v398 = vld [vmem:[%s170 + $0x6d8] sm:$0xff]
      %v399 = vld [vmem:[%s170 + $0x6e0] sm:$0xff]
      %v400 = vld [vmem:[%s170 + $0x6e8] sm:$0xff]
      %v401 = vld [vmem:[%s170 + $0x6f0] sm:$0xff]
      %v402 = vld [vmem:[%s170 + $0x6f8] sm:$0xff]
      %v403 = vld [vmem:[%s170 + $0x700] sm:$0xff]
      %v404 = vld [vmem:[%s170 + $0x708] sm:$0xff]
      %v405 = vld [vmem:[%s170 + $0x710] sm:$0xff]
      %v406 = vld [vmem:[%s170 + $0x718] sm:$0xff]
      %v407 = vld [vmem:[%s170 + $0x720] sm:$0xff]
      %v408 = vld [vmem:[%s170 + $0x728] sm:$0xff]
      %v409 = vld [vmem:[%s170 + $0x730] sm:$0xff]
      %v410 = vld [vmem:[%s170 + $0x738] sm:$0xff]
      %v411 = vld [vmem:[%s170 + $0x740] sm:$0xff]
      %v412 = vld [vmem:[%s170 + $0x748] sm:$0xff]
      %v413 = vld [vmem:[%s170 + $0x750] sm:$0xff]
      %v414 = vld [vmem:[%s170 + $0x758] sm:$0xff]
      %v415 = vld [vmem:[%s170 + $0x760] sm:$0xff]
      %v416 = vld [vmem:[%s170 + $0x768] sm:$0xff]
      %v417 = vld [vmem:[%s170 + $0x770] sm:$0xff]
      %v418 = vld [vmem:[%s170 + $0x778] sm:$0xff]
      %v419 = vld [vmem:[%s170 + $0x780] sm:$0xff]
      %v420 = vld [vmem:[%s170 + $0x788] sm:$0xff]
      %v421 = vld [vmem:[%s170 + $0x790] sm:$0xff]
      %v422 = vld [vmem:[%s170 + $0x798] sm:$0xff]
      %v423 = vld [vmem:[%s170 + $0x7a0] sm:$0xff]
      %v424 = vld [vmem:[%s170 + $0x7a8] sm:$0xff]
      %v425 = vld [vmem:[%s170 + $0x7b0] sm:$0xff]
      %v426 = vld [vmem:[%s170 + $0x7b8] sm:$0xff]
      %v427 = vld [vmem:[%s170 + $0x7c0] sm:$0xff]
      %v428 = vld [vmem:[%s170 + $0x7c8] sm:$0xff]
      %v429 = vld [vmem:[%s170 + $0x7d0] sm:$0xff]
      %v430 = vld [vmem:[%s170 + $0x7d8] sm:$0xff]
      %v431 = vld [vmem:[%s170 + $0x7e0] sm:$0xff]
      %v432 = vld [vmem:[%s170 + $0x7e8] sm:$0xff]
      %v433 = vld [vmem:[%s170 + $0x7f0] sm:$0xff]
      %v434 = vld [vmem:[%s170 + $0x7f8] sm:$0xff]
      %v435 = vld [vmem:[%s1] sm:$0xff]
      %v436 = vld [vmem:[%s1 + $0x8] sm:$0xff]
      %v437 = vld [vmem:[%s1 + $0x10] sm:$0xff]
      %v438 = vld [vmem:[%s1 + $0x18] sm:$0xff]
      %v439 = vld [vmem:[%s1 + $0x20] sm:$0xff]
      %v440 = vld [vmem:[%s1 + $0x28] sm:$0xff]
      %v441 = vld [vmem:[%s1 + $0x30] sm:$0xff]
      %v442 = vld [vmem:[%s1 + $0x38] sm:$0xff]
      %v443 = vld [vmem:[%s1 + $0x40] sm:$0xff]
      %v444 = vld [vmem:[%s1 + $0x48] sm:$0xff]
      %v445 = vld [vmem:[%s1 + $0x50] sm:$0xff]
      %v446 = vld [vmem:[%s1 + $0x58] sm:$0xff]
      %v447 = vld [vmem:[%s1 + $0x60] sm:$0xff]
      %v448 = vld [vmem:[%s1 + $0x68] sm:$0xff]
      %v449 = vld [vmem:[%s1 + $0x70] sm:$0xff]
      %v450 = vld [vmem:[%s1 + $0x78] sm:$0xff]
      %v451 = vld [vmem:[%s1 + $0x80] sm:$0xff]
      %v452 = vld [vmem:[%s1 + $0x88] sm:$0xff]
      %v453 = vld [vmem:[%s1 + $0x90] sm:$0xff]
      %v454 = vld [vmem:[%s1 + $0x98] sm:$0xff]
      %v455 = vld [vmem:[%s1 + $0xa0] sm:$0xff]
      %v456 = vld [vmem:[%s1 + $0xa8] sm:$0xff]
      %v457 = vld [vmem:[%s1 + $0xb0] sm:$0xff]
      %v458 = vld [vmem:[%s1 + $0xb8] sm:$0xff]
      %v459 = vld [vmem:[%s1 + $0xc0] sm:$0xff]
      %v460 = vld [vmem:[%s1 + $0xc8] sm:$0xff]
      %v461 = vld [vmem:[%s1 + $0xd0] sm:$0xff]
      %v462 = vld [vmem:[%s1 + $0xd8] sm:$0xff]
      %v463 = vld [vmem:[%s1 + $0xe0] sm:$0xff]
      %v464 = vld [vmem:[%s1 + $0xe8] sm:$0xff]
      %v465 = vld [vmem:[%s1 + $0xf0] sm:$0xff]
      %v466 = vld [vmem:[%s1 + $0xf8] sm:$0xff]
      %v467 = vld [vmem:[%s1 + $0x100] sm:$0xff]
      %v468 = vld [vmem:[%s1 + $0x108] sm:$0xff]
      %v469 = vld [vmem:[%s1 + $0x110] sm:$0xff]
      %v470 = vld [vmem:[%s1 + $0x118] sm:$0xff]
      %v471 = vld [vmem:[%s1 + $0x120] sm:$0xff]
      %v472 = vld [vmem:[%s1 + $0x128] sm:$0xff]
      %v473 = vld [vmem:[%s1 + $0x130] sm:$0xff]
      %v474 = vld [vmem:[%s1 + $0x138] sm:$0xff]
      %v475 = vld [vmem:[%s1 + $0x140] sm:$0xff]
      %v476 = vld [vmem:[%s1 + $0x148] sm:$0xff]
      %v477 = vld [vmem:[%s1 + $0x150] sm:$0xff]
      %v478 = vld [vmem:[%s1 + $0x158] sm:$0xff]
      %v479 = vld [vmem:[%s1 + $0x160] sm:$0xff]
      %v480 = vld [vmem:[%s1 + $0x168] sm:$0xff]
      %v481 = vld [vmem:[%s1 + $0x170] sm:$0xff]
      %v482 = vld [vmem:[%s1 + $0x178] sm:$0xff]
      %v483 = vld [vmem:[%s1 + $0x180] sm:$0xff]
      %v484 = vld [vmem:[%s1 + $0x188] sm:$0xff]
      %v485 = vld [vmem:[%s1 + $0x190] sm:$0xff]
      %v486 = vld [vmem:[%s1 + $0x198] sm:$0xff]
      %v487 = vld [vmem:[%s1 + $0x1a0] sm:$0xff]
      %v488 = vld [vmem:[%s1 + $0x1a8] sm:$0xff]
      %v489 = vld [vmem:[%s1 + $0x1b0] sm:$0xff]
      %v490 = vld [vmem:[%s1 + $0x1b8] sm:$0xff]
      %v491 = vld [vmem:[%s1 + $0x1c0] sm:$0xff]
      %v492 = vld [vmem:[%s1 + $0x1c8] sm:$0xff]
      %v493 = vld [vmem:[%s1 + $0x1d0] sm:$0xff]
      %v494 = vld [vmem:[%s1 + $0x1d8] sm:$0xff]
      %v495 = vld [vmem:[%s1 + $0x1e0] sm:$0xff]
      %v496 = vld [vmem:[%s1 + $0x1e8] sm:$0xff]
      %v497 = vld [vmem:[%s1 + $0x1f0] sm:$0xff]
      %v498 = vld [vmem:[%s1 + $0x1f8] sm:$0xff]
      %v499 = vld [vmem:[%s1 + $0x200] sm:$0xff]
      %v500 = vld [vmem:[%s1 + $0x208] sm:$0xff]
      %v501 = vld [vmem:[%s1 + $0x210] sm:$0xff]
      %v502 = vld [vmem:[%s1 + $0x218] sm:$0xff]
      %v503 = vld [vmem:[%s1 + $0x220] sm:$0xff]
      %v504 = vld [vmem:[%s1 + $0x228] sm:$0xff]
      %v505 = vld [vmem:[%s1 + $0x230] sm:$0xff]
      %v506 = vld [vmem:[%s1 + $0x238] sm:$0xff]
      %v507 = vld [vmem:[%s1 + $0x240] sm:$0xff]
      %v508 = vld [vmem:[%s1 + $0x248] sm:$0xff]
      %v509 = vld [vmem:[%s1 + $0x250] sm:$0xff]
      %v510 = vld [vmem:[%s1 + $0x258] sm:$0xff]
      %v511 = vld [vmem:[%s1 + $0x260] sm:$0xff]
      %v512 = vld [vmem:[%s1 + $0x268] sm:$0xff]
      %v513 = vld [vmem:[%s1 + $0x270] sm:$0xff]
      %v514 = vld [vmem:[%s1 + $0x278] sm:$0xff]
      %v515 = vld [vmem:[%s1 + $0x280] sm:$0xff]
      %v516 = vld [vmem:[%s1 + $0x288] sm:$0xff]
      %v517 = vld [vmem:[%s1 + $0x290] sm:$0xff]
      %v518 = vld [vmem:[%s1 + $0x298] sm:$0xff]
      %v519 = vld [vmem:[%s1 + $0x2a0] sm:$0xff]
      %v520 = vld [vmem:[%s1 + $0x2a8] sm:$0xff]
      %v521 = vld [vmem:[%s1 + $0x2b0] sm:$0xff]
      %v522 = vld [vmem:[%s1 + $0x2b8] sm:$0xff]
      %v523 = vld [vmem:[%s1 + $0x2c0] sm:$0xff]
      %v524 = vld [vmem:[%s1 + $0x2c8] sm:$0xff]
      %v525 = vld [vmem:[%s1 + $0x2d0] sm:$0xff]
      %v526 = vld [vmem:[%s1 + $0x2d8] sm:$0xff]
      %v527 = vld [vmem:[%s1 + $0x2e0] sm:$0xff]
      %v528 = vld [vmem:[%s1 + $0x2e8] sm:$0xff]
      %v529 = vld [vmem:[%s1 + $0x2f0] sm:$0xff]
      %v530 = vld [vmem:[%s1 + $0x2f8] sm:$0xff]
      %v531 = vld [vmem:[%s1 + $0x300] sm:$0xff]
      %v532 = vld [vmem:[%s1 + $0x308] sm:$0xff]
      %v533 = vld [vmem:[%s1 + $0x310] sm:$0xff]
      %v534 = vld [vmem:[%s1 + $0x318] sm:$0xff]
      %v535 = vld [vmem:[%s1 + $0x320] sm:$0xff]
      %v536 = vld [vmem:[%s1 + $0x328] sm:$0xff]
      %v537 = vld [vmem:[%s1 + $0x330] sm:$0xff]
      %v538 = vld [vmem:[%s1 + $0x338] sm:$0xff]
      %v539 = vld [vmem:[%s1 + $0x340] sm:$0xff]
      %v540 = vld [vmem:[%s1 + $0x348] sm:$0xff]
      %v541 = vld [vmem:[%s1 + $0x350] sm:$0xff]
      %v542 = vld [vmem:[%s1 + $0x358] sm:$0xff]
      %v543 = vld [vmem:[%s1 + $0x360] sm:$0xff]
      %v544 = vld [vmem:[%s1 + $0x368] sm:$0xff]
      %v545 = vld [vmem:[%s1 + $0x370] sm:$0xff]
      %v546 = vld [vmem:[%s1 + $0x378] sm:$0xff]
      %v547 = vld [vmem:[%s1 + $0x380] sm:$0xff]
      %v548 = vld [vmem:[%s1 + $0x388] sm:$0xff]
      %v549 = vld [vmem:[%s1 + $0x390] sm:$0xff]
      %v550 = vld [vmem:[%s1 + $0x398] sm:$0xff]
      %v551 = vld [vmem:[%s1 + $0x3a0] sm:$0xff]
      %v552 = vld [vmem:[%s1 + $0x3a8] sm:$0xff]
      %v553 = vld [vmem:[%s1 + $0x3b0] sm:$0xff]
      %v554 = vld [vmem:[%s1 + $0x3b8] sm:$0xff]
      %v555 = vld [vmem:[%s1 + $0x3c0] sm:$0xff]
      %v556 = vld [vmem:[%s1 + $0x3c8] sm:$0xff]
      %v557 = vld [vmem:[%s1 + $0x3d0] sm:$0xff]
      %v558 = vld [vmem:[%s1 + $0x3d8] sm:$0xff]
      %v559 = vld [vmem:[%s1 + $0x3e0] sm:$0xff]
      %v560 = vld [vmem:[%s1 + $0x3e8] sm:$0xff]
      %v561 = vld [vmem:[%s1 + $0x3f0] sm:$0xff]
      %v562 = vld [vmem:[%s1 + $0x3f8] sm:$0xff]
      %v563 = vld [vmem:[%s1 + $0x400] sm:$0xff]
      %v564 = vld [vmem:[%s1 + $0x408] sm:$0xff]
      %v565 = vld [vmem:[%s1 + $0x410] sm:$0xff]
      %v566 = vld [vmem:[%s1 + $0x418] sm:$0xff]
      %v567 = vld [vmem:[%s1 + $0x420] sm:$0xff]
      %v568 = vld [vmem:[%s1 + $0x428] sm:$0xff]
      %v569 = vld [vmem:[%s1 + $0x430] sm:$0xff]
      %v570 = vld [vmem:[%s1 + $0x438] sm:$0xff]
      %v571 = vld [vmem:[%s1 + $0x440] sm:$0xff]
      %v572 = vld [vmem:[%s1 + $0x448] sm:$0xff]
      %v573 = vld [vmem:[%s1 + $0x450] sm:$0xff]
      %v574 = vld [vmem:[%s1 + $0x458] sm:$0xff]
      %v575 = vld [vmem:[%s1 + $0x460] sm:$0xff]
      %v576 = vld [vmem:[%s1 + $0x468] sm:$0xff]
      %v577 = vld [vmem:[%s1 + $0x470] sm:$0xff]
      %v578 = vld [vmem:[%s1 + $0x478] sm:$0xff]
      %v579 = vld [vmem:[%s1 + $0x480] sm:$0xff]
      %v580 = vld [vmem:[%s1 + $0x488] sm:$0xff]
      %v581 = vld [vmem:[%s1 + $0x490] sm:$0xff]
      %v582 = vld [vmem:[%s1 + $0x498] sm:$0xff]
      %v583 = vld [vmem:[%s1 + $0x4a0] sm:$0xff]
      %v584 = vld [vmem:[%s1 + $0x4a8] sm:$0xff]
      %v585 = vld [vmem:[%s1 + $0x4b0] sm:$0xff]
      %v586 = vld [vmem:[%s1 + $0x4b8] sm:$0xff]
      %v587 = vld [vmem:[%s1 + $0x4c0] sm:$0xff]
      %v588 = vld [vmem:[%s1 + $0x4c8] sm:$0xff]
      %v589 = vld [vmem:[%s1 + $0x4d0] sm:$0xff]
      %v590 = vld [vmem:[%s1 + $0x4d8] sm:$0xff]
      %v591 = vld [vmem:[%s1 + $0x4e0] sm:$0xff]
      %v592 = vld [vmem:[%s1 + $0x4e8] sm:$0xff]
      %v593 = vld [vmem:[%s1 + $0x4f0] sm:$0xff]
      %v594 = vld [vmem:[%s1 + $0x4f8] sm:$0xff]
      %v595 = vld [vmem:[%s1 + $0x500] sm:$0xff]
      %v596 = vld [vmem:[%s1 + $0x508] sm:$0xff]
      %v597 = vld [vmem:[%s1 + $0x510] sm:$0xff]
      %v598 = vld [vmem:[%s1 + $0x518] sm:$0xff]
      %v599 = vld [vmem:[%s1 + $0x520] sm:$0xff]
      %v600 = vld [vmem:[%s1 + $0x528] sm:$0xff]
      %v601 = vld [vmem:[%s1 + $0x530] sm:$0xff]
      %v602 = vld [vmem:[%s1 + $0x538] sm:$0xff]
      %v603 = vld [vmem:[%s1 + $0x540] sm:$0xff]
      %v604 = vld [vmem:[%s1 + $0x548] sm:$0xff]
      %v605 = vld [vmem:[%s1 + $0x550] sm:$0xff]
      %v606 = vld [vmem:[%s1 + $0x558] sm:$0xff]
      %v607 = vld [vmem:[%s1 + $0x560] sm:$0xff]
      %v608 = vld [vmem:[%s1 + $0x568] sm:$0xff]
      %v609 = vld [vmem:[%s1 + $0x570] sm:$0xff]
      %v610 = vld [vmem:[%s1 + $0x578] sm:$0xff]
      %v611 = vld [vmem:[%s1 + $0x580] sm:$0xff]
      %v612 = vld [vmem:[%s1 + $0x588] sm:$0xff]
      %v613 = vld [vmem:[%s1 + $0x590] sm:$0xff]
      %v614 = vld [vmem:[%s1 + $0x598] sm:$0xff]
      %v615 = vld [vmem:[%s1 + $0x5a0] sm:$0xff]
      %v616 = vld [vmem:[%s1 + $0x5a8] sm:$0xff]
      %v617 = vld [vmem:[%s1 + $0x5b0] sm:$0xff]
      %v618 = vld [vmem:[%s1 + $0x5b8] sm:$0xff]
      %v619 = vld [vmem:[%s1 + $0x5c0] sm:$0xff]
      %v620 = vld [vmem:[%s1 + $0x5c8] sm:$0xff]
      %v621 = vld [vmem:[%s1 + $0x5d0] sm:$0xff]
      %v622 = vld [vmem:[%s1 + $0x5d8] sm:$0xff]
      %v623 = vld [vmem:[%s1 + $0x5e0] sm:$0xff]
      %v624 = vld [vmem:[%s1 + $0x5e8] sm:$0xff]
      %v625 = vld [vmem:[%s1 + $0x5f0] sm:$0xff]
      %v626 = vld [vmem:[%s1 + $0x5f8] sm:$0xff]
      %v627 = vld [vmem:[%s1 + $0x600] sm:$0xff]
      %v628 = vld [vmem:[%s1 + $0x608] sm:$0xff]
      %v629 = vld [vmem:[%s1 + $0x610] sm:$0xff]
      %v630 = vld [vmem:[%s1 + $0x618] sm:$0xff]
      %v631 = vld [vmem:[%s1 + $0x620] sm:$0xff]
      %v632 = vld [vmem:[%s1 + $0x628] sm:$0xff]
      %v633 = vld [vmem:[%s1 + $0x630] sm:$0xff]
      %v634 = vld [vmem:[%s1 + $0x638] sm:$0xff]
      %v635 = vld [vmem:[%s1 + $0x640] sm:$0xff]
      %v636 = vld [vmem:[%s1 + $0x648] sm:$0xff]
      %v637 = vld [vmem:[%s1 + $0x650] sm:$0xff]
      %v638 = vld [vmem:[%s1 + $0x658] sm:$0xff]
      %v639 = vld [vmem:[%s1 + $0x660] sm:$0xff]
      %v640 = vld [vmem:[%s1 + $0x668] sm:$0xff]
      %v641 = vld [vmem:[%s1 + $0x670] sm:$0xff]
      %v642 = vld [vmem:[%s1 + $0x678] sm:$0xff]
      %v643 = vld [vmem:[%s1 + $0x680] sm:$0xff]
      %v644 = vld [vmem:[%s1 + $0x688] sm:$0xff]
      %v645 = vld [vmem:[%s1 + $0x690] sm:$0xff]
      %v646 = vld [vmem:[%s1 + $0x698] sm:$0xff]
      %v647 = vld [vmem:[%s1 + $0x6a0] sm:$0xff]
      %v648 = vld [vmem:[%s1 + $0x6a8] sm:$0xff]
      %v649 = vld [vmem:[%s1 + $0x6b0] sm:$0xff]
      %v650 = vld [vmem:[%s1 + $0x6b8] sm:$0xff]
      %v651 = vld [vmem:[%s1 + $0x6c0] sm:$0xff]
      %v652 = vld [vmem:[%s1 + $0x6c8] sm:$0xff]
      %v653 = vld [vmem:[%s1 + $0x6d0] sm:$0xff]
      %v654 = vld [vmem:[%s1 + $0x6d8] sm:$0xff]
      %v655 = vld [vmem:[%s1 + $0x6e0] sm:$0xff]
      %v656 = vld [vmem:[%s1 + $0x6e8] sm:$0xff]
      %v657 = vld [vmem:[%s1 + $0x6f0] sm:$0xff]
      %v658 = vld [vmem:[%s1 + $0x6f8] sm:$0xff]
      %v659 = vld [vmem:[%s1 + $0x700] sm:$0xff]
      %v660 = vld [vmem:[%s1 + $0x708] sm:$0xff]
      %v661 = vld [vmem:[%s1 + $0x710] sm:$0xff]
      %v662 = vld [vmem:[%s1 + $0x718] sm:$0xff]
      %v663 = vld [vmem:[%s1 + $0x720] sm:$0xff]
      %v664 = vld [vmem:[%s1 + $0x728] sm:$0xff]
      %v665 = vld [vmem:[%s1 + $0x730] sm:$0xff]
      %v666 = vld [vmem:[%s1 + $0x738] sm:$0xff]
      %v667 = vld [vmem:[%s1 + $0x740] sm:$0xff]
      %v668 = vld [vmem:[%s1 + $0x748] sm:$0xff]
      %v669 = vld [vmem:[%s1 + $0x750] sm:$0xff]
      %v670 = vld [vmem:[%s1 + $0x758] sm:$0xff]
      %v671 = vld [vmem:[%s1 + $0x760] sm:$0xff]
      %v672 = vld [vmem:[%s1 + $0x768] sm:$0xff]
      %v673 = vld [vmem:[%s1 + $0x770] sm:$0xff]
      %v674 = vld [vmem:[%s1 + $0x778] sm:$0xff]
      %v675 = vld [vmem:[%s1 + $0x780] sm:$0xff]
      %v676 = vld [vmem:[%s1 + $0x788] sm:$0xff]
      %v677 = vld [vmem:[%s1 + $0x790] sm:$0xff]
      %v678 = vld [vmem:[%s1 + $0x798] sm:$0xff]
      %v679 = vld [vmem:[%s1 + $0x7a0] sm:$0xff]
      %v680 = vld [vmem:[%s1 + $0x7a8] sm:$0xff]
      %v681 = vld [vmem:[%s1 + $0x7b0] sm:$0xff]
      %v682 = vld [vmem:[%s1 + $0x7b8] sm:$0xff]
      %v683 = vld [vmem:[%s1 + $0x7c0] sm:$0xff]
      %v684 = vld [vmem:[%s1 + $0x7c8] sm:$0xff]
      %v685 = vld [vmem:[%s1 + $0x7d0] sm:$0xff]
      %v686 = vld [vmem:[%s1 + $0x7d8] sm:$0xff]
      %v687 = vld [vmem:[%s1 + $0x7e0] sm:$0xff]
      %v688 = vld [vmem:[%s1 + $0x7e8] sm:$0xff]
      %v689 = vld [vmem:[%s1 + $0x7f0] sm:$0xff]
      %v690 = vld [vmem:[%s1 + $0x7f8] sm:$0xff]
      %v691 = vld [vmem:[%s2] sm:$0x3]
      %v693 = vlaneseq
      %v694 = vshrl.u32 %v693, 7
      %v695 = vsub.s32 0, %v694
      %v696 = vrot.slane %v691, %v695
      %v697 = vlaneseq
      %v698 = vshrl.u32 %v697, 7
      %v699 = vsub.s32 1, %v698
      %v700 = vrot.slane %v691, %v699
      %703 = vmatprep.subr.mxu0 %v466
      %704 = vmatpush1.msra.mxu0 %v465
      %705 = vmatprep.subr.mxu0 %v464
      %706 = vmatpush1.msra.mxu0 %v463
      %707 = vmatprep.subr.mxu0 %v462
      %708 = vmatpush1.msra.mxu0 %v461
      %709 = vmatprep.subr.mxu0 %v460
      %710 = vmatpush1.msra.mxu0 %v459
      %711 = vmatprep.subr.mxu0 %v458
      %712 = vmatpush1.msra.mxu0 %v457
      %713 = vmatprep.subr.mxu0 %v456
      %714 = vmatpush1.msra.mxu0 %v455
      %715 = vmatprep.subr.mxu0 %v454
      %716 = vmatpush1.msra.mxu0 %v453
      %717 = vmatprep.subr.mxu0 %v452
      %718 = vmatpush1.msra.mxu0 %v451
      %719 = vmatprep.subr.mxu0 %v450
      %720 = vmatpush1.msra.mxu0 %v449
      %721 = vmatprep.subr.mxu0 %v448
      %722 = vmatpush1.msra.mxu0 %v447
      %723 = vmatprep.subr.mxu0 %v446
      %724 = vmatpush1.msra.mxu0 %v445
      %725 = vmatprep.subr.mxu0 %v444
      %726 = vmatpush1.msra.mxu0 %v443
      %727 = vmatprep.subr.mxu0 %v442
      %728 = vmatpush1.msra.mxu0 %v441
      %729 = vmatprep.subr.mxu0 %v440
      %730 = vmatpush1.msra.mxu0 %v439
      %731 = vmatprep.subr.mxu0 %v438
      %732 = vmatpush1.msra.mxu0 %v437
      %733 = vmatprep.subr.mxu0 %v436
      %734 = vmatpush1.msra.mxu0 %v435
      %735 = vmatprep.subr.mxu0 %v498
      %736 = vmatpush2.msra.mxu0 %v497
      %737 = vmatprep.subr.mxu0 %v496
      %738 = vmatpush2.msra.mxu0 %v495
      %739 = vmatprep.subr.mxu0 %v494
      %740 = vmatpush2.msra.mxu0 %v493
      %741 = vmatprep.subr.mxu0 %v492
      %742 = vmatpush2.msra.mxu0 %v491
      %743 = vmatprep.subr.mxu0 %v490
      %744 = vmatpush2.msra.mxu0 %v489
      %745 = vmatprep.subr.mxu0 %v488
      %746 = vmatpush2.msra.mxu0 %v487
      %747 = vmatprep.subr.mxu0 %v486
      %748 = vmatpush2.msra.mxu0 %v485
      %749 = vmatprep.subr.mxu0 %v484
      %750 = vmatpush2.msra.mxu0 %v483
      %751 = vmatprep.subr.mxu0 %v482
      %752 = vmatpush2.msra.mxu0 %v481
      %753 = vmatprep.subr.mxu0 %v480
      %754 = vmatpush2.msra.mxu0 %v479
      %755 = vmatprep.subr.mxu0 %v478
      %756 = vmatpush2.msra.mxu0 %v477
      %757 = vmatprep.subr.mxu0 %v476
      %758 = vmatpush2.msra.mxu0 %v475
      %759 = vmatprep.subr.mxu0 %v474
      %760 = vmatpush2.msra.mxu0 %v473
      %761 = vmatprep.subr.mxu0 %v472
      %762 = vmatpush2.msra.mxu0 %v471
      %763 = vmatprep.subr.mxu0 %v470
      %764 = vmatpush2.msra.mxu0 %v469
      %765 = vmatprep.subr.mxu0 %v468
      %766 = vmatpush2.msra.mxu0 %v467
      %767 = vmatprep.mubr.f32.mxu0 %v180
      %768 = vmatmul.mubr.f32.gmra.mxu0 %v179
      %v769 = vpop.f32.mrf.mxu0
      %v770 = vadd.f32 %v696, %v769
      %v771 = vpop.f32.mrf.mxu0
      %v772 = vadd.f32 %v700, %v771
      %773 = vmatprep.mubr.f32.mxu0 %v188
      %774 = vmatmul.mubr.f32.gmra.mxu0 %v187
      %v775 = vpop.f32.mrf.mxu0
      %v776 = vadd.f32 %v696, %v775
      %v777 = vpop.f32.mrf.mxu0
      %v778 = vadd.f32 %v700, %v777
      %779 = vmatprep.mubr.f32.mxu0 %v196
      %780 = vmatmul.mubr.f32.gmra.mxu0 %v195
      %v781 = vpop.f32.mrf.mxu0
      %v782 = vadd.f32 %v696, %v781
      %v783 = vpop.f32.mrf.mxu0
      %v784 = vadd.f32 %v700, %v783
      %785 = vmatprep.mubr.f32.mxu0 %v204
      %786 = vmatmul.mubr.f32.gmra.mxu0 %v203
      %v787 = vpop.f32.mrf.mxu0
      %v788 = vadd.f32 %v696, %v787
      %v789 = vpop.f32.mrf.mxu0
      %v790 = vadd.f32 %v700, %v789
      %791 = vmatprep.mubr.f32.mxu0 %v212
      %792 = vmatmul.mubr.f32.gmra.mxu0 %v211
      %v793 = vpop.f32.mrf.mxu0
      %v794 = vadd.f32 %v696, %v793
      %v795 = vpop.f32.mrf.mxu0
      %v796 = vadd.f32 %v700, %v795
      %797 = vmatprep.mubr.f32.mxu0 %v220
      %798 = vmatmul.mubr.f32.gmra.mxu0 %v219
      %v799 = vpop.f32.mrf.mxu0
      %v800 = vadd.f32 %v696, %v799
      %v801 = vpop.f32.mrf.mxu0
      %v802 = vadd.f32 %v700, %v801
      %803 = vmatprep.mubr.f32.mxu0 %v228
      %804 = vmatmul.mubr.f32.gmra.mxu0 %v227
      %v805 = vpop.f32.mrf.mxu0
      %v806 = vadd.f32 %v696, %v805
      %v807 = vpop.f32.mrf.mxu0
      %v808 = vadd.f32 %v700, %v807
      %809 = vmatprep.mubr.f32.mxu0 %v236
      %810 = vmatmul.mubr.f32.gmra.mxu0 %v235
      %v811 = vpop.f32.mrf.mxu0
      %v812 = vadd.f32 %v696, %v811
      %v813 = vpop.f32.mrf.mxu0
      %v814 = vadd.f32 %v700, %v813
      %815 = vmatprep.mubr.f32.mxu0 %v244
      %816 = vmatmul.mubr.f32.gmra.mxu0 %v243
      %v817 = vpop.f32.mrf.mxu0
      %v818 = vadd.f32 %v696, %v817
      %v819 = vpop.f32.mrf.mxu0
      %v820 = vadd.f32 %v700, %v819
      %821 = vmatprep.mubr.f32.mxu0 %v252
      %822 = vmatmul.mubr.f32.gmra.mxu0 %v251
      %v823 = vpop.f32.mrf.mxu0
      %v824 = vadd.f32 %v696, %v823
      %v825 = vpop.f32.mrf.mxu0
      %v826 = vadd.f32 %v700, %v825
      %827 = vmatprep.mubr.f32.mxu0 %v260
      %828 = vmatmul.mubr.f32.gmra.mxu0 %v259
      %v829 = vpop.f32.mrf.mxu0
      %v830 = vadd.f32 %v696, %v829
      %v831 = vpop.f32.mrf.mxu0
      %v832 = vadd.f32 %v700, %v831
      %833 = vmatprep.mubr.f32.mxu0 %v268
      %834 = vmatmul.mubr.f32.gmra.mxu0 %v267
      %v835 = vpop.f32.mrf.mxu0
      %v836 = vadd.f32 %v696, %v835
      %v837 = vpop.f32.mrf.mxu0
      %v838 = vadd.f32 %v700, %v837
      %839 = vmatprep.mubr.f32.mxu0 %v276
      %840 = vmatmul.mubr.f32.gmra.mxu0 %v275
      %v841 = vpop.f32.mrf.mxu0
      %v842 = vadd.f32 %v696, %v841
      %v843 = vpop.f32.mrf.mxu0
      %v844 = vadd.f32 %v700, %v843
      %845 = vmatprep.mubr.f32.mxu0 %v284
      %846 = vmatmul.mubr.f32.gmra.mxu0 %v283
      %v847 = vpop.f32.mrf.mxu0
      %v848 = vadd.f32 %v696, %v847
      %v849 = vpop.f32.mrf.mxu0
      %v850 = vadd.f32 %v700, %v849
      %851 = vmatprep.mubr.f32.mxu0 %v292
      %852 = vmatmul.mubr.f32.gmra.mxu0 %v291
      %v853 = vpop.f32.mrf.mxu0
      %v854 = vadd.f32 %v696, %v853
      %v855 = vpop.f32.mrf.mxu0
      %v856 = vadd.f32 %v700, %v855
      %857 = vmatprep.mubr.f32.mxu0 %v300
      %858 = vmatmul.mubr.f32.gmra.mxu0 %v299
      %v859 = vpop.f32.mrf.mxu0
      %v860 = vadd.f32 %v696, %v859
      %v861 = vpop.f32.mrf.mxu0
      %v862 = vadd.f32 %v700, %v861
      %863 = vmatprep.mubr.f32.mxu0 %v308
      %864 = vmatmul.mubr.f32.gmra.mxu0 %v307
      %v865 = vpop.f32.mrf.mxu0
      %v866 = vadd.f32 %v696, %v865
      %v867 = vpop.f32.mrf.mxu0
      %v868 = vadd.f32 %v700, %v867
      %869 = vmatprep.mubr.f32.mxu0 %v316
      %870 = vmatmul.mubr.f32.gmra.mxu0 %v315
      %v871 = vpop.f32.mrf.mxu0
      %v872 = vadd.f32 %v696, %v871
      %v873 = vpop.f32.mrf.mxu0
      %v874 = vadd.f32 %v700, %v873
      %875 = vmatprep.mubr.f32.mxu0 %v324
      %876 = vmatmul.mubr.f32.gmra.mxu0 %v323
      %v877 = vpop.f32.mrf.mxu0
      %v878 = vadd.f32 %v696, %v877
      %v879 = vpop.f32.mrf.mxu0
      %v880 = vadd.f32 %v700, %v879
      %881 = vmatprep.mubr.f32.mxu0 %v332
      %882 = vmatmul.mubr.f32.gmra.mxu0 %v331
      %v883 = vpop.f32.mrf.mxu0
      %v884 = vadd.f32 %v696, %v883
      %v885 = vpop.f32.mrf.mxu0
      %v886 = vadd.f32 %v700, %v885
      %887 = vmatprep.mubr.f32.mxu0 %v340
      %888 = vmatmul.mubr.f32.gmra.mxu0 %v339
      %v889 = vpop.f32.mrf.mxu0
      %v890 = vadd.f32 %v696, %v889
      %v891 = vpop.f32.mrf.mxu0
      %v892 = vadd.f32 %v700, %v891
      %893 = vmatprep.mubr.f32.mxu0 %v348
      %894 = vmatmul.mubr.f32.gmra.mxu0 %v347
      %v895 = vpop.f32.mrf.mxu0
      %v896 = vadd.f32 %v696, %v895
      %v897 = vpop.f32.mrf.mxu0
      %v898 = vadd.f32 %v700, %v897
      %899 = vmatprep.mubr.f32.mxu0 %v356
      %900 = vmatmul.mubr.f32.gmra.mxu0 %v355
      %v901 = vpop.f32.mrf.mxu0
      %v902 = vadd.f32 %v696, %v901
      %v903 = vpop.f32.mrf.mxu0
      %v904 = vadd.f32 %v700, %v903
      %905 = vmatprep.mubr.f32.mxu0 %v364
      %906 = vmatmul.mubr.f32.gmra.mxu0 %v363
      %v907 = vpop.f32.mrf.mxu0
      %v908 = vadd.f32 %v696, %v907
      %v909 = vpop.f32.mrf.mxu0
      %v910 = vadd.f32 %v700, %v909
      %911 = vmatprep.mubr.f32.mxu0 %v372
      %912 = vmatmul.mubr.f32.gmra.mxu0 %v371
      %v913 = vpop.f32.mrf.mxu0
      %v914 = vadd.f32 %v696, %v913
      %v915 = vpop.f32.mrf.mxu0
      %v916 = vadd.f32 %v700, %v915
      %917 = vmatprep.mubr.f32.mxu0 %v380
      %918 = vmatmul.mubr.f32.gmra.mxu0 %v379
      %v919 = vpop.f32.mrf.mxu0
      %v920 = vadd.f32 %v696, %v919
      %v921 = vpop.f32.mrf.mxu0
      %v922 = vadd.f32 %v700, %v921
      %923 = vmatprep.mubr.f32.mxu0 %v388
      %924 = vmatmul.mubr.f32.gmra.mxu0 %v387
      %v925 = vpop.f32.mrf.mxu0
      %v926 = vadd.f32 %v696, %v925
      %v927 = vpop.f32.mrf.mxu0
      %v928 = vadd.f32 %v700, %v927
      %929 = vmatprep.mubr.f32.mxu0 %v396
      %930 = vmatmul.mubr.f32.gmra.mxu0 %v395
      %v931 = vpop.f32.mrf.mxu0
      %v932 = vadd.f32 %v696, %v931
      %v933 = vpop.f32.mrf.mxu0
      %v934 = vadd.f32 %v700, %v933
      %935 = vmatprep.mubr.f32.mxu0 %v404
      %936 = vmatmul.mubr.f32.gmra.mxu0 %v403
      %v937 = vpop.f32.mrf.mxu0
      %v938 = vadd.f32 %v696, %v937
      %v939 = vpop.f32.mrf.mxu0
      %v940 = vadd.f32 %v700, %v939
      %941 = vmatprep.mubr.f32.mxu0 %v412
      %942 = vmatmul.mubr.f32.gmra.mxu0 %v411
      %v943 = vpop.f32.mrf.mxu0
      %v944 = vadd.f32 %v696, %v943
      %v945 = vpop.f32.mrf.mxu0
      %v946 = vadd.f32 %v700, %v945
      %947 = vmatprep.mubr.f32.mxu0 %v420
      %948 = vmatmul.mubr.f32.gmra.mxu0 %v419
      %v949 = vpop.f32.mrf.mxu0
      %v950 = vadd.f32 %v696, %v949
      %v951 = vpop.f32.mrf.mxu0
      %v952 = vadd.f32 %v700, %v951
      %953 = vmatprep.mubr.f32.mxu0 %v428
      %954 = vmatmul.mubr.f32.gmra.mxu0 %v427
      %v955 = vpop.f32.mrf.mxu0
      %v956 = vadd.f32 %v696, %v955
      %v957 = vpop.f32.mrf.mxu0
      %v958 = vadd.f32 %v700, %v957
      %959 = vdwg.mxu0
      %960 = vmatprep.subr.mxu0 %v530
      %961 = vmatpush1.msra.mxu0 %v529
      %962 = vmatprep.subr.mxu0 %v528
      %963 = vmatpush1.msra.mxu0 %v527
      %964 = vmatprep.subr.mxu0 %v526
      %965 = vmatpush1.msra.mxu0 %v525
      %966 = vmatprep.subr.mxu0 %v524
      %967 = vmatpush1.msra.mxu0 %v523
      %968 = vmatprep.subr.mxu0 %v522
      %969 = vmatpush1.msra.mxu0 %v521
      %970 = vmatprep.subr.mxu0 %v520
      %971 = vmatpush1.msra.mxu0 %v519
      %972 = vmatprep.subr.mxu0 %v518
      %973 = vmatpush1.msra.mxu0 %v517
      %974 = vmatprep.subr.mxu0 %v516
      %975 = vmatpush1.msra.mxu0 %v515
      %976 = vmatprep.subr.mxu0 %v514
      %977 = vmatpush1.msra.mxu0 %v513
      %978 = vmatprep.subr.mxu0 %v512
      %979 = vmatpush1.msra.mxu0 %v511
      %980 = vmatprep.subr.mxu0 %v510
      %981 = vmatpush1.msra.mxu0 %v509
      %982 = vmatprep.subr.mxu0 %v508
      %983 = vmatpush1.msra.mxu0 %v507
      %984 = vmatprep.subr.mxu0 %v506
      %985 = vmatpush1.msra.mxu0 %v505
      %986 = vmatprep.subr.mxu0 %v504
      %987 = vmatpush1.msra.mxu0 %v503
      %988 = vmatprep.subr.mxu0 %v502
      %989 = vmatpush1.msra.mxu0 %v501
      %990 = vmatprep.subr.mxu0 %v500
      %991 = vmatpush1.msra.mxu0 %v499
      %992 = vmatprep.subr.mxu0 %v562
      %993 = vmatpush2.msra.mxu0 %v561
      %994 = vmatprep.subr.mxu0 %v560
      %995 = vmatpush2.msra.mxu0 %v559
      %996 = vmatprep.subr.mxu0 %v558
      %997 = vmatpush2.msra.mxu0 %v557
      %998 = vmatprep.subr.mxu0 %v556
      %999 = vmatpush2.msra.mxu0 %v555
      %1000 = vmatprep.subr.mxu0 %v554
      %1001 = vmatpush2.msra.mxu0 %v553
      %1002 = vmatprep.subr.mxu0 %v552
      %1003 = vmatpush2.msra.mxu0 %v551
      %1004 = vmatprep.subr.mxu0 %v550
      %1005 = vmatpush2.msra.mxu0 %v549
      %1006 = vmatprep.subr.mxu0 %v548
      %1007 = vmatpush2.msra.mxu0 %v547
      %1008 = vmatprep.subr.mxu0 %v546
      %1009 = vmatpush2.msra.mxu0 %v545
      %1010 = vmatprep.subr.mxu0 %v544
      %1011 = vmatpush2.msra.mxu0 %v543
      %1012 = vmatprep.subr.mxu0 %v542
      %1013 = vmatpush2.msra.mxu0 %v541
      %1014 = vmatprep.subr.mxu0 %v540
      %1015 = vmatpush2.msra.mxu0 %v539
      %1016 = vmatprep.subr.mxu0 %v538
      %1017 = vmatpush2.msra.mxu0 %v537
      %1018 = vmatprep.subr.mxu0 %v536
      %1019 = vmatpush2.msra.mxu0 %v535
      %1020 = vmatprep.subr.mxu0 %v534
      %1021 = vmatpush2.msra.mxu0 %v533
      %1022 = vmatprep.subr.mxu0 %v532
      %1023 = vmatpush2.msra.mxu0 %v531
      %1024 = vmatprep.mubr.f32.mxu0 %v182
      %1025 = vmatmul.mubr.f32.gmra.mxu0 %v181
      %v1026 = vpop.f32.mrf.mxu0
      %v1027 = vadd.f32 %v770, %v1026
      %v1028 = vpop.f32.mrf.mxu0
      %v1029 = vadd.f32 %v772, %v1028
      %1030 = vmatprep.mubr.f32.mxu0 %v190
      %1031 = vmatmul.mubr.f32.gmra.mxu0 %v189
      %v1032 = vpop.f32.mrf.mxu0
      %v1033 = vadd.f32 %v776, %v1032
      %v1034 = vpop.f32.mrf.mxu0
      %v1035 = vadd.f32 %v778, %v1034
      %1036 = vmatprep.mubr.f32.mxu0 %v198
      %1037 = vmatmul.mubr.f32.gmra.mxu0 %v197
      %v1038 = vpop.f32.mrf.mxu0
      %v1039 = vadd.f32 %v782, %v1038
      %v1040 = vpop.f32.mrf.mxu0
      %v1041 = vadd.f32 %v784, %v1040
      %1042 = vmatprep.mubr.f32.mxu0 %v206
      %1043 = vmatmul.mubr.f32.gmra.mxu0 %v205
      %v1044 = vpop.f32.mrf.mxu0
      %v1045 = vadd.f32 %v788, %v1044
      %v1046 = vpop.f32.mrf.mxu0
      %v1047 = vadd.f32 %v790, %v1046
      %1048 = vmatprep.mubr.f32.mxu0 %v214
      %1049 = vmatmul.mubr.f32.gmra.mxu0 %v213
      %v1050 = vpop.f32.mrf.mxu0
      %v1051 = vadd.f32 %v794, %v1050
      %v1052 = vpop.f32.mrf.mxu0
      %v1053 = vadd.f32 %v796, %v1052
      %1054 = vmatprep.mubr.f32.mxu0 %v222
      %1055 = vmatmul.mubr.f32.gmra.mxu0 %v221
      %v1056 = vpop.f32.mrf.mxu0
      %v1057 = vadd.f32 %v800, %v1056
      %v1058 = vpop.f32.mrf.mxu0
      %v1059 = vadd.f32 %v802, %v1058
      %1060 = vmatprep.mubr.f32.mxu0 %v230
      %1061 = vmatmul.mubr.f32.gmra.mxu0 %v229
      %v1062 = vpop.f32.mrf.mxu0
      %v1063 = vadd.f32 %v806, %v1062
      %v1064 = vpop.f32.mrf.mxu0
      %v1065 = vadd.f32 %v808, %v1064
      %1066 = vmatprep.mubr.f32.mxu0 %v238
      %1067 = vmatmul.mubr.f32.gmra.mxu0 %v237
      %v1068 = vpop.f32.mrf.mxu0
      %v1069 = vadd.f32 %v812, %v1068
      %v1070 = vpop.f32.mrf.mxu0
      %v1071 = vadd.f32 %v814, %v1070
      %1072 = vmatprep.mubr.f32.mxu0 %v246
      %1073 = vmatmul.mubr.f32.gmra.mxu0 %v245
      %v1074 = vpop.f32.mrf.mxu0
      %v1075 = vadd.f32 %v818, %v1074
      %v1076 = vpop.f32.mrf.mxu0
      %v1077 = vadd.f32 %v820, %v1076
      %1078 = vmatprep.mubr.f32.mxu0 %v254
      %1079 = vmatmul.mubr.f32.gmra.mxu0 %v253
      %v1080 = vpop.f32.mrf.mxu0
      %v1081 = vadd.f32 %v824, %v1080
      %v1082 = vpop.f32.mrf.mxu0
      %v1083 = vadd.f32 %v826, %v1082
      %1084 = vmatprep.mubr.f32.mxu0 %v262
      %1085 = vmatmul.mubr.f32.gmra.mxu0 %v261
      %v1086 = vpop.f32.mrf.mxu0
      %v1087 = vadd.f32 %v830, %v1086
      %v1088 = vpop.f32.mrf.mxu0
      %v1089 = vadd.f32 %v832, %v1088
      %1090 = vmatprep.mubr.f32.mxu0 %v270
      %1091 = vmatmul.mubr.f32.gmra.mxu0 %v269
      %v1092 = vpop.f32.mrf.mxu0
      %v1093 = vadd.f32 %v836, %v1092
      %v1094 = vpop.f32.mrf.mxu0
      %v1095 = vadd.f32 %v838, %v1094
      %1096 = vmatprep.mubr.f32.mxu0 %v278
      %1097 = vmatmul.mubr.f32.gmra.mxu0 %v277
      %v1098 = vpop.f32.mrf.mxu0
      %v1099 = vadd.f32 %v842, %v1098
      %v1100 = vpop.f32.mrf.mxu0
      %v1101 = vadd.f32 %v844, %v1100
      %1102 = vmatprep.mubr.f32.mxu0 %v286
      %1103 = vmatmul.mubr.f32.gmra.mxu0 %v285
      %v1104 = vpop.f32.mrf.mxu0
      %v1105 = vadd.f32 %v848, %v1104
      %v1106 = vpop.f32.mrf.mxu0
      %v1107 = vadd.f32 %v850, %v1106
      %1108 = vmatprep.mubr.f32.mxu0 %v294
      %1109 = vmatmul.mubr.f32.gmra.mxu0 %v293
      %v1110 = vpop.f32.mrf.mxu0
      %v1111 = vadd.f32 %v854, %v1110
      %v1112 = vpop.f32.mrf.mxu0
      %v1113 = vadd.f32 %v856, %v1112
      %1114 = vmatprep.mubr.f32.mxu0 %v302
      %1115 = vmatmul.mubr.f32.gmra.mxu0 %v301
      %v1116 = vpop.f32.mrf.mxu0
      %v1117 = vadd.f32 %v860, %v1116
      %v1118 = vpop.f32.mrf.mxu0
      %v1119 = vadd.f32 %v862, %v1118
      %1120 = vmatprep.mubr.f32.mxu0 %v310
      %1121 = vmatmul.mubr.f32.gmra.mxu0 %v309
      %v1122 = vpop.f32.mrf.mxu0
      %v1123 = vadd.f32 %v866, %v1122
      %v1124 = vpop.f32.mrf.mxu0
      %v1125 = vadd.f32 %v868, %v1124
      %1126 = vmatprep.mubr.f32.mxu0 %v318
      %1127 = vmatmul.mubr.f32.gmra.mxu0 %v317
      %v1128 = vpop.f32.mrf.mxu0
      %v1129 = vadd.f32 %v872, %v1128
      %v1130 = vpop.f32.mrf.mxu0
      %v1131 = vadd.f32 %v874, %v1130
      %1132 = vmatprep.mubr.f32.mxu0 %v326
      %1133 = vmatmul.mubr.f32.gmra.mxu0 %v325
      %v1134 = vpop.f32.mrf.mxu0
      %v1135 = vadd.f32 %v878, %v1134
      %v1136 = vpop.f32.mrf.mxu0
      %v1137 = vadd.f32 %v880, %v1136
      %1138 = vmatprep.mubr.f32.mxu0 %v334
      %1139 = vmatmul.mubr.f32.gmra.mxu0 %v333
      %v1140 = vpop.f32.mrf.mxu0
      %v1141 = vadd.f32 %v884, %v1140
      %v1142 = vpop.f32.mrf.mxu0
      %v1143 = vadd.f32 %v886, %v1142
      %1144 = vmatprep.mubr.f32.mxu0 %v342
      %1145 = vmatmul.mubr.f32.gmra.mxu0 %v341
      %v1146 = vpop.f32.mrf.mxu0
      %v1147 = vadd.f32 %v890, %v1146
      %v1148 = vpop.f32.mrf.mxu0
      %v1149 = vadd.f32 %v892, %v1148
      %1150 = vmatprep.mubr.f32.mxu0 %v350
      %1151 = vmatmul.mubr.f32.gmra.mxu0 %v349
      %v1152 = vpop.f32.mrf.mxu0
      %v1153 = vadd.f32 %v896, %v1152
      %v1154 = vpop.f32.mrf.mxu0
      %v1155 = vadd.f32 %v898, %v1154
      %1156 = vmatprep.mubr.f32.mxu0 %v358
      %1157 = vmatmul.mubr.f32.gmra.mxu0 %v357
      %v1158 = vpop.f32.mrf.mxu0
      %v1159 = vadd.f32 %v902, %v1158
      %v1160 = vpop.f32.mrf.mxu0
      %v1161 = vadd.f32 %v904, %v1160
      %1162 = vmatprep.mubr.f32.mxu0 %v366
      %1163 = vmatmul.mubr.f32.gmra.mxu0 %v365
      %v1164 = vpop.f32.mrf.mxu0
      %v1165 = vadd.f32 %v908, %v1164
      %v1166 = vpop.f32.mrf.mxu0
      %v1167 = vadd.f32 %v910, %v1166
      %1168 = vmatprep.mubr.f32.mxu0 %v374
      %1169 = vmatmul.mubr.f32.gmra.mxu0 %v373
      %v1170 = vpop.f32.mrf.mxu0
      %v1171 = vadd.f32 %v914, %v1170
      %v1172 = vpop.f32.mrf.mxu0
      %v1173 = vadd.f32 %v916, %v1172
      %1174 = vmatprep.mubr.f32.mxu0 %v382
      %1175 = vmatmul.mubr.f32.gmra.mxu0 %v381
      %v1176 = vpop.f32.mrf.mxu0
      %v1177 = vadd.f32 %v920, %v1176
      %v1178 = vpop.f32.mrf.mxu0
      %v1179 = vadd.f32 %v922, %v1178
      %1180 = vmatprep.mubr.f32.mxu0 %v390
      %1181 = vmatmul.mubr.f32.gmra.mxu0 %v389
      %v1182 = vpop.f32.mrf.mxu0
      %v1183 = vadd.f32 %v926, %v1182
      %v1184 = vpop.f32.mrf.mxu0
      %v1185 = vadd.f32 %v928, %v1184
      %1186 = vmatprep.mubr.f32.mxu0 %v398
      %1187 = vmatmul.mubr.f32.gmra.mxu0 %v397
      %v1188 = vpop.f32.mrf.mxu0
      %v1189 = vadd.f32 %v932, %v1188
      %v1190 = vpop.f32.mrf.mxu0
      %v1191 = vadd.f32 %v934, %v1190
      %1192 = vmatprep.mubr.f32.mxu0 %v406
      %1193 = vmatmul.mubr.f32.gmra.mxu0 %v405
      %v1194 = vpop.f32.mrf.mxu0
      %v1195 = vadd.f32 %v938, %v1194
      %v1196 = vpop.f32.mrf.mxu0
      %v1197 = vadd.f32 %v940, %v1196
      %1198 = vmatprep.mubr.f32.mxu0 %v414
      %1199 = vmatmul.mubr.f32.gmra.mxu0 %v413
      %v1200 = vpop.f32.mrf.mxu0
      %v1201 = vadd.f32 %v944, %v1200
      %v1202 = vpop.f32.mrf.mxu0
      %v1203 = vadd.f32 %v946, %v1202
      %1204 = vmatprep.mubr.f32.mxu0 %v422
      %1205 = vmatmul.mubr.f32.gmra.mxu0 %v421
      %v1206 = vpop.f32.mrf.mxu0
      %v1207 = vadd.f32 %v950, %v1206
      %v1208 = vpop.f32.mrf.mxu0
      %v1209 = vadd.f32 %v952, %v1208
      %1210 = vmatprep.mubr.f32.mxu0 %v430
      %1211 = vmatmul.mubr.f32.gmra.mxu0 %v429
      %v1212 = vpop.f32.mrf.mxu0
      %v1213 = vadd.f32 %v956, %v1212
      %v1214 = vpop.f32.mrf.mxu0
      %v1215 = vadd.f32 %v958, %v1214
      %1216 = vdwg.mxu0
      %1217 = vmatprep.subr.mxu0 %v594
      %1218 = vmatpush1.msra.mxu0 %v593
      %1219 = vmatprep.subr.mxu0 %v592
      %1220 = vmatpush1.msra.mxu0 %v591
      %1221 = vmatprep.subr.mxu0 %v590
      %1222 = vmatpush1.msra.mxu0 %v589
      %1223 = vmatprep.subr.mxu0 %v588
      %1224 = vmatpush1.msra.mxu0 %v587
      %1225 = vmatprep.subr.mxu0 %v586
      %1226 = vmatpush1.msra.mxu0 %v585
      %1227 = vmatprep.subr.mxu0 %v584
      %1228 = vmatpush1.msra.mxu0 %v583
      %1229 = vmatprep.subr.mxu0 %v582
      %1230 = vmatpush1.msra.mxu0 %v581
      %1231 = vmatprep.subr.mxu0 %v580
      %1232 = vmatpush1.msra.mxu0 %v579
      %1233 = vmatprep.subr.mxu0 %v578
      %1234 = vmatpush1.msra.mxu0 %v577
      %1235 = vmatprep.subr.mxu0 %v576
      %1236 = vmatpush1.msra.mxu0 %v575
      %1237 = vmatprep.subr.mxu0 %v574
      %1238 = vmatpush1.msra.mxu0 %v573
      %1239 = vmatprep.subr.mxu0 %v572
      %1240 = vmatpush1.msra.mxu0 %v571
      %1241 = vmatprep.subr.mxu0 %v570
      %1242 = vmatpush1.msra.mxu0 %v569
      %1243 = vmatprep.subr.mxu0 %v568
      %1244 = vmatpush1.msra.mxu0 %v567
      %1245 = vmatprep.subr.mxu0 %v566
      %1246 = vmatpush1.msra.mxu0 %v565
      %1247 = vmatprep.subr.mxu0 %v564
      %1248 = vmatpush1.msra.mxu0 %v563
      %1249 = vmatprep.subr.mxu0 %v626
      %1250 = vmatpush2.msra.mxu0 %v625
      %1251 = vmatprep.subr.mxu0 %v624
      %1252 = vmatpush2.msra.mxu0 %v623
      %1253 = vmatprep.subr.mxu0 %v622
      %1254 = vmatpush2.msra.mxu0 %v621
      %1255 = vmatprep.subr.mxu0 %v620
      %1256 = vmatpush2.msra.mxu0 %v619
      %1257 = vmatprep.subr.mxu0 %v618
      %1258 = vmatpush2.msra.mxu0 %v617
      %1259 = vmatprep.subr.mxu0 %v616
      %1260 = vmatpush2.msra.mxu0 %v615
      %1261 = vmatprep.subr.mxu0 %v614
      %1262 = vmatpush2.msra.mxu0 %v613
      %1263 = vmatprep.subr.mxu0 %v612
      %1264 = vmatpush2.msra.mxu0 %v611
      %1265 = vmatprep.subr.mxu0 %v610
      %1266 = vmatpush2.msra.mxu0 %v609
      %1267 = vmatprep.subr.mxu0 %v608
      %1268 = vmatpush2.msra.mxu0 %v607
      %1269 = vmatprep.subr.mxu0 %v606
      %1270 = vmatpush2.msra.mxu0 %v605
      %1271 = vmatprep.subr.mxu0 %v604
      %1272 = vmatpush2.msra.mxu0 %v603
      %1273 = vmatprep.subr.mxu0 %v602
      %1274 = vmatpush2.msra.mxu0 %v601
      %1275 = vmatprep.subr.mxu0 %v600
      %1276 = vmatpush2.msra.mxu0 %v599
      %1277 = vmatprep.subr.mxu0 %v598
      %1278 = vmatpush2.msra.mxu0 %v597
      %1279 = vmatprep.subr.mxu0 %v596
      %1280 = vmatpush2.msra.mxu0 %v595
      %1281 = vmatprep.mubr.f32.mxu0 %v184
      %1282 = vmatmul.mubr.f32.gmra.mxu0 %v183
      %v1283 = vpop.f32.mrf.mxu0
      %v1284 = vadd.f32 %v1027, %v1283
      %v1285 = vpop.f32.mrf.mxu0
      %v1286 = vadd.f32 %v1029, %v1285
      %1287 = vmatprep.mubr.f32.mxu0 %v192
      %1288 = vmatmul.mubr.f32.gmra.mxu0 %v191
      %v1289 = vpop.f32.mrf.mxu0
      %v1290 = vadd.f32 %v1033, %v1289
      %v1291 = vpop.f32.mrf.mxu0
      %v1292 = vadd.f32 %v1035, %v1291
      %1293 = vmatprep.mubr.f32.mxu0 %v200
      %1294 = vmatmul.mubr.f32.gmra.mxu0 %v199
      %v1295 = vpop.f32.mrf.mxu0
      %v1296 = vadd.f32 %v1039, %v1295
      %v1297 = vpop.f32.mrf.mxu0
      %v1298 = vadd.f32 %v1041, %v1297
      %1299 = vmatprep.mubr.f32.mxu0 %v208
      %1300 = vmatmul.mubr.f32.gmra.mxu0 %v207
      %v1301 = vpop.f32.mrf.mxu0
      %v1302 = vadd.f32 %v1045, %v1301
      %v1303 = vpop.f32.mrf.mxu0
      %v1304 = vadd.f32 %v1047, %v1303
      %1305 = vmatprep.mubr.f32.mxu0 %v216
      %1306 = vmatmul.mubr.f32.gmra.mxu0 %v215
      %v1307 = vpop.f32.mrf.mxu0
      %v1308 = vadd.f32 %v1051, %v1307
      %v1309 = vpop.f32.mrf.mxu0
      %v1310 = vadd.f32 %v1053, %v1309
      %1311 = vmatprep.mubr.f32.mxu0 %v224
      %1312 = vmatmul.mubr.f32.gmra.mxu0 %v223
      %v1313 = vpop.f32.mrf.mxu0
      %v1314 = vadd.f32 %v1057, %v1313
      %v1315 = vpop.f32.mrf.mxu0
      %v1316 = vadd.f32 %v1059, %v1315
      %1317 = vmatprep.mubr.f32.mxu0 %v232
      %1318 = vmatmul.mubr.f32.gmra.mxu0 %v231
      %v1319 = vpop.f32.mrf.mxu0
      %v1320 = vadd.f32 %v1063, %v1319
      %v1321 = vpop.f32.mrf.mxu0
      %v1322 = vadd.f32 %v1065, %v1321
      %1323 = vmatprep.mubr.f32.mxu0 %v240
      %1324 = vmatmul.mubr.f32.gmra.mxu0 %v239
      %v1325 = vpop.f32.mrf.mxu0
      %v1326 = vadd.f32 %v1069, %v1325
      %v1327 = vpop.f32.mrf.mxu0
      %v1328 = vadd.f32 %v1071, %v1327
      %1329 = vmatprep.mubr.f32.mxu0 %v248
      %1330 = vmatmul.mubr.f32.gmra.mxu0 %v247
      %v1331 = vpop.f32.mrf.mxu0
      %v1332 = vadd.f32 %v1075, %v1331
      %v1333 = vpop.f32.mrf.mxu0
      %v1334 = vadd.f32 %v1077, %v1333
      %1335 = vmatprep.mubr.f32.mxu0 %v256
      %1336 = vmatmul.mubr.f32.gmra.mxu0 %v255
      %v1337 = vpop.f32.mrf.mxu0
      %v1338 = vadd.f32 %v1081, %v1337
      %v1339 = vpop.f32.mrf.mxu0
      %v1340 = vadd.f32 %v1083, %v1339
      %1341 = vmatprep.mubr.f32.mxu0 %v264
      %1342 = vmatmul.mubr.f32.gmra.mxu0 %v263
      %v1343 = vpop.f32.mrf.mxu0
      %v1344 = vadd.f32 %v1087, %v1343
      %v1345 = vpop.f32.mrf.mxu0
      %v1346 = vadd.f32 %v1089, %v1345
      %1347 = vmatprep.mubr.f32.mxu0 %v272
      %1348 = vmatmul.mubr.f32.gmra.mxu0 %v271
      %v1349 = vpop.f32.mrf.mxu0
      %v1350 = vadd.f32 %v1093, %v1349
      %v1351 = vpop.f32.mrf.mxu0
      %v1352 = vadd.f32 %v1095, %v1351
      %1353 = vmatprep.mubr.f32.mxu0 %v280
      %1354 = vmatmul.mubr.f32.gmra.mxu0 %v279
      %v1355 = vpop.f32.mrf.mxu0
      %v1356 = vadd.f32 %v1099, %v1355
      %v1357 = vpop.f32.mrf.mxu0
      %v1358 = vadd.f32 %v1101, %v1357
      %1359 = vmatprep.mubr.f32.mxu0 %v288
      %1360 = vmatmul.mubr.f32.gmra.mxu0 %v287
      %v1361 = vpop.f32.mrf.mxu0
      %v1362 = vadd.f32 %v1105, %v1361
      %v1363 = vpop.f32.mrf.mxu0
      %v1364 = vadd.f32 %v1107, %v1363
      %1365 = vmatprep.mubr.f32.mxu0 %v296
      %1366 = vmatmul.mubr.f32.gmra.mxu0 %v295
      %v1367 = vpop.f32.mrf.mxu0
      %v1368 = vadd.f32 %v1111, %v1367
      %v1369 = vpop.f32.mrf.mxu0
      %v1370 = vadd.f32 %v1113, %v1369
      %1371 = vmatprep.mubr.f32.mxu0 %v304
      %1372 = vmatmul.mubr.f32.gmra.mxu0 %v303
      %v1373 = vpop.f32.mrf.mxu0
      %v1374 = vadd.f32 %v1117, %v1373
      %v1375 = vpop.f32.mrf.mxu0
      %v1376 = vadd.f32 %v1119, %v1375
      %1377 = vmatprep.mubr.f32.mxu0 %v312
      %1378 = vmatmul.mubr.f32.gmra.mxu0 %v311
      %v1379 = vpop.f32.mrf.mxu0
      %v1380 = vadd.f32 %v1123, %v1379
      %v1381 = vpop.f32.mrf.mxu0
      %v1382 = vadd.f32 %v1125, %v1381
      %1383 = vmatprep.mubr.f32.mxu0 %v320
      %1384 = vmatmul.mubr.f32.gmra.mxu0 %v319
      %v1385 = vpop.f32.mrf.mxu0
      %v1386 = vadd.f32 %v1129, %v1385
      %v1387 = vpop.f32.mrf.mxu0
      %v1388 = vadd.f32 %v1131, %v1387
      %1389 = vmatprep.mubr.f32.mxu0 %v328
      %1390 = vmatmul.mubr.f32.gmra.mxu0 %v327
      %v1391 = vpop.f32.mrf.mxu0
      %v1392 = vadd.f32 %v1135, %v1391
      %v1393 = vpop.f32.mrf.mxu0
      %v1394 = vadd.f32 %v1137, %v1393
      %1395 = vmatprep.mubr.f32.mxu0 %v336
      %1396 = vmatmul.mubr.f32.gmra.mxu0 %v335
      %v1397 = vpop.f32.mrf.mxu0
      %v1398 = vadd.f32 %v1141, %v1397
      %v1399 = vpop.f32.mrf.mxu0
      %v1400 = vadd.f32 %v1143, %v1399
      %1401 = vmatprep.mubr.f32.mxu0 %v344
      %1402 = vmatmul.mubr.f32.gmra.mxu0 %v343
      %v1403 = vpop.f32.mrf.mxu0
      %v1404 = vadd.f32 %v1147, %v1403
      %v1405 = vpop.f32.mrf.mxu0
      %v1406 = vadd.f32 %v1149, %v1405
      %1407 = vmatprep.mubr.f32.mxu0 %v352
      %1408 = vmatmul.mubr.f32.gmra.mxu0 %v351
      %v1409 = vpop.f32.mrf.mxu0
      %v1410 = vadd.f32 %v1153, %v1409
      %v1411 = vpop.f32.mrf.mxu0
      %v1412 = vadd.f32 %v1155, %v1411
      %1413 = vmatprep.mubr.f32.mxu0 %v360
      %1414 = vmatmul.mubr.f32.gmra.mxu0 %v359
      %v1415 = vpop.f32.mrf.mxu0
      %v1416 = vadd.f32 %v1159, %v1415
      %v1417 = vpop.f32.mrf.mxu0
      %v1418 = vadd.f32 %v1161, %v1417
      %1419 = vmatprep.mubr.f32.mxu0 %v368
      %1420 = vmatmul.mubr.f32.gmra.mxu0 %v367
      %v1421 = vpop.f32.mrf.mxu0
      %v1422 = vadd.f32 %v1165, %v1421
      %v1423 = vpop.f32.mrf.mxu0
      %v1424 = vadd.f32 %v1167, %v1423
      %1425 = vmatprep.mubr.f32.mxu0 %v376
      %1426 = vmatmul.mubr.f32.gmra.mxu0 %v375
      %v1427 = vpop.f32.mrf.mxu0
      %v1428 = vadd.f32 %v1171, %v1427
      %v1429 = vpop.f32.mrf.mxu0
      %v1430 = vadd.f32 %v1173, %v1429
      %1431 = vmatprep.mubr.f32.mxu0 %v384
      %1432 = vmatmul.mubr.f32.gmra.mxu0 %v383
      %v1433 = vpop.f32.mrf.mxu0
      %v1434 = vadd.f32 %v1177, %v1433
      %v1435 = vpop.f32.mrf.mxu0
      %v1436 = vadd.f32 %v1179, %v1435
      %1437 = vmatprep.mubr.f32.mxu0 %v392
      %1438 = vmatmul.mubr.f32.gmra.mxu0 %v391
      %v1439 = vpop.f32.mrf.mxu0
      %v1440 = vadd.f32 %v1183, %v1439
      %v1441 = vpop.f32.mrf.mxu0
      %v1442 = vadd.f32 %v1185, %v1441
      %1443 = vmatprep.mubr.f32.mxu0 %v400
      %1444 = vmatmul.mubr.f32.gmra.mxu0 %v399
      %v1445 = vpop.f32.mrf.mxu0
      %v1446 = vadd.f32 %v1189, %v1445
      %v1447 = vpop.f32.mrf.mxu0
      %v1448 = vadd.f32 %v1191, %v1447
      %1449 = vmatprep.mubr.f32.mxu0 %v408
      %1450 = vmatmul.mubr.f32.gmra.mxu0 %v407
      %v1451 = vpop.f32.mrf.mxu0
      %v1452 = vadd.f32 %v1195, %v1451
      %v1453 = vpop.f32.mrf.mxu0
      %v1454 = vadd.f32 %v1197, %v1453
      %1455 = vmatprep.mubr.f32.mxu0 %v416
      %1456 = vmatmul.mubr.f32.gmra.mxu0 %v415
      %v1457 = vpop.f32.mrf.mxu0
      %v1458 = vadd.f32 %v1201, %v1457
      %v1459 = vpop.f32.mrf.mxu0
      %v1460 = vadd.f32 %v1203, %v1459
      %1461 = vmatprep.mubr.f32.mxu0 %v424
      %1462 = vmatmul.mubr.f32.gmra.mxu0 %v423
      %v1463 = vpop.f32.mrf.mxu0
      %v1464 = vadd.f32 %v1207, %v1463
      %v1465 = vpop.f32.mrf.mxu0
      %v1466 = vadd.f32 %v1209, %v1465
      %1467 = vmatprep.mubr.f32.mxu0 %v432
      %1468 = vmatmul.mubr.f32.gmra.mxu0 %v431
      %v1469 = vpop.f32.mrf.mxu0
      %v1470 = vadd.f32 %v1213, %v1469
      %v1471 = vpop.f32.mrf.mxu0
      %v1472 = vadd.f32 %v1215, %v1471
      %1473 = vdwg.mxu0
      %1474 = vmatprep.subr.mxu0 %v658
      %1475 = vmatpush1.msra.mxu0 %v657
      %1476 = vmatprep.subr.mxu0 %v656
      %1477 = vmatpush1.msra.mxu0 %v655
      %1478 = vmatprep.subr.mxu0 %v654
      %1479 = vmatpush1.msra.mxu0 %v653
      %1480 = vmatprep.subr.mxu0 %v652
      %1481 = vmatpush1.msra.mxu0 %v651
      %1482 = vmatprep.subr.mxu0 %v650
      %1483 = vmatpush1.msra.mxu0 %v649
      %1484 = vmatprep.subr.mxu0 %v648
      %1485 = vmatpush1.msra.mxu0 %v647
      %1486 = vmatprep.subr.mxu0 %v646
      %1487 = vmatpush1.msra.mxu0 %v645
      %1488 = vmatprep.subr.mxu0 %v644
      %1489 = vmatpush1.msra.mxu0 %v643
      %1490 = vmatprep.subr.mxu0 %v642
      %1491 = vmatpush1.msra.mxu0 %v641
      %1492 = vmatprep.subr.mxu0 %v640
      %1493 = vmatpush1.msra.mxu0 %v639
      %1494 = vmatprep.subr.mxu0 %v638
      %1495 = vmatpush1.msra.mxu0 %v637
      %1496 = vmatprep.subr.mxu0 %v636
      %1497 = vmatpush1.msra.mxu0 %v635
      %1498 = vmatprep.subr.mxu0 %v634
      %1499 = vmatpush1.msra.mxu0 %v633
      %1500 = vmatprep.subr.mxu0 %v632
      %1501 = vmatpush1.msra.mxu0 %v631
      %1502 = vmatprep.subr.mxu0 %v630
      %1503 = vmatpush1.msra.mxu0 %v629
      %1504 = vmatprep.subr.mxu0 %v628
      %1505 = vmatpush1.msra.mxu0 %v627
      %1506 = vmatprep.subr.mxu0 %v690
      %1507 = vmatpush2.msra.mxu0 %v689
      %1508 = vmatprep.subr.mxu0 %v688
      %1509 = vmatpush2.msra.mxu0 %v687
      %1510 = vmatprep.subr.mxu0 %v686
      %1511 = vmatpush2.msra.mxu0 %v685
      %1512 = vmatprep.subr.mxu0 %v684
      %1513 = vmatpush2.msra.mxu0 %v683
      %1514 = vmatprep.subr.mxu0 %v682
      %1515 = vmatpush2.msra.mxu0 %v681
      %1516 = vmatprep.subr.mxu0 %v680
      %1517 = vmatpush2.msra.mxu0 %v679
      %1518 = vmatprep.subr.mxu0 %v678
      %1519 = vmatpush2.msra.mxu0 %v677
      %1520 = vmatprep.subr.mxu0 %v676
      %1521 = vmatpush2.msra.mxu0 %v675
      %1522 = vmatprep.subr.mxu0 %v674
      %1523 = vmatpush2.msra.mxu0 %v673
      %1524 = vmatprep.subr.mxu0 %v672
      %1525 = vmatpush2.msra.mxu0 %v671
      %1526 = vmatprep.subr.mxu0 %v670
      %1527 = vmatpush2.msra.mxu0 %v669
      %1528 = vmatprep.subr.mxu0 %v668
      %1529 = vmatpush2.msra.mxu0 %v667
      %1530 = vmatprep.subr.mxu0 %v666
      %1531 = vmatpush2.msra.mxu0 %v665
      %1532 = vmatprep.subr.mxu0 %v664
      %1533 = vmatpush2.msra.mxu0 %v663
      %1534 = vmatprep.subr.mxu0 %v662
      %1535 = vmatpush2.msra.mxu0 %v661
      %1536 = vmatprep.subr.mxu0 %v660
      %1537 = vmatpush2.msra.mxu0 %v659
      %1538 = vmatprep.mubr.f32.mxu0 %v186
      %1539 = vmatmul.mubr.f32.gmra.mxu0 %v185
      %v1540 = vpop.f32.mrf.mxu0
      %v1541 = vadd.f32 %v1284, %v1540
      %v1542 = vpop.f32.mrf.mxu0
      %v1543 = vadd.f32 %v1286, %v1542
      %1544 = vmatprep.mubr.f32.mxu0 %v194
      %1545 = vmatmul.mubr.f32.gmra.mxu0 %v193
      %v1546 = vpop.f32.mrf.mxu0
      %v1547 = vadd.f32 %v1290, %v1546
      %v1548 = vpop.f32.mrf.mxu0
      %v1549 = vadd.f32 %v1292, %v1548
      %1550 = vmatprep.mubr.f32.mxu0 %v202
      %1551 = vmatmul.mubr.f32.gmra.mxu0 %v201
      %v1552 = vpop.f32.mrf.mxu0
      %v1553 = vadd.f32 %v1296, %v1552
      %v1554 = vpop.f32.mrf.mxu0
      %v1555 = vadd.f32 %v1298, %v1554
      %1556 = vmatprep.mubr.f32.mxu0 %v210
      %1557 = vmatmul.mubr.f32.gmra.mxu0 %v209
      %v1558 = vpop.f32.mrf.mxu0
      %v1559 = vadd.f32 %v1302, %v1558
      %v1560 = vpop.f32.mrf.mxu0
      %v1561 = vadd.f32 %v1304, %v1560
      %1562 = vmatprep.mubr.f32.mxu0 %v218
      %1563 = vmatmul.mubr.f32.gmra.mxu0 %v217
      %v1564 = vpop.f32.mrf.mxu0
      %v1565 = vadd.f32 %v1308, %v1564
      %v1566 = vpop.f32.mrf.mxu0
      %v1567 = vadd.f32 %v1310, %v1566
      %1568 = vmatprep.mubr.f32.mxu0 %v226
      %1569 = vmatmul.mubr.f32.gmra.mxu0 %v225
      %v1570 = vpop.f32.mrf.mxu0
      %v1571 = vadd.f32 %v1314, %v1570
      %v1572 = vpop.f32.mrf.mxu0
      %v1573 = vadd.f32 %v1316, %v1572
      %1574 = vmatprep.mubr.f32.mxu0 %v234
      %1575 = vmatmul.mubr.f32.gmra.mxu0 %v233
      %v1576 = vpop.f32.mrf.mxu0
      %v1577 = vadd.f32 %v1320, %v1576
      %v1578 = vpop.f32.mrf.mxu0
      %v1579 = vadd.f32 %v1322, %v1578
      %1580 = vmatprep.mubr.f32.mxu0 %v242
      %1581 = vmatmul.mubr.f32.gmra.mxu0 %v241
      %v1582 = vpop.f32.mrf.mxu0
      %v1583 = vadd.f32 %v1326, %v1582
      %v1584 = vpop.f32.mrf.mxu0
      %v1585 = vadd.f32 %v1328, %v1584
      %1586 = vmatprep.mubr.f32.mxu0 %v250
      %1587 = vmatmul.mubr.f32.gmra.mxu0 %v249
      %v1588 = vpop.f32.mrf.mxu0
      %v1589 = vadd.f32 %v1332, %v1588
      %v1590 = vpop.f32.mrf.mxu0
      %v1591 = vadd.f32 %v1334, %v1590
      %1592 = vmatprep.mubr.f32.mxu0 %v258
      %1593 = vmatmul.mubr.f32.gmra.mxu0 %v257
      %v1594 = vpop.f32.mrf.mxu0
      %v1595 = vadd.f32 %v1338, %v1594
      %v1596 = vpop.f32.mrf.mxu0
      %v1597 = vadd.f32 %v1340, %v1596
      %1598 = vmatprep.mubr.f32.mxu0 %v266
      %1599 = vmatmul.mubr.f32.gmra.mxu0 %v265
      %v1600 = vpop.f32.mrf.mxu0
      %v1601 = vadd.f32 %v1344, %v1600
      %v1602 = vpop.f32.mrf.mxu0
      %v1603 = vadd.f32 %v1346, %v1602
      %1604 = vmatprep.mubr.f32.mxu0 %v274
      %1605 = vmatmul.mubr.f32.gmra.mxu0 %v273
      %v1606 = vpop.f32.mrf.mxu0
      %v1607 = vadd.f32 %v1350, %v1606
      %v1608 = vpop.f32.mrf.mxu0
      %v1609 = vadd.f32 %v1352, %v1608
      %1610 = vmatprep.mubr.f32.mxu0 %v282
      %1611 = vmatmul.mubr.f32.gmra.mxu0 %v281
      %v1612 = vpop.f32.mrf.mxu0
      %v1613 = vadd.f32 %v1356, %v1612
      %v1614 = vpop.f32.mrf.mxu0
      %v1615 = vadd.f32 %v1358, %v1614
      %1616 = vmatprep.mubr.f32.mxu0 %v290
      %1617 = vmatmul.mubr.f32.gmra.mxu0 %v289
      %v1618 = vpop.f32.mrf.mxu0
      %v1619 = vadd.f32 %v1362, %v1618
      %v1620 = vpop.f32.mrf.mxu0
      %v1621 = vadd.f32 %v1364, %v1620
      %1622 = vmatprep.mubr.f32.mxu0 %v298
      %1623 = vmatmul.mubr.f32.gmra.mxu0 %v297
      %v1624 = vpop.f32.mrf.mxu0
      %v1625 = vadd.f32 %v1368, %v1624
      %v1626 = vpop.f32.mrf.mxu0
      %v1627 = vadd.f32 %v1370, %v1626
      %1628 = vmatprep.mubr.f32.mxu0 %v306
      %1629 = vmatmul.mubr.f32.gmra.mxu0 %v305
      %v1630 = vpop.f32.mrf.mxu0
      %v1631 = vadd.f32 %v1374, %v1630
      %v1632 = vpop.f32.mrf.mxu0
      %v1633 = vadd.f32 %v1376, %v1632
      %1634 = vmatprep.mubr.f32.mxu0 %v314
      %1635 = vmatmul.mubr.f32.gmra.mxu0 %v313
      %v1636 = vpop.f32.mrf.mxu0
      %v1637 = vadd.f32 %v1380, %v1636
      %v1638 = vpop.f32.mrf.mxu0
      %v1639 = vadd.f32 %v1382, %v1638
      %1640 = vmatprep.mubr.f32.mxu0 %v322
      %1641 = vmatmul.mubr.f32.gmra.mxu0 %v321
      %v1642 = vpop.f32.mrf.mxu0
      %v1643 = vadd.f32 %v1386, %v1642
      %v1644 = vpop.f32.mrf.mxu0
      %v1645 = vadd.f32 %v1388, %v1644
      %1646 = vmatprep.mubr.f32.mxu0 %v330
      %1647 = vmatmul.mubr.f32.gmra.mxu0 %v329
      %v1648 = vpop.f32.mrf.mxu0
      %v1649 = vadd.f32 %v1392, %v1648
      %v1650 = vpop.f32.mrf.mxu0
      %v1651 = vadd.f32 %v1394, %v1650
      %1652 = vmatprep.mubr.f32.mxu0 %v338
      %1653 = vmatmul.mubr.f32.gmra.mxu0 %v337
      %v1654 = vpop.f32.mrf.mxu0
      %v1655 = vadd.f32 %v1398, %v1654
      %v1656 = vpop.f32.mrf.mxu0
      %v1657 = vadd.f32 %v1400, %v1656
      %1658 = vmatprep.mubr.f32.mxu0 %v346
      %1659 = vmatmul.mubr.f32.gmra.mxu0 %v345
      %v1660 = vpop.f32.mrf.mxu0
      %v1661 = vadd.f32 %v1404, %v1660
      %v1662 = vpop.f32.mrf.mxu0
      %v1663 = vadd.f32 %v1406, %v1662
      %1664 = vmatprep.mubr.f32.mxu0 %v354
      %1665 = vmatmul.mubr.f32.gmra.mxu0 %v353
      %v1666 = vpop.f32.mrf.mxu0
      %v1667 = vadd.f32 %v1410, %v1666
      %v1668 = vpop.f32.mrf.mxu0
      %v1669 = vadd.f32 %v1412, %v1668
      %1670 = vmatprep.mubr.f32.mxu0 %v362
      %1671 = vmatmul.mubr.f32.gmra.mxu0 %v361
      %v1672 = vpop.f32.mrf.mxu0
      %v1673 = vadd.f32 %v1416, %v1672
      %v1674 = vpop.f32.mrf.mxu0
      %v1675 = vadd.f32 %v1418, %v1674
      %1676 = vmatprep.mubr.f32.mxu0 %v370
      %1677 = vmatmul.mubr.f32.gmra.mxu0 %v369
      %v1678 = vpop.f32.mrf.mxu0
      %v1679 = vadd.f32 %v1422, %v1678
      %v1680 = vpop.f32.mrf.mxu0
      %v1681 = vadd.f32 %v1424, %v1680
      %1682 = vmatprep.mubr.f32.mxu0 %v378
      %1683 = vmatmul.mubr.f32.gmra.mxu0 %v377
      %v1684 = vpop.f32.mrf.mxu0
      %v1685 = vadd.f32 %v1428, %v1684
      %v1686 = vpop.f32.mrf.mxu0
      %v1687 = vadd.f32 %v1430, %v1686
      %1688 = vmatprep.mubr.f32.mxu0 %v386
      %1689 = vmatmul.mubr.f32.gmra.mxu0 %v385
      %v1690 = vpop.f32.mrf.mxu0
      %v1691 = vadd.f32 %v1434, %v1690
      %v1692 = vpop.f32.mrf.mxu0
      %v1693 = vadd.f32 %v1436, %v1692
      %1694 = vmatprep.mubr.f32.mxu0 %v394
      %1695 = vmatmul.mubr.f32.gmra.mxu0 %v393
      %v1696 = vpop.f32.mrf.mxu0
      %v1697 = vadd.f32 %v1440, %v1696
      %v1698 = vpop.f32.mrf.mxu0
      %v1699 = vadd.f32 %v1442, %v1698
      %1700 = vmatprep.mubr.f32.mxu0 %v402
      %1701 = vmatmul.mubr.f32.gmra.mxu0 %v401
      %v1702 = vpop.f32.mrf.mxu0
      %v1703 = vadd.f32 %v1446, %v1702
      %v1704 = vpop.f32.mrf.mxu0
      %v1705 = vadd.f32 %v1448, %v1704
      %1706 = vmatprep.mubr.f32.mxu0 %v410
      %1707 = vmatmul.mubr.f32.gmra.mxu0 %v409
      %v1708 = vpop.f32.mrf.mxu0
      %v1709 = vadd.f32 %v1452, %v1708
      %v1710 = vpop.f32.mrf.mxu0
      %v1711 = vadd.f32 %v1454, %v1710
      %1712 = vmatprep.mubr.f32.mxu0 %v418
      %1713 = vmatmul.mubr.f32.gmra.mxu0 %v417
      %v1714 = vpop.f32.mrf.mxu0
      %v1715 = vadd.f32 %v1458, %v1714
      %v1716 = vpop.f32.mrf.mxu0
      %v1717 = vadd.f32 %v1460, %v1716
      %1718 = vmatprep.mubr.f32.mxu0 %v426
      %1719 = vmatmul.mubr.f32.gmra.mxu0 %v425
      %v1720 = vpop.f32.mrf.mxu0
      %v1721 = vadd.f32 %v1464, %v1720
      %v1722 = vpop.f32.mrf.mxu0
      %v1723 = vadd.f32 %v1466, %v1722
      %1724 = vmatprep.mubr.f32.mxu0 %v434
      %1725 = vmatmul.mubr.f32.gmra.mxu0 %v433
      %v1726 = vpop.f32.mrf.mxu0
      %v1727 = vadd.f32 %v1470, %v1726
      %v1728 = vpop.f32.mrf.mxu0
      %v1729 = vadd.f32 %v1472, %v1728
      %1730 = vdwg.mxu0
      %v1731 = vmax.f32 %v1541, 0.0
      %v1732 = vmax.f32 %v1543, 0.0
      %v1733 = vmax.f32 %v1547, 0.0
      %v1734 = vmax.f32 %v1549, 0.0
      %v1735 = vmax.f32 %v1553, 0.0
      %v1736 = vmax.f32 %v1555, 0.0
      %v1737 = vmax.f32 %v1559, 0.0
      %v1738 = vmax.f32 %v1561, 0.0
      %v1739 = vmax.f32 %v1565, 0.0
      %v1740 = vmax.f32 %v1567, 0.0
      %v1741 = vmax.f32 %v1571, 0.0
      %v1742 = vmax.f32 %v1573, 0.0
      %v1743 = vmax.f32 %v1577, 0.0
      %v1744 = vmax.f32 %v1579, 0.0
      %v1745 = vmax.f32 %v1583, 0.0
      %v1746 = vmax.f32 %v1585, 0.0
      %v1747 = vmax.f32 %v1589, 0.0
      %v1748 = vmax.f32 %v1591, 0.0
      %v1749 = vmax.f32 %v1595, 0.0
      %v1750 = vmax.f32 %v1597, 0.0
      %v1751 = vmax.f32 %v1601, 0.0
      %v1752 = vmax.f32 %v1603, 0.0
      %v1753 = vmax.f32 %v1607, 0.0
      %v1754 = vmax.f32 %v1609, 0.0
      %v1755 = vmax.f32 %v1613, 0.0
      %v1756 = vmax.f32 %v1615, 0.0
      %v1757 = vmax.f32 %v1619, 0.0
      %v1758 = vmax.f32 %v1621, 0.0
      %v1759 = vmax.f32 %v1625, 0.0
      %v1760 = vmax.f32 %v1627, 0.0
      %v1761 = vmax.f32 %v1631, 0.0
      %v1762 = vmax.f32 %v1633, 0.0
      %v1763 = vmax.f32 %v1637, 0.0
      %v1764 = vmax.f32 %v1639, 0.0
      %v1765 = vmax.f32 %v1643, 0.0
      %v1766 = vmax.f32 %v1645, 0.0
      %v1767 = vmax.f32 %v1649, 0.0
      %v1768 = vmax.f32 %v1651, 0.0
      %v1769 = vmax.f32 %v1655, 0.0
      %v1770 = vmax.f32 %v1657, 0.0
      %v1771 = vmax.f32 %v1661, 0.0
      %v1772 = vmax.f32 %v1663, 0.0
      %v1773 = vmax.f32 %v1667, 0.0
      %v1774 = vmax.f32 %v1669, 0.0
      %v1775 = vmax.f32 %v1673, 0.0
      %v1776 = vmax.f32 %v1675, 0.0
      %v1777 = vmax.f32 %v1679, 0.0
      %v1778 = vmax.f32 %v1681, 0.0
      %v1779 = vmax.f32 %v1685, 0.0
      %v1780 = vmax.f32 %v1687, 0.0
      %v1781 = vmax.f32 %v1691, 0.0
      %v1782 = vmax.f32 %v1693, 0.0
      %v1783 = vmax.f32 %v1697, 0.0
      %v1784 = vmax.f32 %v1699, 0.0
      %v1785 = vmax.f32 %v1703, 0.0
      %v1786 = vmax.f32 %v1705, 0.0
      %v1787 = vmax.f32 %v1709, 0.0
      %v1788 = vmax.f32 %v1711, 0.0
      %v1789 = vmax.f32 %v1715, 0.0
      %v1790 = vmax.f32 %v1717, 0.0
      %v1791 = vmax.f32 %v1721, 0.0
      %v1792 = vmax.f32 %v1723, 0.0
      %v1793 = vmax.f32 %v1727, 0.0
      %v1794 = vmax.f32 %v1729, 0.0
      %1795 = vst [vmem:[%s177] sm:$0xff] %v1731
      %1796 = vst [vmem:[%s177 + $0x8] sm:$0xff] %v1732
      %1797 = vst [vmem:[%s177 + $0x10] sm:$0xff] %v1733
      %1798 = vst [vmem:[%s177 + $0x18] sm:$0xff] %v1734
      %1799 = vst [vmem:[%s177 + $0x20] sm:$0xff] %v1735
      %1800 = vst [vmem:[%s177 + $0x28] sm:$0xff] %v1736
      %1801 = vst [vmem:[%s177 + $0x30] sm:$0xff] %v1737
      %1802 = vst [vmem:[%s177 + $0x38] sm:$0xff] %v1738
      %1803 = vst [vmem:[%s177 + $0x40] sm:$0xff] %v1739
      %1804 = vst [vmem:[%s177 + $0x48] sm:$0xff] %v1740
      %1805 = vst [vmem:[%s177 + $0x50] sm:$0xff] %v1741
      %1806 = vst [vmem:[%s177 + $0x58] sm:$0xff] %v1742
      %1807 = vst [vmem:[%s177 + $0x60] sm:$0xff] %v1743
      %1808 = vst [vmem:[%s177 + $0x68] sm:$0xff] %v1744
      %1809 = vst [vmem:[%s177 + $0x70] sm:$0xff] %v1745
      %1810 = vst [vmem:[%s177 + $0x78] sm:$0xff] %v1746
      %1811 = vst [vmem:[%s177 + $0x80] sm:$0xff] %v1747
      %1812 = vst [vmem:[%s177 + $0x88] sm:$0xff] %v1748
      %1813 = vst [vmem:[%s177 + $0x90] sm:$0xff] %v1749
      %1814 = vst [vmem:[%s177 + $0x98] sm:$0xff] %v1750
      %1815 = vst [vmem:[%s177 + $0xa0] sm:$0xff] %v1751
      %1816 = vst [vmem:[%s177 + $0xa8] sm:$0xff] %v1752
      %1817 = vst [vmem:[%s177 + $0xb0] sm:$0xff] %v1753
      %1818 = vst [vmem:[%s177 + $0xb8] sm:$0xff] %v1754
      %1819 = vst [vmem:[%s177 + $0xc0] sm:$0xff] %v1755
      %1820 = vst [vmem:[%s177 + $0xc8] sm:$0xff] %v1756
      %1821 = vst [vmem:[%s177 + $0xd0] sm:$0xff] %v1757
      %1822 = vst [vmem:[%s177 + $0xd8] sm:$0xff] %v1758
      %1823 = vst [vmem:[%s177 + $0xe0] sm:$0xff] %v1759
      %1824 = vst [vmem:[%s177 + $0xe8] sm:$0xff] %v1760
      %1825 = vst [vmem:[%s177 + $0xf0] sm:$0xff] %v1761
      %1826 = vst [vmem:[%s177 + $0xf8] sm:$0xff] %v1762
      %1827 = vst [vmem:[%s177 + $0x100] sm:$0xff] %v1763
      %1828 = vst [vmem:[%s177 + $0x108] sm:$0xff] %v1764
      %1829 = vst [vmem:[%s177 + $0x110] sm:$0xff] %v1765
      %1830 = vst [vmem:[%s177 + $0x118] sm:$0xff] %v1766
      %1831 = vst [vmem:[%s177 + $0x120] sm:$0xff] %v1767
      %1832 = vst [vmem:[%s177 + $0x128] sm:$0xff] %v1768
      %1833 = vst [vmem:[%s177 + $0x130] sm:$0xff] %v1769
      %1834 = vst [vmem:[%s177 + $0x138] sm:$0xff] %v1770
      %1835 = vst [vmem:[%s177 + $0x140] sm:$0xff] %v1771
      %1836 = vst [vmem:[%s177 + $0x148] sm:$0xff] %v1772
      %1837 = vst [vmem:[%s177 + $0x150] sm:$0xff] %v1773
      %1838 = vst [vmem:[%s177 + $0x158] sm:$0xff] %v1774
      %1839 = vst [vmem:[%s177 + $0x160] sm:$0xff] %v1775
      %1840 = vst [vmem:[%s177 + $0x168] sm:$0xff] %v1776
      %1841 = vst [vmem:[%s177 + $0x170] sm:$0xff] %v1777
      %1842 = vst [vmem:[%s177 + $0x178] sm:$0xff] %v1778
      %1843 = vst [vmem:[%s177 + $0x180] sm:$0xff] %v1779
      %1844 = vst [vmem:[%s177 + $0x188] sm:$0xff] %v1780
      %1845 = vst [vmem:[%s177 + $0x190] sm:$0xff] %v1781
      %1846 = vst [vmem:[%s177 + $0x198] sm:$0xff] %v1782
      %1847 = vst [vmem:[%s177 + $0x1a0] sm:$0xff] %v1783
      %1848 = vst [vmem:[%s177 + $0x1a8] sm:$0xff] %v1784
      %1849 = vst [vmem:[%s177 + $0x1b0] sm:$0xff] %v1785
      %1850 = vst [vmem:[%s177 + $0x1b8] sm:$0xff] %v1786
      %1851 = vst [vmem:[%s177 + $0x1c0] sm:$0xff] %v1787
      %1852 = vst [vmem:[%s177 + $0x1c8] sm:$0xff] %v1788
      %1853 = vst [vmem:[%s177 + $0x1d0] sm:$0xff] %v1789
      %1854 = vst [vmem:[%s177 + $0x1d8] sm:$0xff] %v1790
      %1855 = vst [vmem:[%s177 + $0x1e0] sm:$0xff] %v1791
      %1856 = vst [vmem:[%s177 + $0x1e8] sm:$0xff] %v1792
      %1857 = vst [vmem:[%s177 + $0x1f0] sm:$0xff] %v1793
      %1858 = vst [vmem:[%s177 + $0x1f8] sm:$0xff] %v1794
      %s1859 = smul.u32 32, %s14
      %p1860 = scmp.lt.s32.totalorder %s1859, 95
      %s1861 = scalar_select %p1860, %s1859, 95
      %s1862 = smul.addr %s1861, 2
      %s1863 = smul.addr %s1862, 8
      %s1864 = scalar_lea.vmem %s3, %s1863
      // Predicated region
      $region33: #{auxiliary_convolutions.8} parent=31 // pred_check
        %p1865 = pneg %p100
      $region34: #{auxiliary_convolutions.8} parent=31 // pred_check_branch
        %1867 = sbr.rel (%p1865) target = $region36
      $region35: #{auxiliary_convolutions.8} parent=31 // pred_region
        %s1868 = smul.u32 32, %s14
      $region36: #{auxiliary_convolutions.8} parent=31 // pred_fallthru
        _
    $region32: #{auxiliary_convolutions.8} parent=5 // pred_fallthru
      _
    %p1869 = scmp.le.s32.totalorder 2, %s9
    // Predicated region
    $region37: #{auxiliary_convolutions.8} parent=5 // pred_check
      %p1870 = pneg %p1869
    $region38: #{auxiliary_convolutions.8} parent=5 // pred_check_branch
      %1872 = sbr.rel (%p1870) target = $region40
    $region39: #{auxiliary_convolutions.8} parent=5 // pred_region
      %s1873 = ssub.s32 %s9, 2
      // Predicated region
      $region41: #{auxiliary_convolutions.8} parent=39 // pred_check
        %p1874 = pneg %p106
      $region42: #{auxiliary_convolutions.8} parent=39 // pred_check_branch
        %1876 = sbr.rel (%p1874) target = $region44
      $region43: #{auxiliary_convolutions.8} parent=39 // pred_region
        %s1877 = smul.u32 32, %s15
        %p1878 = scmp.lt.s32.totalorder %s1877, 95
        %s1879 = scalar_select %p1878, %s1877, 95
        %s1880 = smul.addr %s1879, 2
        %s1881 = smul.addr %s1880, 8
        %s1882 = scalar_lea.vmem %s3, %s1881
      $region44: #{auxiliary_convolutions.8} parent=39 // pred_fallthru
        _
    $region40: #{auxiliary_convolutions.8} parent=5 // pred_fallthru
      _
  $region6: #{auxiliary_convolutions.8} parent=0 // loop_footer
    %s13 = sadd.s32 1, %s9
  $region7: #{auxiliary_convolutions.8} parent=0 // loop_footer_branch
    %8 = sbr.rel target = $region3
  $region8: #{auxiliary_convolutions.8} parent=0 // loop_exit
    _

// kernel: auxiliary_convolutions.10
$region0: #{auxiliary_convolutions.10}
  #allocation0 [shape = 'u32[]', space=smem, size = 0x4, offset = 0x4, fixed_abs, tag = 'smem constant byte address 0x4 - core index']
  #allocation1 [shape = 'u32[144,128]{1,0:T(1,128)}', space=vmem, size = 0x12000, scoped, tag = 'internal scratch']
  %s0 = inlined_call_operand.vmem [shape: f32[200,512], index: 0, kind: input, shape index: {}]
  %s1 = inlined_call_operand.vmem [shape: f32[512,128], index: 1, kind: input, shape index: {}]
  %s2 = inlined_call_operand.vmem [shape: f32[1,128], index: 2, kind: input, shape index: {}]
  %s3 = inlined_call_operand.vmem [shape: f32[200,128], index: 3, kind: output, shape index: {}]
  %s4 = sld [smem:[#allocation0]]
  $region22: #{auxiliary_convolutions.10} parent=0
    _
  %s6 = ssub.s32 1, %s4
  %s7 = scalar_select 0, %s6, %s4
  // Predicated region
  $region2: #{auxiliary_convolutions.10} parent=0 // pred_check
    _
  $region3: #{auxiliary_convolutions.10} parent=0 // pred_check_branch
    %9 = sbr.rel (0) target = $region5
  $region4: #{auxiliary_convolutions.10} parent=0 // pred_region
    _
  $region5: #{auxiliary_convolutions.10} parent=0 // pred_fallthru
    _
  // Predicated region
  $region6: #{auxiliary_convolutions.10} parent=0 // pred_check
    _
  $region7: #{auxiliary_convolutions.10} parent=0 // pred_check_branch
    %11 = sbr.rel (0) target = $region9
  $region8: #{auxiliary_convolutions.10} parent=0 // pred_region
    _
  $region9: #{auxiliary_convolutions.10} parent=0 // pred_fallthru
    _
  // Predicated region
  $region10: #{auxiliary_convolutions.10} parent=0 // pred_check
    _
  $region11: #{auxiliary_convolutions.10} parent=0 // pred_check_branch
    %13 = sbr.rel (0) target = $region13
  $region12: #{auxiliary_convolutions.10} parent=0 // pred_region
    _
  $region13: #{auxiliary_convolutions.10} parent=0 // pred_fallthru
    _
  %v14 = vld [vmem:[%s0] sm:$0xff]
  %v15 = vld [vmem:[%s0 + $0x8] sm:$0xff]
  %v16 = vld [vmem:[%s0 + $0x10] sm:$0xff]
  %v17 = vld [vmem:[%s0 + $0x18] sm:$0xff]
  %v18 = vld [vmem:[%s0 + $0x20] sm:$0xff]
  %v19 = vld [vmem:[%s0 + $0x28] sm:$0xff]
  %v20 = vld [vmem:[%s0 + $0x30] sm:$0xff]
  %v21 = vld [vmem:[%s0 + $0x38] sm:$0xff]
  %v22 = vld [vmem:[%s0 + $0x40] sm:$0xff]
  %v23 = vld [vmem:[%s0 + $0x48] sm:$0xff]
  %v24 = vld [vmem:[%s0 + $0x50] sm:$0xff]
  %v25 = vld [vmem:[%s0 + $0x58] sm:$0xff]
  %v26 = vld [vmem:[%s0 + $0x60] sm:$0xff]
  %v27 = vld [vmem:[%s0 + $0x68] sm:$0xff]
  %v28 = vld [vmem:[%s0 + $0x70] sm:$0xff]
  %v29 = vld [vmem:[%s0 + $0x78] sm:$0xff]
  %v30 = vld [vmem:[%s0 + $0x80] sm:$0xff]
  %v31 = vld [vmem:[%s0 + $0x88] sm:$0xff]
  %v32 = vld [vmem:[%s0 + $0x90] sm:$0xff]
  %v33 = vld [vmem:[%s0 + $0x98] sm:$0xff]
  %v34 = vld [vmem:[%s0 + $0xa0] sm:$0xff]
  %v35 = vld [vmem:[%s0 + $0xa8] sm:$0xff]
  %v36 = vld [vmem:[%s0 + $0xb0] sm:$0xff]
  %v37 = vld [vmem:[%s0 + $0xb8] sm:$0xff]
  %v38 = vld [vmem:[%s0 + $0xc0] sm:$0xff]
  %v39 = vld [vmem:[%s0 + $0xc8] sm:$0xff]
  %v40 = vld [vmem:[%s0 + $0xd0] sm:$0xff]
  %v41 = vld [vmem:[%s0 + $0xd8] sm:$0xff]
  %v42 = vld [vmem:[%s0 + $0xe0] sm:$0xff]
  %v43 = vld [vmem:[%s0 + $0xe8] sm:$0xff]
  %v44 = vld [vmem:[%s0 + $0xf0] sm:$0xff]
  %v45 = vld [vmem:[%s0 + $0xf8] sm:$0xff]
  %v46 = vld [vmem:[%s0 + $0x100] sm:$0xff]
  %v47 = vld [vmem:[%s0 + $0x108] sm:$0xff]
  %v48 = vld [vmem:[%s0 + $0x110] sm:$0xff]
  %v49 = vld [vmem:[%s0 + $0x118] sm:$0xff]
  %v50 = vld [vmem:[%s0 + $0x120] sm:$0xff]
  %v51 = vld [vmem:[%s0 + $0x128] sm:$0xff]
  %v52 = vld [vmem:[%s0 + $0x130] sm:$0xff]
  %v53 = vld [vmem:[%s0 + $0x138] sm:$0xff]
  %v54 = vld [vmem:[%s0 + $0x140] sm:$0xff]
  %v55 = vld [vmem:[%s0 + $0x148] sm:$0xff]
  %v56 = vld [vmem:[%s0 + $0x150] sm:$0xff]
  %v57 = vld [vmem:[%s0 + $0x158] sm:$0xff]
  %v58 = vld [vmem:[%s0 + $0x160] sm:$0xff]
  %v59 = vld [vmem:[%s0 + $0x168] sm:$0xff]
  %v60 = vld [vmem:[%s0 + $0x170] sm:$0xff]
  %v61 = vld [vmem:[%s0 + $0x178] sm:$0xff]
  %v62 = vld [vmem:[%s0 + $0x180] sm:$0xff]
  %v63 = vld [vmem:[%s0 + $0x188] sm:$0xff]
  %v64 = vld [vmem:[%s0 + $0x190] sm:$0xff]
  %v65 = vld [vmem:[%s0 + $0x198] sm:$0xff]
  %v66 = vld [vmem:[%s0 + $0x1a0] sm:$0xff]
  %v67 = vld [vmem:[%s0 + $0x1a8] sm:$0xff]
  %v68 = vld [vmem:[%s0 + $0x1b0] sm:$0xff]
  %v69 = vld [vmem:[%s0 + $0x1b8] sm:$0xff]
  %v70 = vld [vmem:[%s0 + $0x1c0] sm:$0xff]
  %v71 = vld [vmem:[%s0 + $0x1c8] sm:$0xff]
  %v72 = vld [vmem:[%s0 + $0x1d0] sm:$0xff]
  %v73 = vld [vmem:[%s0 + $0x1d8] sm:$0xff]
  %v74 = vld [vmem:[%s0 + $0x1e0] sm:$0xff]
  %v75 = vld [vmem:[%s0 + $0x1e8] sm:$0xff]
  %v76 = vld [vmem:[%s0 + $0x1f0] sm:$0xff]
  %v77 = vld [vmem:[%s0 + $0x1f8] sm:$0xff]
  %v78 = vld [vmem:[%s0 + $0x200] sm:$0xff]
  %v79 = vld [vmem:[%s0 + $0x208] sm:$0xff]
  %v80 = vld [vmem:[%s0 + $0x210] sm:$0xff]
  %v81 = vld [vmem:[%s0 + $0x218] sm:$0xff]
  %v82 = vld [vmem:[%s0 + $0x220] sm:$0xff]
  %v83 = vld [vmem:[%s0 + $0x228] sm:$0xff]
  %v84 = vld [vmem:[%s0 + $0x230] sm:$0xff]
  %v85 = vld [vmem:[%s0 + $0x238] sm:$0xff]
  %v86 = vld [vmem:[%s0 + $0x240] sm:$0xff]
  %v87 = vld [vmem:[%s0 + $0x248] sm:$0xff]
  %v88 = vld [vmem:[%s0 + $0x250] sm:$0xff]
  %v89 = vld [vmem:[%s0 + $0x258] sm:$0xff]
  %v90 = vld [vmem:[%s0 + $0x260] sm:$0xff]
  %v91 = vld [vmem:[%s0 + $0x268] sm:$0xff]
  %v92 = vld [vmem:[%s0 + $0x270] sm:$0xff]
  %v93 = vld [vmem:[%s0 + $0x278] sm:$0xff]
  %v94 = vld [vmem:[%s0 + $0x280] sm:$0xff]
  %v95 = vld [vmem:[%s0 + $0x288] sm:$0xff]
  %v96 = vld [vmem:[%s0 + $0x290] sm:$0xff]
  %v97 = vld [vmem:[%s0 + $0x298] sm:$0xff]
  %v98 = vld [vmem:[%s0 + $0x2a0] sm:$0xff]
  %v99 = vld [vmem:[%s0 + $0x2a8] sm:$0xff]
  %v100 = vld [vmem:[%s0 + $0x2b0] sm:$0xff]
  %v101 = vld [vmem:[%s0 + $0x2b8] sm:$0xff]
  %v102 = vld [vmem:[%s0 + $0x2c0] sm:$0xff]
  %v103 = vld [vmem:[%s0 + $0x2c8] sm:$0xff]
  %v104 = vld [vmem:[%s0 + $0x2d0] sm:$0xff]
  %v105 = vld [vmem:[%s0 + $0x2d8] sm:$0xff]
  %v106 = vld [vmem:[%s0 + $0x2e0] sm:$0xff]
  %v107 = vld [vmem:[%s0 + $0x2e8] sm:$0xff]
  %v108 = vld [vmem:[%s0 + $0x2f0] sm:$0xff]
  %v109 = vld [vmem:[%s0 + $0x2f8] sm:$0xff]
  %v110 = vld [vmem:[%s0 + $0x300] sm:$0xff]
  %v111 = vld [vmem:[%s0 + $0x308] sm:$0xff]
  %v112 = vld [vmem:[%s0 + $0x310] sm:$0xff]
  %v113 = vld [vmem:[%s0 + $0x318] sm:$0xff]
  %v114 = vld [vmem:[%s1] sm:$0xff]
  %v115 = vld [vmem:[%s1 + $0x8] sm:$0xff]
  %v116 = vld [vmem:[%s1 + $0x10] sm:$0xff]
  %v117 = vld [vmem:[%s1 + $0x18] sm:$0xff]
  %v118 = vld [vmem:[%s1 + $0x20] sm:$0xff]
  %v119 = vld [vmem:[%s1 + $0x28] sm:$0xff]
  %v120 = vld [vmem:[%s1 + $0x30] sm:$0xff]
  %v121 = vld [vmem:[%s1 + $0x38] sm:$0xff]
  %v122 = vld [vmem:[%s1 + $0x40] sm:$0xff]
  %v123 = vld [vmem:[%s1 + $0x48] sm:$0xff]
  %v124 = vld [vmem:[%s1 + $0x50] sm:$0xff]
  %v125 = vld [vmem:[%s1 + $0x58] sm:$0xff]
  %v126 = vld [vmem:[%s1 + $0x60] sm:$0xff]
  %v127 = vld [vmem:[%s1 + $0x68] sm:$0xff]
  %v128 = vld [vmem:[%s1 + $0x70] sm:$0xff]
  %v129 = vld [vmem:[%s1 + $0x78] sm:$0xff]
  %v130 = vld [vmem:[%s1 + $0x80] sm:$0xff]
  %v131 = vld [vmem:[%s1 + $0x88] sm:$0xff]
  %v132 = vld [vmem:[%s1 + $0x90] sm:$0xff]
  %v133 = vld [vmem:[%s1 + $0x98] sm:$0xff]
  %v134 = vld [vmem:[%s1 + $0xa0] sm:$0xff]
  %v135 = vld [vmem:[%s1 + $0xa8] sm:$0xff]
  %v136 = vld [vmem:[%s1 + $0xb0] sm:$0xff]
  %v137 = vld [vmem:[%s1 + $0xb8] sm:$0xff]
  %v138 = vld [vmem:[%s1 + $0xc0] sm:$0xff]
  %v139 = vld [vmem:[%s1 + $0xc8] sm:$0xff]
  %v140 = vld [vmem:[%s1 + $0xd0] sm:$0xff]
  %v141 = vld [vmem:[%s1 + $0xd8] sm:$0xff]
  %v142 = vld [vmem:[%s1 + $0xe0] sm:$0xff]
  %v143 = vld [vmem:[%s1 + $0xe8] sm:$0xff]
  %v144 = vld [vmem:[%s1 + $0xf0] sm:$0xff]
  %v145 = vld [vmem:[%s1 + $0xf8] sm:$0xff]
  %v146 = vld [vmem:[%s1 + $0x100] sm:$0xff]
  %v147 = vld [vmem:[%s1 + $0x108] sm:$0xff]
  %v148 = vld [vmem:[%s1 + $0x110] sm:$0xff]
  %v149 = vld [vmem:[%s1 + $0x118] sm:$0xff]
  %v150 = vld [vmem:[%s1 + $0x120] sm:$0xff]
  %v151 = vld [vmem:[%s1 + $0x128] sm:$0xff]
  %v152 = vld [vmem:[%s1 + $0x130] sm:$0xff]
  %v153 = vld [vmem:[%s1 + $0x138] sm:$0xff]
  %v154 = vld [vmem:[%s1 + $0x140] sm:$0xff]
  %v155 = vld [vmem:[%s1 + $0x148] sm:$0xff]
  %v156 = vld [vmem:[%s1 + $0x150] sm:$0xff]
  %v157 = vld [vmem:[%s1 + $0x158] sm:$0xff]
  %v158 = vld [vmem:[%s1 + $0x160] sm:$0xff]
  %v159 = vld [vmem:[%s1 + $0x168] sm:$0xff]
  %v160 = vld [vmem:[%s1 + $0x170] sm:$0xff]
  %v161 = vld [vmem:[%s1 + $0x178] sm:$0xff]
  %v162 = vld [vmem:[%s1 + $0x180] sm:$0xff]
  %v163 = vld [vmem:[%s1 + $0x188] sm:$0xff]
  %v164 = vld [vmem:[%s1 + $0x190] sm:$0xff]
  %v165 = vld [vmem:[%s1 + $0x198] sm:$0xff]
  %v166 = vld [vmem:[%s1 + $0x1a0] sm:$0xff]
  %v167 = vld [vmem:[%s1 + $0x1a8] sm:$0xff]
  %v168 = vld [vmem:[%s1 + $0x1b0] sm:$0xff]
  %v169 = vld [vmem:[%s1 + $0x1b8] sm:$0xff]
  %v170 = vld [vmem:[%s1 + $0x1c0] sm:$0xff]
  %v171 = vld [vmem:[%s1 + $0x1c8] sm:$0xff]
  %v172 = vld [vmem:[%s1 + $0x1d0] sm:$0xff]
  %v173 = vld [vmem:[%s1 + $0x1d8] sm:$0xff]
  %v174 = vld [vmem:[%s1 + $0x1e0] sm:$0xff]
  %v175 = vld [vmem:[%s1 + $0x1e8] sm:$0xff]
  %v176 = vld [vmem:[%s1 + $0x1f0] sm:$0xff]
  %v177 = vld [vmem:[%s1 + $0x1f8] sm:$0xff]
  %v178 = vld [vmem:[%s2] sm:$0x1]
  %v180 = vlaneseq
  %v181 = vshrl.u32 %v180, 7
  %v182 = vsub.s32 0, %v181
  %v183 = vrot.slane %v178, %v182
  %185 = vmatprep.subr.mxu0 0.0
  %186 = vmatpush1.msra.mxu0 %v129
  %187 = vmatprep.subr.mxu0 0.0
  %188 = vmatpush1.msra.mxu0 %v128
  %189 = vmatprep.subr.mxu0 0.0
  %190 = vmatpush1.msra.mxu0 %v127
  %191 = vmatprep.subr.mxu0 0.0
  %192 = vmatpush1.msra.mxu0 %v126
  %193 = vmatprep.subr.mxu0 0.0
  %194 = vmatpush1.msra.mxu0 %v125
  %195 = vmatprep.subr.mxu0 0.0
  %196 = vmatpush1.msra.mxu0 %v124
  %197 = vmatprep.subr.mxu0 0.0
  %198 = vmatpush1.msra.mxu0 %v123
  %199 = vmatprep.subr.mxu0 0.0
  %200 = vmatpush1.msra.mxu0 %v122
  %201 = vmatprep.subr.mxu0 0.0
  %202 = vmatpush1.msra.mxu0 %v121
  %203 = vmatprep.subr.mxu0 0.0
  %204 = vmatpush1.msra.mxu0 %v120
  %205 = vmatprep.subr.mxu0 0.0
  %206 = vmatpush1.msra.mxu0 %v119
  %207 = vmatprep.subr.mxu0 0.0
  %208 = vmatpush1.msra.mxu0 %v118
  %209 = vmatprep.subr.mxu0 0.0
  %210 = vmatpush1.msra.mxu0 %v117
  %211 = vmatprep.subr.mxu0 0.0
  %212 = vmatpush1.msra.mxu0 %v116
  %213 = vmatprep.subr.mxu0 0.0
  %214 = vmatpush1.msra.mxu0 %v115
  %215 = vmatprep.subr.mxu0 0.0
  %216 = vmatpush1.msra.mxu0 %v114
  %217 = vmatprep.subr.mxu0 0.0
  %218 = vmatpush2.msra.mxu0 %v145
  %219 = vmatprep.subr.mxu0 0.0
  %220 = vmatpush2.msra.mxu0 %v144
  %221 = vmatprep.subr.mxu0 0.0
  %222 = vmatpush2.msra.mxu0 %v143
  %223 = vmatprep.subr.mxu0 0.0
  %224 = vmatpush2.msra.mxu0 %v142
  %225 = vmatprep.subr.mxu0 0.0
  %226 = vmatpush2.msra.mxu0 %v141
  %227 = vmatprep.subr.mxu0 0.0
  %228 = vmatpush2.msra.mxu0 %v140
  %229 = vmatprep.subr.mxu0 0.0
  %230 = vmatpush2.msra.mxu0 %v139
  %231 = vmatprep.subr.mxu0 0.0
  %232 = vmatpush2.msra.mxu0 %v138
  %233 = vmatprep.subr.mxu0 0.0
  %234 = vmatpush2.msra.mxu0 %v137
  %235 = vmatprep.subr.mxu0 0.0
  %236 = vmatpush2.msra.mxu0 %v136
  %237 = vmatprep.subr.mxu0 0.0
  %238 = vmatpush2.msra.mxu0 %v135
  %239 = vmatprep.subr.mxu0 0.0
  %240 = vmatpush2.msra.mxu0 %v134
  %241 = vmatprep.subr.mxu0 0.0
  %242 = vmatpush2.msra.mxu0 %v133
  %243 = vmatprep.subr.mxu0 0.0
  %244 = vmatpush2.msra.mxu0 %v132
  %245 = vmatprep.subr.mxu0 0.0
  %246 = vmatpush2.msra.mxu0 %v131
  %247 = vmatprep.subr.mxu0 0.0
  %248 = vmatpush2.msra.mxu0 %v130
  %249 = vmatprep.mubr.f32.mxu0 %v15
  %250 = vmatmul.mubr.f32.gmra.mxu0 %v14
  %v251 = vpop.f32.mrf.mxu0
  %v252 = vadd.f32 %v183, %v251
  %v253 = vpop.f32.mrf.mxu0
  %254 = vmatprep.mubr.f32.mxu0 %v19
  %255 = vmatmul.mubr.f32.gmra.mxu0 %v18
  %v256 = vpop.f32.mrf.mxu0
  %v257 = vadd.f32 %v183, %v256
  %v258 = vpop.f32.mrf.mxu0
  %259 = vmatprep.mubr.f32.mxu0 %v23
  %260 = vmatmul.mubr.f32.gmra.mxu0 %v22
  %v261 = vpop.f32.mrf.mxu0
  %v262 = vadd.f32 %v183, %v261
  %v263 = vpop.f32.mrf.mxu0
  %264 = vmatprep.mubr.f32.mxu0 %v27
  %265 = vmatmul.mubr.f32.gmra.mxu0 %v26
  %v266 = vpop.f32.mrf.mxu0
  %v267 = vadd.f32 %v183, %v266
  %v268 = vpop.f32.mrf.mxu0
  %269 = vmatprep.mubr.f32.mxu0 %v31
  %270 = vmatmul.mubr.f32.gmra.mxu0 %v30
  %v271 = vpop.f32.mrf.mxu0
  %v272 = vadd.f32 %v183, %v271
  %v273 = vpop.f32.mrf.mxu0
  %274 = vmatprep.mubr.f32.mxu0 %v35
  %275 = vmatmul.mubr.f32.gmra.mxu0 %v34
  %v276 = vpop.f32.mrf.mxu0
  %v277 = vadd.f32 %v183, %v276
  %v278 = vpop.f32.mrf.mxu0
  %279 = vmatprep.mubr.f32.mxu0 %v39
  %280 = vmatmul.mubr.f32.gmra.mxu0 %v38
  %v281 = vpop.f32.mrf.mxu0
  %v282 = vadd.f32 %v183, %v281
  %v283 = vpop.f32.mrf.mxu0
  %284 = vmatprep.mubr.f32.mxu0 %v43
  %285 = vmatmul.mubr.f32.gmra.mxu0 %v42
  %v286 = vpop.f32.mrf.mxu0
  %v287 = vadd.f32 %v183, %v286
  %v288 = vpop.f32.mrf.mxu0
  %289 = vmatprep.mubr.f32.mxu0 %v47
  %290 = vmatmul.mubr.f32.gmra.mxu0 %v46
  %v291 = vpop.f32.mrf.mxu0
  %v292 = vadd.f32 %v183, %v291
  %v293 = vpop.f32.mrf.mxu0
  %294 = vmatprep.mubr.f32.mxu0 %v51
  %295 = vmatmul.mubr.f32.gmra.mxu0 %v50
  %v296 = vpop.f32.mrf.mxu0
  %v297 = vadd.f32 %v183, %v296
  %v298 = vpop.f32.mrf.mxu0
  %299 = vmatprep.mubr.f32.mxu0 %v55
  %300 = vmatmul.mubr.f32.gmra.mxu0 %v54
  %v301 = vpop.f32.mrf.mxu0
  %v302 = vadd.f32 %v183, %v301
  %v303 = vpop.f32.mrf.mxu0
  %304 = vmatprep.mubr.f32.mxu0 %v59
  %305 = vmatmul.mubr.f32.gmra.mxu0 %v58
  %v306 = vpop.f32.mrf.mxu0
  %v307 = vadd.f32 %v183, %v306
  %v308 = vpop.f32.mrf.mxu0
  %309 = vmatprep.mubr.f32.mxu0 %v63
  %310 = vmatmul.mubr.f32.gmra.mxu0 %v62
  %v311 = vpop.f32.mrf.mxu0
  %v312 = vadd.f32 %v183, %v311
  %v313 = vpop.f32.mrf.mxu0
  %314 = vmatprep.mubr.f32.mxu0 %v67
  %315 = vmatmul.mubr.f32.gmra.mxu0 %v66
  %v316 = vpop.f32.mrf.mxu0
  %v317 = vadd.f32 %v183, %v316
  %v318 = vpop.f32.mrf.mxu0
  %319 = vmatprep.mubr.f32.mxu0 %v71
  %320 = vmatmul.mubr.f32.gmra.mxu0 %v70
  %v321 = vpop.f32.mrf.mxu0
  %v322 = vadd.f32 %v183, %v321
  %v323 = vpop.f32.mrf.mxu0
  %324 = vmatprep.mubr.f32.mxu0 %v75
  %325 = vmatmul.mubr.f32.gmra.mxu0 %v74
  %v326 = vpop.f32.mrf.mxu0
  %v327 = vadd.f32 %v183, %v326
  %v328 = vpop.f32.mrf.mxu0
  %329 = vmatprep.mubr.f32.mxu0 %v79
  %330 = vmatmul.mubr.f32.gmra.mxu0 %v78
  %v331 = vpop.f32.mrf.mxu0
  %v332 = vadd.f32 %v183, %v331
  %v333 = vpop.f32.mrf.mxu0
  %334 = vmatprep.mubr.f32.mxu0 %v83
  %335 = vmatmul.mubr.f32.gmra.mxu0 %v82
  %v336 = vpop.f32.mrf.mxu0
  %v337 = vadd.f32 %v183, %v336
  %v338 = vpop.f32.mrf.mxu0
  %339 = vmatprep.mubr.f32.mxu0 %v87
  %340 = vmatmul.mubr.f32.gmra.mxu0 %v86
  %v341 = vpop.f32.mrf.mxu0
  %v342 = vadd.f32 %v183, %v341
  %v343 = vpop.f32.mrf.mxu0
  %344 = vmatprep.mubr.f32.mxu0 %v91
  %345 = vmatmul.mubr.f32.gmra.mxu0 %v90
  %v346 = vpop.f32.mrf.mxu0
  %v347 = vadd.f32 %v183, %v346
  %v348 = vpop.f32.mrf.mxu0
  %349 = vmatprep.mubr.f32.mxu0 %v95
  %350 = vmatmul.mubr.f32.gmra.mxu0 %v94
  %v351 = vpop.f32.mrf.mxu0
  %v352 = vadd.f32 %v183, %v351
  %v353 = vpop.f32.mrf.mxu0
  %354 = vmatprep.mubr.f32.mxu0 %v99
  %355 = vmatmul.mubr.f32.gmra.mxu0 %v98
  %v356 = vpop.f32.mrf.mxu0
  %v357 = vadd.f32 %v183, %v356
  %v358 = vpop.f32.mrf.mxu0
  %359 = vmatprep.mubr.f32.mxu0 %v103
  %360 = vmatmul.mubr.f32.gmra.mxu0 %v102
  %v361 = vpop.f32.mrf.mxu0
  %v362 = vadd.f32 %v183, %v361
  %v363 = vpop.f32.mrf.mxu0
  %364 = vmatprep.mubr.f32.mxu0 %v107
  %365 = vmatmul.mubr.f32.gmra.mxu0 %v106
  %v366 = vpop.f32.mrf.mxu0
  %v367 = vadd.f32 %v183, %v366
  %v368 = vpop.f32.mrf.mxu0
  %369 = vmatprep.mubr.f32.mxu0 %v111
  %370 = vmatmul.mubr.f32.gmra.mxu0 %v110
  %v371 = vpop.f32.mrf.mxu0
  %v372 = vadd.f32 %v183, %v371
  %v373 = vpop.f32.mrf.mxu0
  %374 = vdwg.mxu0
  %375 = vmatprep.subr.mxu0 0.0
  %376 = vmatpush1.msra.mxu0 %v161
  %377 = vmatprep.subr.mxu0 0.0
  %378 = vmatpush1.msra.mxu0 %v160
  %379 = vmatprep.subr.mxu0 0.0
  %380 = vmatpush1.msra.mxu0 %v159
  %381 = vmatprep.subr.mxu0 0.0
  %382 = vmatpush1.msra.mxu0 %v158
  %383 = vmatprep.subr.mxu0 0.0
  %384 = vmatpush1.msra.mxu0 %v157
  %385 = vmatprep.subr.mxu0 0.0
  %386 = vmatpush1.msra.mxu0 %v156
  %387 = vmatprep.subr.mxu0 0.0
  %388 = vmatpush1.msra.mxu0 %v155
  %389 = vmatprep.subr.mxu0 0.0
  %390 = vmatpush1.msra.mxu0 %v154
  %391 = vmatprep.subr.mxu0 0.0
  %392 = vmatpush1.msra.mxu0 %v153
  %393 = vmatprep.subr.mxu0 0.0
  %394 = vmatpush1.msra.mxu0 %v152
  %395 = vmatprep.subr.mxu0 0.0
  %396 = vmatpush1.msra.mxu0 %v151
  %397 = vmatprep.subr.mxu0 0.0
  %398 = vmatpush1.msra.mxu0 %v150
  %399 = vmatprep.subr.mxu0 0.0
  %400 = vmatpush1.msra.mxu0 %v149
  %401 = vmatprep.subr.mxu0 0.0
  %402 = vmatpush1.msra.mxu0 %v148
  %403 = vmatprep.subr.mxu0 0.0
  %404 = vmatpush1.msra.mxu0 %v147
  %405 = vmatprep.subr.mxu0 0.0
  %406 = vmatpush1.msra.mxu0 %v146
  %407 = vmatprep.subr.mxu0 0.0
  %408 = vmatpush2.msra.mxu0 %v177
  %409 = vmatprep.subr.mxu0 0.0
  %410 = vmatpush2.msra.mxu0 %v176
  %411 = vmatprep.subr.mxu0 0.0
  %412 = vmatpush2.msra.mxu0 %v175
  %413 = vmatprep.subr.mxu0 0.0
  %414 = vmatpush2.msra.mxu0 %v174
  %415 = vmatprep.subr.mxu0 0.0
  %416 = vmatpush2.msra.mxu0 %v173
  %417 = vmatprep.subr.mxu0 0.0
  %418 = vmatpush2.msra.mxu0 %v172
  %419 = vmatprep.subr.mxu0 0.0
  %420 = vmatpush2.msra.mxu0 %v171
  %421 = vmatprep.subr.mxu0 0.0
  %422 = vmatpush2.msra.mxu0 %v170
  %423 = vmatprep.subr.mxu0 0.0
  %424 = vmatpush2.msra.mxu0 %v169
  %425 = vmatprep.subr.mxu0 0.0
  %426 = vmatpush2.msra.mxu0 %v168
  %427 = vmatprep.subr.mxu0 0.0
  %428 = vmatpush2.msra.mxu0 %v167
  %429 = vmatprep.subr.mxu0 0.0
  %430 = vmatpush2.msra.mxu0 %v166
  %431 = vmatprep.subr.mxu0 0.0
  %432 = vmatpush2.msra.mxu0 %v165
  %433 = vmatprep.subr.mxu0 0.0
  %434 = vmatpush2.msra.mxu0 %v164
  %435 = vmatprep.subr.mxu0 0.0
  %436 = vmatpush2.msra.mxu0 %v163
  %437 = vmatprep.subr.mxu0 0.0
  %438 = vmatpush2.msra.mxu0 %v162
  %439 = vmatprep.mubr.f32.mxu0 %v17
  %440 = vmatmul.mubr.f32.gmra.mxu0 %v16
  %v441 = vpop.f32.mrf.mxu0
  %v442 = vadd.f32 %v252, %v441
  %v443 = vpop.f32.mrf.mxu0
  %444 = vmatprep.mubr.f32.mxu0 %v21
  %445 = vmatmul.mubr.f32.gmra.mxu0 %v20
  %v446 = vpop.f32.mrf.mxu0
  %v447 = vadd.f32 %v257, %v446
  %v448 = vpop.f32.mrf.mxu0
  %449 = vmatprep.mubr.f32.mxu0 %v25
  %450 = vmatmul.mubr.f32.gmra.mxu0 %v24
  %v451 = vpop.f32.mrf.mxu0
  %v452 = vadd.f32 %v262, %v451
  %v453 = vpop.f32.mrf.mxu0
  %454 = vmatprep.mubr.f32.mxu0 %v29
  %455 = vmatmul.mubr.f32.gmra.mxu0 %v28
  %v456 = vpop.f32.mrf.mxu0
  %v457 = vadd.f32 %v267, %v456
  %v458 = vpop.f32.mrf.mxu0
  %459 = vmatprep.mubr.f32.mxu0 %v33
  %460 = vmatmul.mubr.f32.gmra.mxu0 %v32
  %v461 = vpop.f32.mrf.mxu0
  %v462 = vadd.f32 %v272, %v461
  %v463 = vpop.f32.mrf.mxu0
  %464 = vmatprep.mubr.f32.mxu0 %v37
  %465 = vmatmul.mubr.f32.gmra.mxu0 %v36
  %v466 = vpop.f32.mrf.mxu0
  %v467 = vadd.f32 %v277, %v466
  %v468 = vpop.f32.mrf.mxu0
  %469 = vmatprep.mubr.f32.mxu0 %v41
  %470 = vmatmul.mubr.f32.gmra.mxu0 %v40
  %v471 = vpop.f32.mrf.mxu0
  %v472 = vadd.f32 %v282, %v471
  %v473 = vpop.f32.mrf.mxu0
  %474 = vmatprep.mubr.f32.mxu0 %v45
  %475 = vmatmul.mubr.f32.gmra.mxu0 %v44
  %v476 = vpop.f32.mrf.mxu0
  %v477 = vadd.f32 %v287, %v476
  %v478 = vpop.f32.mrf.mxu0
  %479 = vmatprep.mubr.f32.mxu0 %v49
  %480 = vmatmul.mubr.f32.gmra.mxu0 %v48
  %v481 = vpop.f32.mrf.mxu0
  %v482 = vadd.f32 %v292, %v481
  %v483 = vpop.f32.mrf.mxu0
  %484 = vmatprep.mubr.f32.mxu0 %v53
  %485 = vmatmul.mubr.f32.gmra.mxu0 %v52
  %v486 = vpop.f32.mrf.mxu0
  %v487 = vadd.f32 %v297, %v486
  %v488 = vpop.f32.mrf.mxu0
  %489 = vmatprep.mubr.f32.mxu0 %v57
  %490 = vmatmul.mubr.f32.gmra.mxu0 %v56
  %v491 = vpop.f32.mrf.mxu0
  %v492 = vadd.f32 %v302, %v491
  %v493 = vpop.f32.mrf.mxu0
  %494 = vmatprep.mubr.f32.mxu0 %v61
  %495 = vmatmul.mubr.f32.gmra.mxu0 %v60
  %v496 = vpop.f32.mrf.mxu0
  %v497 = vadd.f32 %v307, %v496
  %v498 = vpop.f32.mrf.mxu0
  %499 = vmatprep.mubr.f32.mxu0 %v65
  %500 = vmatmul.mubr.f32.gmra.mxu0 %v64
  %v501 = vpop.f32.mrf.mxu0
  %v502 = vadd.f32 %v312, %v501
  %v503 = vpop.f32.mrf.mxu0
  %504 = vmatprep.mubr.f32.mxu0 %v69
  %505 = vmatmul.mubr.f32.gmra.mxu0 %v68
  %v506 = vpop.f32.mrf.mxu0
  %v507 = vadd.f32 %v317, %v506
  %v508 = vpop.f32.mrf.mxu0
  %509 = vmatprep.mubr.f32.mxu0 %v73
  %510 = vmatmul.mubr.f32.gmra.mxu0 %v72
  %v511 = vpop.f32.mrf.mxu0
  %v512 = vadd.f32 %v322, %v511
  %v513 = vpop.f32.mrf.mxu0
  %514 = vmatprep.mubr.f32.mxu0 %v77
  %515 = vmatmul.mubr.f32.gmra.mxu0 %v76
  %v516 = vpop.f32.mrf.mxu0
  %v517 = vadd.f32 %v327, %v516
  %v518 = vpop.f32.mrf.mxu0
  %519 = vmatprep.mubr.f32.mxu0 %v81
  %520 = vmatmul.mubr.f32.gmra.mxu0 %v80
  %v521 = vpop.f32.mrf.mxu0
  %v522 = vadd.f32 %v332, %v521
  %v523 = vpop.f32.mrf.mxu0
  %524 = vmatprep.mubr.f32.mxu0 %v85
  %525 = vmatmul.mubr.f32.gmra.mxu0 %v84
  %v526 = vpop.f32.mrf.mxu0
  %v527 = vadd.f32 %v337, %v526
  %v528 = vpop.f32.mrf.mxu0
  %529 = vmatprep.mubr.f32.mxu0 %v89
  %530 = vmatmul.mubr.f32.gmra.mxu0 %v88
  %v531 = vpop.f32.mrf.mxu0
  %v532 = vadd.f32 %v342, %v531
  %v533 = vpop.f32.mrf.mxu0
  %534 = vmatprep.mubr.f32.mxu0 %v93
  %535 = vmatmul.mubr.f32.gmra.mxu0 %v92
  %v536 = vpop.f32.mrf.mxu0
  %v537 = vadd.f32 %v347, %v536
  %v538 = vpop.f32.mrf.mxu0
  %539 = vmatprep.mubr.f32.mxu0 %v97
  %540 = vmatmul.mubr.f32.gmra.mxu0 %v96
  %v541 = vpop.f32.mrf.mxu0
  %v542 = vadd.f32 %v352, %v541
  %v543 = vpop.f32.mrf.mxu0
  %544 = vmatprep.mubr.f32.mxu0 %v101
  %545 = vmatmul.mubr.f32.gmra.mxu0 %v100
  %v546 = vpop.f32.mrf.mxu0
  %v547 = vadd.f32 %v357, %v546
  %v548 = vpop.f32.mrf.mxu0
  %549 = vmatprep.mubr.f32.mxu0 %v105
  %550 = vmatmul.mubr.f32.gmra.mxu0 %v104
  %v551 = vpop.f32.mrf.mxu0
  %v552 = vadd.f32 %v362, %v551
  %v553 = vpop.f32.mrf.mxu0
  %554 = vmatprep.mubr.f32.mxu0 %v109
  %555 = vmatmul.mubr.f32.gmra.mxu0 %v108
  %v556 = vpop.f32.mrf.mxu0
  %v557 = vadd.f32 %v367, %v556
  %v558 = vpop.f32.mrf.mxu0
  %559 = vmatprep.mubr.f32.mxu0 %v113
  %560 = vmatmul.mubr.f32.gmra.mxu0 %v112
  %v561 = vpop.f32.mrf.mxu0
  %v562 = vadd.f32 %v372, %v561
  %v563 = vpop.f32.mrf.mxu0
  %564 = vdwg.mxu0
  %v565 = vmax.f32 %v442, 0.0
  %v566 = vmax.f32 %v447, 0.0
  %v567 = vmax.f32 %v452, 0.0
  %v568 = vmax.f32 %v457, 0.0
  %v569 = vmax.f32 %v462, 0.0
  %v570 = vmax.f32 %v467, 0.0
  %v571 = vmax.f32 %v472, 0.0
  %v572 = vmax.f32 %v477, 0.0
  %v573 = vmax.f32 %v482, 0.0
  %v574 = vmax.f32 %v487, 0.0
  %v575 = vmax.f32 %v492, 0.0
  %v576 = vmax.f32 %v497, 0.0
  %v577 = vmax.f32 %v502, 0.0
  %v578 = vmax.f32 %v507, 0.0
  %v579 = vmax.f32 %v512, 0.0
  %v580 = vmax.f32 %v517, 0.0
  %v581 = vmax.f32 %v522, 0.0
  %v582 = vmax.f32 %v527, 0.0
  %v583 = vmax.f32 %v532, 0.0
  %v584 = vmax.f32 %v537, 0.0
  %v585 = vmax.f32 %v542, 0.0
  %v586 = vmax.f32 %v547, 0.0
  %v587 = vmax.f32 %v552, 0.0
  %v588 = vmax.f32 %v557, 0.0
  %v589 = vmax.f32 %v562, 0.0
  %590 = vst [vmem:[%s3] sm:$0xff] %v565
  %591 = vst [vmem:[%s3 + $0x8] sm:$0xff] %v566
  %592 = vst [vmem:[%s3 + $0x10] sm:$0xff] %v567
  %593 = vst [vmem:[%s3 + $0x18] sm:$0xff] %v568
  %594 = vst [vmem:[%s3 + $0x20] sm:$0xff] %v569
  %595 = vst [vmem:[%s3 + $0x28] sm:$0xff] %v570
  %596 = vst [vmem:[%s3 + $0x30] sm:$0xff] %v571
  %597 = vst [vmem:[%s3 + $0x38] sm:$0xff] %v572
  %598 = vst [vmem:[%s3 + $0x40] sm:$0xff] %v573
  %599 = vst [vmem:[%s3 + $0x48] sm:$0xff] %v574
  %600 = vst [vmem:[%s3 + $0x50] sm:$0xff] %v575
  %601 = vst [vmem:[%s3 + $0x58] sm:$0xff] %v576
  %602 = vst [vmem:[%s3 + $0x60] sm:$0xff] %v577
  %603 = vst [vmem:[%s3 + $0x68] sm:$0xff] %v578
  %604 = vst [vmem:[%s3 + $0x70] sm:$0xff] %v579
  %605 = vst [vmem:[%s3 + $0x78] sm:$0xff] %v580
  %606 = vst [vmem:[%s3 + $0x80] sm:$0xff] %v581
  %607 = vst [vmem:[%s3 + $0x88] sm:$0xff] %v582
  %608 = vst [vmem:[%s3 + $0x90] sm:$0xff] %v583
  %609 = vst [vmem:[%s3 + $0x98] sm:$0xff] %v584
  %610 = vst [vmem:[%s3 + $0xa0] sm:$0xff] %v585
  %611 = vst [vmem:[%s3 + $0xa8] sm:$0xff] %v586
  %612 = vst [vmem:[%s3 + $0xb0] sm:$0xff] %v587
  %613 = vst [vmem:[%s3 + $0xb8] sm:$0xff] %v588
  %614 = vst [vmem:[%s3 + $0xc0] sm:$0xff] %v589
  // Predicated region
  $region14: #{auxiliary_convolutions.10} parent=0 // pred_check
    _
  $region15: #{auxiliary_convolutions.10} parent=0 // pred_check_branch
    %616 = sbr.rel (0) target = $region17
  $region16: #{auxiliary_convolutions.10} parent=0 // pred_region
    _
  $region17: #{auxiliary_convolutions.10} parent=0 // pred_fallthru
    _
  // Predicated region
  $region18: #{auxiliary_convolutions.10} parent=0 // pred_check
    _
  $region19: #{auxiliary_convolutions.10} parent=0 // pred_check_branch
    %618 = sbr.rel (0) target = $region21
  $region20: #{auxiliary_convolutions.10} parent=0 // pred_region
    _
  $region21: #{auxiliary_convolutions.10} parent=0 // pred_fallthru
    _

// kernel: auxiliary_convolutions.12
$region0: #{auxiliary_convolutions.12}
  #allocation0 [shape = 'u32[]', space=smem, size = 0x4, offset = 0x4, fixed_abs, tag = 'smem constant byte address 0x4 - core index']
  #allocation1 [shape = 'u32[144,128]{1,0:T(1,128)}', space=vmem, size = 0x12000, scoped, tag = 'internal scratch']
  %s0 = inlined_call_operand.vmem [shape: f32[56,256], index: 0, kind: input, shape index: {}]
  %s1 = inlined_call_operand.vmem [shape: f32[256,128], index: 1, kind: input, shape index: {}]
  %s2 = inlined_call_operand.vmem [shape: f32[1,128], index: 2, kind: input, shape index: {}]
  %s3 = inlined_call_operand.vmem [shape: f32[56,128], index: 3, kind: output, shape index: {}]
  %s4 = sld [smem:[#allocation0]]
  $region22: #{auxiliary_convolutions.12} parent=0
    _
  %s6 = ssub.s32 1, %s4
  %s7 = scalar_select 0, %s6, %s4
  // Predicated region
  $region2: #{auxiliary_convolutions.12} parent=0 // pred_check
    _
  $region3: #{auxiliary_convolutions.12} parent=0 // pred_check_branch
    %9 = sbr.rel (0) target = $region5
  $region4: #{auxiliary_convolutions.12} parent=0 // pred_region
    _
  $region5: #{auxiliary_convolutions.12} parent=0 // pred_fallthru
    _
  // Predicated region
  $region6: #{auxiliary_convolutions.12} parent=0 // pred_check
    _
  $region7: #{auxiliary_convolutions.12} parent=0 // pred_check_branch
    %11 = sbr.rel (0) target = $region9
  $region8: #{auxiliary_convolutions.12} parent=0 // pred_region
    _
  $region9: #{auxiliary_convolutions.12} parent=0 // pred_fallthru
    _
  // Predicated region
  $region10: #{auxiliary_convolutions.12} parent=0 // pred_check
    _
  $region11: #{auxiliary_convolutions.12} parent=0 // pred_check_branch
    %13 = sbr.rel (0) target = $region13
  $region12: #{auxiliary_convolutions.12} parent=0 // pred_region
    _
  $region13: #{auxiliary_convolutions.12} parent=0 // pred_fallthru
    _
  %v14 = vld [vmem:[%s0] sm:$0xff]
  %v15 = vld [vmem:[%s0 + $0x8] sm:$0xff]
  %v16 = vld [vmem:[%s0 + $0x10] sm:$0xff]
  %v17 = vld [vmem:[%s0 + $0x18] sm:$0xff]
  %v18 = vld [vmem:[%s0 + $0x20] sm:$0xff]
  %v19 = vld [vmem:[%s0 + $0x28] sm:$0xff]
  %v20 = vld [vmem:[%s0 + $0x30] sm:$0xff]
  %v21 = vld [vmem:[%s0 + $0x38] sm:$0xff]
  %v22 = vld [vmem:[%s0 + $0x40] sm:$0xff]
  %v23 = vld [vmem:[%s0 + $0x48] sm:$0xff]
  %v24 = vld [vmem:[%s0 + $0x50] sm:$0xff]
  %v25 = vld [vmem:[%s0 + $0x58] sm:$0xff]
  %v26 = vld [vmem:[%s0 + $0x60] sm:$0xff]
  %v27 = vld [vmem:[%s0 + $0x68] sm:$0xff]
  %v28 = vld [vmem:[%s1] sm:$0xff]
  %v29 = vld [vmem:[%s1 + $0x8] sm:$0xff]
  %v30 = vld [vmem:[%s1 + $0x10] sm:$0xff]
  %v31 = vld [vmem:[%s1 + $0x18] sm:$0xff]
  %v32 = vld [vmem:[%s1 + $0x20] sm:$0xff]
  %v33 = vld [vmem:[%s1 + $0x28] sm:$0xff]
  %v34 = vld [vmem:[%s1 + $0x30] sm:$0xff]
  %v35 = vld [vmem:[%s1 + $0x38] sm:$0xff]
  %v36 = vld [vmem:[%s1 + $0x40] sm:$0xff]
  %v37 = vld [vmem:[%s1 + $0x48] sm:$0xff]
  %v38 = vld [vmem:[%s1 + $0x50] sm:$0xff]
  %v39 = vld [vmem:[%s1 + $0x58] sm:$0xff]
  %v40 = vld [vmem:[%s1 + $0x60] sm:$0xff]
  %v41 = vld [vmem:[%s1 + $0x68] sm:$0xff]
  %v42 = vld [vmem:[%s1 + $0x70] sm:$0xff]
  %v43 = vld [vmem:[%s1 + $0x78] sm:$0xff]
  %v44 = vld [vmem:[%s1 + $0x80] sm:$0xff]
  %v45 = vld [vmem:[%s1 + $0x88] sm:$0xff]
  %v46 = vld [vmem:[%s1 + $0x90] sm:$0xff]
  %v47 = vld [vmem:[%s1 + $0x98] sm:$0xff]
  %v48 = vld [vmem:[%s1 + $0xa0] sm:$0xff]
  %v49 = vld [vmem:[%s1 + $0xa8] sm:$0xff]
  %v50 = vld [vmem:[%s1 + $0xb0] sm:$0xff]
  %v51 = vld [vmem:[%s1 + $0xb8] sm:$0xff]
  %v52 = vld [vmem:[%s1 + $0xc0] sm:$0xff]
  %v53 = vld [vmem:[%s1 + $0xc8] sm:$0xff]
  %v54 = vld [vmem:[%s1 + $0xd0] sm:$0xff]
  %v55 = vld [vmem:[%s1 + $0xd8] sm:$0xff]
  %v56 = vld [vmem:[%s1 + $0xe0] sm:$0xff]
  %v57 = vld [vmem:[%s1 + $0xe8] sm:$0xff]
  %v58 = vld [vmem:[%s1 + $0xf0] sm:$0xff]
  %v59 = vld [vmem:[%s1 + $0xf8] sm:$0xff]
  %v60 = vld [vmem:[%s2] sm:$0x1]
  %v62 = vlaneseq
  %v63 = vshrl.u32 %v62, 7
  %v64 = vsub.s32 0, %v63
  %v65 = vrot.slane %v60, %v64
  %67 = vmatprep.subr.mxu0 0.0
  %68 = vmatpush1.msra.mxu0 %v43
  %69 = vmatprep.subr.mxu0 0.0
  %70 = vmatpush1.msra.mxu0 %v42
  %71 = vmatprep.subr.mxu0 0.0
  %72 = vmatpush1.msra.mxu0 %v41
  %73 = vmatprep.subr.mxu0 0.0
  %74 = vmatpush1.msra.mxu0 %v40
  %75 = vmatprep.subr.mxu0 0.0
  %76 = vmatpush1.msra.mxu0 %v39
  %77 = vmatprep.subr.mxu0 0.0
  %78 = vmatpush1.msra.mxu0 %v38
  %79 = vmatprep.subr.mxu0 0.0
  %80 = vmatpush1.msra.mxu0 %v37
  %81 = vmatprep.subr.mxu0 0.0
  %82 = vmatpush1.msra.mxu0 %v36
  %83 = vmatprep.subr.mxu0 0.0
  %84 = vmatpush1.msra.mxu0 %v35
  %85 = vmatprep.subr.mxu0 0.0
  %86 = vmatpush1.msra.mxu0 %v34
  %87 = vmatprep.subr.mxu0 0.0
  %88 = vmatpush1.msra.mxu0 %v33
  %89 = vmatprep.subr.mxu0 0.0
  %90 = vmatpush1.msra.mxu0 %v32
  %91 = vmatprep.subr.mxu0 0.0
  %92 = vmatpush1.msra.mxu0 %v31
  %93 = vmatprep.subr.mxu0 0.0
  %94 = vmatpush1.msra.mxu0 %v30
  %95 = vmatprep.subr.mxu0 0.0
  %96 = vmatpush1.msra.mxu0 %v29
  %97 = vmatprep.subr.mxu0 0.0
  %98 = vmatpush1.msra.mxu0 %v28
  %99 = vmatprep.subr.mxu0 0.0
  %100 = vmatpush2.msra.mxu0 %v59
  %101 = vmatprep.subr.mxu0 0.0
  %102 = vmatpush2.msra.mxu0 %v58
  %103 = vmatprep.subr.mxu0 0.0
  %104 = vmatpush2.msra.mxu0 %v57
  %105 = vmatprep.subr.mxu0 0.0
  %106 = vmatpush2.msra.mxu0 %v56
  %107 = vmatprep.subr.mxu0 0.0
  %108 = vmatpush2.msra.mxu0 %v55
  %109 = vmatprep.subr.mxu0 0.0
  %110 = vmatpush2.msra.mxu0 %v54
  %111 = vmatprep.subr.mxu0 0.0
  %112 = vmatpush2.msra.mxu0 %v53
  %113 = vmatprep.subr.mxu0 0.0
  %114 = vmatpush2.msra.mxu0 %v52
  %115 = vmatprep.subr.mxu0 0.0
  %116 = vmatpush2.msra.mxu0 %v51
  %117 = vmatprep.subr.mxu0 0.0
  %118 = vmatpush2.msra.mxu0 %v50
  %119 = vmatprep.subr.mxu0 0.0
  %120 = vmatpush2.msra.mxu0 %v49
  %121 = vmatprep.subr.mxu0 0.0
  %122 = vmatpush2.msra.mxu0 %v48
  %123 = vmatprep.subr.mxu0 0.0
  %124 = vmatpush2.msra.mxu0 %v47
  %125 = vmatprep.subr.mxu0 0.0
  %126 = vmatpush2.msra.mxu0 %v46
  %127 = vmatprep.subr.mxu0 0.0
  %128 = vmatpush2.msra.mxu0 %v45
  %129 = vmatprep.subr.mxu0 0.0
  %130 = vmatpush2.msra.mxu0 %v44
  %131 = vmatprep.mubr.f32.mxu0 %v15
  %132 = vmatmul.mubr.f32.gmra.mxu0 %v14
  %v133 = vpop.f32.mrf.mxu0
  %v134 = vadd.f32 %v65, %v133
  %v135 = vpop.f32.mrf.mxu0
  %136 = vmatprep.mubr.f32.mxu0 %v17
  %137 = vmatmul.mubr.f32.gmra.mxu0 %v16
  %v138 = vpop.f32.mrf.mxu0
  %v139 = vadd.f32 %v65, %v138
  %v140 = vpop.f32.mrf.mxu0
  %141 = vmatprep.mubr.f32.mxu0 %v19
  %142 = vmatmul.mubr.f32.gmra.mxu0 %v18
  %v143 = vpop.f32.mrf.mxu0
  %v144 = vadd.f32 %v65, %v143
  %v145 = vpop.f32.mrf.mxu0
  %146 = vmatprep.mubr.f32.mxu0 %v21
  %147 = vmatmul.mubr.f32.gmra.mxu0 %v20
  %v148 = vpop.f32.mrf.mxu0
  %v149 = vadd.f32 %v65, %v148
  %v150 = vpop.f32.mrf.mxu0
  %151 = vmatprep.mubr.f32.mxu0 %v23
  %152 = vmatmul.mubr.f32.gmra.mxu0 %v22
  %v153 = vpop.f32.mrf.mxu0
  %v154 = vadd.f32 %v65, %v153
  %v155 = vpop.f32.mrf.mxu0
  %156 = vmatprep.mubr.f32.mxu0 %v25
  %157 = vmatmul.mubr.f32.gmra.mxu0 %v24
  %v158 = vpop.f32.mrf.mxu0
  %v159 = vadd.f32 %v65, %v158
  %v160 = vpop.f32.mrf.mxu0
  %161 = vmatprep.mubr.f32.mxu0 %v27
  %162 = vmatmul.mubr.f32.gmra.mxu0 %v26
  %v163 = vpop.f32.mrf.mxu0
  %v164 = vadd.f32 %v65, %v163
  %v165 = vpop.f32.mrf.mxu0
  %166 = vdwg.mxu0
  %v167 = vmax.f32 %v134, 0.0
  %v168 = vmax.f32 %v139, 0.0
  %v169 = vmax.f32 %v144, 0.0
  %v170 = vmax.f32 %v149, 0.0
  %v171 = vmax.f32 %v154, 0.0
  %v172 = vmax.f32 %v159, 0.0
  %v173 = vmax.f32 %v164, 0.0
  %174 = vst [vmem:[%s3] sm:$0xff] %v167
  %175 = vst [vmem:[%s3 + $0x8] sm:$0xff] %v168
  %176 = vst [vmem:[%s3 + $0x10] sm:$0xff] %v169
  %177 = vst [vmem:[%s3 + $0x18] sm:$0xff] %v170
  %178 = vst [vmem:[%s3 + $0x20] sm:$0xff] %v171
  %179 = vst [vmem:[%s3 + $0x28] sm:$0xff] %v172
  %180 = vst [vmem:[%s3 + $0x30] sm:$0xff] %v173
  // Predicated region
  $region14: #{auxiliary_convolutions.12} parent=0 // pred_check
    _
  $region15: #{auxiliary_convolutions.12} parent=0 // pred_check_branch
    %182 = sbr.rel (0) target = $region17
  $region16: #{auxiliary_convolutions.12} parent=0 // pred_region
    _
  $region17: #{auxiliary_convolutions.12} parent=0 // pred_fallthru
    _
  // Predicated region
  $region18: #{auxiliary_convolutions.12} parent=0 // pred_check
    _
  $region19: #{auxiliary_convolutions.12} parent=0 // pred_check_branch
    %184 = sbr.rel (0) target = $region21
  $region20: #{auxiliary_convolutions.12} parent=0 // pred_region
    _
  $region21: #{auxiliary_convolutions.12} parent=0 // pred_fallthru
    _

// kernel: auxiliary_convolutions.11
$region0: #{auxiliary_convolutions.11}
  #allocation0 [shape = 'u32[]', space=smem, size = 0x4, offset = 0x4, fixed_abs, tag = 'smem constant byte address 0x4 - core index']
  #allocation1 [shape = 'u32[144,128]{1,0:T(1,128)}', space=vmem, size = 0x12000, scoped, tag = 'internal scratch']
  %s0 = inlined_call_operand.vmem [shape: f32[56,1152], index: 0, kind: input, shape index: {}]
  %s1 = inlined_call_operand.vmem [shape: f32[1152,256], index: 1, kind: input, shape index: {}]
  %s2 = inlined_call_operand.vmem [shape: f32[1,256], index: 2, kind: input, shape index: {}]
  %s3 = inlined_call_operand.vmem [shape: f32[56,256], index: 3, kind: output, shape index: {}]
  %s4 = sld [smem:[#allocation0]]
  $region22: #{auxiliary_convolutions.11} parent=0
    _
  %s6 = ssub.s32 1, %s4
  %s7 = scalar_select 0, %s6, %s4
  // Predicated region
  $region2: #{auxiliary_convolutions.11} parent=0 // pred_check
    _
  $region3: #{auxiliary_convolutions.11} parent=0 // pred_check_branch
    %9 = sbr.rel (0) target = $region5
  $region4: #{auxiliary_convolutions.11} parent=0 // pred_region
    _
  $region5: #{auxiliary_convolutions.11} parent=0 // pred_fallthru
    _
  // Predicated region
  $region6: #{auxiliary_convolutions.11} parent=0 // pred_check
    _
  $region7: #{auxiliary_convolutions.11} parent=0 // pred_check_branch
    %11 = sbr.rel (0) target = $region9
  $region8: #{auxiliary_convolutions.11} parent=0 // pred_region
    _
  $region9: #{auxiliary_convolutions.11} parent=0 // pred_fallthru
    _
  // Predicated region
  $region10: #{auxiliary_convolutions.11} parent=0 // pred_check
    _
  $region11: #{auxiliary_convolutions.11} parent=0 // pred_check_branch
    %13 = sbr.rel (0) target = $region13
  $region12: #{auxiliary_convolutions.11} parent=0 // pred_region
    _
  $region13: #{auxiliary_convolutions.11} parent=0 // pred_fallthru
    _
  %v14 = vld [vmem:[%s0] sm:$0xff]
  %v15 = vld [vmem:[%s0 + $0x8] sm:$0xff]
  %v16 = vld [vmem:[%s0 + $0x10] sm:$0xff]
  %v17 = vld [vmem:[%s0 + $0x18] sm:$0xff]
  %v18 = vld [vmem:[%s0 + $0x20] sm:$0xff]
  %v19 = vld [vmem:[%s0 + $0x28] sm:$0xff]
  %v20 = vld [vmem:[%s0 + $0x30] sm:$0xff]
  %v21 = vld [vmem:[%s0 + $0x38] sm:$0xff]
  %v22 = vld [vmem:[%s0 + $0x40] sm:$0xff]
  %v23 = vld [vmem:[%s0 + $0x48] sm:$0xff]
  %v24 = vld [vmem:[%s0 + $0x50] sm:$0xff]
  %v25 = vld [vmem:[%s0 + $0x58] sm:$0xff]
  %v26 = vld [vmem:[%s0 + $0x60] sm:$0xff]
  %v27 = vld [vmem:[%s0 + $0x68] sm:$0xff]
  %v28 = vld [vmem:[%s0 + $0x70] sm:$0xff]
  %v29 = vld [vmem:[%s0 + $0x78] sm:$0xff]
  %v30 = vld [vmem:[%s0 + $0x80] sm:$0xff]
  %v31 = vld [vmem:[%s0 + $0x88] sm:$0xff]
  %v32 = vld [vmem:[%s0 + $0x90] sm:$0xff]
  %v33 = vld [vmem:[%s0 + $0x98] sm:$0xff]
  %v34 = vld [vmem:[%s0 + $0xa0] sm:$0xff]
  %v35 = vld [vmem:[%s0 + $0xa8] sm:$0xff]
  %v36 = vld [vmem:[%s0 + $0xb0] sm:$0xff]
  %v37 = vld [vmem:[%s0 + $0xb8] sm:$0xff]
  %v38 = vld [vmem:[%s0 + $0xc0] sm:$0xff]
  %v39 = vld [vmem:[%s0 + $0xc8] sm:$0xff]
  %v40 = vld [vmem:[%s0 + $0xd0] sm:$0xff]
  %v41 = vld [vmem:[%s0 + $0xd8] sm:$0xff]
  %v42 = vld [vmem:[%s0 + $0xe0] sm:$0xff]
  %v43 = vld [vmem:[%s0 + $0xe8] sm:$0xff]
  %v44 = vld [vmem:[%s0 + $0xf0] sm:$0xff]
  %v45 = vld [vmem:[%s0 + $0xf8] sm:$0xff]
  %v46 = vld [vmem:[%s0 + $0x100] sm:$0xff]
  %v47 = vld [vmem:[%s0 + $0x108] sm:$0xff]
  %v48 = vld [vmem:[%s0 + $0x110] sm:$0xff]
  %v49 = vld [vmem:[%s0 + $0x118] sm:$0xff]
  %v50 = vld [vmem:[%s0 + $0x120] sm:$0xff]
  %v51 = vld [vmem:[%s0 + $0x128] sm:$0xff]
  %v52 = vld [vmem:[%s0 + $0x130] sm:$0xff]
  %v53 = vld [vmem:[%s0 + $0x138] sm:$0xff]
  %v54 = vld [vmem:[%s0 + $0x140] sm:$0xff]
  %v55 = vld [vmem:[%s0 + $0x148] sm:$0xff]
  %v56 = vld [vmem:[%s0 + $0x150] sm:$0xff]
  %v57 = vld [vmem:[%s0 + $0x158] sm:$0xff]
  %v58 = vld [vmem:[%s0 + $0x160] sm:$0xff]
  %v59 = vld [vmem:[%s0 + $0x168] sm:$0xff]
  %v60 = vld [vmem:[%s0 + $0x170] sm:$0xff]
  %v61 = vld [vmem:[%s0 + $0x178] sm:$0xff]
  %v62 = vld [vmem:[%s0 + $0x180] sm:$0xff]
  %v63 = vld [vmem:[%s0 + $0x188] sm:$0xff]
  %v64 = vld [vmem:[%s0 + $0x190] sm:$0xff]
  %v65 = vld [vmem:[%s0 + $0x198] sm:$0xff]
  %v66 = vld [vmem:[%s0 + $0x1a0] sm:$0xff]
  %v67 = vld [vmem:[%s0 + $0x1a8] sm:$0xff]
  %v68 = vld [vmem:[%s0 + $0x1b0] sm:$0xff]
  %v69 = vld [vmem:[%s0 + $0x1b8] sm:$0xff]
  %v70 = vld [vmem:[%s0 + $0x1c0] sm:$0xff]
  %v71 = vld [vmem:[%s0 + $0x1c8] sm:$0xff]
  %v72 = vld [vmem:[%s0 + $0x1d0] sm:$0xff]
  %v73 = vld [vmem:[%s0 + $0x1d8] sm:$0xff]
  %v74 = vld [vmem:[%s0 + $0x1e0] sm:$0xff]
  %v75 = vld [vmem:[%s0 + $0x1e8] sm:$0xff]
  %v76 = vld [vmem:[%s0 + $0x1f0] sm:$0xff]
  %v77 = vld [vmem:[%s1] sm:$0xff]
  %v78 = vld [vmem:[%s1 + $0x8] sm:$0xff]
  %v79 = vld [vmem:[%s1 + $0x10] sm:$0xff]
  %v80 = vld [vmem:[%s1 + $0x18] sm:$0xff]
  %v81 = vld [vmem:[%s1 + $0x20] sm:$0xff]
  %v82 = vld [vmem:[%s1 + $0x28] sm:$0xff]
  %v83 = vld [vmem:[%s1 + $0x30] sm:$0xff]
  %v84 = vld [vmem:[%s1 + $0x38] sm:$0xff]
  %v85 = vld [vmem:[%s1 + $0x40] sm:$0xff]
  %v86 = vld [vmem:[%s1 + $0x48] sm:$0xff]
  %v87 = vld [vmem:[%s1 + $0x50] sm:$0xff]
  %v88 = vld [vmem:[%s1 + $0x58] sm:$0xff]
  %v89 = vld [vmem:[%s1 + $0x60] sm:$0xff]
  %v90 = vld [vmem:[%s1 + $0x68] sm:$0xff]
  %v91 = vld [vmem:[%s1 + $0x70] sm:$0xff]
  %v92 = vld [vmem:[%s1 + $0x78] sm:$0xff]
  %v93 = vld [vmem:[%s1 + $0x80] sm:$0xff]
  %v94 = vld [vmem:[%s1 + $0x88] sm:$0xff]
  %v95 = vld [vmem:[%s1 + $0x90] sm:$0xff]
  %v96 = vld [vmem:[%s1 + $0x98] sm:$0xff]
  %v97 = vld [vmem:[%s1 + $0xa0] sm:$0xff]
  %v98 = vld [vmem:[%s1 + $0xa8] sm:$0xff]
  %v99 = vld [vmem:[%s1 + $0xb0] sm:$0xff]
  %v100 = vld [vmem:[%s1 + $0xb8] sm:$0xff]
  %v101 = vld [vmem:[%s1 + $0xc0] sm:$0xff]
  %v102 = vld [vmem:[%s1 + $0xc8] sm:$0xff]
  %v103 = vld [vmem:[%s1 + $0xd0] sm:$0xff]
  %v104 = vld [vmem:[%s1 + $0xd8] sm:$0xff]
  %v105 = vld [vmem:[%s1 + $0xe0] sm:$0xff]
  %v106 = vld [vmem:[%s1 + $0xe8] sm:$0xff]
  %v107 = vld [vmem:[%s1 + $0xf0] sm:$0xff]
  %v108 = vld [vmem:[%s1 + $0xf8] sm:$0xff]
  %v109 = vld [vmem:[%s1 + $0x100] sm:$0xff]
  %v110 = vld [vmem:[%s1 + $0x108] sm:$0xff]
  %v111 = vld [vmem:[%s1 + $0x110] sm:$0xff]
  %v112 = vld [vmem:[%s1 + $0x118] sm:$0xff]
  %v113 = vld [vmem:[%s1 + $0x120] sm:$0xff]
  %v114 = vld [vmem:[%s1 + $0x128] sm:$0xff]
  %v115 = vld [vmem:[%s1 + $0x130] sm:$0xff]
  %v116 = vld [vmem:[%s1 + $0x138] sm:$0xff]
  %v117 = vld [vmem:[%s1 + $0x140] sm:$0xff]
  %v118 = vld [vmem:[%s1 + $0x148] sm:$0xff]
  %v119 = vld [vmem:[%s1 + $0x150] sm:$0xff]
  %v120 = vld [vmem:[%s1 + $0x158] sm:$0xff]
  %v121 = vld [vmem:[%s1 + $0x160] sm:$0xff]
  %v122 = vld [vmem:[%s1 + $0x168] sm:$0xff]
  %v123 = vld [vmem:[%s1 + $0x170] sm:$0xff]
  %v124 = vld [vmem:[%s1 + $0x178] sm:$0xff]
  %v125 = vld [vmem:[%s1 + $0x180] sm:$0xff]
  %v126 = vld [vmem:[%s1 + $0x188] sm:$0xff]
  %v127 = vld [vmem:[%s1 + $0x190] sm:$0xff]
  %v128 = vld [vmem:[%s1 + $0x198] sm:$0xff]
  %v129 = vld [vmem:[%s1 + $0x1a0] sm:$0xff]
  %v130 = vld [vmem:[%s1 + $0x1a8] sm:$0xff]
  %v131 = vld [vmem:[%s1 + $0x1b0] sm:$0xff]
  %v132 = vld [vmem:[%s1 + $0x1b8] sm:$0xff]
  %v133 = vld [vmem:[%s1 + $0x1c0] sm:$0xff]
  %v134 = vld [vmem:[%s1 + $0x1c8] sm:$0xff]
  %v135 = vld [vmem:[%s1 + $0x1d0] sm:$0xff]
  %v136 = vld [vmem:[%s1 + $0x1d8] sm:$0xff]
  %v137 = vld [vmem:[%s1 + $0x1e0] sm:$0xff]
  %v138 = vld [vmem:[%s1 + $0x1e8] sm:$0xff]
  %v139 = vld [vmem:[%s1 + $0x1f0] sm:$0xff]
  %v140 = vld [vmem:[%s1 + $0x1f8] sm:$0xff]
  %v141 = vld [vmem:[%s1 + $0x200] sm:$0xff]
  %v142 = vld [vmem:[%s1 + $0x208] sm:$0xff]
  %v143 = vld [vmem:[%s1 + $0x210] sm:$0xff]
  %v144 = vld [vmem:[%s1 + $0x218] sm:$0xff]
  %v145 = vld [vmem:[%s1 + $0x220] sm:$0xff]
  %v146 = vld [vmem:[%s1 + $0x228] sm:$0xff]
  %v147 = vld [vmem:[%s1 + $0x230] sm:$0xff]
  %v148 = vld [vmem:[%s1 + $0x238] sm:$0xff]
  %v149 = vld [vmem:[%s1 + $0x240] sm:$0xff]
  %v150 = vld [vmem:[%s1 + $0x248] sm:$0xff]
  %v151 = vld [vmem:[%s1 + $0x250] sm:$0xff]
  %v152 = vld [vmem:[%s1 + $0x258] sm:$0xff]
  %v153 = vld [vmem:[%s1 + $0x260] sm:$0xff]
  %v154 = vld [vmem:[%s1 + $0x268] sm:$0xff]
  %v155 = vld [vmem:[%s1 + $0x270] sm:$0xff]
  %v156 = vld [vmem:[%s1 + $0x278] sm:$0xff]
  %v157 = vld [vmem:[%s1 + $0x280] sm:$0xff]
  %v158 = vld [vmem:[%s1 + $0x288] sm:$0xff]
  %v159 = vld [vmem:[%s1 + $0x290] sm:$0xff]
  %v160 = vld [vmem:[%s1 + $0x298] sm:$0xff]
  %v161 = vld [vmem:[%s1 + $0x2a0] sm:$0xff]
  %v162 = vld [vmem:[%s1 + $0x2a8] sm:$0xff]
  %v163 = vld [vmem:[%s1 + $0x2b0] sm:$0xff]
  %v164 = vld [vmem:[%s1 + $0x2b8] sm:$0xff]
  %v165 = vld [vmem:[%s1 + $0x2c0] sm:$0xff]
  %v166 = vld [vmem:[%s1 + $0x2c8] sm:$0xff]
  %v167 = vld [vmem:[%s1 + $0x2d0] sm:$0xff]
  %v168 = vld [vmem:[%s1 + $0x2d8] sm:$0xff]
  %v169 = vld [vmem:[%s1 + $0x2e0] sm:$0xff]
  %v170 = vld [vmem:[%s1 + $0x2e8] sm:$0xff]
  %v171 = vld [vmem:[%s1 + $0x2f0] sm:$0xff]
  %v172 = vld [vmem:[%s1 + $0x2f8] sm:$0xff]
  %v173 = vld [vmem:[%s1 + $0x300] sm:$0xff]
  %v174 = vld [vmem:[%s1 + $0x308] sm:$0xff]
  %v175 = vld [vmem:[%s1 + $0x310] sm:$0xff]
  %v176 = vld [vmem:[%s1 + $0x318] sm:$0xff]
  %v177 = vld [vmem:[%s1 + $0x320] sm:$0xff]
  %v178 = vld [vmem:[%s1 + $0x328] sm:$0xff]
  %v179 = vld [vmem:[%s1 + $0x330] sm:$0xff]
  %v180 = vld [vmem:[%s1 + $0x338] sm:$0xff]
  %v181 = vld [vmem:[%s1 + $0x340] sm:$0xff]
  %v182 = vld [vmem:[%s1 + $0x348] sm:$0xff]
  %v183 = vld [vmem:[%s1 + $0x350] sm:$0xff]
  %v184 = vld [vmem:[%s1 + $0x358] sm:$0xff]
  %v185 = vld [vmem:[%s1 + $0x360] sm:$0xff]
  %v186 = vld [vmem:[%s1 + $0x368] sm:$0xff]
  %v187 = vld [vmem:[%s1 + $0x370] sm:$0xff]
  %v188 = vld [vmem:[%s1 + $0x378] sm:$0xff]
  %v189 = vld [vmem:[%s1 + $0x380] sm:$0xff]
  %v190 = vld [vmem:[%s1 + $0x388] sm:$0xff]
  %v191 = vld [vmem:[%s1 + $0x390] sm:$0xff]
  %v192 = vld [vmem:[%s1 + $0x398] sm:$0xff]
  %v193 = vld [vmem:[%s1 + $0x3a0] sm:$0xff]
  %v194 = vld [vmem:[%s1 + $0x3a8] sm:$0xff]
  %v195 = vld [vmem:[%s1 + $0x3b0] sm:$0xff]
  %v196 = vld [vmem:[%s1 + $0x3b8] sm:$0xff]
  %v197 = vld [vmem:[%s1 + $0x3c0] sm:$0xff]
  %v198 = vld [vmem:[%s1 + $0x3c8] sm:$0xff]
  %v199 = vld [vmem:[%s1 + $0x3d0] sm:$0xff]
  %v200 = vld [vmem:[%s1 + $0x3d8] sm:$0xff]
  %v201 = vld [vmem:[%s1 + $0x3e0] sm:$0xff]
  %v202 = vld [vmem:[%s1 + $0x3e8] sm:$0xff]
  %v203 = vld [vmem:[%s1 + $0x3f0] sm:$0xff]
  %v204 = vld [vmem:[%s1 + $0x3f8] sm:$0xff]
  %v205 = vld [vmem:[%s1 + $0x400] sm:$0xff]
  %v206 = vld [vmem:[%s1 + $0x408] sm:$0xff]
  %v207 = vld [vmem:[%s1 + $0x410] sm:$0xff]
  %v208 = vld [vmem:[%s1 + $0x418] sm:$0xff]
  %v209 = vld [vmem:[%s1 + $0x420] sm:$0xff]
  %v210 = vld [vmem:[%s1 + $0x428] sm:$0xff]
  %v211 = vld [vmem:[%s1 + $0x430] sm:$0xff]
  %v212 = vld [vmem:[%s1 + $0x438] sm:$0xff]
  %v213 = vld [vmem:[%s1 + $0x440] sm:$0xff]
  %v214 = vld [vmem:[%s1 + $0x448] sm:$0xff]
  %v215 = vld [vmem:[%s1 + $0x450] sm:$0xff]
  %v216 = vld [vmem:[%s1 + $0x458] sm:$0xff]
  %v217 = vld [vmem:[%s1 + $0x460] sm:$0xff]
  %v218 = vld [vmem:[%s1 + $0x468] sm:$0xff]
  %v219 = vld [vmem:[%s1 + $0x470] sm:$0xff]
  %v220 = vld [vmem:[%s1 + $0x478] sm:$0xff]
  %v221 = vld [vmem:[%s1 + $0x480] sm:$0xff]
  %v222 = vld [vmem:[%s1 + $0x488] sm:$0xff]
  %v223 = vld [vmem:[%s1 + $0x490] sm:$0xff]
  %v224 = vld [vmem:[%s1 + $0x498] sm:$0xff]
  %v225 = vld [vmem:[%s1 + $0x4a0] sm:$0xff]
  %v226 = vld [vmem:[%s1 + $0x4a8] sm:$0xff]
  %v227 = vld [vmem:[%s1 + $0x4b0] sm:$0xff]
  %v228 = vld [vmem:[%s1 + $0x4b8] sm:$0xff]
  %v229 = vld [vmem:[%s1 + $0x4c0] sm:$0xff]
  %v230 = vld [vmem:[%s1 + $0x4c8] sm:$0xff]
  %v231 = vld [vmem:[%s1 + $0x4d0] sm:$0xff]
  %v232 = vld [vmem:[%s1 + $0x4d8] sm:$0xff]
  %v233 = vld [vmem:[%s1 + $0x4e0] sm:$0xff]
  %v234 = vld [vmem:[%s1 + $0x4e8] sm:$0xff]
  %v235 = vld [vmem:[%s1 + $0x4f0] sm:$0xff]
  %v236 = vld [vmem:[%s1 + $0x4f8] sm:$0xff]
  %v237 = vld [vmem:[%s1 + $0x500] sm:$0xff]
  %v238 = vld [vmem:[%s1 + $0x508] sm:$0xff]
  %v239 = vld [vmem:[%s1 + $0x510] sm:$0xff]
  %v240 = vld [vmem:[%s1 + $0x518] sm:$0xff]
  %v241 = vld [vmem:[%s1 + $0x520] sm:$0xff]
  %v242 = vld [vmem:[%s1 + $0x528] sm:$0xff]
  %v243 = vld [vmem:[%s1 + $0x530] sm:$0xff]
  %v244 = vld [vmem:[%s1 + $0x538] sm:$0xff]
  %v245 = vld [vmem:[%s1 + $0x540] sm:$0xff]
  %v246 = vld [vmem:[%s1 + $0x548] sm:$0xff]
  %v247 = vld [vmem:[%s1 + $0x550] sm:$0xff]
  %v248 = vld [vmem:[%s1 + $0x558] sm:$0xff]
  %v249 = vld [vmem:[%s1 + $0x560] sm:$0xff]
  %v250 = vld [vmem:[%s1 + $0x568] sm:$0xff]
  %v251 = vld [vmem:[%s1 + $0x570] sm:$0xff]
  %v252 = vld [vmem:[%s1 + $0x578] sm:$0xff]
  %v253 = vld [vmem:[%s1 + $0x580] sm:$0xff]
  %v254 = vld [vmem:[%s1 + $0x588] sm:$0xff]
  %v255 = vld [vmem:[%s1 + $0x590] sm:$0xff]
  %v256 = vld [vmem:[%s1 + $0x598] sm:$0xff]
  %v257 = vld [vmem:[%s1 + $0x5a0] sm:$0xff]
  %v258 = vld [vmem:[%s1 + $0x5a8] sm:$0xff]
  %v259 = vld [vmem:[%s1 + $0x5b0] sm:$0xff]
  %v260 = vld [vmem:[%s1 + $0x5b8] sm:$0xff]
  %v261 = vld [vmem:[%s1 + $0x5c0] sm:$0xff]
  %v262 = vld [vmem:[%s1 + $0x5c8] sm:$0xff]
  %v263 = vld [vmem:[%s1 + $0x5d0] sm:$0xff]
  %v264 = vld [vmem:[%s1 + $0x5d8] sm:$0xff]
  %v265 = vld [vmem:[%s1 + $0x5e0] sm:$0xff]
  %v266 = vld [vmem:[%s1 + $0x5e8] sm:$0xff]
  %v267 = vld [vmem:[%s1 + $0x5f0] sm:$0xff]
  %v268 = vld [vmem:[%s1 + $0x5f8] sm:$0xff]
  %v269 = vld [vmem:[%s1 + $0x600] sm:$0xff]
  %v270 = vld [vmem:[%s1 + $0x608] sm:$0xff]
  %v271 = vld [vmem:[%s1 + $0x610] sm:$0xff]
  %v272 = vld [vmem:[%s1 + $0x618] sm:$0xff]
  %v273 = vld [vmem:[%s1 + $0x620] sm:$0xff]
  %v274 = vld [vmem:[%s1 + $0x628] sm:$0xff]
  %v275 = vld [vmem:[%s1 + $0x630] sm:$0xff]
  %v276 = vld [vmem:[%s1 + $0x638] sm:$0xff]
  %v277 = vld [vmem:[%s1 + $0x640] sm:$0xff]
  %v278 = vld [vmem:[%s1 + $0x648] sm:$0xff]
  %v279 = vld [vmem:[%s1 + $0x650] sm:$0xff]
  %v280 = vld [vmem:[%s1 + $0x658] sm:$0xff]
  %v281 = vld [vmem:[%s1 + $0x660] sm:$0xff]
  %v282 = vld [vmem:[%s1 + $0x668] sm:$0xff]
  %v283 = vld [vmem:[%s1 + $0x670] sm:$0xff]
  %v284 = vld [vmem:[%s1 + $0x678] sm:$0xff]
  %v285 = vld [vmem:[%s1 + $0x680] sm:$0xff]
  %v286 = vld [vmem:[%s1 + $0x688] sm:$0xff]
  %v287 = vld [vmem:[%s1 + $0x690] sm:$0xff]
  %v288 = vld [vmem:[%s1 + $0x698] sm:$0xff]
  %v289 = vld [vmem:[%s1 + $0x6a0] sm:$0xff]
  %v290 = vld [vmem:[%s1 + $0x6a8] sm:$0xff]
  %v291 = vld [vmem:[%s1 + $0x6b0] sm:$0xff]
  %v292 = vld [vmem:[%s1 + $0x6b8] sm:$0xff]
  %v293 = vld [vmem:[%s1 + $0x6c0] sm:$0xff]
  %v294 = vld [vmem:[%s1 + $0x6c8] sm:$0xff]
  %v295 = vld [vmem:[%s1 + $0x6d0] sm:$0xff]
  %v296 = vld [vmem:[%s1 + $0x6d8] sm:$0xff]
  %v297 = vld [vmem:[%s1 + $0x6e0] sm:$0xff]
  %v298 = vld [vmem:[%s1 + $0x6e8] sm:$0xff]
  %v299 = vld [vmem:[%s1 + $0x6f0] sm:$0xff]
  %v300 = vld [vmem:[%s1 + $0x6f8] sm:$0xff]
  %v301 = vld [vmem:[%s1 + $0x700] sm:$0xff]
  %v302 = vld [vmem:[%s1 + $0x708] sm:$0xff]
  %v303 = vld [vmem:[%s1 + $0x710] sm:$0xff]
  %v304 = vld [vmem:[%s1 + $0x718] sm:$0xff]
  %v305 = vld [vmem:[%s1 + $0x720] sm:$0xff]
  %v306 = vld [vmem:[%s1 + $0x728] sm:$0xff]
  %v307 = vld [vmem:[%s1 + $0x730] sm:$0xff]
  %v308 = vld [vmem:[%s1 + $0x738] sm:$0xff]
  %v309 = vld [vmem:[%s1 + $0x740] sm:$0xff]
  %v310 = vld [vmem:[%s1 + $0x748] sm:$0xff]
  %v311 = vld [vmem:[%s1 + $0x750] sm:$0xff]
  %v312 = vld [vmem:[%s1 + $0x758] sm:$0xff]
  %v313 = vld [vmem:[%s1 + $0x760] sm:$0xff]
  %v314 = vld [vmem:[%s1 + $0x768] sm:$0xff]
  %v315 = vld [vmem:[%s1 + $0x770] sm:$0xff]
  %v316 = vld [vmem:[%s1 + $0x778] sm:$0xff]
  %v317 = vld [vmem:[%s1 + $0x780] sm:$0xff]
  %v318 = vld [vmem:[%s1 + $0x788] sm:$0xff]
  %v319 = vld [vmem:[%s1 + $0x790] sm:$0xff]
  %v320 = vld [vmem:[%s1 + $0x798] sm:$0xff]
  %v321 = vld [vmem:[%s1 + $0x7a0] sm:$0xff]
  %v322 = vld [vmem:[%s1 + $0x7a8] sm:$0xff]
  %v323 = vld [vmem:[%s1 + $0x7b0] sm:$0xff]
  %v324 = vld [vmem:[%s1 + $0x7b8] sm:$0xff]
  %v325 = vld [vmem:[%s1 + $0x7c0] sm:$0xff]
  %v326 = vld [vmem:[%s1 + $0x7c8] sm:$0xff]
  %v327 = vld [vmem:[%s1 + $0x7d0] sm:$0xff]
  %v328 = vld [vmem:[%s1 + $0x7d8] sm:$0xff]
  %v329 = vld [vmem:[%s1 + $0x7e0] sm:$0xff]
  %v330 = vld [vmem:[%s1 + $0x7e8] sm:$0xff]
  %v331 = vld [vmem:[%s1 + $0x7f0] sm:$0xff]
  %v332 = vld [vmem:[%s1 + $0x7f8] sm:$0xff]
  %v333 = vld [vmem:[%s1 + $0x800] sm:$0xff]
  %v334 = vld [vmem:[%s1 + $0x808] sm:$0xff]
  %v335 = vld [vmem:[%s1 + $0x810] sm:$0xff]
  %v336 = vld [vmem:[%s1 + $0x818] sm:$0xff]
  %v337 = vld [vmem:[%s1 + $0x820] sm:$0xff]
  %v338 = vld [vmem:[%s1 + $0x828] sm:$0xff]
  %v339 = vld [vmem:[%s1 + $0x830] sm:$0xff]
  %v340 = vld [vmem:[%s1 + $0x838] sm:$0xff]
  %v341 = vld [vmem:[%s1 + $0x840] sm:$0xff]
  %v342 = vld [vmem:[%s1 + $0x848] sm:$0xff]
  %v343 = vld [vmem:[%s1 + $0x850] sm:$0xff]
  %v344 = vld [vmem:[%s1 + $0x858] sm:$0xff]
  %v345 = vld [vmem:[%s1 + $0x860] sm:$0xff]
  %v346 = vld [vmem:[%s1 + $0x868] sm:$0xff]
  %v347 = vld [vmem:[%s1 + $0x870] sm:$0xff]
  %v348 = vld [vmem:[%s1 + $0x878] sm:$0xff]
  %v349 = vld [vmem:[%s1 + $0x880] sm:$0xff]
  %v350 = vld [vmem:[%s1 + $0x888] sm:$0xff]
  %v351 = vld [vmem:[%s1 + $0x890] sm:$0xff]
  %v352 = vld [vmem:[%s1 + $0x898] sm:$0xff]
  %v353 = vld [vmem:[%s1 + $0x8a0] sm:$0xff]
  %v354 = vld [vmem:[%s1 + $0x8a8] sm:$0xff]
  %v355 = vld [vmem:[%s1 + $0x8b0] sm:$0xff]
  %v356 = vld [vmem:[%s1 + $0x8b8] sm:$0xff]
  %v357 = vld [vmem:[%s1 + $0x8c0] sm:$0xff]
  %v358 = vld [vmem:[%s1 + $0x8c8] sm:$0xff]
  %v359 = vld [vmem:[%s1 + $0x8d0] sm:$0xff]
  %v360 = vld [vmem:[%s1 + $0x8d8] sm:$0xff]
  %v361 = vld [vmem:[%s1 + $0x8e0] sm:$0xff]
  %v362 = vld [vmem:[%s1 + $0x8e8] sm:$0xff]
  %v363 = vld [vmem:[%s1 + $0x8f0] sm:$0xff]
  %v364 = vld [vmem:[%s1 + $0x8f8] sm:$0xff]
  %v365 = vld [vmem:[%s2] sm:$0x3]
  %v367 = vlaneseq
  %v368 = vshrl.u32 %v367, 7
  %v369 = vsub.s32 0, %v368
  %v370 = vrot.slane %v365, %v369
  %v371 = vlaneseq
  %v372 = vshrl.u32 %v371, 7
  %v373 = vsub.s32 1, %v372
  %v374 = vrot.slane %v365, %v373
  %377 = vmatprep.subr.mxu0 %v108
  %378 = vmatpush1.msra.mxu0 %v107
  %379 = vmatprep.subr.mxu0 %v106
  %380 = vmatpush1.msra.mxu0 %v105
  %381 = vmatprep.subr.mxu0 %v104
  %382 = vmatpush1.msra.mxu0 %v103
  %383 = vmatprep.subr.mxu0 %v102
  %384 = vmatpush1.msra.mxu0 %v101
  %385 = vmatprep.subr.mxu0 %v100
  %386 = vmatpush1.msra.mxu0 %v99
  %387 = vmatprep.subr.mxu0 %v98
  %388 = vmatpush1.msra.mxu0 %v97
  %389 = vmatprep.subr.mxu0 %v96
  %390 = vmatpush1.msra.mxu0 %v95
  %391 = vmatprep.subr.mxu0 %v94
  %392 = vmatpush1.msra.mxu0 %v93
  %393 = vmatprep.subr.mxu0 %v92
  %394 = vmatpush1.msra.mxu0 %v91
  %395 = vmatprep.subr.mxu0 %v90
  %396 = vmatpush1.msra.mxu0 %v89
  %397 = vmatprep.subr.mxu0 %v88
  %398 = vmatpush1.msra.mxu0 %v87
  %399 = vmatprep.subr.mxu0 %v86
  %400 = vmatpush1.msra.mxu0 %v85
  %401 = vmatprep.subr.mxu0 %v84
  %402 = vmatpush1.msra.mxu0 %v83
  %403 = vmatprep.subr.mxu0 %v82
  %404 = vmatpush1.msra.mxu0 %v81
  %405 = vmatprep.subr.mxu0 %v80
  %406 = vmatpush1.msra.mxu0 %v79
  %407 = vmatprep.subr.mxu0 %v78
  %408 = vmatpush1.msra.mxu0 %v77
  %409 = vmatprep.subr.mxu0 %v140
  %410 = vmatpush2.msra.mxu0 %v139
  %411 = vmatprep.subr.mxu0 %v138
  %412 = vmatpush2.msra.mxu0 %v137
  %413 = vmatprep.subr.mxu0 %v136
  %414 = vmatpush2.msra.mxu0 %v135
  %415 = vmatprep.subr.mxu0 %v134
  %416 = vmatpush2.msra.mxu0 %v133
  %417 = vmatprep.subr.mxu0 %v132
  %418 = vmatpush2.msra.mxu0 %v131
  %419 = vmatprep.subr.mxu0 %v130
  %420 = vmatpush2.msra.mxu0 %v129
  %421 = vmatprep.subr.mxu0 %v128
  %422 = vmatpush2.msra.mxu0 %v127
  %423 = vmatprep.subr.mxu0 %v126
  %424 = vmatpush2.msra.mxu0 %v125
  %425 = vmatprep.subr.mxu0 %v124
  %426 = vmatpush2.msra.mxu0 %v123
  %427 = vmatprep.subr.mxu0 %v122
  %428 = vmatpush2.msra.mxu0 %v121
  %429 = vmatprep.subr.mxu0 %v120
  %430 = vmatpush2.msra.mxu0 %v119
  %431 = vmatprep.subr.mxu0 %v118
  %432 = vmatpush2.msra.mxu0 %v117
  %433 = vmatprep.subr.mxu0 %v116
  %434 = vmatpush2.msra.mxu0 %v115
  %435 = vmatprep.subr.mxu0 %v114
  %436 = vmatpush2.msra.mxu0 %v113
  %437 = vmatprep.subr.mxu0 %v112
  %438 = vmatpush2.msra.mxu0 %v111
  %439 = vmatprep.subr.mxu0 %v110
  %440 = vmatpush2.msra.mxu0 %v109
  %441 = vmatprep.mubr.f32.mxu0 %v15
  %442 = vmatmul.mubr.f32.gmra.mxu0 %v14
  %v443 = vpop.f32.mrf.mxu0
  %v444 = vadd.f32 %v370, %v443
  %v445 = vpop.f32.mrf.mxu0
  %v446 = vadd.f32 %v374, %v445
  %447 = vmatprep.mubr.f32.mxu0 %v24
  %448 = vmatmul.mubr.f32.gmra.mxu0 %v23
  %v449 = vpop.f32.mrf.mxu0
  %v450 = vadd.f32 %v370, %v449
  %v451 = vpop.f32.mrf.mxu0
  %v452 = vadd.f32 %v374, %v451
  %453 = vmatprep.mubr.f32.mxu0 %v33
  %454 = vmatmul.mubr.f32.gmra.mxu0 %v32
  %v455 = vpop.f32.mrf.mxu0
  %v456 = vadd.f32 %v370, %v455
  %v457 = vpop.f32.mrf.mxu0
  %v458 = vadd.f32 %v374, %v457
  %459 = vmatprep.mubr.f32.mxu0 %v42
  %460 = vmatmul.mubr.f32.gmra.mxu0 %v41
  %v461 = vpop.f32.mrf.mxu0
  %v462 = vadd.f32 %v370, %v461
  %v463 = vpop.f32.mrf.mxu0
  %v464 = vadd.f32 %v374, %v463
  %465 = vmatprep.mubr.f32.mxu0 %v51
  %466 = vmatmul.mubr.f32.gmra.mxu0 %v50
  %v467 = vpop.f32.mrf.mxu0
  %v468 = vadd.f32 %v370, %v467
  %v469 = vpop.f32.mrf.mxu0
  %v470 = vadd.f32 %v374, %v469
  %471 = vmatprep.mubr.f32.mxu0 %v60
  %472 = vmatmul.mubr.f32.gmra.mxu0 %v59
  %v473 = vpop.f32.mrf.mxu0
  %v474 = vadd.f32 %v370, %v473
  %v475 = vpop.f32.mrf.mxu0
  %v476 = vadd.f32 %v374, %v475
  %477 = vmatprep.mubr.f32.mxu0 %v69
  %478 = vmatmul.mubr.f32.gmra.mxu0 %v68
  %v479 = vpop.f32.mrf.mxu0
  %v480 = vadd.f32 %v370, %v479
  %v481 = vpop.f32.mrf.mxu0
  %v482 = vadd.f32 %v374, %v481
  %483 = vdwg.mxu0
  %484 = vmatprep.subr.mxu0 %v172
  %485 = vmatpush1.msra.mxu0 %v171
  %486 = vmatprep.subr.mxu0 %v170
  %487 = vmatpush1.msra.mxu0 %v169
  %488 = vmatprep.subr.mxu0 %v168
  %489 = vmatpush1.msra.mxu0 %v167
  %490 = vmatprep.subr.mxu0 %v166
  %491 = vmatpush1.msra.mxu0 %v165
  %492 = vmatprep.subr.mxu0 %v164
  %493 = vmatpush1.msra.mxu0 %v163
  %494 = vmatprep.subr.mxu0 %v162
  %495 = vmatpush1.msra.mxu0 %v161
  %496 = vmatprep.subr.mxu0 %v160
  %497 = vmatpush1.msra.mxu0 %v159
  %498 = vmatprep.subr.mxu0 %v158
  %499 = vmatpush1.msra.mxu0 %v157
  %500 = vmatprep.subr.mxu0 %v156
  %501 = vmatpush1.msra.mxu0 %v155
  %502 = vmatprep.subr.mxu0 %v154
  %503 = vmatpush1.msra.mxu0 %v153
  %504 = vmatprep.subr.mxu0 %v152
  %505 = vmatpush1.msra.mxu0 %v151
  %506 = vmatprep.subr.mxu0 %v150
  %507 = vmatpush1.msra.mxu0 %v149
  %508 = vmatprep.subr.mxu0 %v148
  %509 = vmatpush1.msra.mxu0 %v147
  %510 = vmatprep.subr.mxu0 %v146
  %511 = vmatpush1.msra.mxu0 %v145
  %512 = vmatprep.subr.mxu0 %v144
  %513 = vmatpush1.msra.mxu0 %v143
  %514 = vmatprep.subr.mxu0 %v142
  %515 = vmatpush1.msra.mxu0 %v141
  %516 = vmatprep.subr.mxu0 %v204
  %517 = vmatpush2.msra.mxu0 %v203
  %518 = vmatprep.subr.mxu0 %v202
  %519 = vmatpush2.msra.mxu0 %v201
  %520 = vmatprep.subr.mxu0 %v200
  %521 = vmatpush2.msra.mxu0 %v199
  %522 = vmatprep.subr.mxu0 %v198
  %523 = vmatpush2.msra.mxu0 %v197
  %524 = vmatprep.subr.mxu0 %v196
  %525 = vmatpush2.msra.mxu0 %v195
  %526 = vmatprep.subr.mxu0 %v194
  %527 = vmatpush2.msra.mxu0 %v193
  %528 = vmatprep.subr.mxu0 %v192
  %529 = vmatpush2.msra.mxu0 %v191
  %530 = vmatprep.subr.mxu0 %v190
  %531 = vmatpush2.msra.mxu0 %v189
  %532 = vmatprep.subr.mxu0 %v188
  %533 = vmatpush2.msra.mxu0 %v187
  %534 = vmatprep.subr.mxu0 %v186
  %535 = vmatpush2.msra.mxu0 %v185
  %536 = vmatprep.subr.mxu0 %v184
  %537 = vmatpush2.msra.mxu0 %v183
  %538 = vmatprep.subr.mxu0 %v182
  %539 = vmatpush2.msra.mxu0 %v181
  %540 = vmatprep.subr.mxu0 %v180
  %541 = vmatpush2.msra.mxu0 %v179
  %542 = vmatprep.subr.mxu0 %v178
  %543 = vmatpush2.msra.mxu0 %v177
  %544 = vmatprep.subr.mxu0 %v176
  %545 = vmatpush2.msra.mxu0 %v175
  %546 = vmatprep.subr.mxu0 %v174
  %547 = vmatpush2.msra.mxu0 %v173
  %548 = vmatprep.mubr.f32.mxu0 %v17
  %549 = vmatmul.mubr.f32.gmra.mxu0 %v16
  %v550 = vpop.f32.mrf.mxu0
  %v551 = vadd.f32 %v444, %v550
  %v552 = vpop.f32.mrf.mxu0
  %v553 = vadd.f32 %v446, %v552
  %554 = vmatprep.mubr.f32.mxu0 %v26
  %555 = vmatmul.mubr.f32.gmra.mxu0 %v25
  %v556 = vpop.f32.mrf.mxu0
  %v557 = vadd.f32 %v450, %v556
  %v558 = vpop.f32.mrf.mxu0
  %v559 = vadd.f32 %v452, %v558
  %560 = vmatprep.mubr.f32.mxu0 %v35
  %561 = vmatmul.mubr.f32.gmra.mxu0 %v34
  %v562 = vpop.f32.mrf.mxu0
  %v563 = vadd.f32 %v456, %v562
  %v564 = vpop.f32.mrf.mxu0
  %v565 = vadd.f32 %v458, %v564
  %566 = vmatprep.mubr.f32.mxu0 %v44
  %567 = vmatmul.mubr.f32.gmra.mxu0 %v43
  %v568 = vpop.f32.mrf.mxu0
  %v569 = vadd.f32 %v462, %v568
  %v570 = vpop.f32.mrf.mxu0
  %v571 = vadd.f32 %v464, %v570
  %572 = vmatprep.mubr.f32.mxu0 %v53
  %573 = vmatmul.mubr.f32.gmra.mxu0 %v52
  %v574 = vpop.f32.mrf.mxu0
  %v575 = vadd.f32 %v468, %v574
  %v576 = vpop.f32.mrf.mxu0
  %v577 = vadd.f32 %v470, %v576
  %578 = vmatprep.mubr.f32.mxu0 %v62
  %579 = vmatmul.mubr.f32.gmra.mxu0 %v61
  %v580 = vpop.f32.mrf.mxu0
  %v581 = vadd.f32 %v474, %v580
  %v582 = vpop.f32.mrf.mxu0
  %v583 = vadd.f32 %v476, %v582
  %584 = vmatprep.mubr.f32.mxu0 %v71
  %585 = vmatmul.mubr.f32.gmra.mxu0 %v70
  %v586 = vpop.f32.mrf.mxu0
  %v587 = vadd.f32 %v480, %v586
  %v588 = vpop.f32.mrf.mxu0
  %v589 = vadd.f32 %v482, %v588
  %590 = vdwg.mxu0
  %591 = vmatprep.subr.mxu0 %v236
  %592 = vmatpush1.msra.mxu0 %v235
  %593 = vmatprep.subr.mxu0 %v234
  %594 = vmatpush1.msra.mxu0 %v233
  %595 = vmatprep.subr.mxu0 %v232
  %596 = vmatpush1.msra.mxu0 %v231
  %597 = vmatprep.subr.mxu0 %v230
  %598 = vmatpush1.msra.mxu0 %v229
  %599 = vmatprep.subr.mxu0 %v228
  %600 = vmatpush1.msra.mxu0 %v227
  %601 = vmatprep.subr.mxu0 %v226
  %602 = vmatpush1.msra.mxu0 %v225
  %603 = vmatprep.subr.mxu0 %v224
  %604 = vmatpush1.msra.mxu0 %v223
  %605 = vmatprep.subr.mxu0 %v222
  %606 = vmatpush1.msra.mxu0 %v221
  %607 = vmatprep.subr.mxu0 %v220
  %608 = vmatpush1.msra.mxu0 %v219
  %609 = vmatprep.subr.mxu0 %v218
  %610 = vmatpush1.msra.mxu0 %v217
  %611 = vmatprep.subr.mxu0 %v216
  %612 = vmatpush1.msra.mxu0 %v215
  %613 = vmatprep.subr.mxu0 %v214
  %614 = vmatpush1.msra.mxu0 %v213
  %615 = vmatprep.subr.mxu0 %v212
  %616 = vmatpush1.msra.mxu0 %v211
  %617 = vmatprep.subr.mxu0 %v210
  %618 = vmatpush1.msra.mxu0 %v209
  %619 = vmatprep.subr.mxu0 %v208
  %620 = vmatpush1.msra.mxu0 %v207
  %621 = vmatprep.subr.mxu0 %v206
  %622 = vmatpush1.msra.mxu0 %v205
  %623 = vmatprep.subr.mxu0 %v268
  %624 = vmatpush2.msra.mxu0 %v267
  %625 = vmatprep.subr.mxu0 %v266
  %626 = vmatpush2.msra.mxu0 %v265
  %627 = vmatprep.subr.mxu0 %v264
  %628 = vmatpush2.msra.mxu0 %v263
  %629 = vmatprep.subr.mxu0 %v262
  %630 = vmatpush2.msra.mxu0 %v261
  %631 = vmatprep.subr.mxu0 %v260
  %632 = vmatpush2.msra.mxu0 %v259
  %633 = vmatprep.subr.mxu0 %v258
  %634 = vmatpush2.msra.mxu0 %v257
  %635 = vmatprep.subr.mxu0 %v256
  %636 = vmatpush2.msra.mxu0 %v255
  %637 = vmatprep.subr.mxu0 %v254
  %638 = vmatpush2.msra.mxu0 %v253
  %639 = vmatprep.subr.mxu0 %v252
  %640 = vmatpush2.msra.mxu0 %v251
  %641 = vmatprep.subr.mxu0 %v250
  %642 = vmatpush2.msra.mxu0 %v249
  %643 = vmatprep.subr.mxu0 %v248
  %644 = vmatpush2.msra.mxu0 %v247
  %645 = vmatprep.subr.mxu0 %v246
  %646 = vmatpush2.msra.mxu0 %v245
  %647 = vmatprep.subr.mxu0 %v244
  %648 = vmatpush2.msra.mxu0 %v243
  %649 = vmatprep.subr.mxu0 %v242
  %650 = vmatpush2.msra.mxu0 %v241
  %651 = vmatprep.subr.mxu0 %v240
  %652 = vmatpush2.msra.mxu0 %v239
  %653 = vmatprep.subr.mxu0 %v238
  %654 = vmatpush2.msra.mxu0 %v237
  %655 = vmatprep.mubr.f32.mxu0 %v19
  %656 = vmatmul.mubr.f32.gmra.mxu0 %v18
  %v657 = vpop.f32.mrf.mxu0
  %v658 = vadd.f32 %v551, %v657
  %v659 = vpop.f32.mrf.mxu0
  %v660 = vadd.f32 %v553, %v659
  %661 = vmatprep.mubr.f32.mxu0 %v28
  %662 = vmatmul.mubr.f32.gmra.mxu0 %v27
  %v663 = vpop.f32.mrf.mxu0
  %v664 = vadd.f32 %v557, %v663
  %v665 = vpop.f32.mrf.mxu0
  %v666 = vadd.f32 %v559, %v665
  %667 = vmatprep.mubr.f32.mxu0 %v37
  %668 = vmatmul.mubr.f32.gmra.mxu0 %v36
  %v669 = vpop.f32.mrf.mxu0
  %v670 = vadd.f32 %v563, %v669
  %v671 = vpop.f32.mrf.mxu0
  %v672 = vadd.f32 %v565, %v671
  %673 = vmatprep.mubr.f32.mxu0 %v46
  %674 = vmatmul.mubr.f32.gmra.mxu0 %v45
  %v675 = vpop.f32.mrf.mxu0
  %v676 = vadd.f32 %v569, %v675
  %v677 = vpop.f32.mrf.mxu0
  %v678 = vadd.f32 %v571, %v677
  %679 = vmatprep.mubr.f32.mxu0 %v55
  %680 = vmatmul.mubr.f32.gmra.mxu0 %v54
  %v681 = vpop.f32.mrf.mxu0
  %v682 = vadd.f32 %v575, %v681
  %v683 = vpop.f32.mrf.mxu0
  %v684 = vadd.f32 %v577, %v683
  %685 = vmatprep.mubr.f32.mxu0 %v64
  %686 = vmatmul.mubr.f32.gmra.mxu0 %v63
  %v687 = vpop.f32.mrf.mxu0
  %v688 = vadd.f32 %v581, %v687
  %v689 = vpop.f32.mrf.mxu0
  %v690 = vadd.f32 %v583, %v689
  %691 = vmatprep.mubr.f32.mxu0 %v73
  %692 = vmatmul.mubr.f32.gmra.mxu0 %v72
  %v693 = vpop.f32.mrf.mxu0
  %v694 = vadd.f32 %v587, %v693
  %v695 = vpop.f32.mrf.mxu0
  %v696 = vadd.f32 %v589, %v695
  %697 = vdwg.mxu0
  %698 = vmatprep.subr.mxu0 %v300
  %699 = vmatpush1.msra.mxu0 %v299
  %700 = vmatprep.subr.mxu0 %v298
  %701 = vmatpush1.msra.mxu0 %v297
  %702 = vmatprep.subr.mxu0 %v296
  %703 = vmatpush1.msra.mxu0 %v295
  %704 = vmatprep.subr.mxu0 %v294
  %705 = vmatpush1.msra.mxu0 %v293
  %706 = vmatprep.subr.mxu0 %v292
  %707 = vmatpush1.msra.mxu0 %v291
  %708 = vmatprep.subr.mxu0 %v290
  %709 = vmatpush1.msra.mxu0 %v289
  %710 = vmatprep.subr.mxu0 %v288
  %711 = vmatpush1.msra.mxu0 %v287
  %712 = vmatprep.subr.mxu0 %v286
  %713 = vmatpush1.msra.mxu0 %v285
  %714 = vmatprep.subr.mxu0 %v284
  %715 = vmatpush1.msra.mxu0 %v283
  %716 = vmatprep.subr.mxu0 %v282
  %717 = vmatpush1.msra.mxu0 %v281
  %718 = vmatprep.subr.mxu0 %v280
  %719 = vmatpush1.msra.mxu0 %v279
  %720 = vmatprep.subr.mxu0 %v278
  %721 = vmatpush1.msra.mxu0 %v277
  %722 = vmatprep.subr.mxu0 %v276
  %723 = vmatpush1.msra.mxu0 %v275
  %724 = vmatprep.subr.mxu0 %v274
  %725 = vmatpush1.msra.mxu0 %v273
  %726 = vmatprep.subr.mxu0 %v272
  %727 = vmatpush1.msra.mxu0 %v271
  %728 = vmatprep.subr.mxu0 %v270
  %729 = vmatpush1.msra.mxu0 %v269
  %730 = vmatprep.subr.mxu0 %v332
  %731 = vmatpush2.msra.mxu0 %v331
  %732 = vmatprep.subr.mxu0 %v330
  %733 = vmatpush2.msra.mxu0 %v329
  %734 = vmatprep.subr.mxu0 %v328
  %735 = vmatpush2.msra.mxu0 %v327
  %736 = vmatprep.subr.mxu0 %v326
  %737 = vmatpush2.msra.mxu0 %v325
  %738 = vmatprep.subr.mxu0 %v324
  %739 = vmatpush2.msra.mxu0 %v323
  %740 = vmatprep.subr.mxu0 %v322
  %741 = vmatpush2.msra.mxu0 %v321
  %742 = vmatprep.subr.mxu0 %v320
  %743 = vmatpush2.msra.mxu0 %v319
  %744 = vmatprep.subr.mxu0 %v318
  %745 = vmatpush2.msra.mxu0 %v317
  %746 = vmatprep.subr.mxu0 %v316
  %747 = vmatpush2.msra.mxu0 %v315
  %748 = vmatprep.subr.mxu0 %v314
  %749 = vmatpush2.msra.mxu0 %v313
  %750 = vmatprep.subr.mxu0 %v312
  %751 = vmatpush2.msra.mxu0 %v311
  %752 = vmatprep.subr.mxu0 %v310
  %753 = vmatpush2.msra.mxu0 %v309
  %754 = vmatprep.subr.mxu0 %v308
  %755 = vmatpush2.msra.mxu0 %v307
  %756 = vmatprep.subr.mxu0 %v306
  %757 = vmatpush2.msra.mxu0 %v305
  %758 = vmatprep.subr.mxu0 %v304
  %759 = vmatpush2.msra.mxu0 %v303
  %760 = vmatprep.subr.mxu0 %v302
  %761 = vmatpush2.msra.mxu0 %v301
  %762 = vmatprep.mubr.f32.mxu0 %v21
  %763 = vmatmul.mubr.f32.gmra.mxu0 %v20
  %v764 = vpop.f32.mrf.mxu0
  %v765 = vadd.f32 %v658, %v764
  %v766 = vpop.f32.mrf.mxu0
  %v767 = vadd.f32 %v660, %v766
  %768 = vmatprep.mubr.f32.mxu0 %v30
  %769 = vmatmul.mubr.f32.gmra.mxu0 %v29
  %v770 = vpop.f32.mrf.mxu0
  %v771 = vadd.f32 %v664, %v770
  %v772 = vpop.f32.mrf.mxu0
  %v773 = vadd.f32 %v666, %v772
  %774 = vmatprep.mubr.f32.mxu0 %v39
  %775 = vmatmul.mubr.f32.gmra.mxu0 %v38
  %v776 = vpop.f32.mrf.mxu0
  %v777 = vadd.f32 %v670, %v776
  %v778 = vpop.f32.mrf.mxu0
  %v779 = vadd.f32 %v672, %v778
  %780 = vmatprep.mubr.f32.mxu0 %v48
  %781 = vmatmul.mubr.f32.gmra.mxu0 %v47
  %v782 = vpop.f32.mrf.mxu0
  %v783 = vadd.f32 %v676, %v782
  %v784 = vpop.f32.mrf.mxu0
  %v785 = vadd.f32 %v678, %v784
  %786 = vmatprep.mubr.f32.mxu0 %v57
  %787 = vmatmul.mubr.f32.gmra.mxu0 %v56
  %v788 = vpop.f32.mrf.mxu0
  %v789 = vadd.f32 %v682, %v788
  %v790 = vpop.f32.mrf.mxu0
  %v791 = vadd.f32 %v684, %v790
  %792 = vmatprep.mubr.f32.mxu0 %v66
  %793 = vmatmul.mubr.f32.gmra.mxu0 %v65
  %v794 = vpop.f32.mrf.mxu0
  %v795 = vadd.f32 %v688, %v794
  %v796 = vpop.f32.mrf.mxu0
  %v797 = vadd.f32 %v690, %v796
  %798 = vmatprep.mubr.f32.mxu0 %v75
  %799 = vmatmul.mubr.f32.gmra.mxu0 %v74
  %v800 = vpop.f32.mrf.mxu0
  %v801 = vadd.f32 %v694, %v800
  %v802 = vpop.f32.mrf.mxu0
  %v803 = vadd.f32 %v696, %v802
  %804 = vdwg.mxu0
  %805 = vmatprep.subr.mxu0 %v364
  %806 = vmatpush1.msra.mxu0 %v363
  %807 = vmatprep.subr.mxu0 %v362
  %808 = vmatpush1.msra.mxu0 %v361
  %809 = vmatprep.subr.mxu0 %v360
  %810 = vmatpush1.msra.mxu0 %v359
  %811 = vmatprep.subr.mxu0 %v358
  %812 = vmatpush1.msra.mxu0 %v357
  %813 = vmatprep.subr.mxu0 %v356
  %814 = vmatpush1.msra.mxu0 %v355
  %815 = vmatprep.subr.mxu0 %v354
  %816 = vmatpush1.msra.mxu0 %v353
  %817 = vmatprep.subr.mxu0 %v352
  %818 = vmatpush1.msra.mxu0 %v351
  %819 = vmatprep.subr.mxu0 %v350
  %820 = vmatpush1.msra.mxu0 %v349
  %821 = vmatprep.subr.mxu0 %v348
  %822 = vmatpush1.msra.mxu0 %v347
  %823 = vmatprep.subr.mxu0 %v346
  %824 = vmatpush1.msra.mxu0 %v345
  %825 = vmatprep.subr.mxu0 %v344
  %826 = vmatpush1.msra.mxu0 %v343
  %827 = vmatprep.subr.mxu0 %v342
  %828 = vmatpush1.msra.mxu0 %v341
  %829 = vmatprep.subr.mxu0 %v340
  %830 = vmatpush1.msra.mxu0 %v339
  %831 = vmatprep.subr.mxu0 %v338
  %832 = vmatpush1.msra.mxu0 %v337
  %833 = vmatprep.subr.mxu0 %v336
  %834 = vmatpush1.msra.mxu0 %v335
  %835 = vmatprep.subr.mxu0 %v334
  %836 = vmatpush1.msra.mxu0 %v333
  %837 = vmatprep.subr.mxu0 0.0
  %838 = vmatpush2.msra.mxu0 0.0
  %839 = vmatprep.subr.mxu0 0.0
  %840 = vmatpush2.msra.mxu0 0.0
  %841 = vmatprep.subr.mxu0 0.0
  %842 = vmatpush2.msra.mxu0 0.0
  %843 = vmatprep.subr.mxu0 0.0
  %844 = vmatpush2.msra.mxu0 0.0
  %845 = vmatprep.subr.mxu0 0.0
  %846 = vmatpush2.msra.mxu0 0.0
  %847 = vmatprep.subr.mxu0 0.0
  %848 = vmatpush2.msra.mxu0 0.0
  %849 = vmatprep.subr.mxu0 0.0
  %850 = vmatpush2.msra.mxu0 0.0
  %851 = vmatprep.subr.mxu0 0.0
  %852 = vmatpush2.msra.mxu0 0.0
  %853 = vmatprep.subr.mxu0 0.0
  %854 = vmatpush2.msra.mxu0 0.0
  %855 = vmatprep.subr.mxu0 0.0
  %856 = vmatpush2.msra.mxu0 0.0
  %857 = vmatprep.subr.mxu0 0.0
  %858 = vmatpush2.msra.mxu0 0.0
  %859 = vmatprep.subr.mxu0 0.0
  %860 = vmatpush2.msra.mxu0 0.0
  %861 = vmatprep.subr.mxu0 0.0
  %862 = vmatpush2.msra.mxu0 0.0
  %863 = vmatprep.subr.mxu0 0.0
  %864 = vmatpush2.msra.mxu0 0.0
  %865 = vmatprep.subr.mxu0 0.0
  %866 = vmatpush2.msra.mxu0 0.0
  %867 = vmatprep.subr.mxu0 0.0
  %868 = vmatpush2.msra.mxu0 0.0
  %869 = vmatprep.mubr.f32.mxu0 0.0
  %870 = vmatmul.mubr.f32.gmra.mxu0 %v22
  %v871 = vpop.f32.mrf.mxu0
  %v872 = vadd.f32 %v765, %v871
  %v873 = vpop.f32.mrf.mxu0
  %v874 = vadd.f32 %v767, %v873
  %875 = vmatprep.mubr.f32.mxu0 0.0
  %876 = vmatmul.mubr.f32.gmra.mxu0 %v31
  %v877 = vpop.f32.mrf.mxu0
  %v878 = vadd.f32 %v771, %v877
  %v879 = vpop.f32.mrf.mxu0
  %v880 = vadd.f32 %v773, %v879
  %881 = vmatprep.mubr.f32.mxu0 0.0
  %882 = vmatmul.mubr.f32.gmra.mxu0 %v40
  %v883 = vpop.f32.mrf.mxu0
  %v884 = vadd.f32 %v777, %v883
  %v885 = vpop.f32.mrf.mxu0
  %v886 = vadd.f32 %v779, %v885
  %887 = vmatprep.mubr.f32.mxu0 0.0
  %888 = vmatmul.mubr.f32.gmra.mxu0 %v49
  %v889 = vpop.f32.mrf.mxu0
  %v890 = vadd.f32 %v783, %v889
  %v891 = vpop.f32.mrf.mxu0
  %v892 = vadd.f32 %v785, %v891
  %893 = vmatprep.mubr.f32.mxu0 0.0
  %894 = vmatmul.mubr.f32.gmra.mxu0 %v58
  %v895 = vpop.f32.mrf.mxu0
  %v896 = vadd.f32 %v789, %v895
  %v897 = vpop.f32.mrf.mxu0
  %v898 = vadd.f32 %v791, %v897
  %899 = vmatprep.mubr.f32.mxu0 0.0
  %900 = vmatmul.mubr.f32.gmra.mxu0 %v67
  %v901 = vpop.f32.mrf.mxu0
  %v902 = vadd.f32 %v795, %v901
  %v903 = vpop.f32.mrf.mxu0
  %v904 = vadd.f32 %v797, %v903
  %905 = vmatprep.mubr.f32.mxu0 0.0
  %906 = vmatmul.mubr.f32.gmra.mxu0 %v76
  %v907 = vpop.f32.mrf.mxu0
  %v908 = vadd.f32 %v801, %v907
  %v909 = vpop.f32.mrf.mxu0
  %v910 = vadd.f32 %v803, %v909
  %911 = vdwg.mxu0
  %v912 = vmax.f32 %v872, 0.0
  %v913 = vmax.f32 %v874, 0.0
  %v914 = vmax.f32 %v878, 0.0
  %v915 = vmax.f32 %v880, 0.0
  %v916 = vmax.f32 %v884, 0.0
  %v917 = vmax.f32 %v886, 0.0
  %v918 = vmax.f32 %v890, 0.0
  %v919 = vmax.f32 %v892, 0.0
  %v920 = vmax.f32 %v896, 0.0
  %v921 = vmax.f32 %v898, 0.0
  %v922 = vmax.f32 %v902, 0.0
  %v923 = vmax.f32 %v904, 0.0
  %v924 = vmax.f32 %v908, 0.0
  %v925 = vmax.f32 %v910, 0.0
  %926 = vst [vmem:[%s3] sm:$0xff] %v912
  %927 = vst [vmem:[%s3 + $0x8] sm:$0xff] %v913
  %928 = vst [vmem:[%s3 + $0x10] sm:$0xff] %v914
  %929 = vst [vmem:[%s3 + $0x18] sm:$0xff] %v915
  %930 = vst [vmem:[%s3 + $0x20] sm:$0xff] %v916
  %931 = vst [vmem:[%s3 + $0x28] sm:$0xff] %v917
  %932 = vst [vmem:[%s3 + $0x30] sm:$0xff] %v918
  %933 = vst [vmem:[%s3 + $0x38] sm:$0xff] %v919
  %934 = vst [vmem:[%s3 + $0x40] sm:$0xff] %v920
  %935 = vst [vmem:[%s3 + $0x48] sm:$0xff] %v921
  %936 = vst [vmem:[%s3 + $0x50] sm:$0xff] %v922
  %937 = vst [vmem:[%s3 + $0x58] sm:$0xff] %v923
  %938 = vst [vmem:[%s3 + $0x60] sm:$0xff] %v924
  %939 = vst [vmem:[%s3 + $0x68] sm:$0xff] %v925
  // Predicated region
  $region14: #{auxiliary_convolutions.11} parent=0 // pred_check
    _
  $region15: #{auxiliary_convolutions.11} parent=0 // pred_check_branch
    %941 = sbr.rel (0) target = $region17
  $region16: #{auxiliary_convolutions.11} parent=0 // pred_region
    _
  $region17: #{auxiliary_convolutions.11} parent=0 // pred_fallthru
    _
  // Predicated region
  $region18: #{auxiliary_convolutions.11} parent=0 // pred_check
    _
  $region19: #{auxiliary_convolutions.11} parent=0 // pred_check_branch
    %943 = sbr.rel (0) target = $region21
  $region20: #{auxiliary_convolutions.11} parent=0 // pred_region
    _
  $region21: #{auxiliary_convolutions.11} parent=0 // pred_fallthru
    _

// kernel: auxiliary_convolutions.9
$region0: #{auxiliary_convolutions.9}
  #allocation0 [shape = 'u32[]', space=smem, size = 0x4, offset = 0x4, fixed_abs, tag = 'smem constant byte address 0x4 - core index']
  #allocation1 [shape = 'u32[144,128]{1,0:T(1,128)}', space=vmem, size = 0x12000, scoped, tag = 'internal scratch']
  %s0 = inlined_call_operand.vmem [shape: f32[200,2304], index: 0, kind: input, shape index: {}]
  %s1 = inlined_call_operand.vmem [shape: f32[2304,512], index: 1, kind: input, shape index: {}]
  %s2 = inlined_call_operand.vmem [shape: f32[1,512], index: 2, kind: input, shape index: {}]
  %s3 = inlined_call_operand.vmem [shape: f32[200,512], index: 3, kind: output, shape index: {}]
  %s4 = sld [smem:[#allocation0]]
  $region22: #{auxiliary_convolutions.9} parent=0
    _
  %s6 = ssub.s32 1, %s4
  %s7 = scalar_select 0, %s6, %s4
  // Predicated region
  $region2: #{auxiliary_convolutions.9} parent=0 // pred_check
    _
  $region3: #{auxiliary_convolutions.9} parent=0 // pred_check_branch
    %9 = sbr.rel (0) target = $region5
  $region4: #{auxiliary_convolutions.9} parent=0 // pred_region
    _
  $region5: #{auxiliary_convolutions.9} parent=0 // pred_fallthru
    _
  // Predicated region
  $region6: #{auxiliary_convolutions.9} parent=0 // pred_check
    _
  $region7: #{auxiliary_convolutions.9} parent=0 // pred_check_branch
    %11 = sbr.rel (0) target = $region9
  $region8: #{auxiliary_convolutions.9} parent=0 // pred_region
    _
  $region9: #{auxiliary_convolutions.9} parent=0 // pred_fallthru
    _
  // Predicated region
  $region10: #{auxiliary_convolutions.9} parent=0 // pred_check
    _
  $region11: #{auxiliary_convolutions.9} parent=0 // pred_check_branch
    %13 = sbr.rel (0) target = $region13
  $region12: #{auxiliary_convolutions.9} parent=0 // pred_region
    _
  $region13: #{auxiliary_convolutions.9} parent=0 // pred_fallthru
    _
  %v14 = vld [vmem:[%s0] sm:$0xff]
  %v15 = vld [vmem:[%s0 + $0x8] sm:$0xff]
  %v16 = vld [vmem:[%s0 + $0x10] sm:$0xff]
  %v17 = vld [vmem:[%s0 + $0x18] sm:$0xff]
  %v18 = vld [vmem:[%s0 + $0x20] sm:$0xff]
  %v19 = vld [vmem:[%s0 + $0x28] sm:$0xff]
  %v20 = vld [vmem:[%s0 + $0x30] sm:$0xff]
  %v21 = vld [vmem:[%s0 + $0x38] sm:$0xff]
  %v22 = vld [vmem:[%s0 + $0x40] sm:$0xff]
  %v23 = vld [vmem:[%s0 + $0x48] sm:$0xff]
  %v24 = vld [vmem:[%s0 + $0x50] sm:$0xff]
  %v25 = vld [vmem:[%s0 + $0x58] sm:$0xff]
  %v26 = vld [vmem:[%s0 + $0x60] sm:$0xff]
  %v27 = vld [vmem:[%s0 + $0x68] sm:$0xff]
  %v28 = vld [vmem:[%s0 + $0x70] sm:$0xff]
  %v29 = vld [vmem:[%s0 + $0x78] sm:$0xff]
  %v30 = vld [vmem:[%s0 + $0x80] sm:$0xff]
  %v31 = vld [vmem:[%s0 + $0x88] sm:$0xff]
  %v32 = vld [vmem:[%s0 + $0x90] sm:$0xff]
  %v33 = vld [vmem:[%s0 + $0x98] sm:$0xff]
  %v34 = vld [vmem:[%s0 + $0xa0] sm:$0xff]
  %v35 = vld [vmem:[%s0 + $0xa8] sm:$0xff]
  %v36 = vld [vmem:[%s0 + $0xb0] sm:$0xff]
  %v37 = vld [vmem:[%s0 + $0xb8] sm:$0xff]
  %v38 = vld [vmem:[%s0 + $0xc0] sm:$0xff]
  %v39 = vld [vmem:[%s0 + $0xc8] sm:$0xff]
  %v40 = vld [vmem:[%s0 + $0xd0] sm:$0xff]
  %v41 = vld [vmem:[%s0 + $0xd8] sm:$0xff]
  %v42 = vld [vmem:[%s0 + $0xe0] sm:$0xff]
  %v43 = vld [vmem:[%s0 + $0xe8] sm:$0xff]
  %v44 = vld [vmem:[%s0 + $0xf0] sm:$0xff]
  %v45 = vld [vmem:[%s0 + $0xf8] sm:$0xff]
  %v46 = vld [vmem:[%s0 + $0x100] sm:$0xff]
  %v47 = vld [vmem:[%s0 + $0x108] sm:$0xff]
  %v48 = vld [vmem:[%s0 + $0x110] sm:$0xff]
  %v49 = vld [vmem:[%s0 + $0x118] sm:$0xff]
  %v50 = vld [vmem:[%s0 + $0x120] sm:$0xff]
  %v51 = vld [vmem:[%s0 + $0x128] sm:$0xff]
  %v52 = vld [vmem:[%s0 + $0x130] sm:$0xff]
  %v53 = vld [vmem:[%s0 + $0x138] sm:$0xff]
  %v54 = vld [vmem:[%s0 + $0x140] sm:$0xff]
  %v55 = vld [vmem:[%s0 + $0x148] sm:$0xff]
  %v56 = vld [vmem:[%s0 + $0x150] sm:$0xff]
  %v57 = vld [vmem:[%s0 + $0x158] sm:$0xff]
  %v58 = vld [vmem:[%s0 + $0x160] sm:$0xff]
  %v59 = vld [vmem:[%s0 + $0x168] sm:$0xff]
  %v60 = vld [vmem:[%s0 + $0x170] sm:$0xff]
  %v61 = vld [vmem:[%s0 + $0x178] sm:$0xff]
  %v62 = vld [vmem:[%s0 + $0x180] sm:$0xff]
  %v63 = vld [vmem:[%s0 + $0x188] sm:$0xff]
  %v64 = vld [vmem:[%s0 + $0x190] sm:$0xff]
  %v65 = vld [vmem:[%s0 + $0x198] sm:$0xff]
  %v66 = vld [vmem:[%s0 + $0x1a0] sm:$0xff]
  %v67 = vld [vmem:[%s0 + $0x1a8] sm:$0xff]
  %v68 = vld [vmem:[%s0 + $0x1b0] sm:$0xff]
  %v69 = vld [vmem:[%s0 + $0x1b8] sm:$0xff]
  %v70 = vld [vmem:[%s0 + $0x1c0] sm:$0xff]
  %v71 = vld [vmem:[%s0 + $0x1c8] sm:$0xff]
  %v72 = vld [vmem:[%s0 + $0x1d0] sm:$0xff]
  %v73 = vld [vmem:[%s0 + $0x1d8] sm:$0xff]
  %v74 = vld [vmem:[%s0 + $0x1e0] sm:$0xff]
  %v75 = vld [vmem:[%s0 + $0x1e8] sm:$0xff]
  %v76 = vld [vmem:[%s0 + $0x1f0] sm:$0xff]
  %v77 = vld [vmem:[%s0 + $0x1f8] sm:$0xff]
  %v78 = vld [vmem:[%s0 + $0x200] sm:$0xff]
  %v79 = vld [vmem:[%s0 + $0x208] sm:$0xff]
  %v80 = vld [vmem:[%s0 + $0x210] sm:$0xff]
  %v81 = vld [vmem:[%s0 + $0x218] sm:$0xff]
  %v82 = vld [vmem:[%s0 + $0x220] sm:$0xff]
  %v83 = vld [vmem:[%s0 + $0x228] sm:$0xff]
  %v84 = vld [vmem:[%s0 + $0x230] sm:$0xff]
  %v85 = vld [vmem:[%s0 + $0x238] sm:$0xff]
  %v86 = vld [vmem:[%s0 + $0x240] sm:$0xff]
  %v87 = vld [vmem:[%s0 + $0x248] sm:$0xff]
  %v88 = vld [vmem:[%s0 + $0x250] sm:$0xff]
  %v89 = vld [vmem:[%s0 + $0x258] sm:$0xff]
  %v90 = vld [vmem:[%s0 + $0x260] sm:$0xff]
  %v91 = vld [vmem:[%s0 + $0x268] sm:$0xff]
  %v92 = vld [vmem:[%s0 + $0x270] sm:$0xff]
  %v93 = vld [vmem:[%s0 + $0x278] sm:$0xff]
  %v94 = vld [vmem:[%s0 + $0x280] sm:$0xff]
  %v95 = vld [vmem:[%s0 + $0x288] sm:$0xff]
  %v96 = vld [vmem:[%s0 + $0x290] sm:$0xff]
  %v97 = vld [vmem:[%s0 + $0x298] sm:$0xff]
  %v98 = vld [vmem:[%s0 + $0x2a0] sm:$0xff]
  %v99 = vld [vmem:[%s0 + $0x2a8] sm:$0xff]
  %v100 = vld [vmem:[%s0 + $0x2b0] sm:$0xff]
  %v101 = vld [vmem:[%s0 + $0x2b8] sm:$0xff]
  %v102 = vld [vmem:[%s0 + $0x2c0] sm:$0xff]
  %v103 = vld [vmem:[%s0 + $0x2c8] sm:$0xff]
  %v104 = vld [vmem:[%s0 + $0x2d0] sm:$0xff]
  %v105 = vld [vmem:[%s0 + $0x2d8] sm:$0xff]
  %v106 = vld [vmem:[%s0 + $0x2e0] sm:$0xff]
  %v107 = vld [vmem:[%s0 + $0x2e8] sm:$0xff]
  %v108 = vld [vmem:[%s0 + $0x2f0] sm:$0xff]
  %v109 = vld [vmem:[%s0 + $0x2f8] sm:$0xff]
  %v110 = vld [vmem:[%s0 + $0x300] sm:$0xff]
  %v111 = vld [vmem:[%s0 + $0x308] sm:$0xff]
  %v112 = vld [vmem:[%s0 + $0x310] sm:$0xff]
  %v113 = vld [vmem:[%s0 + $0x318] sm:$0xff]
  %v114 = vld [vmem:[%s0 + $0x320] sm:$0xff]
  %v115 = vld [vmem:[%s0 + $0x328] sm:$0xff]
  %v116 = vld [vmem:[%s0 + $0x330] sm:$0xff]
  %v117 = vld [vmem:[%s0 + $0x338] sm:$0xff]
  %v118 = vld [vmem:[%s0 + $0x340] sm:$0xff]
  %v119 = vld [vmem:[%s0 + $0x348] sm:$0xff]
  %v120 = vld [vmem:[%s0 + $0x350] sm:$0xff]
  %v121 = vld [vmem:[%s0 + $0x358] sm:$0xff]
  %v122 = vld [vmem:[%s0 + $0x360] sm:$0xff]
  %v123 = vld [vmem:[%s0 + $0x368] sm:$0xff]
  %v124 = vld [vmem:[%s0 + $0x370] sm:$0xff]
  %v125 = vld [vmem:[%s0 + $0x378] sm:$0xff]
  %v126 = vld [vmem:[%s0 + $0x380] sm:$0xff]
  %v127 = vld [vmem:[%s0 + $0x388] sm:$0xff]
  %v128 = vld [vmem:[%s0 + $0x390] sm:$0xff]
  %v129 = vld [vmem:[%s0 + $0x398] sm:$0xff]
  %v130 = vld [vmem:[%s0 + $0x3a0] sm:$0xff]
  %v131 = vld [vmem:[%s0 + $0x3a8] sm:$0xff]
  %v132 = vld [vmem:[%s0 + $0x3b0] sm:$0xff]
  %v133 = vld [vmem:[%s0 + $0x3b8] sm:$0xff]
  %v134 = vld [vmem:[%s0 + $0x3c0] sm:$0xff]
  %v135 = vld [vmem:[%s0 + $0x3c8] sm:$0xff]
  %v136 = vld [vmem:[%s0 + $0x3d0] sm:$0xff]
  %v137 = vld [vmem:[%s0 + $0x3d8] sm:$0xff]
  %v138 = vld [vmem:[%s0 + $0x3e0] sm:$0xff]
  %v139 = vld [vmem:[%s0 + $0x3e8] sm:$0xff]
  %v140 = vld [vmem:[%s0 + $0x3f0] sm:$0xff]
  %v141 = vld [vmem:[%s0 + $0x3f8] sm:$0xff]
  %v142 = vld [vmem:[%s0 + $0x400] sm:$0xff]
  %v143 = vld [vmem:[%s0 + $0x408] sm:$0xff]
  %v144 = vld [vmem:[%s0 + $0x410] sm:$0xff]
  %v145 = vld [vmem:[%s0 + $0x418] sm:$0xff]
  %v146 = vld [vmem:[%s0 + $0x420] sm:$0xff]
  %v147 = vld [vmem:[%s0 + $0x428] sm:$0xff]
  %v148 = vld [vmem:[%s0 + $0x430] sm:$0xff]
  %v149 = vld [vmem:[%s0 + $0x438] sm:$0xff]
  %v150 = vld [vmem:[%s0 + $0x440] sm:$0xff]
  %v151 = vld [vmem:[%s0 + $0x448] sm:$0xff]
  %v152 = vld [vmem:[%s0 + $0x450] sm:$0xff]
  %v153 = vld [vmem:[%s0 + $0x458] sm:$0xff]
  %v154 = vld [vmem:[%s0 + $0x460] sm:$0xff]
  %v155 = vld [vmem:[%s0 + $0x468] sm:$0xff]
  %v156 = vld [vmem:[%s0 + $0x470] sm:$0xff]
  %v157 = vld [vmem:[%s0 + $0x478] sm:$0xff]
  %v158 = vld [vmem:[%s0 + $0x480] sm:$0xff]
  %v159 = vld [vmem:[%s0 + $0x488] sm:$0xff]
  %v160 = vld [vmem:[%s0 + $0x490] sm:$0xff]
  %v161 = vld [vmem:[%s0 + $0x498] sm:$0xff]
  %v162 = vld [vmem:[%s0 + $0x4a0] sm:$0xff]
  %v163 = vld [vmem:[%s0 + $0x4a8] sm:$0xff]
  %v164 = vld [vmem:[%s0 + $0x4b0] sm:$0xff]
  %v165 = vld [vmem:[%s0 + $0x4b8] sm:$0xff]
  %v166 = vld [vmem:[%s0 + $0x4c0] sm:$0xff]
  %v167 = vld [vmem:[%s0 + $0x4c8] sm:$0xff]
  %v168 = vld [vmem:[%s0 + $0x4d0] sm:$0xff]
  %v169 = vld [vmem:[%s0 + $0x4d8] sm:$0xff]
  %v170 = vld [vmem:[%s0 + $0x4e0] sm:$0xff]
  %v171 = vld [vmem:[%s0 + $0x4e8] sm:$0xff]
  %v172 = vld [vmem:[%s0 + $0x4f0] sm:$0xff]
  %v173 = vld [vmem:[%s0 + $0x4f8] sm:$0xff]
  %v174 = vld [vmem:[%s0 + $0x500] sm:$0xff]
  %v175 = vld [vmem:[%s0 + $0x508] sm:$0xff]
  %v176 = vld [vmem:[%s0 + $0x510] sm:$0xff]
  %v177 = vld [vmem:[%s0 + $0x518] sm:$0xff]
  %v178 = vld [vmem:[%s0 + $0x520] sm:$0xff]
  %v179 = vld [vmem:[%s0 + $0x528] sm:$0xff]
  %v180 = vld [vmem:[%s0 + $0x530] sm:$0xff]
  %v181 = vld [vmem:[%s0 + $0x538] sm:$0xff]
  %v182 = vld [vmem:[%s0 + $0x540] sm:$0xff]
  %v183 = vld [vmem:[%s0 + $0x548] sm:$0xff]
  %v184 = vld [vmem:[%s0 + $0x550] sm:$0xff]
  %v185 = vld [vmem:[%s0 + $0x558] sm:$0xff]
  %v186 = vld [vmem:[%s0 + $0x560] sm:$0xff]
  %v187 = vld [vmem:[%s0 + $0x568] sm:$0xff]
  %v188 = vld [vmem:[%s0 + $0x570] sm:$0xff]
  %v189 = vld [vmem:[%s0 + $0x578] sm:$0xff]
  %v190 = vld [vmem:[%s0 + $0x580] sm:$0xff]
  %v191 = vld [vmem:[%s0 + $0x588] sm:$0xff]
  %v192 = vld [vmem:[%s0 + $0x590] sm:$0xff]
  %v193 = vld [vmem:[%s0 + $0x598] sm:$0xff]
  %v194 = vld [vmem:[%s0 + $0x5a0] sm:$0xff]
  %v195 = vld [vmem:[%s0 + $0x5a8] sm:$0xff]
  %v196 = vld [vmem:[%s0 + $0x5b0] sm:$0xff]
  %v197 = vld [vmem:[%s0 + $0x5b8] sm:$0xff]
  %v198 = vld [vmem:[%s0 + $0x5c0] sm:$0xff]
  %v199 = vld [vmem:[%s0 + $0x5c8] sm:$0xff]
  %v200 = vld [vmem:[%s0 + $0x5d0] sm:$0xff]
  %v201 = vld [vmem:[%s0 + $0x5d8] sm:$0xff]
  %v202 = vld [vmem:[%s0 + $0x5e0] sm:$0xff]
  %v203 = vld [vmem:[%s0 + $0x5e8] sm:$0xff]
  %v204 = vld [vmem:[%s0 + $0x5f0] sm:$0xff]
  %v205 = vld [vmem:[%s0 + $0x5f8] sm:$0xff]
  %v206 = vld [vmem:[%s0 + $0x600] sm:$0xff]
  %v207 = vld [vmem:[%s0 + $0x608] sm:$0xff]
  %v208 = vld [vmem:[%s0 + $0x610] sm:$0xff]
  %v209 = vld [vmem:[%s0 + $0x618] sm:$0xff]
  %v210 = vld [vmem:[%s0 + $0x620] sm:$0xff]
  %v211 = vld [vmem:[%s0 + $0x628] sm:$0xff]
  %v212 = vld [vmem:[%s0 + $0x630] sm:$0xff]
  %v213 = vld [vmem:[%s0 + $0x638] sm:$0xff]
  %v214 = vld [vmem:[%s0 + $0x640] sm:$0xff]
  %v215 = vld [vmem:[%s0 + $0x648] sm:$0xff]
  %v216 = vld [vmem:[%s0 + $0x650] sm:$0xff]
  %v217 = vld [vmem:[%s0 + $0x658] sm:$0xff]
  %v218 = vld [vmem:[%s0 + $0x660] sm:$0xff]
  %v219 = vld [vmem:[%s0 + $0x668] sm:$0xff]
  %v220 = vld [vmem:[%s0 + $0x670] sm:$0xff]
  %v221 = vld [vmem:[%s0 + $0x678] sm:$0xff]
  %v222 = vld [vmem:[%s0 + $0x680] sm:$0xff]
  %v223 = vld [vmem:[%s0 + $0x688] sm:$0xff]
  %v224 = vld [vmem:[%s0 + $0x690] sm:$0xff]
  %v225 = vld [vmem:[%s0 + $0x698] sm:$0xff]
  %v226 = vld [vmem:[%s0 + $0x6a0] sm:$0xff]
  %v227 = vld [vmem:[%s0 + $0x6a8] sm:$0xff]
  %v228 = vld [vmem:[%s0 + $0x6b0] sm:$0xff]
  %v229 = vld [vmem:[%s0 + $0x6b8] sm:$0xff]
  %v230 = vld [vmem:[%s0 + $0x6c0] sm:$0xff]
  %v231 = vld [vmem:[%s0 + $0x6c8] sm:$0xff]
  %v232 = vld [vmem:[%s0 + $0x6d0] sm:$0xff]
  %v233 = vld [vmem:[%s0 + $0x6d8] sm:$0xff]
  %v234 = vld [vmem:[%s0 + $0x6e0] sm:$0xff]
  %v235 = vld [vmem:[%s0 + $0x6e8] sm:$0xff]
  %v236 = vld [vmem:[%s0 + $0x6f0] sm:$0xff]
  %v237 = vld [vmem:[%s0 + $0x6f8] sm:$0xff]
  %v238 = vld [vmem:[%s0 + $0x700] sm:$0xff]
  %v239 = vld [vmem:[%s0 + $0x708] sm:$0xff]
  %v240 = vld [vmem:[%s0 + $0x710] sm:$0xff]
  %v241 = vld [vmem:[%s0 + $0x718] sm:$0xff]
  %v242 = vld [vmem:[%s0 + $0x720] sm:$0xff]
  %v243 = vld [vmem:[%s0 + $0x728] sm:$0xff]
  %v244 = vld [vmem:[%s0 + $0x730] sm:$0xff]
  %v245 = vld [vmem:[%s0 + $0x738] sm:$0xff]
  %v246 = vld [vmem:[%s0 + $0x740] sm:$0xff]
  %v247 = vld [vmem:[%s0 + $0x748] sm:$0xff]
  %v248 = vld [vmem:[%s0 + $0x750] sm:$0xff]
  %v249 = vld [vmem:[%s0 + $0x758] sm:$0xff]
  %v250 = vld [vmem:[%s0 + $0x760] sm:$0xff]
  %v251 = vld [vmem:[%s0 + $0x768] sm:$0xff]
  %v252 = vld [vmem:[%s0 + $0x770] sm:$0xff]
  %v253 = vld [vmem:[%s0 + $0x778] sm:$0xff]
  %v254 = vld [vmem:[%s0 + $0x780] sm:$0xff]
  %v255 = vld [vmem:[%s0 + $0x788] sm:$0xff]
  %v256 = vld [vmem:[%s0 + $0x790] sm:$0xff]
  %v257 = vld [vmem:[%s0 + $0x798] sm:$0xff]
  %v258 = vld [vmem:[%s0 + $0x7a0] sm:$0xff]
  %v259 = vld [vmem:[%s0 + $0x7a8] sm:$0xff]
  %v260 = vld [vmem:[%s0 + $0x7b0] sm:$0xff]
  %v261 = vld [vmem:[%s0 + $0x7b8] sm:$0xff]
  %v262 = vld [vmem:[%s0 + $0x7c0] sm:$0xff]
  %v263 = vld [vmem:[%s0 + $0x7c8] sm:$0xff]
  %v264 = vld [vmem:[%s0 + $0x7d0] sm:$0xff]
  %v265 = vld [vmem:[%s0 + $0x7d8] sm:$0xff]
  %v266 = vld [vmem:[%s0 + $0x7e0] sm:$0xff]
  %v267 = vld [vmem:[%s0 + $0x7e8] sm:$0xff]
  %v268 = vld [vmem:[%s0 + $0x7f0] sm:$0xff]
  %v269 = vld [vmem:[%s0 + $0x7f8] sm:$0xff]
  %v270 = vld [vmem:[%s0 + $0x800] sm:$0xff]
  %v271 = vld [vmem:[%s0 + $0x808] sm:$0xff]
  %v272 = vld [vmem:[%s0 + $0x810] sm:$0xff]
  %v273 = vld [vmem:[%s0 + $0x818] sm:$0xff]
  %v274 = vld [vmem:[%s0 + $0x820] sm:$0xff]
  %v275 = vld [vmem:[%s0 + $0x828] sm:$0xff]
  %v276 = vld [vmem:[%s0 + $0x830] sm:$0xff]
  %v277 = vld [vmem:[%s0 + $0x838] sm:$0xff]
  %v278 = vld [vmem:[%s0 + $0x840] sm:$0xff]
  %v279 = vld [vmem:[%s0 + $0x848] sm:$0xff]
  %v280 = vld [vmem:[%s0 + $0x850] sm:$0xff]
  %v281 = vld [vmem:[%s0 + $0x858] sm:$0xff]
  %v282 = vld [vmem:[%s0 + $0x860] sm:$0xff]
  %v283 = vld [vmem:[%s0 + $0x868] sm:$0xff]
  %v284 = vld [vmem:[%s0 + $0x870] sm:$0xff]
  %v285 = vld [vmem:[%s0 + $0x878] sm:$0xff]
  %v286 = vld [vmem:[%s0 + $0x880] sm:$0xff]
  %v287 = vld [vmem:[%s0 + $0x888] sm:$0xff]
  %v288 = vld [vmem:[%s0 + $0x890] sm:$0xff]
  %v289 = vld [vmem:[%s0 + $0x898] sm:$0xff]
  %v290 = vld [vmem:[%s0 + $0x8a0] sm:$0xff]
  %v291 = vld [vmem:[%s0 + $0x8a8] sm:$0xff]
  %v292 = vld [vmem:[%s0 + $0x8b0] sm:$0xff]
  %v293 = vld [vmem:[%s0 + $0x8b8] sm:$0xff]
  %v294 = vld [vmem:[%s0 + $0x8c0] sm:$0xff]
  %v295 = vld [vmem:[%s0 + $0x8c8] sm:$0xff]
  %v296 = vld [vmem:[%s0 + $0x8d0] sm:$0xff]
  %v297 = vld [vmem:[%s0 + $0x8d8] sm:$0xff]
  %v298 = vld [vmem:[%s0 + $0x8e0] sm:$0xff]
  %v299 = vld [vmem:[%s0 + $0x8e8] sm:$0xff]
  %v300 = vld [vmem:[%s0 + $0x8f0] sm:$0xff]
  %v301 = vld [vmem:[%s0 + $0x8f8] sm:$0xff]
  %v302 = vld [vmem:[%s0 + $0x900] sm:$0xff]
  %v303 = vld [vmem:[%s0 + $0x908] sm:$0xff]
  %v304 = vld [vmem:[%s0 + $0x910] sm:$0xff]
  %v305 = vld [vmem:[%s0 + $0x918] sm:$0xff]
  %v306 = vld [vmem:[%s0 + $0x920] sm:$0xff]
  %v307 = vld [vmem:[%s0 + $0x928] sm:$0xff]
  %v308 = vld [vmem:[%s0 + $0x930] sm:$0xff]
  %v309 = vld [vmem:[%s0 + $0x938] sm:$0xff]
  %v310 = vld [vmem:[%s0 + $0x940] sm:$0xff]
  %v311 = vld [vmem:[%s0 + $0x948] sm:$0xff]
  %v312 = vld [vmem:[%s0 + $0x950] sm:$0xff]
  %v313 = vld [vmem:[%s0 + $0x958] sm:$0xff]
  %v314 = vld [vmem:[%s0 + $0x960] sm:$0xff]
  %v315 = vld [vmem:[%s0 + $0x968] sm:$0xff]
  %v316 = vld [vmem:[%s0 + $0x970] sm:$0xff]
  %v317 = vld [vmem:[%s0 + $0x978] sm:$0xff]
  %v318 = vld [vmem:[%s0 + $0x980] sm:$0xff]
  %v319 = vld [vmem:[%s0 + $0x988] sm:$0xff]
  %v320 = vld [vmem:[%s0 + $0x990] sm:$0xff]
  %v321 = vld [vmem:[%s0 + $0x998] sm:$0xff]
  %v322 = vld [vmem:[%s0 + $0x9a0] sm:$0xff]
  %v323 = vld [vmem:[%s0 + $0x9a8] sm:$0xff]
  %v324 = vld [vmem:[%s0 + $0x9b0] sm:$0xff]
  %v325 = vld [vmem:[%s0 + $0x9b8] sm:$0xff]
  %v326 = vld [vmem:[%s0 + $0x9c0] sm:$0xff]
  %v327 = vld [vmem:[%s0 + $0x9c8] sm:$0xff]
  %v328 = vld [vmem:[%s0 + $0x9d0] sm:$0xff]
  %v329 = vld [vmem:[%s0 + $0x9d8] sm:$0xff]
  %v330 = vld [vmem:[%s0 + $0x9e0] sm:$0xff]
  %v331 = vld [vmem:[%s0 + $0x9e8] sm:$0xff]
  %v332 = vld [vmem:[%s0 + $0x9f0] sm:$0xff]
  %v333 = vld [vmem:[%s0 + $0x9f8] sm:$0xff]
  %v334 = vld [vmem:[%s0 + $0xa00] sm:$0xff]
  %v335 = vld [vmem:[%s0 + $0xa08] sm:$0xff]
  %v336 = vld [vmem:[%s0 + $0xa10] sm:$0xff]
  %v337 = vld [vmem:[%s0 + $0xa18] sm:$0xff]
  %v338 = vld [vmem:[%s0 + $0xa20] sm:$0xff]
  %v339 = vld [vmem:[%s0 + $0xa28] sm:$0xff]
  %v340 = vld [vmem:[%s0 + $0xa30] sm:$0xff]
  %v341 = vld [vmem:[%s0 + $0xa38] sm:$0xff]
  %v342 = vld [vmem:[%s0 + $0xa40] sm:$0xff]
  %v343 = vld [vmem:[%s0 + $0xa48] sm:$0xff]
  %v344 = vld [vmem:[%s0 + $0xa50] sm:$0xff]
  %v345 = vld [vmem:[%s0 + $0xa58] sm:$0xff]
  %v346 = vld [vmem:[%s0 + $0xa60] sm:$0xff]
  %v347 = vld [vmem:[%s0 + $0xa68] sm:$0xff]
  %v348 = vld [vmem:[%s0 + $0xa70] sm:$0xff]
  %v349 = vld [vmem:[%s0 + $0xa78] sm:$0xff]
  %v350 = vld [vmem:[%s0 + $0xa80] sm:$0xff]
  %v351 = vld [vmem:[%s0 + $0xa88] sm:$0xff]
  %v352 = vld [vmem:[%s0 + $0xa90] sm:$0xff]
  %v353 = vld [vmem:[%s0 + $0xa98] sm:$0xff]
  %v354 = vld [vmem:[%s0 + $0xaa0] sm:$0xff]
  %v355 = vld [vmem:[%s0 + $0xaa8] sm:$0xff]
  %v356 = vld [vmem:[%s0 + $0xab0] sm:$0xff]
  %v357 = vld [vmem:[%s0 + $0xab8] sm:$0xff]
  %v358 = vld [vmem:[%s0 + $0xac0] sm:$0xff]
  %v359 = vld [vmem:[%s0 + $0xac8] sm:$0xff]
  %v360 = vld [vmem:[%s0 + $0xad0] sm:$0xff]
  %v361 = vld [vmem:[%s0 + $0xad8] sm:$0xff]
  %v362 = vld [vmem:[%s0 + $0xae0] sm:$0xff]
  %v363 = vld [vmem:[%s0 + $0xae8] sm:$0xff]
  %v364 = vld [vmem:[%s0 + $0xaf0] sm:$0xff]
  %v365 = vld [vmem:[%s0 + $0xaf8] sm:$0xff]
  %v366 = vld [vmem:[%s0 + $0xb00] sm:$0xff]
  %v367 = vld [vmem:[%s0 + $0xb08] sm:$0xff]
  %v368 = vld [vmem:[%s0 + $0xb10] sm:$0xff]
  %v369 = vld [vmem:[%s0 + $0xb18] sm:$0xff]
  %v370 = vld [vmem:[%s0 + $0xb20] sm:$0xff]
  %v371 = vld [vmem:[%s0 + $0xb28] sm:$0xff]
  %v372 = vld [vmem:[%s0 + $0xb30] sm:$0xff]
  %v373 = vld [vmem:[%s0 + $0xb38] sm:$0xff]
  %v374 = vld [vmem:[%s0 + $0xb40] sm:$0xff]
  %v375 = vld [vmem:[%s0 + $0xb48] sm:$0xff]
  %v376 = vld [vmem:[%s0 + $0xb50] sm:$0xff]
  %v377 = vld [vmem:[%s0 + $0xb58] sm:$0xff]
  %v378 = vld [vmem:[%s0 + $0xb60] sm:$0xff]
  %v379 = vld [vmem:[%s0 + $0xb68] sm:$0xff]
  %v380 = vld [vmem:[%s0 + $0xb70] sm:$0xff]
  %v381 = vld [vmem:[%s0 + $0xb78] sm:$0xff]
  %v382 = vld [vmem:[%s0 + $0xb80] sm:$0xff]
  %v383 = vld [vmem:[%s0 + $0xb88] sm:$0xff]
  %v384 = vld [vmem:[%s0 + $0xb90] sm:$0xff]
  %v385 = vld [vmem:[%s0 + $0xb98] sm:$0xff]
  %v386 = vld [vmem:[%s0 + $0xba0] sm:$0xff]
  %v387 = vld [vmem:[%s0 + $0xba8] sm:$0xff]
  %v388 = vld [vmem:[%s0 + $0xbb0] sm:$0xff]
  %v389 = vld [vmem:[%s0 + $0xbb8] sm:$0xff]
  %v390 = vld [vmem:[%s0 + $0xbc0] sm:$0xff]
  %v391 = vld [vmem:[%s0 + $0xbc8] sm:$0xff]
  %v392 = vld [vmem:[%s0 + $0xbd0] sm:$0xff]
  %v393 = vld [vmem:[%s0 + $0xbd8] sm:$0xff]
  %v394 = vld [vmem:[%s0 + $0xbe0] sm:$0xff]
  %v395 = vld [vmem:[%s0 + $0xbe8] sm:$0xff]
  %v396 = vld [vmem:[%s0 + $0xbf0] sm:$0xff]
  %v397 = vld [vmem:[%s0 + $0xbf8] sm:$0xff]
  %v398 = vld [vmem:[%s0 + $0xc00] sm:$0xff]
  %v399 = vld [vmem:[%s0 + $0xc08] sm:$0xff]
  %v400 = vld [vmem:[%s0 + $0xc10] sm:$0xff]
  %v401 = vld [vmem:[%s0 + $0xc18] sm:$0xff]
  %v402 = vld [vmem:[%s0 + $0xc20] sm:$0xff]
  %v403 = vld [vmem:[%s0 + $0xc28] sm:$0xff]
  %v404 = vld [vmem:[%s0 + $0xc30] sm:$0xff]
  %v405 = vld [vmem:[%s0 + $0xc38] sm:$0xff]
  %v406 = vld [vmem:[%s0 + $0xc40] sm:$0xff]
  %v407 = vld [vmem:[%s0 + $0xc48] sm:$0xff]
  %v408 = vld [vmem:[%s0 + $0xc50] sm:$0xff]
  %v409 = vld [vmem:[%s0 + $0xc58] sm:$0xff]
  %v410 = vld [vmem:[%s0 + $0xc60] sm:$0xff]
  %v411 = vld [vmem:[%s0 + $0xc68] sm:$0xff]
  %v412 = vld [vmem:[%s0 + $0xc70] sm:$0xff]
  %v413 = vld [vmem:[%s0 + $0xc78] sm:$0xff]
  %v414 = vld [vmem:[%s0 + $0xc80] sm:$0xff]
  %v415 = vld [vmem:[%s0 + $0xc88] sm:$0xff]
  %v416 = vld [vmem:[%s0 + $0xc90] sm:$0xff]
  %v417 = vld [vmem:[%s0 + $0xc98] sm:$0xff]
  %v418 = vld [vmem:[%s0 + $0xca0] sm:$0xff]
  %v419 = vld [vmem:[%s0 + $0xca8] sm:$0xff]
  %v420 = vld [vmem:[%s0 + $0xcb0] sm:$0xff]
  %v421 = vld [vmem:[%s0 + $0xcb8] sm:$0xff]
  %v422 = vld [vmem:[%s0 + $0xcc0] sm:$0xff]
  %v423 = vld [vmem:[%s0 + $0xcc8] sm:$0xff]
  %v424 = vld [vmem:[%s0 + $0xcd0] sm:$0xff]
  %v425 = vld [vmem:[%s0 + $0xcd8] sm:$0xff]
  %v426 = vld [vmem:[%s0 + $0xce0] sm:$0xff]
  %v427 = vld [vmem:[%s0 + $0xce8] sm:$0xff]
  %v428 = vld [vmem:[%s0 + $0xcf0] sm:$0xff]
  %v429 = vld [vmem:[%s0 + $0xcf8] sm:$0xff]
  %v430 = vld [vmem:[%s0 + $0xd00] sm:$0xff]
  %v431 = vld [vmem:[%s0 + $0xd08] sm:$0xff]
  %v432 = vld [vmem:[%s0 + $0xd10] sm:$0xff]
  %v433 = vld [vmem:[%s0 + $0xd18] sm:$0xff]
  %v434 = vld [vmem:[%s0 + $0xd20] sm:$0xff]
  %v435 = vld [vmem:[%s0 + $0xd28] sm:$0xff]
  %v436 = vld [vmem:[%s0 + $0xd30] sm:$0xff]
  %v437 = vld [vmem:[%s0 + $0xd38] sm:$0xff]
  %v438 = vld [vmem:[%s0 + $0xd40] sm:$0xff]
  %v439 = vld [vmem:[%s0 + $0xd48] sm:$0xff]
  %v440 = vld [vmem:[%s0 + $0xd50] sm:$0xff]
  %v441 = vld [vmem:[%s0 + $0xd58] sm:$0xff]
  %v442 = vld [vmem:[%s0 + $0xd60] sm:$0xff]
  %v443 = vld [vmem:[%s0 + $0xd68] sm:$0xff]
  %v444 = vld [vmem:[%s0 + $0xd70] sm:$0xff]
  %v445 = vld [vmem:[%s0 + $0xd78] sm:$0xff]
  %v446 = vld [vmem:[%s0 + $0xd80] sm:$0xff]
  %v447 = vld [vmem:[%s0 + $0xd88] sm:$0xff]
  %v448 = vld [vmem:[%s0 + $0xd90] sm:$0xff]
  %v449 = vld [vmem:[%s0 + $0xd98] sm:$0xff]
  %v450 = vld [vmem:[%s0 + $0xda0] sm:$0xff]
  %v451 = vld [vmem:[%s0 + $0xda8] sm:$0xff]
  %v452 = vld [vmem:[%s0 + $0xdb0] sm:$0xff]
  %v453 = vld [vmem:[%s0 + $0xdb8] sm:$0xff]
  %v454 = vld [vmem:[%s0 + $0xdc0] sm:$0xff]
  %v455 = vld [vmem:[%s0 + $0xdc8] sm:$0xff]
  %v456 = vld [vmem:[%s0 + $0xdd0] sm:$0xff]
  %v457 = vld [vmem:[%s0 + $0xdd8] sm:$0xff]
  %v458 = vld [vmem:[%s0 + $0xde0] sm:$0xff]
  %v459 = vld [vmem:[%s0 + $0xde8] sm:$0xff]
  %v460 = vld [vmem:[%s0 + $0xdf0] sm:$0xff]
  %v461 = vld [vmem:[%s0 + $0xdf8] sm:$0xff]
  %v462 = vld [vmem:[%s0 + $0xe00] sm:$0xff]
  %v463 = vld [vmem:[%s0 + $0xe08] sm:$0xff]
  %v464 = vld [vmem:[%s1] sm:$0xff]
  %v465 = vld [vmem:[%s1 + $0x8] sm:$0xff]
  %v466 = vld [vmem:[%s1 + $0x10] sm:$0xff]
  %v467 = vld [vmem:[%s1 + $0x18] sm:$0xff]
  %v468 = vld [vmem:[%s1 + $0x20] sm:$0xff]
  %v469 = vld [vmem:[%s1 + $0x28] sm:$0xff]
  %v470 = vld [vmem:[%s1 + $0x30] sm:$0xff]
  %v471 = vld [vmem:[%s1 + $0x38] sm:$0xff]
  %v472 = vld [vmem:[%s1 + $0x40] sm:$0xff]
  %v473 = vld [vmem:[%s1 + $0x48] sm:$0xff]
  %v474 = vld [vmem:[%s1 + $0x50] sm:$0xff]
  %v475 = vld [vmem:[%s1 + $0x58] sm:$0xff]
  %v476 = vld [vmem:[%s1 + $0x60] sm:$0xff]
  %v477 = vld [vmem:[%s1 + $0x68] sm:$0xff]
  %v478 = vld [vmem:[%s1 + $0x70] sm:$0xff]
  %v479 = vld [vmem:[%s1 + $0x78] sm:$0xff]
  %v480 = vld [vmem:[%s1 + $0x80] sm:$0xff]
  %v481 = vld [vmem:[%s1 + $0x88] sm:$0xff]
  %v482 = vld [vmem:[%s1 + $0x90] sm:$0xff]
  %v483 = vld [vmem:[%s1 + $0x98] sm:$0xff]
  %v484 = vld [vmem:[%s1 + $0xa0] sm:$0xff]
  %v485 = vld [vmem:[%s1 + $0xa8] sm:$0xff]
  %v486 = vld [vmem:[%s1 + $0xb0] sm:$0xff]
  %v487 = vld [vmem:[%s1 + $0xb8] sm:$0xff]
  %v488 = vld [vmem:[%s1 + $0xc0] sm:$0xff]
  %v489 = vld [vmem:[%s1 + $0xc8] sm:$0xff]
  %v490 = vld [vmem:[%s1 + $0xd0] sm:$0xff]
  %v491 = vld [vmem:[%s1 + $0xd8] sm:$0xff]
  %v492 = vld [vmem:[%s1 + $0xe0] sm:$0xff]
  %v493 = vld [vmem:[%s1 + $0xe8] sm:$0xff]
  %v494 = vld [vmem:[%s1 + $0xf0] sm:$0xff]
  %v495 = vld [vmem:[%s1 + $0xf8] sm:$0xff]
  %v496 = vld [vmem:[%s1 + $0x100] sm:$0xff]
  %v497 = vld [vmem:[%s1 + $0x108] sm:$0xff]
  %v498 = vld [vmem:[%s1 + $0x110] sm:$0xff]
  %v499 = vld [vmem:[%s1 + $0x118] sm:$0xff]
  %v500 = vld [vmem:[%s1 + $0x120] sm:$0xff]
  %v501 = vld [vmem:[%s1 + $0x128] sm:$0xff]
  %v502 = vld [vmem:[%s1 + $0x130] sm:$0xff]
  %v503 = vld [vmem:[%s1 + $0x138] sm:$0xff]
  %v504 = vld [vmem:[%s1 + $0x140] sm:$0xff]
  %v505 = vld [vmem:[%s1 + $0x148] sm:$0xff]
  %v506 = vld [vmem:[%s1 + $0x150] sm:$0xff]
  %v507 = vld [vmem:[%s1 + $0x158] sm:$0xff]
  %v508 = vld [vmem:[%s1 + $0x160] sm:$0xff]
  %v509 = vld [vmem:[%s1 + $0x168] sm:$0xff]
  %v510 = vld [vmem:[%s1 + $0x170] sm:$0xff]
  %v511 = vld [vmem:[%s1 + $0x178] sm:$0xff]
  %v512 = vld [vmem:[%s1 + $0x180] sm:$0xff]
  %v513 = vld [vmem:[%s1 + $0x188] sm:$0xff]
  %v514 = vld [vmem:[%s1 + $0x190] sm:$0xff]
  %v515 = vld [vmem:[%s1 + $0x198] sm:$0xff]
  %v516 = vld [vmem:[%s1 + $0x1a0] sm:$0xff]
  %v517 = vld [vmem:[%s1 + $0x1a8] sm:$0xff]
  %v518 = vld [vmem:[%s1 + $0x1b0] sm:$0xff]
  %v519 = vld [vmem:[%s1 + $0x1b8] sm:$0xff]
  %v520 = vld [vmem:[%s1 + $0x1c0] sm:$0xff]
  %v521 = vld [vmem:[%s1 + $0x1c8] sm:$0xff]
  %v522 = vld [vmem:[%s1 + $0x1d0] sm:$0xff]
  %v523 = vld [vmem:[%s1 + $0x1d8] sm:$0xff]
  %v524 = vld [vmem:[%s1 + $0x1e0] sm:$0xff]
  %v525 = vld [vmem:[%s1 + $0x1e8] sm:$0xff]
  %v526 = vld [vmem:[%s1 + $0x1f0] sm:$0xff]
  %v527 = vld [vmem:[%s1 + $0x1f8] sm:$0xff]
  %v528 = vld [vmem:[%s1 + $0x200] sm:$0xff]
  %v529 = vld [vmem:[%s1 + $0x208] sm:$0xff]
  %v530 = vld [vmem:[%s1 + $0x210] sm:$0xff]
  %v531 = vld [vmem:[%s1 + $0x218] sm:$0xff]
  %v532 = vld [vmem:[%s1 + $0x220] sm:$0xff]
  %v533 = vld [vmem:[%s1 + $0x228] sm:$0xff]
  %v534 = vld [vmem:[%s1 + $0x230] sm:$0xff]
  %v535 = vld [vmem:[%s1 + $0x238] sm:$0xff]
  %v536 = vld [vmem:[%s1 + $0x240] sm:$0xff]
  %v537 = vld [vmem:[%s1 + $0x248] sm:$0xff]
  %v538 = vld [vmem:[%s1 + $0x250] sm:$0xff]
  %v539 = vld [vmem:[%s1 + $0x258] sm:$0xff]
  %v540 = vld [vmem:[%s1 + $0x260] sm:$0xff]
  %v541 = vld [vmem:[%s1 + $0x268] sm:$0xff]
  %v542 = vld [vmem:[%s1 + $0x270] sm:$0xff]
  %v543 = vld [vmem:[%s1 + $0x278] sm:$0xff]
  %v544 = vld [vmem:[%s1 + $0x280] sm:$0xff]
  %v545 = vld [vmem:[%s1 + $0x288] sm:$0xff]
  %v546 = vld [vmem:[%s1 + $0x290] sm:$0xff]
  %v547 = vld [vmem:[%s1 + $0x298] sm:$0xff]
  %v548 = vld [vmem:[%s1 + $0x2a0] sm:$0xff]
  %v549 = vld [vmem:[%s1 + $0x2a8] sm:$0xff]
  %v550 = vld [vmem:[%s1 + $0x2b0] sm:$0xff]
  %v551 = vld [vmem:[%s1 + $0x2b8] sm:$0xff]
  %v552 = vld [vmem:[%s1 + $0x2c0] sm:$0xff]
  %v553 = vld [vmem:[%s1 + $0x2c8] sm:$0xff]
  %v554 = vld [vmem:[%s1 + $0x2d0] sm:$0xff]
  %v555 = vld [vmem:[%s1 + $0x2d8] sm:$0xff]
  %v556 = vld [vmem:[%s1 + $0x2e0] sm:$0xff]
  %v557 = vld [vmem:[%s1 + $0x2e8] sm:$0xff]
  %v558 = vld [vmem:[%s1 + $0x2f0] sm:$0xff]
  %v559 = vld [vmem:[%s1 + $0x2f8] sm:$0xff]
  %v560 = vld [vmem:[%s1 + $0x300] sm:$0xff]
  %v561 = vld [vmem:[%s1 + $0x308] sm:$0xff]
  %v562 = vld [vmem:[%s1 + $0x310] sm:$0xff]
  %v563 = vld [vmem:[%s1 + $0x318] sm:$0xff]
  %v564 = vld [vmem:[%s1 + $0x320] sm:$0xff]
  %v565 = vld [vmem:[%s1 + $0x328] sm:$0xff]
  %v566 = vld [vmem:[%s1 + $0x330] sm:$0xff]
  %v567 = vld [vmem:[%s1 + $0x338] sm:$0xff]
  %v568 = vld [vmem:[%s1 + $0x340] sm:$0xff]
  %v569 = vld [vmem:[%s1 + $0x348] sm:$0xff]
  %v570 = vld [vmem:[%s1 + $0x350] sm:$0xff]
  %v571 = vld [vmem:[%s1 + $0x358] sm:$0xff]
  %v572 = vld [vmem:[%s1 + $0x360] sm:$0xff]
  %v573 = vld [vmem:[%s1 + $0x368] sm:$0xff]
  %v574 = vld [vmem:[%s1 + $0x370] sm:$0xff]
  %v575 = vld [vmem:[%s1 + $0x378] sm:$0xff]
  %v576 = vld [vmem:[%s1 + $0x380] sm:$0xff]
  %v577 = vld [vmem:[%s1 + $0x388] sm:$0xff]
  %v578 = vld [vmem:[%s1 + $0x390] sm:$0xff]
  %v579 = vld [vmem:[%s1 + $0x398] sm:$0xff]
  %v580 = vld [vmem:[%s1 + $0x3a0] sm:$0xff]
  %v581 = vld [vmem:[%s1 + $0x3a8] sm:$0xff]
  %v582 = vld [vmem:[%s1 + $0x3b0] sm:$0xff]
  %v583 = vld [vmem:[%s1 + $0x3b8] sm:$0xff]
  %v584 = vld [vmem:[%s1 + $0x3c0] sm:$0xff]
  %v585 = vld [vmem:[%s1 + $0x3c8] sm:$0xff]
  %v586 = vld [vmem:[%s1 + $0x3d0] sm:$0xff]
  %v587 = vld [vmem:[%s1 + $0x3d8] sm:$0xff]
  %v588 = vld [vmem:[%s1 + $0x3e0] sm:$0xff]
  %v589 = vld [vmem:[%s1 + $0x3e8] sm:$0xff]
  %v590 = vld [vmem:[%s1 + $0x3f0] sm:$0xff]
  %v591 = vld [vmem:[%s1 + $0x3f8] sm:$0xff]
  %v592 = vld [vmem:[%s1 + $0x400] sm:$0xff]
  %v593 = vld [vmem:[%s1 + $0x408] sm:$0xff]
  %v594 = vld [vmem:[%s1 + $0x410] sm:$0xff]
  %v595 = vld [vmem:[%s1 + $0x418] sm:$0xff]
  %v596 = vld [vmem:[%s1 + $0x420] sm:$0xff]
  %v597 = vld [vmem:[%s1 + $0x428] sm:$0xff]
  %v598 = vld [vmem:[%s1 + $0x430] sm:$0xff]
  %v599 = vld [vmem:[%s1 + $0x438] sm:$0xff]
  %v600 = vld [vmem:[%s1 + $0x440] sm:$0xff]
  %v601 = vld [vmem:[%s1 + $0x448] sm:$0xff]
  %v602 = vld [vmem:[%s1 + $0x450] sm:$0xff]
  %v603 = vld [vmem:[%s1 + $0x458] sm:$0xff]
  %v604 = vld [vmem:[%s1 + $0x460] sm:$0xff]
  %v605 = vld [vmem:[%s1 + $0x468] sm:$0xff]
  %v606 = vld [vmem:[%s1 + $0x470] sm:$0xff]
  %v607 = vld [vmem:[%s1 + $0x478] sm:$0xff]
  %v608 = vld [vmem:[%s1 + $0x480] sm:$0xff]
  %v609 = vld [vmem:[%s1 + $0x488] sm:$0xff]
  %v610 = vld [vmem:[%s1 + $0x490] sm:$0xff]
  %v611 = vld [vmem:[%s1 + $0x498] sm:$0xff]
  %v612 = vld [vmem:[%s1 + $0x4a0] sm:$0xff]
  %v613 = vld [vmem:[%s1 + $0x4a8] sm:$0xff]
  %v614 = vld [vmem:[%s1 + $0x4b0] sm:$0xff]
  %v615 = vld [vmem:[%s1 + $0x4b8] sm:$0xff]
  %v616 = vld [vmem:[%s1 + $0x4c0] sm:$0xff]
  %v617 = vld [vmem:[%s1 + $0x4c8] sm:$0xff]
  %v618 = vld [vmem:[%s1 + $0x4d0] sm:$0xff]
  %v619 = vld [vmem:[%s1 + $0x4d8] sm:$0xff]
  %v620 = vld [vmem:[%s1 + $0x4e0] sm:$0xff]
  %v621 = vld [vmem:[%s1 + $0x4e8] sm:$0xff]
  %v622 = vld [vmem:[%s1 + $0x4f0] sm:$0xff]
  %v623 = vld [vmem:[%s1 + $0x4f8] sm:$0xff]
  %v624 = vld [vmem:[%s1 + $0x500] sm:$0xff]
  %v625 = vld [vmem:[%s1 + $0x508] sm:$0xff]
  %v626 = vld [vmem:[%s1 + $0x510] sm:$0xff]
  %v627 = vld [vmem:[%s1 + $0x518] sm:$0xff]
  %v628 = vld [vmem:[%s1 + $0x520] sm:$0xff]
  %v629 = vld [vmem:[%s1 + $0x528] sm:$0xff]
  %v630 = vld [vmem:[%s1 + $0x530] sm:$0xff]
  %v631 = vld [vmem:[%s1 + $0x538] sm:$0xff]
  %v632 = vld [vmem:[%s1 + $0x540] sm:$0xff]
  %v633 = vld [vmem:[%s1 + $0x548] sm:$0xff]
  %v634 = vld [vmem:[%s1 + $0x550] sm:$0xff]
  %v635 = vld [vmem:[%s1 + $0x558] sm:$0xff]
  %v636 = vld [vmem:[%s1 + $0x560] sm:$0xff]
  %v637 = vld [vmem:[%s1 + $0x568] sm:$0xff]
  %v638 = vld [vmem:[%s1 + $0x570] sm:$0xff]
  %v639 = vld [vmem:[%s1 + $0x578] sm:$0xff]
  %v640 = vld [vmem:[%s1 + $0x580] sm:$0xff]
  %v641 = vld [vmem:[%s1 + $0x588] sm:$0xff]
  %v642 = vld [vmem:[%s1 + $0x590] sm:$0xff]
  %v643 = vld [vmem:[%s1 + $0x598] sm:$0xff]
  %v644 = vld [vmem:[%s1 + $0x5a0] sm:$0xff]
  %v645 = vld [vmem:[%s1 + $0x5a8] sm:$0xff]
  %v646 = vld [vmem:[%s1 + $0x5b0] sm:$0xff]
  %v647 = vld [vmem:[%s1 + $0x5b8] sm:$0xff]
  %v648 = vld [vmem:[%s1 + $0x5c0] sm:$0xff]
  %v649 = vld [vmem:[%s1 + $0x5c8] sm:$0xff]
  %v650 = vld [vmem:[%s1 + $0x5d0] sm:$0xff]
  %v651 = vld [vmem:[%s1 + $0x5d8] sm:$0xff]
  %v652 = vld [vmem:[%s1 + $0x5e0] sm:$0xff]
  %v653 = vld [vmem:[%s1 + $0x5e8] sm:$0xff]
  %v654 = vld [vmem:[%s1 + $0x5f0] sm:$0xff]
  %v655 = vld [vmem:[%s1 + $0x5f8] sm:$0xff]
  %v656 = vld [vmem:[%s1 + $0x600] sm:$0xff]
  %v657 = vld [vmem:[%s1 + $0x608] sm:$0xff]
  %v658 = vld [vmem:[%s1 + $0x610] sm:$0xff]
  %v659 = vld [vmem:[%s1 + $0x618] sm:$0xff]
  %v660 = vld [vmem:[%s1 + $0x620] sm:$0xff]
  %v661 = vld [vmem:[%s1 + $0x628] sm:$0xff]
  %v662 = vld [vmem:[%s1 + $0x630] sm:$0xff]
  %v663 = vld [vmem:[%s1 + $0x638] sm:$0xff]
  %v664 = vld [vmem:[%s1 + $0x640] sm:$0xff]
  %v665 = vld [vmem:[%s1 + $0x648] sm:$0xff]
  %v666 = vld [vmem:[%s1 + $0x650] sm:$0xff]
  %v667 = vld [vmem:[%s1 + $0x658] sm:$0xff]
  %v668 = vld [vmem:[%s1 + $0x660] sm:$0xff]
  %v669 = vld [vmem:[%s1 + $0x668] sm:$0xff]
  %v670 = vld [vmem:[%s1 + $0x670] sm:$0xff]
  %v671 = vld [vmem:[%s1 + $0x678] sm:$0xff]
  %v672 = vld [vmem:[%s1 + $0x680] sm:$0xff]
  %v673 = vld [vmem:[%s1 + $0x688] sm:$0xff]
  %v674 = vld [vmem:[%s1 + $0x690] sm:$0xff]
  %v675 = vld [vmem:[%s1 + $0x698] sm:$0xff]
  %v676 = vld [vmem:[%s1 + $0x6a0] sm:$0xff]
  %v677 = vld [vmem:[%s1 + $0x6a8] sm:$0xff]
  %v678 = vld [vmem:[%s1 + $0x6b0] sm:$0xff]
  %v679 = vld [vmem:[%s1 + $0x6b8] sm:$0xff]
  %v680 = vld [vmem:[%s1 + $0x6c0] sm:$0xff]
  %v681 = vld [vmem:[%s1 + $0x6c8] sm:$0xff]
  %v682 = vld [vmem:[%s1 + $0x6d0] sm:$0xff]
  %v683 = vld [vmem:[%s1 + $0x6d8] sm:$0xff]
  %v684 = vld [vmem:[%s1 + $0x6e0] sm:$0xff]
  %v685 = vld [vmem:[%s1 + $0x6e8] sm:$0xff]
  %v686 = vld [vmem:[%s1 + $0x6f0] sm:$0xff]
  %v687 = vld [vmem:[%s1 + $0x6f8] sm:$0xff]
  %v688 = vld [vmem:[%s1 + $0x700] sm:$0xff]
  %v689 = vld [vmem:[%s1 + $0x708] sm:$0xff]
  %v690 = vld [vmem:[%s1 + $0x710] sm:$0xff]
  %v691 = vld [vmem:[%s1 + $0x718] sm:$0xff]
  %v692 = vld [vmem:[%s1 + $0x720] sm:$0xff]
  %v693 = vld [vmem:[%s1 + $0x728] sm:$0xff]
  %v694 = vld [vmem:[%s1 + $0x730] sm:$0xff]
  %v695 = vld [vmem:[%s1 + $0x738] sm:$0xff]
  %v696 = vld [vmem:[%s1 + $0x740] sm:$0xff]
  %v697 = vld [vmem:[%s1 + $0x748] sm:$0xff]
  %v698 = vld [vmem:[%s1 + $0x750] sm:$0xff]
  %v699 = vld [vmem:[%s1 + $0x758] sm:$0xff]
  %v700 = vld [vmem:[%s1 + $0x760] sm:$0xff]
  %v701 = vld [vmem:[%s1 + $0x768] sm:$0xff]
  %v702 = vld [vmem:[%s1 + $0x770] sm:$0xff]
  %v703 = vld [vmem:[%s1 + $0x778] sm:$0xff]
  %v704 = vld [vmem:[%s1 + $0x780] sm:$0xff]
  %v705 = vld [vmem:[%s1 + $0x788] sm:$0xff]
  %v706 = vld [vmem:[%s1 + $0x790] sm:$0xff]
  %v707 = vld [vmem:[%s1 + $0x798] sm:$0xff]
  %v708 = vld [vmem:[%s1 + $0x7a0] sm:$0xff]
  %v709 = vld [vmem:[%s1 + $0x7a8] sm:$0xff]
  %v710 = vld [vmem:[%s1 + $0x7b0] sm:$0xff]
  %v711 = vld [vmem:[%s1 + $0x7b8] sm:$0xff]
  %v712 = vld [vmem:[%s1 + $0x7c0] sm:$0xff]
  %v713 = vld [vmem:[%s1 + $0x7c8] sm:$0xff]
  %v714 = vld [vmem:[%s1 + $0x7d0] sm:$0xff]
  %v715 = vld [vmem:[%s1 + $0x7d8] sm:$0xff]
  %v716 = vld [vmem:[%s1 + $0x7e0] sm:$0xff]
  %v717 = vld [vmem:[%s1 + $0x7e8] sm:$0xff]
  %v718 = vld [vmem:[%s1 + $0x7f0] sm:$0xff]
  %v719 = vld [vmem:[%s1 + $0x7f8] sm:$0xff]
  %v720 = vld [vmem:[%s1 + $0x800] sm:$0xff]
  %v721 = vld [vmem:[%s1 + $0x808] sm:$0xff]
  %v722 = vld [vmem:[%s1 + $0x810] sm:$0xff]
  %v723 = vld [vmem:[%s1 + $0x818] sm:$0xff]
  %v724 = vld [vmem:[%s1 + $0x820] sm:$0xff]
  %v725 = vld [vmem:[%s1 + $0x828] sm:$0xff]
  %v726 = vld [vmem:[%s1 + $0x830] sm:$0xff]
  %v727 = vld [vmem:[%s1 + $0x838] sm:$0xff]
  %v728 = vld [vmem:[%s1 + $0x840] sm:$0xff]
  %v729 = vld [vmem:[%s1 + $0x848] sm:$0xff]
  %v730 = vld [vmem:[%s1 + $0x850] sm:$0xff]
  %v731 = vld [vmem:[%s1 + $0x858] sm:$0xff]
  %v732 = vld [vmem:[%s1 + $0x860] sm:$0xff]
  %v733 = vld [vmem:[%s1 + $0x868] sm:$0xff]
  %v734 = vld [vmem:[%s1 + $0x870] sm:$0xff]
  %v735 = vld [vmem:[%s1 + $0x878] sm:$0xff]
  %v736 = vld [vmem:[%s1 + $0x880] sm:$0xff]
  %v737 = vld [vmem:[%s1 + $0x888] sm:$0xff]
  %v738 = vld [vmem:[%s1 + $0x890] sm:$0xff]
  %v739 = vld [vmem:[%s1 + $0x898] sm:$0xff]
  %v740 = vld [vmem:[%s1 + $0x8a0] sm:$0xff]
  %v741 = vld [vmem:[%s1 + $0x8a8] sm:$0xff]
  %v742 = vld [vmem:[%s1 + $0x8b0] sm:$0xff]
  %v743 = vld [vmem:[%s1 + $0x8b8] sm:$0xff]
  %v744 = vld [vmem:[%s1 + $0x8c0] sm:$0xff]
  %v745 = vld [vmem:[%s1 + $0x8c8] sm:$0xff]
  %v746 = vld [vmem:[%s1 + $0x8d0] sm:$0xff]
  %v747 = vld [vmem:[%s1 + $0x8d8] sm:$0xff]
  %v748 = vld [vmem:[%s1 + $0x8e0] sm:$0xff]
  %v749 = vld [vmem:[%s1 + $0x8e8] sm:$0xff]
  %v750 = vld [vmem:[%s1 + $0x8f0] sm:$0xff]
  %v751 = vld [vmem:[%s1 + $0x8f8] sm:$0xff]
  %v752 = vld [vmem:[%s1 + $0x900] sm:$0xff]
  %v753 = vld [vmem:[%s1 + $0x908] sm:$0xff]
  %v754 = vld [vmem:[%s1 + $0x910] sm:$0xff]
  %v755 = vld [vmem:[%s1 + $0x918] sm:$0xff]
  %v756 = vld [vmem:[%s1 + $0x920] sm:$0xff]
  %v757 = vld [vmem:[%s1 + $0x928] sm:$0xff]
  %v758 = vld [vmem:[%s1 + $0x930] sm:$0xff]
  %v759 = vld [vmem:[%s1 + $0x938] sm:$0xff]
  %v760 = vld [vmem:[%s1 + $0x940] sm:$0xff]
  %v761 = vld [vmem:[%s1 + $0x948] sm:$0xff]
  %v762 = vld [vmem:[%s1 + $0x950] sm:$0xff]
  %v763 = vld [vmem:[%s1 + $0x958] sm:$0xff]
  %v764 = vld [vmem:[%s1 + $0x960] sm:$0xff]
  %v765 = vld [vmem:[%s1 + $0x968] sm:$0xff]
  %v766 = vld [vmem:[%s1 + $0x970] sm:$0xff]
  %v767 = vld [vmem:[%s1 + $0x978] sm:$0xff]
  %v768 = vld [vmem:[%s1 + $0x980] sm:$0xff]
  %v769 = vld [vmem:[%s1 + $0x988] sm:$0xff]
  %v770 = vld [vmem:[%s1 + $0x990] sm:$0xff]
  %v771 = vld [vmem:[%s1 + $0x998] sm:$0xff]
  %v772 = vld [vmem:[%s1 + $0x9a0] sm:$0xff]
  %v773 = vld [vmem:[%s1 + $0x9a8] sm:$0xff]
  %v774 = vld [vmem:[%s1 + $0x9b0] sm:$0xff]
  %v775 = vld [vmem:[%s1 + $0x9b8] sm:$0xff]
  %v776 = vld [vmem:[%s1 + $0x9c0] sm:$0xff]
  %v777 = vld [vmem:[%s1 + $0x9c8] sm:$0xff]
  %v778 = vld [vmem:[%s1 + $0x9d0] sm:$0xff]
  %v779 = vld [vmem:[%s1 + $0x9d8] sm:$0xff]
  %v780 = vld [vmem:[%s1 + $0x9e0] sm:$0xff]
  %v781 = vld [vmem:[%s1 + $0x9e8] sm:$0xff]
  %v782 = vld [vmem:[%s1 + $0x9f0] sm:$0xff]
  %v783 = vld [vmem:[%s1 + $0x9f8] sm:$0xff]
  %v784 = vld [vmem:[%s1 + $0xa00] sm:$0xff]
  %v785 = vld [vmem:[%s1 + $0xa08] sm:$0xff]
  %v786 = vld [vmem:[%s1 + $0xa10] sm:$0xff]
  %v787 = vld [vmem:[%s1 + $0xa18] sm:$0xff]
  %v788 = vld [vmem:[%s1 + $0xa20] sm:$0xff]
  %v789 = vld [vmem:[%s1 + $0xa28] sm:$0xff]
  %v790 = vld [vmem:[%s1 + $0xa30] sm:$0xff]
  %v791 = vld [vmem:[%s1 + $0xa38] sm:$0xff]
  %v792 = vld [vmem:[%s1 + $0xa40] sm:$0xff]
  %v793 = vld [vmem:[%s1 + $0xa48] sm:$0xff]
  %v794 = vld [vmem:[%s1 + $0xa50] sm:$0xff]
  %v795 = vld [vmem:[%s1 + $0xa58] sm:$0xff]
  %v796 = vld [vmem:[%s1 + $0xa60] sm:$0xff]
  %v797 = vld [vmem:[%s1 + $0xa68] sm:$0xff]
  %v798 = vld [vmem:[%s1 + $0xa70] sm:$0xff]
  %v799 = vld [vmem:[%s1 + $0xa78] sm:$0xff]
  %v800 = vld [vmem:[%s1 + $0xa80] sm:$0xff]
  %v801 = vld [vmem:[%s1 + $0xa88] sm:$0xff]
  %v802 = vld [vmem:[%s1 + $0xa90] sm:$0xff]
  %v803 = vld [vmem:[%s1 + $0xa98] sm:$0xff]
  %v804 = vld [vmem:[%s1 + $0xaa0] sm:$0xff]
  %v805 = vld [vmem:[%s1 + $0xaa8] sm:$0xff]
  %v806 = vld [vmem:[%s1 + $0xab0] sm:$0xff]
  %v807 = vld [vmem:[%s1 + $0xab8] sm:$0xff]
  %v808 = vld [vmem:[%s1 + $0xac0] sm:$0xff]
  %v809 = vld [vmem:[%s1 + $0xac8] sm:$0xff]
  %v810 = vld [vmem:[%s1 + $0xad0] sm:$0xff]
  %v811 = vld [vmem:[%s1 + $0xad8] sm:$0xff]
  %v812 = vld [vmem:[%s1 + $0xae0] sm:$0xff]
  %v813 = vld [vmem:[%s1 + $0xae8] sm:$0xff]
  %v814 = vld [vmem:[%s1 + $0xaf0] sm:$0xff]
  %v815 = vld [vmem:[%s1 + $0xaf8] sm:$0xff]
  %v816 = vld [vmem:[%s1 + $0xb00] sm:$0xff]
  %v817 = vld [vmem:[%s1 + $0xb08] sm:$0xff]
  %v818 = vld [vmem:[%s1 + $0xb10] sm:$0xff]
  %v819 = vld [vmem:[%s1 + $0xb18] sm:$0xff]
  %v820 = vld [vmem:[%s1 + $0xb20] sm:$0xff]
  %v821 = vld [vmem:[%s1 + $0xb28] sm:$0xff]
  %v822 = vld [vmem:[%s1 + $0xb30] sm:$0xff]
  %v823 = vld [vmem:[%s1 + $0xb38] sm:$0xff]
  %v824 = vld [vmem:[%s1 + $0xb40] sm:$0xff]
  %v825 = vld [vmem:[%s1 + $0xb48] sm:$0xff]
  %v826 = vld [vmem:[%s1 + $0xb50] sm:$0xff]
  %v827 = vld [vmem:[%s1 + $0xb58] sm:$0xff]
  %v828 = vld [vmem:[%s1 + $0xb60] sm:$0xff]
  %v829 = vld [vmem:[%s1 + $0xb68] sm:$0xff]
  %v830 = vld [vmem:[%s1 + $0xb70] sm:$0xff]
  %v831 = vld [vmem:[%s1 + $0xb78] sm:$0xff]
  %v832 = vld [vmem:[%s1 + $0xb80] sm:$0xff]
  %v833 = vld [vmem:[%s1 + $0xb88] sm:$0xff]
  %v834 = vld [vmem:[%s1 + $0xb90] sm:$0xff]
  %v835 = vld [vmem:[%s1 + $0xb98] sm:$0xff]
  %v836 = vld [vmem:[%s1 + $0xba0] sm:$0xff]
  %v837 = vld [vmem:[%s1 + $0xba8] sm:$0xff]
  %v838 = vld [vmem:[%s1 + $0xbb0] sm:$0xff]
  %v839 = vld [vmem:[%s1 + $0xbb8] sm:$0xff]
  %v840 = vld [vmem:[%s1 + $0xbc0] sm:$0xff]
  %v841 = vld [vmem:[%s1 + $0xbc8] sm:$0xff]
  %v842 = vld [vmem:[%s1 + $0xbd0] sm:$0xff]
  %v843 = vld [vmem:[%s1 + $0xbd8] sm:$0xff]
  %v844 = vld [vmem:[%s1 + $0xbe0] sm:$0xff]
  %v845 = vld [vmem:[%s1 + $0xbe8] sm:$0xff]
  %v846 = vld [vmem:[%s1 + $0xbf0] sm:$0xff]
  %v847 = vld [vmem:[%s1 + $0xbf8] sm:$0xff]
  %v848 = vld [vmem:[%s1 + $0xc00] sm:$0xff]
  %v849 = vld [vmem:[%s1 + $0xc08] sm:$0xff]
  %v850 = vld [vmem:[%s1 + $0xc10] sm:$0xff]
  %v851 = vld [vmem:[%s1 + $0xc18] sm:$0xff]
  %v852 = vld [vmem:[%s1 + $0xc20] sm:$0xff]
  %v853 = vld [vmem:[%s1 + $0xc28] sm:$0xff]
  %v854 = vld [vmem:[%s1 + $0xc30] sm:$0xff]
  %v855 = vld [vmem:[%s1 + $0xc38] sm:$0xff]
  %v856 = vld [vmem:[%s1 + $0xc40] sm:$0xff]
  %v857 = vld [vmem:[%s1 + $0xc48] sm:$0xff]
  %v858 = vld [vmem:[%s1 + $0xc50] sm:$0xff]
  %v859 = vld [vmem:[%s1 + $0xc58] sm:$0xff]
  %v860 = vld [vmem:[%s1 + $0xc60] sm:$0xff]
  %v861 = vld [vmem:[%s1 + $0xc68] sm:$0xff]
  %v862 = vld [vmem:[%s1 + $0xc70] sm:$0xff]
  %v863 = vld [vmem:[%s1 + $0xc78] sm:$0xff]
  %v864 = vld [vmem:[%s1 + $0xc80] sm:$0xff]
  %v865 = vld [vmem:[%s1 + $0xc88] sm:$0xff]
  %v866 = vld [vmem:[%s1 + $0xc90] sm:$0xff]
  %v867 = vld [vmem:[%s1 + $0xc98] sm:$0xff]
  %v868 = vld [vmem:[%s1 + $0xca0] sm:$0xff]
  %v869 = vld [vmem:[%s1 + $0xca8] sm:$0xff]
  %v870 = vld [vmem:[%s1 + $0xcb0] sm:$0xff]
  %v871 = vld [vmem:[%s1 + $0xcb8] sm:$0xff]
  %v872 = vld [vmem:[%s1 + $0xcc0] sm:$0xff]
  %v873 = vld [vmem:[%s1 + $0xcc8] sm:$0xff]
  %v874 = vld [vmem:[%s1 + $0xcd0] sm:$0xff]
  %v875 = vld [vmem:[%s1 + $0xcd8] sm:$0xff]
  %v876 = vld [vmem:[%s1 + $0xce0] sm:$0xff]
  %v877 = vld [vmem:[%s1 + $0xce8] sm:$0xff]
  %v878 = vld [vmem:[%s1 + $0xcf0] sm:$0xff]
  %v879 = vld [vmem:[%s1 + $0xcf8] sm:$0xff]
  %v880 = vld [vmem:[%s1 + $0xd00] sm:$0xff]
  %v881 = vld [vmem:[%s1 + $0xd08] sm:$0xff]
  %v882 = vld [vmem:[%s1 + $0xd10] sm:$0xff]
  %v883 = vld [vmem:[%s1 + $0xd18] sm:$0xff]
  %v884 = vld [vmem:[%s1 + $0xd20] sm:$0xff]
  %v885 = vld [vmem:[%s1 + $0xd28] sm:$0xff]
  %v886 = vld [vmem:[%s1 + $0xd30] sm:$0xff]
  %v887 = vld [vmem:[%s1 + $0xd38] sm:$0xff]
  %v888 = vld [vmem:[%s1 + $0xd40] sm:$0xff]
  %v889 = vld [vmem:[%s1 + $0xd48] sm:$0xff]
  %v890 = vld [vmem:[%s1 + $0xd50] sm:$0xff]
  %v891 = vld [vmem:[%s1 + $0xd58] sm:$0xff]
  %v892 = vld [vmem:[%s1 + $0xd60] sm:$0xff]
  %v893 = vld [vmem:[%s1 + $0xd68] sm:$0xff]
  %v894 = vld [vmem:[%s1 + $0xd70] sm:$0xff]
  %v895 = vld [vmem:[%s1 + $0xd78] sm:$0xff]
  %v896 = vld [vmem:[%s1 + $0xd80] sm:$0xff]
  %v897 = vld [vmem:[%s1 + $0xd88] sm:$0xff]
  %v898 = vld [vmem:[%s1 + $0xd90] sm:$0xff]
  %v899 = vld [vmem:[%s1 + $0xd98] sm:$0xff]
  %v900 = vld [vmem:[%s1 + $0xda0] sm:$0xff]
  %v901 = vld [vmem:[%s1 + $0xda8] sm:$0xff]
  %v902 = vld [vmem:[%s1 + $0xdb0] sm:$0xff]
  %v903 = vld [vmem:[%s1 + $0xdb8] sm:$0xff]
  %v904 = vld [vmem:[%s1 + $0xdc0] sm:$0xff]
  %v905 = vld [vmem:[%s1 + $0xdc8] sm:$0xff]
  %v906 = vld [vmem:[%s1 + $0xdd0] sm:$0xff]
  %v907 = vld [vmem:[%s1 + $0xdd8] sm:$0xff]
  %v908 = vld [vmem:[%s1 + $0xde0] sm:$0xff]
  %v909 = vld [vmem:[%s1 + $0xde8] sm:$0xff]
  %v910 = vld [vmem:[%s1 + $0xdf0] sm:$0xff]
  %v911 = vld [vmem:[%s1 + $0xdf8] sm:$0xff]
  %v912 = vld [vmem:[%s1 + $0xe00] sm:$0xff]
  %v913 = vld [vmem:[%s1 + $0xe08] sm:$0xff]
  %v914 = vld [vmem:[%s1 + $0xe10] sm:$0xff]
  %v915 = vld [vmem:[%s1 + $0xe18] sm:$0xff]
  %v916 = vld [vmem:[%s1 + $0xe20] sm:$0xff]
  %v917 = vld [vmem:[%s1 + $0xe28] sm:$0xff]
  %v918 = vld [vmem:[%s1 + $0xe30] sm:$0xff]
  %v919 = vld [vmem:[%s1 + $0xe38] sm:$0xff]
  %v920 = vld [vmem:[%s1 + $0xe40] sm:$0xff]
  %v921 = vld [vmem:[%s1 + $0xe48] sm:$0xff]
  %v922 = vld [vmem:[%s1 + $0xe50] sm:$0xff]
  %v923 = vld [vmem:[%s1 + $0xe58] sm:$0xff]
  %v924 = vld [vmem:[%s1 + $0xe60] sm:$0xff]
  %v925 = vld [vmem:[%s1 + $0xe68] sm:$0xff]
  %v926 = vld [vmem:[%s1 + $0xe70] sm:$0xff]
  %v927 = vld [vmem:[%s1 + $0xe78] sm:$0xff]
  %v928 = vld [vmem:[%s1 + $0xe80] sm:$0xff]
  %v929 = vld [vmem:[%s1 + $0xe88] sm:$0xff]
  %v930 = vld [vmem:[%s1 + $0xe90] sm:$0xff]
  %v931 = vld [vmem:[%s1 + $0xe98] sm:$0xff]
  %v932 = vld [vmem:[%s1 + $0xea0] sm:$0xff]
  %v933 = vld [vmem:[%s1 + $0xea8] sm:$0xff]
  %v934 = vld [vmem:[%s1 + $0xeb0] sm:$0xff]
  %v935 = vld [vmem:[%s1 + $0xeb8] sm:$0xff]
  %v936 = vld [vmem:[%s1 + $0xec0] sm:$0xff]
  %v937 = vld [vmem:[%s1 + $0xec8] sm:$0xff]
  %v938 = vld [vmem:[%s1 + $0xed0] sm:$0xff]
  %v939 = vld [vmem:[%s1 + $0xed8] sm:$0xff]
  %v940 = vld [vmem:[%s1 + $0xee0] sm:$0xff]
  %v941 = vld [vmem:[%s1 + $0xee8] sm:$0xff]
  %v942 = vld [vmem:[%s1 + $0xef0] sm:$0xff]
  %v943 = vld [vmem:[%s1 + $0xef8] sm:$0xff]
  %v944 = vld [vmem:[%s1 + $0xf00] sm:$0xff]
  %v945 = vld [vmem:[%s1 + $0xf08] sm:$0xff]
  %v946 = vld [vmem:[%s1 + $0xf10] sm:$0xff]
  %v947 = vld [vmem:[%s1 + $0xf18] sm:$0xff]
  %v948 = vld [vmem:[%s1 + $0xf20] sm:$0xff]
  %v949 = vld [vmem:[%s1 + $0xf28] sm:$0xff]
  %v950 = vld [vmem:[%s1 + $0xf30] sm:$0xff]
  %v951 = vld [vmem:[%s1 + $0xf38] sm:$0xff]
  %v952 = vld [vmem:[%s1 + $0xf40] sm:$0xff]
  %v953 = vld [vmem:[%s1 + $0xf48] sm:$0xff]
  %v954 = vld [vmem:[%s1 + $0xf50] sm:$0xff]
  %v955 = vld [vmem:[%s1 + $0xf58] sm:$0xff]
  %v956 = vld [vmem:[%s1 + $0xf60] sm:$0xff]
  %v957 = vld [vmem:[%s1 + $0xf68] sm:$0xff]
  %v958 = vld [vmem:[%s1 + $0xf70] sm:$0xff]
  %v959 = vld [vmem:[%s1 + $0xf78] sm:$0xff]
  %v960 = vld [vmem:[%s1 + $0xf80] sm:$0xff]
  %v961 = vld [vmem:[%s1 + $0xf88] sm:$0xff]
  %v962 = vld [vmem:[%s1 + $0xf90] sm:$0xff]
  %v963 = vld [vmem:[%s1 + $0xf98] sm:$0xff]
  %v964 = vld [vmem:[%s1 + $0xfa0] sm:$0xff]
  %v965 = vld [vmem:[%s1 + $0xfa8] sm:$0xff]
  %v966 = vld [vmem:[%s1 + $0xfb0] sm:$0xff]
  %v967 = vld [vmem:[%s1 + $0xfb8] sm:$0xff]
  %v968 = vld [vmem:[%s1 + $0xfc0] sm:$0xff]
  %v969 = vld [vmem:[%s1 + $0xfc8] sm:$0xff]
  %v970 = vld [vmem:[%s1 + $0xfd0] sm:$0xff]
  %v971 = vld [vmem:[%s1 + $0xfd8] sm:$0xff]
  %v972 = vld [vmem:[%s1 + $0xfe0] sm:$0xff]
  %v973 = vld [vmem:[%s1 + $0xfe8] sm:$0xff]
  %v974 = vld [vmem:[%s1 + $0xff0] sm:$0xff]
  %v975 = vld [vmem:[%s1 + $0xff8] sm:$0xff]
  %v976 = vld [vmem:[%s1 + $0x1000] sm:$0xff]
  %v977 = vld [vmem:[%s1 + $0x1008] sm:$0xff]
  %v978 = vld [vmem:[%s1 + $0x1010] sm:$0xff]
  %v979 = vld [vmem:[%s1 + $0x1018] sm:$0xff]
  %v980 = vld [vmem:[%s1 + $0x1020] sm:$0xff]
  %v981 = vld [vmem:[%s1 + $0x1028] sm:$0xff]
  %v982 = vld [vmem:[%s1 + $0x1030] sm:$0xff]
  %v983 = vld [vmem:[%s1 + $0x1038] sm:$0xff]
  %v984 = vld [vmem:[%s1 + $0x1040] sm:$0xff]
  %v985 = vld [vmem:[%s1 + $0x1048] sm:$0xff]
  %v986 = vld [vmem:[%s1 + $0x1050] sm:$0xff]
  %v987 = vld [vmem:[%s1 + $0x1058] sm:$0xff]
  %v988 = vld [vmem:[%s1 + $0x1060] sm:$0xff]
  %v989 = vld [vmem:[%s1 + $0x1068] sm:$0xff]
  %v990 = vld [vmem:[%s1 + $0x1070] sm:$0xff]
  %v991 = vld [vmem:[%s1 + $0x1078] sm:$0xff]
  %v992 = vld [vmem:[%s1 + $0x1080] sm:$0xff]
  %v993 = vld [vmem:[%s1 + $0x1088] sm:$0xff]
  %v994 = vld [vmem:[%s1 + $0x1090] sm:$0xff]
  %v995 = vld [vmem:[%s1 + $0x1098] sm:$0xff]
  %v996 = vld [vmem:[%s1 + $0x10a0] sm:$0xff]
  %v997 = vld [vmem:[%s1 + $0x10a8] sm:$0xff]
  %v998 = vld [vmem:[%s1 + $0x10b0] sm:$0xff]
  %v999 = vld [vmem:[%s1 + $0x10b8] sm:$0xff]
  %v1000 = vld [vmem:[%s1 + $0x10c0] sm:$0xff]
  %v1001 = vld [vmem:[%s1 + $0x10c8] sm:$0xff]
  %v1002 = vld [vmem:[%s1 + $0x10d0] sm:$0xff]
  %v1003 = vld [vmem:[%s1 + $0x10d8] sm:$0xff]
  %v1004 = vld [vmem:[%s1 + $0x10e0] sm:$0xff]
  %v1005 = vld [vmem:[%s1 + $0x10e8] sm:$0xff]
  %v1006 = vld [vmem:[%s1 + $0x10f0] sm:$0xff]
  %v1007 = vld [vmem:[%s1 + $0x10f8] sm:$0xff]
  %v1008 = vld [vmem:[%s1 + $0x1100] sm:$0xff]
  %v1009 = vld [vmem:[%s1 + $0x1108] sm:$0xff]
  %v1010 = vld [vmem:[%s1 + $0x1110] sm:$0xff]
  %v1011 = vld [vmem:[%s1 + $0x1118] sm:$0xff]
  %v1012 = vld [vmem:[%s1 + $0x1120] sm:$0xff]
  %v1013 = vld [vmem:[%s1 + $0x1128] sm:$0xff]
  %v1014 = vld [vmem:[%s1 + $0x1130] sm:$0xff]
  %v1015 = vld [vmem:[%s1 + $0x1138] sm:$0xff]
  %v1016 = vld [vmem:[%s1 + $0x1140] sm:$0xff]
  %v1017 = vld [vmem:[%s1 + $0x1148] sm:$0xff]
  %v1018 = vld [vmem:[%s1 + $0x1150] sm:$0xff]
  %v1019 = vld [vmem:[%s1 + $0x1158] sm:$0xff]
  %v1020 = vld [vmem:[%s1 + $0x1160] sm:$0xff]
  %v1021 = vld [vmem:[%s1 + $0x1168] sm:$0xff]
  %v1022 = vld [vmem:[%s1 + $0x1170] sm:$0xff]
  %v1023 = vld [vmem:[%s1 + $0x1178] sm:$0xff]
  %v1024 = vld [vmem:[%s1 + $0x1180] sm:$0xff]
  %v1025 = vld [vmem:[%s1 + $0x1188] sm:$0xff]
  %v1026 = vld [vmem:[%s1 + $0x1190] sm:$0xff]
  %v1027 = vld [vmem:[%s1 + $0x1198] sm:$0xff]
  %v1028 = vld [vmem:[%s1 + $0x11a0] sm:$0xff]
  %v1029 = vld [vmem:[%s1 + $0x11a8] sm:$0xff]
  %v1030 = vld [vmem:[%s1 + $0x11b0] sm:$0xff]
  %v1031 = vld [vmem:[%s1 + $0x11b8] sm:$0xff]
  %v1032 = vld [vmem:[%s1 + $0x11c0] sm:$0xff]
  %v1033 = vld [vmem:[%s1 + $0x11c8] sm:$0xff]
  %v1034 = vld [vmem:[%s1 + $0x11d0] sm:$0xff]
  %v1035 = vld [vmem:[%s1 + $0x11d8] sm:$0xff]
  %v1036 = vld [vmem:[%s1 + $0x11e0] sm:$0xff]
  %v1037 = vld [vmem:[%s1 + $0x11e8] sm:$0xff]
  %v1038 = vld [vmem:[%s1 + $0x11f0] sm:$0xff]
  %v1039 = vld [vmem:[%s1 + $0x11f8] sm:$0xff]
  %v1040 = vld [vmem:[%s1 + $0x1200] sm:$0xff]
  %v1041 = vld [vmem:[%s1 + $0x1208] sm:$0xff]
  %v1042 = vld [vmem:[%s1 + $0x1210] sm:$0xff]
  %v1043 = vld [vmem:[%s1 + $0x1218] sm:$0xff]
  %v1044 = vld [vmem:[%s1 + $0x1220] sm:$0xff]
  %v1045 = vld [vmem:[%s1 + $0x1228] sm:$0xff]
  %v1046 = vld [vmem:[%s1 + $0x1230] sm:$0xff]
  %v1047 = vld [vmem:[%s1 + $0x1238] sm:$0xff]
  %v1048 = vld [vmem:[%s1 + $0x1240] sm:$0xff]
  %v1049 = vld [vmem:[%s1 + $0x1248] sm:$0xff]
  %v1050 = vld [vmem:[%s1 + $0x1250] sm:$0xff]
  %v1051 = vld [vmem:[%s1 + $0x1258] sm:$0xff]
  %v1052 = vld [vmem:[%s1 + $0x1260] sm:$0xff]
  %v1053 = vld [vmem:[%s1 + $0x1268] sm:$0xff]
  %v1054 = vld [vmem:[%s1 + $0x1270] sm:$0xff]
  %v1055 = vld [vmem:[%s1 + $0x1278] sm:$0xff]
  %v1056 = vld [vmem:[%s1 + $0x1280] sm:$0xff]
  %v1057 = vld [vmem:[%s1 + $0x1288] sm:$0xff]
  %v1058 = vld [vmem:[%s1 + $0x1290] sm:$0xff]
  %v1059 = vld [vmem:[%s1 + $0x1298] sm:$0xff]
  %v1060 = vld [vmem:[%s1 + $0x12a0] sm:$0xff]
  %v1061 = vld [vmem:[%s1 + $0x12a8] sm:$0xff]
  %v1062 = vld [vmem:[%s1 + $0x12b0] sm:$0xff]
  %v1063 = vld [vmem:[%s1 + $0x12b8] sm:$0xff]
  %v1064 = vld [vmem:[%s1 + $0x12c0] sm:$0xff]
  %v1065 = vld [vmem:[%s1 + $0x12c8] sm:$0xff]
  %v1066 = vld [vmem:[%s1 + $0x12d0] sm:$0xff]
  %v1067 = vld [vmem:[%s1 + $0x12d8] sm:$0xff]
  %v1068 = vld [vmem:[%s1 + $0x12e0] sm:$0xff]
  %v1069 = vld [vmem:[%s1 + $0x12e8] sm:$0xff]
  %v1070 = vld [vmem:[%s1 + $0x12f0] sm:$0xff]
  %v1071 = vld [vmem:[%s1 + $0x12f8] sm:$0xff]
  %v1072 = vld [vmem:[%s1 + $0x1300] sm:$0xff]
  %v1073 = vld [vmem:[%s1 + $0x1308] sm:$0xff]
  %v1074 = vld [vmem:[%s1 + $0x1310] sm:$0xff]
  %v1075 = vld [vmem:[%s1 + $0x1318] sm:$0xff]
  %v1076 = vld [vmem:[%s1 + $0x1320] sm:$0xff]
  %v1077 = vld [vmem:[%s1 + $0x1328] sm:$0xff]
  %v1078 = vld [vmem:[%s1 + $0x1330] sm:$0xff]
  %v1079 = vld [vmem:[%s1 + $0x1338] sm:$0xff]
  %v1080 = vld [vmem:[%s1 + $0x1340] sm:$0xff]
  %v1081 = vld [vmem:[%s1 + $0x1348] sm:$0xff]
  %v1082 = vld [vmem:[%s1 + $0x1350] sm:$0xff]
  %v1083 = vld [vmem:[%s1 + $0x1358] sm:$0xff]
  %v1084 = vld [vmem:[%s1 + $0x1360] sm:$0xff]
  %v1085 = vld [vmem:[%s1 + $0x1368] sm:$0xff]
  %v1086 = vld [vmem:[%s1 + $0x1370] sm:$0xff]
  %v1087 = vld [vmem:[%s1 + $0x1378] sm:$0xff]
  %v1088 = vld [vmem:[%s1 + $0x1380] sm:$0xff]
  %v1089 = vld [vmem:[%s1 + $0x1388] sm:$0xff]
  %v1090 = vld [vmem:[%s1 + $0x1390] sm:$0xff]
  %v1091 = vld [vmem:[%s1 + $0x1398] sm:$0xff]
  %v1092 = vld [vmem:[%s1 + $0x13a0] sm:$0xff]
  %v1093 = vld [vmem:[%s1 + $0x13a8] sm:$0xff]
  %v1094 = vld [vmem:[%s1 + $0x13b0] sm:$0xff]
  %v1095 = vld [vmem:[%s1 + $0x13b8] sm:$0xff]
  %v1096 = vld [vmem:[%s1 + $0x13c0] sm:$0xff]
  %v1097 = vld [vmem:[%s1 + $0x13c8] sm:$0xff]
  %v1098 = vld [vmem:[%s1 + $0x13d0] sm:$0xff]
  %v1099 = vld [vmem:[%s1 + $0x13d8] sm:$0xff]
  %v1100 = vld [vmem:[%s1 + $0x13e0] sm:$0xff]
  %v1101 = vld [vmem:[%s1 + $0x13e8] sm:$0xff]
  %v1102 = vld [vmem:[%s1 + $0x13f0] sm:$0xff]
  %v1103 = vld [vmem:[%s1 + $0x13f8] sm:$0xff]
  %v1104 = vld [vmem:[%s1 + $0x1400] sm:$0xff]
  %v1105 = vld [vmem:[%s1 + $0x1408] sm:$0xff]
  %v1106 = vld [vmem:[%s1 + $0x1410] sm:$0xff]
  %v1107 = vld [vmem:[%s1 + $0x1418] sm:$0xff]
  %v1108 = vld [vmem:[%s1 + $0x1420] sm:$0xff]
  %v1109 = vld [vmem:[%s1 + $0x1428] sm:$0xff]
  %v1110 = vld [vmem:[%s1 + $0x1430] sm:$0xff]
  %v1111 = vld [vmem:[%s1 + $0x1438] sm:$0xff]
  %v1112 = vld [vmem:[%s1 + $0x1440] sm:$0xff]
  %v1113 = vld [vmem:[%s1 + $0x1448] sm:$0xff]
  %v1114 = vld [vmem:[%s1 + $0x1450] sm:$0xff]
  %v1115 = vld [vmem:[%s1 + $0x1458] sm:$0xff]
  %v1116 = vld [vmem:[%s1 + $0x1460] sm:$0xff]
  %v1117 = vld [vmem:[%s1 + $0x1468] sm:$0xff]
  %v1118 = vld [vmem:[%s1 + $0x1470] sm:$0xff]
  %v1119 = vld [vmem:[%s1 + $0x1478] sm:$0xff]
  %v1120 = vld [vmem:[%s1 + $0x1480] sm:$0xff]
  %v1121 = vld [vmem:[%s1 + $0x1488] sm:$0xff]
  %v1122 = vld [vmem:[%s1 + $0x1490] sm:$0xff]
  %v1123 = vld [vmem:[%s1 + $0x1498] sm:$0xff]
  %v1124 = vld [vmem:[%s1 + $0x14a0] sm:$0xff]
  %v1125 = vld [vmem:[%s1 + $0x14a8] sm:$0xff]
  %v1126 = vld [vmem:[%s1 + $0x14b0] sm:$0xff]
  %v1127 = vld [vmem:[%s1 + $0x14b8] sm:$0xff]
  %v1128 = vld [vmem:[%s1 + $0x14c0] sm:$0xff]
  %v1129 = vld [vmem:[%s1 + $0x14c8] sm:$0xff]
  %v1130 = vld [vmem:[%s1 + $0x14d0] sm:$0xff]
  %v1131 = vld [vmem:[%s1 + $0x14d8] sm:$0xff]
  %v1132 = vld [vmem:[%s1 + $0x14e0] sm:$0xff]
  %v1133 = vld [vmem:[%s1 + $0x14e8] sm:$0xff]
  %v1134 = vld [vmem:[%s1 + $0x14f0] sm:$0xff]
  %v1135 = vld [vmem:[%s1 + $0x14f8] sm:$0xff]
  %v1136 = vld [vmem:[%s1 + $0x1500] sm:$0xff]
  %v1137 = vld [vmem:[%s1 + $0x1508] sm:$0xff]
  %v1138 = vld [vmem:[%s1 + $0x1510] sm:$0xff]
  %v1139 = vld [vmem:[%s1 + $0x1518] sm:$0xff]
  %v1140 = vld [vmem:[%s1 + $0x1520] sm:$0xff]
  %v1141 = vld [vmem:[%s1 + $0x1528] sm:$0xff]
  %v1142 = vld [vmem:[%s1 + $0x1530] sm:$0xff]
  %v1143 = vld [vmem:[%s1 + $0x1538] sm:$0xff]
  %v1144 = vld [vmem:[%s1 + $0x1540] sm:$0xff]
  %v1145 = vld [vmem:[%s1 + $0x1548] sm:$0xff]
  %v1146 = vld [vmem:[%s1 + $0x1550] sm:$0xff]
  %v1147 = vld [vmem:[%s1 + $0x1558] sm:$0xff]
  %v1148 = vld [vmem:[%s1 + $0x1560] sm:$0xff]
  %v1149 = vld [vmem:[%s1 + $0x1568] sm:$0xff]
  %v1150 = vld [vmem:[%s1 + $0x1570] sm:$0xff]
  %v1151 = vld [vmem:[%s1 + $0x1578] sm:$0xff]
  %v1152 = vld [vmem:[%s1 + $0x1580] sm:$0xff]
  %v1153 = vld [vmem:[%s1 + $0x1588] sm:$0xff]
  %v1154 = vld [vmem:[%s1 + $0x1590] sm:$0xff]
  %v1155 = vld [vmem:[%s1 + $0x1598] sm:$0xff]
  %v1156 = vld [vmem:[%s1 + $0x15a0] sm:$0xff]
  %v1157 = vld [vmem:[%s1 + $0x15a8] sm:$0xff]
  %v1158 = vld [vmem:[%s1 + $0x15b0] sm:$0xff]
  %v1159 = vld [vmem:[%s1 + $0x15b8] sm:$0xff]
  %v1160 = vld [vmem:[%s1 + $0x15c0] sm:$0xff]
  %v1161 = vld [vmem:[%s1 + $0x15c8] sm:$0xff]
  %v1162 = vld [vmem:[%s1 + $0x15d0] sm:$0xff]
  %v1163 = vld [vmem:[%s1 + $0x15d8] sm:$0xff]
  %v1164 = vld [vmem:[%s1 + $0x15e0] sm:$0xff]
  %v1165 = vld [vmem:[%s1 + $0x15e8] sm:$0xff]
  %v1166 = vld [vmem:[%s1 + $0x15f0] sm:$0xff]
  %v1167 = vld [vmem:[%s1 + $0x15f8] sm:$0xff]
  %v1168 = vld [vmem:[%s1 + $0x1600] sm:$0xff]
  %v1169 = vld [vmem:[%s1 + $0x1608] sm:$0xff]
  %v1170 = vld [vmem:[%s1 + $0x1610] sm:$0xff]
  %v1171 = vld [vmem:[%s1 + $0x1618] sm:$0xff]
  %v1172 = vld [vmem:[%s1 + $0x1620] sm:$0xff]
  %v1173 = vld [vmem:[%s1 + $0x1628] sm:$0xff]
  %v1174 = vld [vmem:[%s1 + $0x1630] sm:$0xff]
  %v1175 = vld [vmem:[%s1 + $0x1638] sm:$0xff]
  %v1176 = vld [vmem:[%s1 + $0x1640] sm:$0xff]
  %v1177 = vld [vmem:[%s1 + $0x1648] sm:$0xff]
  %v1178 = vld [vmem:[%s1 + $0x1650] sm:$0xff]
  %v1179 = vld [vmem:[%s1 + $0x1658] sm:$0xff]
  %v1180 = vld [vmem:[%s1 + $0x1660] sm:$0xff]
  %v1181 = vld [vmem:[%s1 + $0x1668] sm:$0xff]
  %v1182 = vld [vmem:[%s1 + $0x1670] sm:$0xff]
  %v1183 = vld [vmem:[%s1 + $0x1678] sm:$0xff]
  %v1184 = vld [vmem:[%s1 + $0x1680] sm:$0xff]
  %v1185 = vld [vmem:[%s1 + $0x1688] sm:$0xff]
  %v1186 = vld [vmem:[%s1 + $0x1690] sm:$0xff]
  %v1187 = vld [vmem:[%s1 + $0x1698] sm:$0xff]
  %v1188 = vld [vmem:[%s1 + $0x16a0] sm:$0xff]
  %v1189 = vld [vmem:[%s1 + $0x16a8] sm:$0xff]
  %v1190 = vld [vmem:[%s1 + $0x16b0] sm:$0xff]
  %v1191 = vld [vmem:[%s1 + $0x16b8] sm:$0xff]
  %v1192 = vld [vmem:[%s1 + $0x16c0] sm:$0xff]
  %v1193 = vld [vmem:[%s1 + $0x16c8] sm:$0xff]
  %v1194 = vld [vmem:[%s1 + $0x16d0] sm:$0xff]
  %v1195 = vld [vmem:[%s1 + $0x16d8] sm:$0xff]
  %v1196 = vld [vmem:[%s1 + $0x16e0] sm:$0xff]
  %v1197 = vld [vmem:[%s1 + $0x16e8] sm:$0xff]
  %v1198 = vld [vmem:[%s1 + $0x16f0] sm:$0xff]
  %v1199 = vld [vmem:[%s1 + $0x16f8] sm:$0xff]
  %v1200 = vld [vmem:[%s1 + $0x1700] sm:$0xff]
  %v1201 = vld [vmem:[%s1 + $0x1708] sm:$0xff]
  %v1202 = vld [vmem:[%s1 + $0x1710] sm:$0xff]
  %v1203 = vld [vmem:[%s1 + $0x1718] sm:$0xff]
  %v1204 = vld [vmem:[%s1 + $0x1720] sm:$0xff]
  %v1205 = vld [vmem:[%s1 + $0x1728] sm:$0xff]
  %v1206 = vld [vmem:[%s1 + $0x1730] sm:$0xff]
  %v1207 = vld [vmem:[%s1 + $0x1738] sm:$0xff]
  %v1208 = vld [vmem:[%s1 + $0x1740] sm:$0xff]
  %v1209 = vld [vmem:[%s1 + $0x1748] sm:$0xff]
  %v1210 = vld [vmem:[%s1 + $0x1750] sm:$0xff]
  %v1211 = vld [vmem:[%s1 + $0x1758] sm:$0xff]
  %v1212 = vld [vmem:[%s1 + $0x1760] sm:$0xff]
  %v1213 = vld [vmem:[%s1 + $0x1768] sm:$0xff]
  %v1214 = vld [vmem:[%s1 + $0x1770] sm:$0xff]
  %v1215 = vld [vmem:[%s1 + $0x1778] sm:$0xff]
  %v1216 = vld [vmem:[%s1 + $0x1780] sm:$0xff]
  %v1217 = vld [vmem:[%s1 + $0x1788] sm:$0xff]
  %v1218 = vld [vmem:[%s1 + $0x1790] sm:$0xff]
  %v1219 = vld [vmem:[%s1 + $0x1798] sm:$0xff]
  %v1220 = vld [vmem:[%s1 + $0x17a0] sm:$0xff]
  %v1221 = vld [vmem:[%s1 + $0x17a8] sm:$0xff]
  %v1222 = vld [vmem:[%s1 + $0x17b0] sm:$0xff]
  %v1223 = vld [vmem:[%s1 + $0x17b8] sm:$0xff]
  %v1224 = vld [vmem:[%s1 + $0x17c0] sm:$0xff]
  %v1225 = vld [vmem:[%s1 + $0x17c8] sm:$0xff]
  %v1226 = vld [vmem:[%s1 + $0x17d0] sm:$0xff]
  %v1227 = vld [vmem:[%s1 + $0x17d8] sm:$0xff]
  %v1228 = vld [vmem:[%s1 + $0x17e0] sm:$0xff]
  %v1229 = vld [vmem:[%s1 + $0x17e8] sm:$0xff]
  %v1230 = vld [vmem:[%s1 + $0x17f0] sm:$0xff]
  %v1231 = vld [vmem:[%s1 + $0x17f8] sm:$0xff]
  %v1232 = vld [vmem:[%s1 + $0x1800] sm:$0xff]
  %v1233 = vld [vmem:[%s1 + $0x1808] sm:$0xff]
  %v1234 = vld [vmem:[%s1 + $0x1810] sm:$0xff]
  %v1235 = vld [vmem:[%s1 + $0x1818] sm:$0xff]
  %v1236 = vld [vmem:[%s1 + $0x1820] sm:$0xff]
  %v1237 = vld [vmem:[%s1 + $0x1828] sm:$0xff]
  %v1238 = vld [vmem:[%s1 + $0x1830] sm:$0xff]
  %v1239 = vld [vmem:[%s1 + $0x1838] sm:$0xff]
  %v1240 = vld [vmem:[%s1 + $0x1840] sm:$0xff]
  %v1241 = vld [vmem:[%s1 + $0x1848] sm:$0xff]
  %v1242 = vld [vmem:[%s1 + $0x1850] sm:$0xff]
  %v1243 = vld [vmem:[%s1 + $0x1858] sm:$0xff]
  %v1244 = vld [vmem:[%s1 + $0x1860] sm:$0xff]
  %v1245 = vld [vmem:[%s1 + $0x1868] sm:$0xff]
  %v1246 = vld [vmem:[%s1 + $0x1870] sm:$0xff]
  %v1247 = vld [vmem:[%s1 + $0x1878] sm:$0xff]
  %v1248 = vld [vmem:[%s1 + $0x1880] sm:$0xff]
  %v1249 = vld [vmem:[%s1 + $0x1888] sm:$0xff]
  %v1250 = vld [vmem:[%s1 + $0x1890] sm:$0xff]
  %v1251 = vld [vmem:[%s1 + $0x1898] sm:$0xff]
  %v1252 = vld [vmem:[%s1 + $0x18a0] sm:$0xff]
  %v1253 = vld [vmem:[%s1 + $0x18a8] sm:$0xff]
  %v1254 = vld [vmem:[%s1 + $0x18b0] sm:$0xff]
  %v1255 = vld [vmem:[%s1 + $0x18b8] sm:$0xff]
  %v1256 = vld [vmem:[%s1 + $0x18c0] sm:$0xff]
  %v1257 = vld [vmem:[%s1 + $0x18c8] sm:$0xff]
  %v1258 = vld [vmem:[%s1 + $0x18d0] sm:$0xff]
  %v1259 = vld [vmem:[%s1 + $0x18d8] sm:$0xff]
  %v1260 = vld [vmem:[%s1 + $0x18e0] sm:$0xff]
  %v1261 = vld [vmem:[%s1 + $0x18e8] sm:$0xff]
  %v1262 = vld [vmem:[%s1 + $0x18f0] sm:$0xff]
  %v1263 = vld [vmem:[%s1 + $0x18f8] sm:$0xff]
  %v1264 = vld [vmem:[%s1 + $0x1900] sm:$0xff]
  %v1265 = vld [vmem:[%s1 + $0x1908] sm:$0xff]
  %v1266 = vld [vmem:[%s1 + $0x1910] sm:$0xff]
  %v1267 = vld [vmem:[%s1 + $0x1918] sm:$0xff]
  %v1268 = vld [vmem:[%s1 + $0x1920] sm:$0xff]
  %v1269 = vld [vmem:[%s1 + $0x1928] sm:$0xff]
  %v1270 = vld [vmem:[%s1 + $0x1930] sm:$0xff]
  %v1271 = vld [vmem:[%s1 + $0x1938] sm:$0xff]
  %v1272 = vld [vmem:[%s1 + $0x1940] sm:$0xff]
  %v1273 = vld [vmem:[%s1 + $0x1948] sm:$0xff]
  %v1274 = vld [vmem:[%s1 + $0x1950] sm:$0xff]
  %v1275 = vld [vmem:[%s1 + $0x1958] sm:$0xff]
  %v1276 = vld [vmem:[%s1 + $0x1960] sm:$0xff]
  %v1277 = vld [vmem:[%s1 + $0x1968] sm:$0xff]
  %v1278 = vld [vmem:[%s1 + $0x1970] sm:$0xff]
  %v1279 = vld [vmem:[%s1 + $0x1978] sm:$0xff]
  %v1280 = vld [vmem:[%s1 + $0x1980] sm:$0xff]
  %v1281 = vld [vmem:[%s1 + $0x1988] sm:$0xff]
  %v1282 = vld [vmem:[%s1 + $0x1990] sm:$0xff]
  %v1283 = vld [vmem:[%s1 + $0x1998] sm:$0xff]
  %v1284 = vld [vmem:[%s1 + $0x19a0] sm:$0xff]
  %v1285 = vld [vmem:[%s1 + $0x19a8] sm:$0xff]
  %v1286 = vld [vmem:[%s1 + $0x19b0] sm:$0xff]
  %v1287 = vld [vmem:[%s1 + $0x19b8] sm:$0xff]
  %v1288 = vld [vmem:[%s1 + $0x19c0] sm:$0xff]
  %v1289 = vld [vmem:[%s1 + $0x19c8] sm:$0xff]
  %v1290 = vld [vmem:[%s1 + $0x19d0] sm:$0xff]
  %v1291 = vld [vmem:[%s1 + $0x19d8] sm:$0xff]
  %v1292 = vld [vmem:[%s1 + $0x19e0] sm:$0xff]
  %v1293 = vld [vmem:[%s1 + $0x19e8] sm:$0xff]
  %v1294 = vld [vmem:[%s1 + $0x19f0] sm:$0xff]
  %v1295 = vld [vmem:[%s1 + $0x19f8] sm:$0xff]
  %v1296 = vld [vmem:[%s1 + $0x1a00] sm:$0xff]
  %v1297 = vld [vmem:[%s1 + $0x1a08] sm:$0xff]
  %v1298 = vld [vmem:[%s1 + $0x1a10] sm:$0xff]
  %v1299 = vld [vmem:[%s1 + $0x1a18] sm:$0xff]
  %v1300 = vld [vmem:[%s1 + $0x1a20] sm:$0xff]
  %v1301 = vld [vmem:[%s1 + $0x1a28] sm:$0xff]
  %v1302 = vld [vmem:[%s1 + $0x1a30] sm:$0xff]
  %v1303 = vld [vmem:[%s1 + $0x1a38] sm:$0xff]
  %v1304 = vld [vmem:[%s1 + $0x1a40] sm:$0xff]
  %v1305 = vld [vmem:[%s1 + $0x1a48] sm:$0xff]
  %v1306 = vld [vmem:[%s1 + $0x1a50] sm:$0xff]
  %v1307 = vld [vmem:[%s1 + $0x1a58] sm:$0xff]
  %v1308 = vld [vmem:[%s1 + $0x1a60] sm:$0xff]
  %v1309 = vld [vmem:[%s1 + $0x1a68] sm:$0xff]
  %v1310 = vld [vmem:[%s1 + $0x1a70] sm:$0xff]
  %v1311 = vld [vmem:[%s1 + $0x1a78] sm:$0xff]
  %v1312 = vld [vmem:[%s1 + $0x1a80] sm:$0xff]
  %v1313 = vld [vmem:[%s1 + $0x1a88] sm:$0xff]
  %v1314 = vld [vmem:[%s1 + $0x1a90] sm:$0xff]
  %v1315 = vld [vmem:[%s1 + $0x1a98] sm:$0xff]
  %v1316 = vld [vmem:[%s1 + $0x1aa0] sm:$0xff]
  %v1317 = vld [vmem:[%s1 + $0x1aa8] sm:$0xff]
  %v1318 = vld [vmem:[%s1 + $0x1ab0] sm:$0xff]
  %v1319 = vld [vmem:[%s1 + $0x1ab8] sm:$0xff]
  %v1320 = vld [vmem:[%s1 + $0x1ac0] sm:$0xff]
  %v1321 = vld [vmem:[%s1 + $0x1ac8] sm:$0xff]
  %v1322 = vld [vmem:[%s1 + $0x1ad0] sm:$0xff]
  %v1323 = vld [vmem:[%s1 + $0x1ad8] sm:$0xff]
  %v1324 = vld [vmem:[%s1 + $0x1ae0] sm:$0xff]
  %v1325 = vld [vmem:[%s1 + $0x1ae8] sm:$0xff]
  %v1326 = vld [vmem:[%s1 + $0x1af0] sm:$0xff]
  %v1327 = vld [vmem:[%s1 + $0x1af8] sm:$0xff]
  %v1328 = vld [vmem:[%s1 + $0x1b00] sm:$0xff]
  %v1329 = vld [vmem:[%s1 + $0x1b08] sm:$0xff]
  %v1330 = vld [vmem:[%s1 + $0x1b10] sm:$0xff]
  %v1331 = vld [vmem:[%s1 + $0x1b18] sm:$0xff]
  %v1332 = vld [vmem:[%s1 + $0x1b20] sm:$0xff]
  %v1333 = vld [vmem:[%s1 + $0x1b28] sm:$0xff]
  %v1334 = vld [vmem:[%s1 + $0x1b30] sm:$0xff]
  %v1335 = vld [vmem:[%s1 + $0x1b38] sm:$0xff]
  %v1336 = vld [vmem:[%s1 + $0x1b40] sm:$0xff]
  %v1337 = vld [vmem:[%s1 + $0x1b48] sm:$0xff]
  %v1338 = vld [vmem:[%s1 + $0x1b50] sm:$0xff]
  %v1339 = vld [vmem:[%s1 + $0x1b58] sm:$0xff]
  %v1340 = vld [vmem:[%s1 + $0x1b60] sm:$0xff]
  %v1341 = vld [vmem:[%s1 + $0x1b68] sm:$0xff]
  %v1342 = vld [vmem:[%s1 + $0x1b70] sm:$0xff]
  %v1343 = vld [vmem:[%s1 + $0x1b78] sm:$0xff]
  %v1344 = vld [vmem:[%s1 + $0x1b80] sm:$0xff]
  %v1345 = vld [vmem:[%s1 + $0x1b88] sm:$0xff]
  %v1346 = vld [vmem:[%s1 + $0x1b90] sm:$0xff]
  %v1347 = vld [vmem:[%s1 + $0x1b98] sm:$0xff]
  %v1348 = vld [vmem:[%s1 + $0x1ba0] sm:$0xff]
  %v1349 = vld [vmem:[%s1 + $0x1ba8] sm:$0xff]
  %v1350 = vld [vmem:[%s1 + $0x1bb0] sm:$0xff]
  %v1351 = vld [vmem:[%s1 + $0x1bb8] sm:$0xff]
  %v1352 = vld [vmem:[%s1 + $0x1bc0] sm:$0xff]
  %v1353 = vld [vmem:[%s1 + $0x1bc8] sm:$0xff]
  %v1354 = vld [vmem:[%s1 + $0x1bd0] sm:$0xff]
  %v1355 = vld [vmem:[%s1 + $0x1bd8] sm:$0xff]
  %v1356 = vld [vmem:[%s1 + $0x1be0] sm:$0xff]
  %v1357 = vld [vmem:[%s1 + $0x1be8] sm:$0xff]
  %v1358 = vld [vmem:[%s1 + $0x1bf0] sm:$0xff]
  %v1359 = vld [vmem:[%s1 + $0x1bf8] sm:$0xff]
  %v1360 = vld [vmem:[%s1 + $0x1c00] sm:$0xff]
  %v1361 = vld [vmem:[%s1 + $0x1c08] sm:$0xff]
  %v1362 = vld [vmem:[%s1 + $0x1c10] sm:$0xff]
  %v1363 = vld [vmem:[%s1 + $0x1c18] sm:$0xff]
  %v1364 = vld [vmem:[%s1 + $0x1c20] sm:$0xff]
  %v1365 = vld [vmem:[%s1 + $0x1c28] sm:$0xff]
  %v1366 = vld [vmem:[%s1 + $0x1c30] sm:$0xff]
  %v1367 = vld [vmem:[%s1 + $0x1c38] sm:$0xff]
  %v1368 = vld [vmem:[%s1 + $0x1c40] sm:$0xff]
  %v1369 = vld [vmem:[%s1 + $0x1c48] sm:$0xff]
  %v1370 = vld [vmem:[%s1 + $0x1c50] sm:$0xff]
  %v1371 = vld [vmem:[%s1 + $0x1c58] sm:$0xff]
  %v1372 = vld [vmem:[%s1 + $0x1c60] sm:$0xff]
  %v1373 = vld [vmem:[%s1 + $0x1c68] sm:$0xff]
  %v1374 = vld [vmem:[%s1 + $0x1c70] sm:$0xff]
  %v1375 = vld [vmem:[%s1 + $0x1c78] sm:$0xff]
  %v1376 = vld [vmem:[%s1 + $0x1c80] sm:$0xff]
  %v1377 = vld [vmem:[%s1 + $0x1c88] sm:$0xff]
  %v1378 = vld [vmem:[%s1 + $0x1c90] sm:$0xff]
  %v1379 = vld [vmem:[%s1 + $0x1c98] sm:$0xff]
  %v1380 = vld [vmem:[%s1 + $0x1ca0] sm:$0xff]
  %v1381 = vld [vmem:[%s1 + $0x1ca8] sm:$0xff]
  %v1382 = vld [vmem:[%s1 + $0x1cb0] sm:$0xff]
  %v1383 = vld [vmem:[%s1 + $0x1cb8] sm:$0xff]
  %v1384 = vld [vmem:[%s1 + $0x1cc0] sm:$0xff]
  %v1385 = vld [vmem:[%s1 + $0x1cc8] sm:$0xff]
  %v1386 = vld [vmem:[%s1 + $0x1cd0] sm:$0xff]
  %v1387 = vld [vmem:[%s1 + $0x1cd8] sm:$0xff]
  %v1388 = vld [vmem:[%s1 + $0x1ce0] sm:$0xff]
  %v1389 = vld [vmem:[%s1 + $0x1ce8] sm:$0xff]
  %v1390 = vld [vmem:[%s1 + $0x1cf0] sm:$0xff]
  %v1391 = vld [vmem:[%s1 + $0x1cf8] sm:$0xff]
  %v1392 = vld [vmem:[%s1 + $0x1d00] sm:$0xff]
  %v1393 = vld [vmem:[%s1 + $0x1d08] sm:$0xff]
  %v1394 = vld [vmem:[%s1 + $0x1d10] sm:$0xff]
  %v1395 = vld [vmem:[%s1 + $0x1d18] sm:$0xff]
  %v1396 = vld [vmem:[%s1 + $0x1d20] sm:$0xff]
  %v1397 = vld [vmem:[%s1 + $0x1d28] sm:$0xff]
  %v1398 = vld [vmem:[%s1 + $0x1d30] sm:$0xff]
  %v1399 = vld [vmem:[%s1 + $0x1d38] sm:$0xff]
  %v1400 = vld [vmem:[%s1 + $0x1d40] sm:$0xff]
  %v1401 = vld [vmem:[%s1 + $0x1d48] sm:$0xff]
  %v1402 = vld [vmem:[%s1 + $0x1d50] sm:$0xff]
  %v1403 = vld [vmem:[%s1 + $0x1d58] sm:$0xff]
  %v1404 = vld [vmem:[%s1 + $0x1d60] sm:$0xff]
  %v1405 = vld [vmem:[%s1 + $0x1d68] sm:$0xff]
  %v1406 = vld [vmem:[%s1 + $0x1d70] sm:$0xff]
  %v1407 = vld [vmem:[%s1 + $0x1d78] sm:$0xff]
  %v1408 = vld [vmem:[%s1 + $0x1d80] sm:$0xff]
  %v1409 = vld [vmem:[%s1 + $0x1d88] sm:$0xff]
  %v1410 = vld [vmem:[%s1 + $0x1d90] sm:$0xff]
  %v1411 = vld [vmem:[%s1 + $0x1d98] sm:$0xff]
  %v1412 = vld [vmem:[%s1 + $0x1da0] sm:$0xff]
  %v1413 = vld [vmem:[%s1 + $0x1da8] sm:$0xff]
  %v1414 = vld [vmem:[%s1 + $0x1db0] sm:$0xff]
  %v1415 = vld [vmem:[%s1 + $0x1db8] sm:$0xff]
  %v1416 = vld [vmem:[%s1 + $0x1dc0] sm:$0xff]
  %v1417 = vld [vmem:[%s1 + $0x1dc8] sm:$0xff]
  %v1418 = vld [vmem:[%s1 + $0x1dd0] sm:$0xff]
  %v1419 = vld [vmem:[%s1 + $0x1dd8] sm:$0xff]
  %v1420 = vld [vmem:[%s1 + $0x1de0] sm:$0xff]
  %v1421 = vld [vmem:[%s1 + $0x1de8] sm:$0xff]
  %v1422 = vld [vmem:[%s1 + $0x1df0] sm:$0xff]
  %v1423 = vld [vmem:[%s1 + $0x1df8] sm:$0xff]
  %v1424 = vld [vmem:[%s1 + $0x1e00] sm:$0xff]
  %v1425 = vld [vmem:[%s1 + $0x1e08] sm:$0xff]
  %v1426 = vld [vmem:[%s1 + $0x1e10] sm:$0xff]
  %v1427 = vld [vmem:[%s1 + $0x1e18] sm:$0xff]
  %v1428 = vld [vmem:[%s1 + $0x1e20] sm:$0xff]
  %v1429 = vld [vmem:[%s1 + $0x1e28] sm:$0xff]
  %v1430 = vld [vmem:[%s1 + $0x1e30] sm:$0xff]
  %v1431 = vld [vmem:[%s1 + $0x1e38] sm:$0xff]
  %v1432 = vld [vmem:[%s1 + $0x1e40] sm:$0xff]
  %v1433 = vld [vmem:[%s1 + $0x1e48] sm:$0xff]
  %v1434 = vld [vmem:[%s1 + $0x1e50] sm:$0xff]
  %v1435 = vld [vmem:[%s1 + $0x1e58] sm:$0xff]
  %v1436 = vld [vmem:[%s1 + $0x1e60] sm:$0xff]
  %v1437 = vld [vmem:[%s1 + $0x1e68] sm:$0xff]
  %v1438 = vld [vmem:[%s1 + $0x1e70] sm:$0xff]
  %v1439 = vld [vmem:[%s1 + $0x1e78] sm:$0xff]
  %v1440 = vld [vmem:[%s1 + $0x1e80] sm:$0xff]
  %v1441 = vld [vmem:[%s1 + $0x1e88] sm:$0xff]
  %v1442 = vld [vmem:[%s1 + $0x1e90] sm:$0xff]
  %v1443 = vld [vmem:[%s1 + $0x1e98] sm:$0xff]
  %v1444 = vld [vmem:[%s1 + $0x1ea0] sm:$0xff]
  %v1445 = vld [vmem:[%s1 + $0x1ea8] sm:$0xff]
  %v1446 = vld [vmem:[%s1 + $0x1eb0] sm:$0xff]
  %v1447 = vld [vmem:[%s1 + $0x1eb8] sm:$0xff]
  %v1448 = vld [vmem:[%s1 + $0x1ec0] sm:$0xff]
  %v1449 = vld [vmem:[%s1 + $0x1ec8] sm:$0xff]
  %v1450 = vld [vmem:[%s1 + $0x1ed0] sm:$0xff]
  %v1451 = vld [vmem:[%s1 + $0x1ed8] sm:$0xff]
  %v1452 = vld [vmem:[%s1 + $0x1ee0] sm:$0xff]
  %v1453 = vld [vmem:[%s1 + $0x1ee8] sm:$0xff]
  %v1454 = vld [vmem:[%s1 + $0x1ef0] sm:$0xff]
  %v1455 = vld [vmem:[%s1 + $0x1ef8] sm:$0xff]
  %v1456 = vld [vmem:[%s1 + $0x1f00] sm:$0xff]
  %v1457 = vld [vmem:[%s1 + $0x1f08] sm:$0xff]
  %v1458 = vld [vmem:[%s1 + $0x1f10] sm:$0xff]
  %v1459 = vld [vmem:[%s1 + $0x1f18] sm:$0xff]
  %v1460 = vld [vmem:[%s1 + $0x1f20] sm:$0xff]
  %v1461 = vld [vmem:[%s1 + $0x1f28] sm:$0xff]
  %v1462 = vld [vmem:[%s1 + $0x1f30] sm:$0xff]
  %v1463 = vld [vmem:[%s1 + $0x1f38] sm:$0xff]
  %v1464 = vld [vmem:[%s1 + $0x1f40] sm:$0xff]
  %v1465 = vld [vmem:[%s1 + $0x1f48] sm:$0xff]
  %v1466 = vld [vmem:[%s1 + $0x1f50] sm:$0xff]
  %v1467 = vld [vmem:[%s1 + $0x1f58] sm:$0xff]
  %v1468 = vld [vmem:[%s1 + $0x1f60] sm:$0xff]
  %v1469 = vld [vmem:[%s1 + $0x1f68] sm:$0xff]
  %v1470 = vld [vmem:[%s1 + $0x1f70] sm:$0xff]
  %v1471 = vld [vmem:[%s1 + $0x1f78] sm:$0xff]
  %v1472 = vld [vmem:[%s1 + $0x1f80] sm:$0xff]
  %v1473 = vld [vmem:[%s1 + $0x1f88] sm:$0xff]
  %v1474 = vld [vmem:[%s1 + $0x1f90] sm:$0xff]
  %v1475 = vld [vmem:[%s1 + $0x1f98] sm:$0xff]
  %v1476 = vld [vmem:[%s1 + $0x1fa0] sm:$0xff]
  %v1477 = vld [vmem:[%s1 + $0x1fa8] sm:$0xff]
  %v1478 = vld [vmem:[%s1 + $0x1fb0] sm:$0xff]
  %v1479 = vld [vmem:[%s1 + $0x1fb8] sm:$0xff]
  %v1480 = vld [vmem:[%s1 + $0x1fc0] sm:$0xff]
  %v1481 = vld [vmem:[%s1 + $0x1fc8] sm:$0xff]
  %v1482 = vld [vmem:[%s1 + $0x1fd0] sm:$0xff]
  %v1483 = vld [vmem:[%s1 + $0x1fd8] sm:$0xff]
  %v1484 = vld [vmem:[%s1 + $0x1fe0] sm:$0xff]
  %v1485 = vld [vmem:[%s1 + $0x1fe8] sm:$0xff]
  %v1486 = vld [vmem:[%s1 + $0x1ff0] sm:$0xff]
  %v1487 = vld [vmem:[%s1 + $0x1ff8] sm:$0xff]
  %v1488 = vld [vmem:[%s1 + $0x2000] sm:$0xff]
  %v1489 = vld [vmem:[%s1 + $0x2008] sm:$0xff]
  %v1490 = vld [vmem:[%s1 + $0x2010] sm:$0xff]
  %v1491 = vld [vmem:[%s1 + $0x2018] sm:$0xff]
  %v1492 = vld [vmem:[%s1 + $0x2020] sm:$0xff]
  %v1493 = vld [vmem:[%s1 + $0x2028] sm:$0xff]
  %v1494 = vld [vmem:[%s1 + $0x2030] sm:$0xff]
  %v1495 = vld [vmem:[%s1 + $0x2038] sm:$0xff]
  %v1496 = vld [vmem:[%s1 + $0x2040] sm:$0xff]
  %v1497 = vld [vmem:[%s1 + $0x2048] sm:$0xff]
  %v1498 = vld [vmem:[%s1 + $0x2050] sm:$0xff]
  %v1499 = vld [vmem:[%s1 + $0x2058] sm:$0xff]
  %v1500 = vld [vmem:[%s1 + $0x2060] sm:$0xff]
  %v1501 = vld [vmem:[%s1 + $0x2068] sm:$0xff]
  %v1502 = vld [vmem:[%s1 + $0x2070] sm:$0xff]
  %v1503 = vld [vmem:[%s1 + $0x2078] sm:$0xff]
  %v1504 = vld [vmem:[%s1 + $0x2080] sm:$0xff]
  %v1505 = vld [vmem:[%s1 + $0x2088] sm:$0xff]
  %v1506 = vld [vmem:[%s1 + $0x2090] sm:$0xff]
  %v1507 = vld [vmem:[%s1 + $0x2098] sm:$0xff]
  %v1508 = vld [vmem:[%s1 + $0x20a0] sm:$0xff]
  %v1509 = vld [vmem:[%s1 + $0x20a8] sm:$0xff]
  %v1510 = vld [vmem:[%s1 + $0x20b0] sm:$0xff]
  %v1511 = vld [vmem:[%s1 + $0x20b8] sm:$0xff]
  %v1512 = vld [vmem:[%s1 + $0x20c0] sm:$0xff]
  %v1513 = vld [vmem:[%s1 + $0x20c8] sm:$0xff]
  %v1514 = vld [vmem:[%s1 + $0x20d0] sm:$0xff]
  %v1515 = vld [vmem:[%s1 + $0x20d8] sm:$0xff]
  %v1516 = vld [vmem:[%s1 + $0x20e0] sm:$0xff]
  %v1517 = vld [vmem:[%s1 + $0x20e8] sm:$0xff]
  %v1518 = vld [vmem:[%s1 + $0x20f0] sm:$0xff]
  %v1519 = vld [vmem:[%s1 + $0x20f8] sm:$0xff]
  %v1520 = vld [vmem:[%s1 + $0x2100] sm:$0xff]
  %v1521 = vld [vmem:[%s1 + $0x2108] sm:$0xff]
  %v1522 = vld [vmem:[%s1 + $0x2110] sm:$0xff]
  %v1523 = vld [vmem:[%s1 + $0x2118] sm:$0xff]
  %v1524 = vld [vmem:[%s1 + $0x2120] sm:$0xff]
  %v1525 = vld [vmem:[%s1 + $0x2128] sm:$0xff]
  %v1526 = vld [vmem:[%s1 + $0x2130] sm:$0xff]
  %v1527 = vld [vmem:[%s1 + $0x2138] sm:$0xff]
  %v1528 = vld [vmem:[%s1 + $0x2140] sm:$0xff]
  %v1529 = vld [vmem:[%s1 + $0x2148] sm:$0xff]
  %v1530 = vld [vmem:[%s1 + $0x2150] sm:$0xff]
  %v1531 = vld [vmem:[%s1 + $0x2158] sm:$0xff]
  %v1532 = vld [vmem:[%s1 + $0x2160] sm:$0xff]
  %v1533 = vld [vmem:[%s1 + $0x2168] sm:$0xff]
  %v1534 = vld [vmem:[%s1 + $0x2170] sm:$0xff]
  %v1535 = vld [vmem:[%s1 + $0x2178] sm:$0xff]
  %v1536 = vld [vmem:[%s1 + $0x2180] sm:$0xff]
  %v1537 = vld [vmem:[%s1 + $0x2188] sm:$0xff]
  %v1538 = vld [vmem:[%s1 + $0x2190] sm:$0xff]
  %v1539 = vld [vmem:[%s1 + $0x2198] sm:$0xff]
  %v1540 = vld [vmem:[%s1 + $0x21a0] sm:$0xff]
  %v1541 = vld [vmem:[%s1 + $0x21a8] sm:$0xff]
  %v1542 = vld [vmem:[%s1 + $0x21b0] sm:$0xff]
  %v1543 = vld [vmem:[%s1 + $0x21b8] sm:$0xff]
  %v1544 = vld [vmem:[%s1 + $0x21c0] sm:$0xff]
  %v1545 = vld [vmem:[%s1 + $0x21c8] sm:$0xff]
  %v1546 = vld [vmem:[%s1 + $0x21d0] sm:$0xff]
  %v1547 = vld [vmem:[%s1 + $0x21d8] sm:$0xff]
  %v1548 = vld [vmem:[%s1 + $0x21e0] sm:$0xff]
  %v1549 = vld [vmem:[%s1 + $0x21e8] sm:$0xff]
  %v1550 = vld [vmem:[%s1 + $0x21f0] sm:$0xff]
  %v1551 = vld [vmem:[%s1 + $0x21f8] sm:$0xff]
  %v1552 = vld [vmem:[%s1 + $0x2200] sm:$0xff]
  %v1553 = vld [vmem:[%s1 + $0x2208] sm:$0xff]
  %v1554 = vld [vmem:[%s1 + $0x2210] sm:$0xff]
  %v1555 = vld [vmem:[%s1 + $0x2218] sm:$0xff]
  %v1556 = vld [vmem:[%s1 + $0x2220] sm:$0xff]
  %v1557 = vld [vmem:[%s1 + $0x2228] sm:$0xff]
  %v1558 = vld [vmem:[%s1 + $0x2230] sm:$0xff]
  %v1559 = vld [vmem:[%s1 + $0x2238] sm:$0xff]
  %v1560 = vld [vmem:[%s1 + $0x2240] sm:$0xff]
  %v1561 = vld [vmem:[%s1 + $0x2248] sm:$0xff]
  %v1562 = vld [vmem:[%s1 + $0x2250] sm:$0xff]
  %v1563 = vld [vmem:[%s1 + $0x2258] sm:$0xff]
  %v1564 = vld [vmem:[%s1 + $0x2260] sm:$0xff]
  %v1565 = vld [vmem:[%s1 + $0x2268] sm:$0xff]
  %v1566 = vld [vmem:[%s1 + $0x2270] sm:$0xff]
  %v1567 = vld [vmem:[%s1 + $0x2278] sm:$0xff]
  %v1568 = vld [vmem:[%s1 + $0x2280] sm:$0xff]
  %v1569 = vld [vmem:[%s1 + $0x2288] sm:$0xff]
  %v1570 = vld [vmem:[%s1 + $0x2290] sm:$0xff]
  %v1571 = vld [vmem:[%s1 + $0x2298] sm:$0xff]
  %v1572 = vld [vmem:[%s1 + $0x22a0] sm:$0xff]
  %v1573 = vld [vmem:[%s1 + $0x22a8] sm:$0xff]
  %v1574 = vld [vmem:[%s1 + $0x22b0] sm:$0xff]
  %v1575 = vld [vmem:[%s1 + $0x22b8] sm:$0xff]
  %v1576 = vld [vmem:[%s1 + $0x22c0] sm:$0xff]
  %v1577 = vld [vmem:[%s1 + $0x22c8] sm:$0xff]
  %v1578 = vld [vmem:[%s1 + $0x22d0] sm:$0xff]
  %v1579 = vld [vmem:[%s1 + $0x22d8] sm:$0xff]
  %v1580 = vld [vmem:[%s1 + $0x22e0] sm:$0xff]
  %v1581 = vld [vmem:[%s1 + $0x22e8] sm:$0xff]
  %v1582 = vld [vmem:[%s1 + $0x22f0] sm:$0xff]
  %v1583 = vld [vmem:[%s1 + $0x22f8] sm:$0xff]
  %v1584 = vld [vmem:[%s1 + $0x2300] sm:$0xff]
  %v1585 = vld [vmem:[%s1 + $0x2308] sm:$0xff]
  %v1586 = vld [vmem:[%s1 + $0x2310] sm:$0xff]
  %v1587 = vld [vmem:[%s1 + $0x2318] sm:$0xff]
  %v1588 = vld [vmem:[%s1 + $0x2320] sm:$0xff]
  %v1589 = vld [vmem:[%s1 + $0x2328] sm:$0xff]
  %v1590 = vld [vmem:[%s1 + $0x2330] sm:$0xff]
  %v1591 = vld [vmem:[%s1 + $0x2338] sm:$0xff]
  %v1592 = vld [vmem:[%s1 + $0x2340] sm:$0xff]
  %v1593 = vld [vmem:[%s1 + $0x2348] sm:$0xff]
  %v1594 = vld [vmem:[%s1 + $0x2350] sm:$0xff]
  %v1595 = vld [vmem:[%s1 + $0x2358] sm:$0xff]
  %v1596 = vld [vmem:[%s1 + $0x2360] sm:$0xff]
  %v1597 = vld [vmem:[%s1 + $0x2368] sm:$0xff]
  %v1598 = vld [vmem:[%s1 + $0x2370] sm:$0xff]
  %v1599 = vld [vmem:[%s1 + $0x2378] sm:$0xff]
  %v1600 = vld [vmem:[%s1 + $0x2380] sm:$0xff]
  %v1601 = vld [vmem:[%s1 + $0x2388] sm:$0xff]
  %v1602 = vld [vmem:[%s1 + $0x2390] sm:$0xff]
  %v1603 = vld [vmem:[%s1 + $0x2398] sm:$0xff]
  %v1604 = vld [vmem:[%s1 + $0x23a0] sm:$0xff]
  %v1605 = vld [vmem:[%s1 + $0x23a8] sm:$0xff]
  %v1606 = vld [vmem:[%s1 + $0x23b0] sm:$0xff]
  %v1607 = vld [vmem:[%s1 + $0x23b8] sm:$0xff]
  %v1608 = vld [vmem:[%s1 + $0x23c0] sm:$0xff]
  %v1609 = vld [vmem:[%s1 + $0x23c8] sm:$0xff]
  %v1610 = vld [vmem:[%s1 + $0x23d0] sm:$0xff]
  %v1611 = vld [vmem:[%s1 + $0x23d8] sm:$0xff]
  %v1612 = vld [vmem:[%s1 + $0x23e0] sm:$0xff]
  %v1613 = vld [vmem:[%s1 + $0x23e8] sm:$0xff]
  %v1614 = vld [vmem:[%s1 + $0x23f0] sm:$0xff]
  %v1615 = vld [vmem:[%s1 + $0x23f8] sm:$0xff]
  %v1616 = vld [vmem:[%s2] sm:$0xf]
  %v1618 = vlaneseq
  %v1619 = vshrl.u32 %v1618, 7
  %v1620 = vsub.s32 0, %v1619
  %v1621 = vrot.slane %v1616, %v1620
  %v1622 = vlaneseq
  %v1623 = vshrl.u32 %v1622, 7
  %v1624 = vsub.s32 1, %v1623
  %v1625 = vrot.slane %v1616, %v1624
  %v1626 = vlaneseq
  %v1627 = vshrl.u32 %v1626, 7
  %v1628 = vsub.s32 2, %v1627
  %v1629 = vrot.slane %v1616, %v1628
  %v1630 = vlaneseq
  %v1631 = vshrl.u32 %v1630, 7
  %v1632 = vsub.s32 3, %v1631
  %v1633 = vrot.slane %v1616, %v1632
  %1638 = vmatprep.subr.mxu0 %v525
  %1639 = vmatpush1.msra.mxu0 %v524
  %1640 = vmatprep.subr.mxu0 %v521
  %1641 = vmatpush1.msra.mxu0 %v520
  %1642 = vmatprep.subr.mxu0 %v517
  %1643 = vmatpush1.msra.mxu0 %v516
  %1644 = vmatprep.subr.mxu0 %v513
  %1645 = vmatpush1.msra.mxu0 %v512
  %1646 = vmatprep.subr.mxu0 %v509
  %1647 = vmatpush1.msra.mxu0 %v508
  %1648 = vmatprep.subr.mxu0 %v505
  %1649 = vmatpush1.msra.mxu0 %v504
  %1650 = vmatprep.subr.mxu0 %v501
  %1651 = vmatpush1.msra.mxu0 %v500
  %1652 = vmatprep.subr.mxu0 %v497
  %1653 = vmatpush1.msra.mxu0 %v496
  %1654 = vmatprep.subr.mxu0 %v493
  %1655 = vmatpush1.msra.mxu0 %v492
  %1656 = vmatprep.subr.mxu0 %v489
  %1657 = vmatpush1.msra.mxu0 %v488
  %1658 = vmatprep.subr.mxu0 %v485
  %1659 = vmatpush1.msra.mxu0 %v484
  %1660 = vmatprep.subr.mxu0 %v481
  %1661 = vmatpush1.msra.mxu0 %v480
  %1662 = vmatprep.subr.mxu0 %v477
  %1663 = vmatpush1.msra.mxu0 %v476
  %1664 = vmatprep.subr.mxu0 %v473
  %1665 = vmatpush1.msra.mxu0 %v472
  %1666 = vmatprep.subr.mxu0 %v469
  %1667 = vmatpush1.msra.mxu0 %v468
  %1668 = vmatprep.subr.mxu0 %v465
  %1669 = vmatpush1.msra.mxu0 %v464
  %1670 = vmatprep.subr.mxu0 %v589
  %1671 = vmatpush2.msra.mxu0 %v588
  %1672 = vmatprep.subr.mxu0 %v585
  %1673 = vmatpush2.msra.mxu0 %v584
  %1674 = vmatprep.subr.mxu0 %v581
  %1675 = vmatpush2.msra.mxu0 %v580
  %1676 = vmatprep.subr.mxu0 %v577
  %1677 = vmatpush2.msra.mxu0 %v576
  %1678 = vmatprep.subr.mxu0 %v573
  %1679 = vmatpush2.msra.mxu0 %v572
  %1680 = vmatprep.subr.mxu0 %v569
  %1681 = vmatpush2.msra.mxu0 %v568
  %1682 = vmatprep.subr.mxu0 %v565
  %1683 = vmatpush2.msra.mxu0 %v564
  %1684 = vmatprep.subr.mxu0 %v561
  %1685 = vmatpush2.msra.mxu0 %v560
  %1686 = vmatprep.subr.mxu0 %v557
  %1687 = vmatpush2.msra.mxu0 %v556
  %1688 = vmatprep.subr.mxu0 %v553
  %1689 = vmatpush2.msra.mxu0 %v552
  %1690 = vmatprep.subr.mxu0 %v549
  %1691 = vmatpush2.msra.mxu0 %v548
  %1692 = vmatprep.subr.mxu0 %v545
  %1693 = vmatpush2.msra.mxu0 %v544
  %1694 = vmatprep.subr.mxu0 %v541
  %1695 = vmatpush2.msra.mxu0 %v540
  %1696 = vmatprep.subr.mxu0 %v537
  %1697 = vmatpush2.msra.mxu0 %v536
  %1698 = vmatprep.subr.mxu0 %v533
  %1699 = vmatpush2.msra.mxu0 %v532
  %1700 = vmatprep.subr.mxu0 %v529
  %1701 = vmatpush2.msra.mxu0 %v528
  %1702 = vmatprep.mubr.f32.mxu0 %v15
  %1703 = vmatmul.mubr.f32.gmra.mxu0 %v14
  %v1704 = vpop.f32.mrf.mxu0
  %v1705 = vadd.f32 %v1621, %v1704
  %v1706 = vpop.f32.mrf.mxu0
  %v1707 = vadd.f32 %v1625, %v1706
  %1708 = vmatprep.mubr.f32.mxu0 %v33
  %1709 = vmatmul.mubr.f32.gmra.mxu0 %v32
  %v1710 = vpop.f32.mrf.mxu0
  %v1711 = vadd.f32 %v1621, %v1710
  %v1712 = vpop.f32.mrf.mxu0
  %v1713 = vadd.f32 %v1625, %v1712
  %1714 = vmatprep.mubr.f32.mxu0 %v51
  %1715 = vmatmul.mubr.f32.gmra.mxu0 %v50
  %v1716 = vpop.f32.mrf.mxu0
  %v1717 = vadd.f32 %v1621, %v1716
  %v1718 = vpop.f32.mrf.mxu0
  %v1719 = vadd.f32 %v1625, %v1718
  %1720 = vmatprep.mubr.f32.mxu0 %v69
  %1721 = vmatmul.mubr.f32.gmra.mxu0 %v68
  %v1722 = vpop.f32.mrf.mxu0
  %v1723 = vadd.f32 %v1621, %v1722
  %v1724 = vpop.f32.mrf.mxu0
  %v1725 = vadd.f32 %v1625, %v1724
  %1726 = vmatprep.mubr.f32.mxu0 %v87
  %1727 = vmatmul.mubr.f32.gmra.mxu0 %v86
  %v1728 = vpop.f32.mrf.mxu0
  %v1729 = vadd.f32 %v1621, %v1728
  %v1730 = vpop.f32.mrf.mxu0
  %v1731 = vadd.f32 %v1625, %v1730
  %1732 = vmatprep.mubr.f32.mxu0 %v105
  %1733 = vmatmul.mubr.f32.gmra.mxu0 %v104
  %v1734 = vpop.f32.mrf.mxu0
  %v1735 = vadd.f32 %v1621, %v1734
  %v1736 = vpop.f32.mrf.mxu0
  %v1737 = vadd.f32 %v1625, %v1736
  %1738 = vmatprep.mubr.f32.mxu0 %v123
  %1739 = vmatmul.mubr.f32.gmra.mxu0 %v122
  %v1740 = vpop.f32.mrf.mxu0
  %v1741 = vadd.f32 %v1621, %v1740
  %v1742 = vpop.f32.mrf.mxu0
  %v1743 = vadd.f32 %v1625, %v1742
  %1744 = vmatprep.mubr.f32.mxu0 %v141
  %1745 = vmatmul.mubr.f32.gmra.mxu0 %v140
  %v1746 = vpop.f32.mrf.mxu0
  %v1747 = vadd.f32 %v1621, %v1746
  %v1748 = vpop.f32.mrf.mxu0
  %v1749 = vadd.f32 %v1625, %v1748
  %1750 = vmatprep.mubr.f32.mxu0 %v159
  %1751 = vmatmul.mubr.f32.gmra.mxu0 %v158
  %v1752 = vpop.f32.mrf.mxu0
  %v1753 = vadd.f32 %v1621, %v1752
  %v1754 = vpop.f32.mrf.mxu0
  %v1755 = vadd.f32 %v1625, %v1754
  %1756 = vmatprep.mubr.f32.mxu0 %v177
  %1757 = vmatmul.mubr.f32.gmra.mxu0 %v176
  %v1758 = vpop.f32.mrf.mxu0
  %v1759 = vadd.f32 %v1621, %v1758
  %v1760 = vpop.f32.mrf.mxu0
  %v1761 = vadd.f32 %v1625, %v1760
  %1762 = vmatprep.mubr.f32.mxu0 %v195
  %1763 = vmatmul.mubr.f32.gmra.mxu0 %v194
  %v1764 = vpop.f32.mrf.mxu0
  %v1765 = vadd.f32 %v1621, %v1764
  %v1766 = vpop.f32.mrf.mxu0
  %v1767 = vadd.f32 %v1625, %v1766
  %1768 = vmatprep.mubr.f32.mxu0 %v213
  %1769 = vmatmul.mubr.f32.gmra.mxu0 %v212
  %v1770 = vpop.f32.mrf.mxu0
  %v1771 = vadd.f32 %v1621, %v1770
  %v1772 = vpop.f32.mrf.mxu0
  %v1773 = vadd.f32 %v1625, %v1772
  %1774 = vmatprep.mubr.f32.mxu0 %v231
  %1775 = vmatmul.mubr.f32.gmra.mxu0 %v230
  %v1776 = vpop.f32.mrf.mxu0
  %v1777 = vadd.f32 %v1621, %v1776
  %v1778 = vpop.f32.mrf.mxu0
  %v1779 = vadd.f32 %v1625, %v1778
  %1780 = vmatprep.mubr.f32.mxu0 %v249
  %1781 = vmatmul.mubr.f32.gmra.mxu0 %v248
  %v1782 = vpop.f32.mrf.mxu0
  %v1783 = vadd.f32 %v1621, %v1782
  %v1784 = vpop.f32.mrf.mxu0
  %v1785 = vadd.f32 %v1625, %v1784
  %1786 = vmatprep.mubr.f32.mxu0 %v267
  %1787 = vmatmul.mubr.f32.gmra.mxu0 %v266
  %v1788 = vpop.f32.mrf.mxu0
  %v1789 = vadd.f32 %v1621, %v1788
  %v1790 = vpop.f32.mrf.mxu0
  %v1791 = vadd.f32 %v1625, %v1790
  %1792 = vmatprep.mubr.f32.mxu0 %v285
  %1793 = vmatmul.mubr.f32.gmra.mxu0 %v284
  %v1794 = vpop.f32.mrf.mxu0
  %v1795 = vadd.f32 %v1621, %v1794
  %v1796 = vpop.f32.mrf.mxu0
  %v1797 = vadd.f32 %v1625, %v1796
  %1798 = vmatprep.mubr.f32.mxu0 %v303
  %1799 = vmatmul.mubr.f32.gmra.mxu0 %v302
  %v1800 = vpop.f32.mrf.mxu0
  %v1801 = vadd.f32 %v1621, %v1800
  %v1802 = vpop.f32.mrf.mxu0
  %v1803 = vadd.f32 %v1625, %v1802
  %1804 = vmatprep.mubr.f32.mxu0 %v321
  %1805 = vmatmul.mubr.f32.gmra.mxu0 %v320
  %v1806 = vpop.f32.mrf.mxu0
  %v1807 = vadd.f32 %v1621, %v1806
  %v1808 = vpop.f32.mrf.mxu0
  %v1809 = vadd.f32 %v1625, %v1808
  %1810 = vmatprep.mubr.f32.mxu0 %v339
  %1811 = vmatmul.mubr.f32.gmra.mxu0 %v338
  %v1812 = vpop.f32.mrf.mxu0
  %v1813 = vadd.f32 %v1621, %v1812
  %v1814 = vpop.f32.mrf.mxu0
  %v1815 = vadd.f32 %v1625, %v1814
  %1816 = vmatprep.mubr.f32.mxu0 %v357
  %1817 = vmatmul.mubr.f32.gmra.mxu0 %v356
  %v1818 = vpop.f32.mrf.mxu0
  %v1819 = vadd.f32 %v1621, %v1818
  %v1820 = vpop.f32.mrf.mxu0
  %v1821 = vadd.f32 %v1625, %v1820
  %1822 = vmatprep.mubr.f32.mxu0 %v375
  %1823 = vmatmul.mubr.f32.gmra.mxu0 %v374
  %v1824 = vpop.f32.mrf.mxu0
  %v1825 = vadd.f32 %v1621, %v1824
  %v1826 = vpop.f32.mrf.mxu0
  %v1827 = vadd.f32 %v1625, %v1826
  %1828 = vmatprep.mubr.f32.mxu0 %v393
  %1829 = vmatmul.mubr.f32.gmra.mxu0 %v392
  %v1830 = vpop.f32.mrf.mxu0
  %v1831 = vadd.f32 %v1621, %v1830
  %v1832 = vpop.f32.mrf.mxu0
  %v1833 = vadd.f32 %v1625, %v1832
  %1834 = vmatprep.mubr.f32.mxu0 %v411
  %1835 = vmatmul.mubr.f32.gmra.mxu0 %v410
  %v1836 = vpop.f32.mrf.mxu0
  %v1837 = vadd.f32 %v1621, %v1836
  %v1838 = vpop.f32.mrf.mxu0
  %v1839 = vadd.f32 %v1625, %v1838
  %1840 = vmatprep.mubr.f32.mxu0 %v429
  %1841 = vmatmul.mubr.f32.gmra.mxu0 %v428
  %v1842 = vpop.f32.mrf.mxu0
  %v1843 = vadd.f32 %v1621, %v1842
  %v1844 = vpop.f32.mrf.mxu0
  %v1845 = vadd.f32 %v1625, %v1844
  %1846 = vmatprep.mubr.f32.mxu0 %v447
  %1847 = vmatmul.mubr.f32.gmra.mxu0 %v446
  %v1848 = vpop.f32.mrf.mxu0
  %v1849 = vadd.f32 %v1621, %v1848
  %v1850 = vpop.f32.mrf.mxu0
  %v1851 = vadd.f32 %v1625, %v1850
  %1852 = vdwg.mxu0
  %1853 = vmatprep.subr.mxu0 %v653
  %1854 = vmatpush1.msra.mxu0 %v652
  %1855 = vmatprep.subr.mxu0 %v649
  %1856 = vmatpush1.msra.mxu0 %v648
  %1857 = vmatprep.subr.mxu0 %v645
  %1858 = vmatpush1.msra.mxu0 %v644
  %1859 = vmatprep.subr.mxu0 %v641
  %1860 = vmatpush1.msra.mxu0 %v640
  %1861 = vmatprep.subr.mxu0 %v637
  %1862 = vmatpush1.msra.mxu0 %v636
  %1863 = vmatprep.subr.mxu0 %v633
  %1864 = vmatpush1.msra.mxu0 %v632
  %1865 = vmatprep.subr.mxu0 %v629
  %1866 = vmatpush1.msra.mxu0 %v628
  %1867 = vmatprep.subr.mxu0 %v625
  %1868 = vmatpush1.msra.mxu0 %v624
  %1869 = vmatprep.subr.mxu0 %v621
  %1870 = vmatpush1.msra.mxu0 %v620
  %1871 = vmatprep.subr.mxu0 %v617
  %1872 = vmatpush1.msra.mxu0 %v616
  %1873 = vmatprep.subr.mxu0 %v613
  %1874 = vmatpush1.msra.mxu0 %v612
  %1875 = vmatprep.subr.mxu0 %v609
  %1876 = vmatpush1.msra.mxu0 %v608
  %1877 = vmatprep.subr.mxu0 %v605
  %1878 = vmatpush1.msra.mxu0 %v604
  %1879 = vmatprep.subr.mxu0 %v601
  %1880 = vmatpush1.msra.mxu0 %v600
  %1881 = vmatprep.subr.mxu0 %v597
  %1882 = vmatpush1.msra.mxu0 %v596
  %1883 = vmatprep.subr.mxu0 %v593
  %1884 = vmatpush1.msra.mxu0 %v592
  %1885 = vmatprep.subr.mxu0 %v717
  %1886 = vmatpush2.msra.mxu0 %v716
  %1887 = vmatprep.subr.mxu0 %v713
  %1888 = vmatpush2.msra.mxu0 %v712
  %1889 = vmatprep.subr.mxu0 %v709
  %1890 = vmatpush2.msra.mxu0 %v708
  %1891 = vmatprep.subr.mxu0 %v705
  %1892 = vmatpush2.msra.mxu0 %v704
  %1893 = vmatprep.subr.mxu0 %v701
  %1894 = vmatpush2.msra.mxu0 %v700
  %1895 = vmatprep.subr.mxu0 %v697
  %1896 = vmatpush2.msra.mxu0 %v696
  %1897 = vmatprep.subr.mxu0 %v693
  %1898 = vmatpush2.msra.mxu0 %v692
  %1899 = vmatprep.subr.mxu0 %v689
  %1900 = vmatpush2.msra.mxu0 %v688
  %1901 = vmatprep.subr.mxu0 %v685
  %1902 = vmatpush2.msra.mxu0 %v684
  %1903 = vmatprep.subr.mxu0 %v681
  %1904 = vmatpush2.msra.mxu0 %v680
  %1905 = vmatprep.subr.mxu0 %v677
  %1906 = vmatpush2.msra.mxu0 %v676
  %1907 = vmatprep.subr.mxu0 %v673
  %1908 = vmatpush2.msra.mxu0 %v672
  %1909 = vmatprep.subr.mxu0 %v669
  %1910 = vmatpush2.msra.mxu0 %v668
  %1911 = vmatprep.subr.mxu0 %v665
  %1912 = vmatpush2.msra.mxu0 %v664
  %1913 = vmatprep.subr.mxu0 %v661
  %1914 = vmatpush2.msra.mxu0 %v660
  %1915 = vmatprep.subr.mxu0 %v657
  %1916 = vmatpush2.msra.mxu0 %v656
  %1917 = vmatprep.mubr.f32.mxu0 %v17
  %1918 = vmatmul.mubr.f32.gmra.mxu0 %v16
  %v1919 = vpop.f32.mrf.mxu0
  %v1920 = vadd.f32 %v1705, %v1919
  %v1921 = vpop.f32.mrf.mxu0
  %v1922 = vadd.f32 %v1707, %v1921
  %1923 = vmatprep.mubr.f32.mxu0 %v35
  %1924 = vmatmul.mubr.f32.gmra.mxu0 %v34
  %v1925 = vpop.f32.mrf.mxu0
  %v1926 = vadd.f32 %v1711, %v1925
  %v1927 = vpop.f32.mrf.mxu0
  %v1928 = vadd.f32 %v1713, %v1927
  %1929 = vmatprep.mubr.f32.mxu0 %v53
  %1930 = vmatmul.mubr.f32.gmra.mxu0 %v52
  %v1931 = vpop.f32.mrf.mxu0
  %v1932 = vadd.f32 %v1717, %v1931
  %v1933 = vpop.f32.mrf.mxu0
  %v1934 = vadd.f32 %v1719, %v1933
  %1935 = vmatprep.mubr.f32.mxu0 %v71
  %1936 = vmatmul.mubr.f32.gmra.mxu0 %v70
  %v1937 = vpop.f32.mrf.mxu0
  %v1938 = vadd.f32 %v1723, %v1937
  %v1939 = vpop.f32.mrf.mxu0
  %v1940 = vadd.f32 %v1725, %v1939
  %1941 = vmatprep.mubr.f32.mxu0 %v89
  %1942 = vmatmul.mubr.f32.gmra.mxu0 %v88
  %v1943 = vpop.f32.mrf.mxu0
  %v1944 = vadd.f32 %v1729, %v1943
  %v1945 = vpop.f32.mrf.mxu0
  %v1946 = vadd.f32 %v1731, %v1945
  %1947 = vmatprep.mubr.f32.mxu0 %v107
  %1948 = vmatmul.mubr.f32.gmra.mxu0 %v106
  %v1949 = vpop.f32.mrf.mxu0
  %v1950 = vadd.f32 %v1735, %v1949
  %v1951 = vpop.f32.mrf.mxu0
  %v1952 = vadd.f32 %v1737, %v1951
  %1953 = vmatprep.mubr.f32.mxu0 %v125
  %1954 = vmatmul.mubr.f32.gmra.mxu0 %v124
  %v1955 = vpop.f32.mrf.mxu0
  %v1956 = vadd.f32 %v1741, %v1955
  %v1957 = vpop.f32.mrf.mxu0
  %v1958 = vadd.f32 %v1743, %v1957
  %1959 = vmatprep.mubr.f32.mxu0 %v143
  %1960 = vmatmul.mubr.f32.gmra.mxu0 %v142
  %v1961 = vpop.f32.mrf.mxu0
  %v1962 = vadd.f32 %v1747, %v1961
  %v1963 = vpop.f32.mrf.mxu0
  %v1964 = vadd.f32 %v1749, %v1963
  %1965 = vmatprep.mubr.f32.mxu0 %v161
  %1966 = vmatmul.mubr.f32.gmra.mxu0 %v160
  %v1967 = vpop.f32.mrf.mxu0
  %v1968 = vadd.f32 %v1753, %v1967
  %v1969 = vpop.f32.mrf.mxu0
  %v1970 = vadd.f32 %v1755, %v1969
  %1971 = vmatprep.mubr.f32.mxu0 %v179
  %1972 = vmatmul.mubr.f32.gmra.mxu0 %v178
  %v1973 = vpop.f32.mrf.mxu0
  %v1974 = vadd.f32 %v1759, %v1973
  %v1975 = vpop.f32.mrf.mxu0
  %v1976 = vadd.f32 %v1761, %v1975
  %1977 = vmatprep.mubr.f32.mxu0 %v197
  %1978 = vmatmul.mubr.f32.gmra.mxu0 %v196
  %v1979 = vpop.f32.mrf.mxu0
  %v1980 = vadd.f32 %v1765, %v1979
  %v1981 = vpop.f32.mrf.mxu0
  %v1982 = vadd.f32 %v1767, %v1981
  %1983 = vmatprep.mubr.f32.mxu0 %v215
  %1984 = vmatmul.mubr.f32.gmra.mxu0 %v214
  %v1985 = vpop.f32.mrf.mxu0
  %v1986 = vadd.f32 %v1771, %v1985
  %v1987 = vpop.f32.mrf.mxu0
  %v1988 = vadd.f32 %v1773, %v1987
  %1989 = vmatprep.mubr.f32.mxu0 %v233
  %1990 = vmatmul.mubr.f32.gmra.mxu0 %v232
  %v1991 = vpop.f32.mrf.mxu0
  %v1992 = vadd.f32 %v1777, %v1991
  %v1993 = vpop.f32.mrf.mxu0
  %v1994 = vadd.f32 %v1779, %v1993
  %1995 = vmatprep.mubr.f32.mxu0 %v251
  %1996 = vmatmul.mubr.f32.gmra.mxu0 %v250
  %v1997 = vpop.f32.mrf.mxu0
  %v1998 = vadd.f32 %v1783, %v1997
  %v1999 = vpop.f32.mrf.mxu0
  %v2000 = vadd.f32 %v1785, %v1999
  %2001 = vmatprep.mubr.f32.mxu0 %v269
  %2002 = vmatmul.mubr.f32.gmra.mxu0 %v268
  %v2003 = vpop.f32.mrf.mxu0
  %v2004 = vadd.f32 %v1789, %v2003
  %v2005 = vpop.f32.mrf.mxu0
  %v2006 = vadd.f32 %v1791, %v2005
  %2007 = vmatprep.mubr.f32.mxu0 %v287
  %2008 = vmatmul.mubr.f32.gmra.mxu0 %v286
  %v2009 = vpop.f32.mrf.mxu0
  %v2010 = vadd.f32 %v1795, %v2009
  %v2011 = vpop.f32.mrf.mxu0
  %v2012 = vadd.f32 %v1797, %v2011
  %2013 = vmatprep.mubr.f32.mxu0 %v305
  %2014 = vmatmul.mubr.f32.gmra.mxu0 %v304
  %v2015 = vpop.f32.mrf.mxu0
  %v2016 = vadd.f32 %v1801, %v2015
  %v2017 = vpop.f32.mrf.mxu0
  %v2018 = vadd.f32 %v1803, %v2017
  %2019 = vmatprep.mubr.f32.mxu0 %v323
  %2020 = vmatmul.mubr.f32.gmra.mxu0 %v322
  %v2021 = vpop.f32.mrf.mxu0
  %v2022 = vadd.f32 %v1807, %v2021
  %v2023 = vpop.f32.mrf.mxu0
  %v2024 = vadd.f32 %v1809, %v2023
  %2025 = vmatprep.mubr.f32.mxu0 %v341
  %2026 = vmatmul.mubr.f32.gmra.mxu0 %v340
  %v2027 = vpop.f32.mrf.mxu0
  %v2028 = vadd.f32 %v1813, %v2027
  %v2029 = vpop.f32.mrf.mxu0
  %v2030 = vadd.f32 %v1815, %v2029
  %2031 = vmatprep.mubr.f32.mxu0 %v359
  %2032 = vmatmul.mubr.f32.gmra.mxu0 %v358
  %v2033 = vpop.f32.mrf.mxu0
  %v2034 = vadd.f32 %v1819, %v2033
  %v2035 = vpop.f32.mrf.mxu0
  %v2036 = vadd.f32 %v1821, %v2035
  %2037 = vmatprep.mubr.f32.mxu0 %v377
  %2038 = vmatmul.mubr.f32.gmra.mxu0 %v376
  %v2039 = vpop.f32.mrf.mxu0
  %v2040 = vadd.f32 %v1825, %v2039
  %v2041 = vpop.f32.mrf.mxu0
  %v2042 = vadd.f32 %v1827, %v2041
  %2043 = vmatprep.mubr.f32.mxu0 %v395
  %2044 = vmatmul.mubr.f32.gmra.mxu0 %v394
  %v2045 = vpop.f32.mrf.mxu0
  %v2046 = vadd.f32 %v1831, %v2045
  %v2047 = vpop.f32.mrf.mxu0
  %v2048 = vadd.f32 %v1833, %v2047
  %2049 = vmatprep.mubr.f32.mxu0 %v413
  %2050 = vmatmul.mubr.f32.gmra.mxu0 %v412
  %v2051 = vpop.f32.mrf.mxu0
  %v2052 = vadd.f32 %v1837, %v2051
  %v2053 = vpop.f32.mrf.mxu0
  %v2054 = vadd.f32 %v1839, %v2053
  %2055 = vmatprep.mubr.f32.mxu0 %v431
  %2056 = vmatmul.mubr.f32.gmra.mxu0 %v430
  %v2057 = vpop.f32.mrf.mxu0
  %v2058 = vadd.f32 %v1843, %v2057
  %v2059 = vpop.f32.mrf.mxu0
  %v2060 = vadd.f32 %v1845, %v2059
  %2061 = vmatprep.mubr.f32.mxu0 %v449
  %2062 = vmatmul.mubr.f32.gmra.mxu0 %v448
  %v2063 = vpop.f32.mrf.mxu0
  %v2064 = vadd.f32 %v1849, %v2063
  %v2065 = vpop.f32.mrf.mxu0
  %v2066 = vadd.f32 %v1851, %v2065
  %2067 = vdwg.mxu0
  %2068 = vmatprep.subr.mxu0 %v781
  %2069 = vmatpush1.msra.mxu0 %v780
  %2070 = vmatprep.subr.mxu0 %v777
  %2071 = vmatpush1.msra.mxu0 %v776
  %2072 = vmatprep.subr.mxu0 %v773
  %2073 = vmatpush1.msra.mxu0 %v772
  %2074 = vmatprep.subr.mxu0 %v769
  %2075 = vmatpush1.msra.mxu0 %v768
  %2076 = vmatprep.subr.mxu0 %v765
  %2077 = vmatpush1.msra.mxu0 %v764
  %2078 = vmatprep.subr.mxu0 %v761
  %2079 = vmatpush1.msra.mxu0 %v760
  %2080 = vmatprep.subr.mxu0 %v757
  %2081 = vmatpush1.msra.mxu0 %v756
  %2082 = vmatprep.subr.mxu0 %v753
  %2083 = vmatpush1.msra.mxu0 %v752
  %2084 = vmatprep.subr.mxu0 %v749
  %2085 = vmatpush1.msra.mxu0 %v748
  %2086 = vmatprep.subr.mxu0 %v745
  %2087 = vmatpush1.msra.mxu0 %v744
  %2088 = vmatprep.subr.mxu0 %v741
  %2089 = vmatpush1.msra.mxu0 %v740
  %2090 = vmatprep.subr.mxu0 %v737
  %2091 = vmatpush1.msra.mxu0 %v736
  %2092 = vmatprep.subr.mxu0 %v733
  %2093 = vmatpush1.msra.mxu0 %v732
  %2094 = vmatprep.subr.mxu0 %v729
  %2095 = vmatpush1.msra.mxu0 %v728
  %2096 = vmatprep.subr.mxu0 %v725
  %2097 = vmatpush1.msra.mxu0 %v724
  %2098 = vmatprep.subr.mxu0 %v721
  %2099 = vmatpush1.msra.mxu0 %v720
  %2100 = vmatprep.subr.mxu0 %v845
  %2101 = vmatpush2.msra.mxu0 %v844
  %2102 = vmatprep.subr.mxu0 %v841
  %2103 = vmatpush2.msra.mxu0 %v840
  %2104 = vmatprep.subr.mxu0 %v837
  %2105 = vmatpush2.msra.mxu0 %v836
  %2106 = vmatprep.subr.mxu0 %v833
  %2107 = vmatpush2.msra.mxu0 %v832
  %2108 = vmatprep.subr.mxu0 %v829
  %2109 = vmatpush2.msra.mxu0 %v828
  %2110 = vmatprep.subr.mxu0 %v825
  %2111 = vmatpush2.msra.mxu0 %v824
  %2112 = vmatprep.subr.mxu0 %v821
  %2113 = vmatpush2.msra.mxu0 %v820
  %2114 = vmatprep.subr.mxu0 %v817
  %2115 = vmatpush2.msra.mxu0 %v816
  %2116 = vmatprep.subr.mxu0 %v813
  %2117 = vmatpush2.msra.mxu0 %v812
  %2118 = vmatprep.subr.mxu0 %v809
  %2119 = vmatpush2.msra.mxu0 %v808
  %2120 = vmatprep.subr.mxu0 %v805
  %2121 = vmatpush2.msra.mxu0 %v804
  %2122 = vmatprep.subr.mxu0 %v801
  %2123 = vmatpush2.msra.mxu0 %v800
  %2124 = vmatprep.subr.mxu0 %v797
  %2125 = vmatpush2.msra.mxu0 %v796
  %2126 = vmatprep.subr.mxu0 %v793
  %2127 = vmatpush2.msra.mxu0 %v792
  %2128 = vmatprep.subr.mxu0 %v789
  %2129 = vmatpush2.msra.mxu0 %v788
  %2130 = vmatprep.subr.mxu0 %v785
  %2131 = vmatpush2.msra.mxu0 %v784
  %2132 = vmatprep.mubr.f32.mxu0 %v19
  %2133 = vmatmul.mubr.f32.gmra.mxu0 %v18
  %v2134 = vpop.f32.mrf.mxu0
  %v2135 = vadd.f32 %v1920, %v2134
  %v2136 = vpop.f32.mrf.mxu0
  %v2137 = vadd.f32 %v1922, %v2136
  %2138 = vmatprep.mubr.f32.mxu0 %v37
  %2139 = vmatmul.mubr.f32.gmra.mxu0 %v36
  %v2140 = vpop.f32.mrf.mxu0
  %v2141 = vadd.f32 %v1926, %v2140
  %v2142 = vpop.f32.mrf.mxu0
  %v2143 = vadd.f32 %v1928, %v2142
  %2144 = vmatprep.mubr.f32.mxu0 %v55
  %2145 = vmatmul.mubr.f32.gmra.mxu0 %v54
  %v2146 = vpop.f32.mrf.mxu0
  %v2147 = vadd.f32 %v1932, %v2146
  %v2148 = vpop.f32.mrf.mxu0
  %v2149 = vadd.f32 %v1934, %v2148
  %2150 = vmatprep.mubr.f32.mxu0 %v73
  %2151 = vmatmul.mubr.f32.gmra.mxu0 %v72
  %v2152 = vpop.f32.mrf.mxu0
  %v2153 = vadd.f32 %v1938, %v2152
  %v2154 = vpop.f32.mrf.mxu0
  %v2155 = vadd.f32 %v1940, %v2154
  %2156 = vmatprep.mubr.f32.mxu0 %v91
  %2157 = vmatmul.mubr.f32.gmra.mxu0 %v90
  %v2158 = vpop.f32.mrf.mxu0
  %v2159 = vadd.f32 %v1944, %v2158
  %v2160 = vpop.f32.mrf.mxu0
  %v2161 = vadd.f32 %v1946, %v2160
  %2162 = vmatprep.mubr.f32.mxu0 %v109
  %2163 = vmatmul.mubr.f32.gmra.mxu0 %v108
  %v2164 = vpop.f32.mrf.mxu0
  %v2165 = vadd.f32 %v1950, %v2164
  %v2166 = vpop.f32.mrf.mxu0
  %v2167 = vadd.f32 %v1952, %v2166
  %2168 = vmatprep.mubr.f32.mxu0 %v127
  %2169 = vmatmul.mubr.f32.gmra.mxu0 %v126
  %v2170 = vpop.f32.mrf.mxu0
  %v2171 = vadd.f32 %v1956, %v2170
  %v2172 = vpop.f32.mrf.mxu0
  %v2173 = vadd.f32 %v1958, %v2172
  %2174 = vmatprep.mubr.f32.mxu0 %v145
  %2175 = vmatmul.mubr.f32.gmra.mxu0 %v144
  %v2176 = vpop.f32.mrf.mxu0
  %v2177 = vadd.f32 %v1962, %v2176
  %v2178 = vpop.f32.mrf.mxu0
  %v2179 = vadd.f32 %v1964, %v2178
  %2180 = vmatprep.mubr.f32.mxu0 %v163
  %2181 = vmatmul.mubr.f32.gmra.mxu0 %v162
  %v2182 = vpop.f32.mrf.mxu0
  %v2183 = vadd.f32 %v1968, %v2182
  %v2184 = vpop.f32.mrf.mxu0
  %v2185 = vadd.f32 %v1970, %v2184
  %2186 = vmatprep.mubr.f32.mxu0 %v181
  %2187 = vmatmul.mubr.f32.gmra.mxu0 %v180
  %v2188 = vpop.f32.mrf.mxu0
  %v2189 = vadd.f32 %v1974, %v2188
  %v2190 = vpop.f32.mrf.mxu0
  %v2191 = vadd.f32 %v1976, %v2190
  %2192 = vmatprep.mubr.f32.mxu0 %v199
  %2193 = vmatmul.mubr.f32.gmra.mxu0 %v198
  %v2194 = vpop.f32.mrf.mxu0
  %v2195 = vadd.f32 %v1980, %v2194
  %v2196 = vpop.f32.mrf.mxu0
  %v2197 = vadd.f32 %v1982, %v2196
  %2198 = vmatprep.mubr.f32.mxu0 %v217
  %2199 = vmatmul.mubr.f32.gmra.mxu0 %v216
  %v2200 = vpop.f32.mrf.mxu0
  %v2201 = vadd.f32 %v1986, %v2200
  %v2202 = vpop.f32.mrf.mxu0
  %v2203 = vadd.f32 %v1988, %v2202
  %2204 = vmatprep.mubr.f32.mxu0 %v235
  %2205 = vmatmul.mubr.f32.gmra.mxu0 %v234
  %v2206 = vpop.f32.mrf.mxu0
  %v2207 = vadd.f32 %v1992, %v2206
  %v2208 = vpop.f32.mrf.mxu0
  %v2209 = vadd.f32 %v1994, %v2208
  %2210 = vmatprep.mubr.f32.mxu0 %v253
  %2211 = vmatmul.mubr.f32.gmra.mxu0 %v252
  %v2212 = vpop.f32.mrf.mxu0
  %v2213 = vadd.f32 %v1998, %v2212
  %v2214 = vpop.f32.mrf.mxu0
  %v2215 = vadd.f32 %v2000, %v2214
  %2216 = vmatprep.mubr.f32.mxu0 %v271
  %2217 = vmatmul.mubr.f32.gmra.mxu0 %v270
  %v2218 = vpop.f32.mrf.mxu0
  %v2219 = vadd.f32 %v2004, %v2218
  %v2220 = vpop.f32.mrf.mxu0
  %v2221 = vadd.f32 %v2006, %v2220
  %2222 = vmatprep.mubr.f32.mxu0 %v289
  %2223 = vmatmul.mubr.f32.gmra.mxu0 %v288
  %v2224 = vpop.f32.mrf.mxu0
  %v2225 = vadd.f32 %v2010, %v2224
  %v2226 = vpop.f32.mrf.mxu0
  %v2227 = vadd.f32 %v2012, %v2226
  %2228 = vmatprep.mubr.f32.mxu0 %v307
  %2229 = vmatmul.mubr.f32.gmra.mxu0 %v306
  %v2230 = vpop.f32.mrf.mxu0
  %v2231 = vadd.f32 %v2016, %v2230
  %v2232 = vpop.f32.mrf.mxu0
  %v2233 = vadd.f32 %v2018, %v2232
  %2234 = vmatprep.mubr.f32.mxu0 %v325
  %2235 = vmatmul.mubr.f32.gmra.mxu0 %v324
  %v2236 = vpop.f32.mrf.mxu0
  %v2237 = vadd.f32 %v2022, %v2236
  %v2238 = vpop.f32.mrf.mxu0
  %v2239 = vadd.f32 %v2024, %v2238
  %2240 = vmatprep.mubr.f32.mxu0 %v343
  %2241 = vmatmul.mubr.f32.gmra.mxu0 %v342
  %v2242 = vpop.f32.mrf.mxu0
  %v2243 = vadd.f32 %v2028, %v2242
  %v2244 = vpop.f32.mrf.mxu0
  %v2245 = vadd.f32 %v2030, %v2244
  %2246 = vmatprep.mubr.f32.mxu0 %v361
  %2247 = vmatmul.mubr.f32.gmra.mxu0 %v360
  %v2248 = vpop.f32.mrf.mxu0
  %v2249 = vadd.f32 %v2034, %v2248
  %v2250 = vpop.f32.mrf.mxu0
  %v2251 = vadd.f32 %v2036, %v2250
  %2252 = vmatprep.mubr.f32.mxu0 %v379
  %2253 = vmatmul.mubr.f32.gmra.mxu0 %v378
  %v2254 = vpop.f32.mrf.mxu0
  %v2255 = vadd.f32 %v2040, %v2254
  %v2256 = vpop.f32.mrf.mxu0
  %v2257 = vadd.f32 %v2042, %v2256
  %2258 = vmatprep.mubr.f32.mxu0 %v397
  %2259 = vmatmul.mubr.f32.gmra.mxu0 %v396
  %v2260 = vpop.f32.mrf.mxu0
  %v2261 = vadd.f32 %v2046, %v2260
  %v2262 = vpop.f32.mrf.mxu0
  %v2263 = vadd.f32 %v2048, %v2262
  %2264 = vmatprep.mubr.f32.mxu0 %v415
  %2265 = vmatmul.mubr.f32.gmra.mxu0 %v414
  %v2266 = vpop.f32.mrf.mxu0
  %v2267 = vadd.f32 %v2052, %v2266
  %v2268 = vpop.f32.mrf.mxu0
  %v2269 = vadd.f32 %v2054, %v2268
  %2270 = vmatprep.mubr.f32.mxu0 %v433
  %2271 = vmatmul.mubr.f32.gmra.mxu0 %v432
  %v2272 = vpop.f32.mrf.mxu0
  %v2273 = vadd.f32 %v2058, %v2272
  %v2274 = vpop.f32.mrf.mxu0
  %v2275 = vadd.f32 %v2060, %v2274
  %2276 = vmatprep.mubr.f32.mxu0 %v451
  %2277 = vmatmul.mubr.f32.gmra.mxu0 %v450
  %v2278 = vpop.f32.mrf.mxu0
  %v2279 = vadd.f32 %v2064, %v2278
  %v2280 = vpop.f32.mrf.mxu0
  %v2281 = vadd.f32 %v2066, %v2280
  %2282 = vdwg.mxu0
  %2283 = vmatprep.subr.mxu0 %v909
  %2284 = vmatpush1.msra.mxu0 %v908
  %2285 = vmatprep.subr.mxu0 %v905
  %2286 = vmatpush1.msra.mxu0 %v904
  %2287 = vmatprep.subr.mxu0 %v901
  %2288 = vmatpush1.msra.mxu0 %v900
  %2289 = vmatprep.subr.mxu0 %v897
  %2290 = vmatpush1.msra.mxu0 %v896
  %2291 = vmatprep.subr.mxu0 %v893
  %2292 = vmatpush1.msra.mxu0 %v892
  %2293 = vmatprep.subr.mxu0 %v889
  %2294 = vmatpush1.msra.mxu0 %v888
  %2295 = vmatprep.subr.mxu0 %v885
  %2296 = vmatpush1.msra.mxu0 %v884
  %2297 = vmatprep.subr.mxu0 %v881
  %2298 = vmatpush1.msra.mxu0 %v880
  %2299 = vmatprep.subr.mxu0 %v877
  %2300 = vmatpush1.msra.mxu0 %v876
  %2301 = vmatprep.subr.mxu0 %v873
  %2302 = vmatpush1.msra.mxu0 %v872
  %2303 = vmatprep.subr.mxu0 %v869
  %2304 = vmatpush1.msra.mxu0 %v868
  %2305 = vmatprep.subr.mxu0 %v865
  %2306 = vmatpush1.msra.mxu0 %v864
  %2307 = vmatprep.subr.mxu0 %v861
  %2308 = vmatpush1.msra.mxu0 %v860
  %2309 = vmatprep.subr.mxu0 %v857
  %2310 = vmatpush1.msra.mxu0 %v856
  %2311 = vmatprep.subr.mxu0 %v853
  %2312 = vmatpush1.msra.mxu0 %v852
  %2313 = vmatprep.subr.mxu0 %v849
  %2314 = vmatpush1.msra.mxu0 %v848
  %2315 = vmatprep.subr.mxu0 %v973
  %2316 = vmatpush2.msra.mxu0 %v972
  %2317 = vmatprep.subr.mxu0 %v969
  %2318 = vmatpush2.msra.mxu0 %v968
  %2319 = vmatprep.subr.mxu0 %v965
  %2320 = vmatpush2.msra.mxu0 %v964
  %2321 = vmatprep.subr.mxu0 %v961
  %2322 = vmatpush2.msra.mxu0 %v960
  %2323 = vmatprep.subr.mxu0 %v957
  %2324 = vmatpush2.msra.mxu0 %v956
  %2325 = vmatprep.subr.mxu0 %v953
  %2326 = vmatpush2.msra.mxu0 %v952
  %2327 = vmatprep.subr.mxu0 %v949
  %2328 = vmatpush2.msra.mxu0 %v948
  %2329 = vmatprep.subr.mxu0 %v945
  %2330 = vmatpush2.msra.mxu0 %v944
  %2331 = vmatprep.subr.mxu0 %v941
  %2332 = vmatpush2.msra.mxu0 %v940
  %2333 = vmatprep.subr.mxu0 %v937
  %2334 = vmatpush2.msra.mxu0 %v936
  %2335 = vmatprep.subr.mxu0 %v933
  %2336 = vmatpush2.msra.mxu0 %v932
  %2337 = vmatprep.subr.mxu0 %v929
  %2338 = vmatpush2.msra.mxu0 %v928
  %2339 = vmatprep.subr.mxu0 %v925
  %2340 = vmatpush2.msra.mxu0 %v924
  %2341 = vmatprep.subr.mxu0 %v921
  %2342 = vmatpush2.msra.mxu0 %v920
  %2343 = vmatprep.subr.mxu0 %v917
  %2344 = vmatpush2.msra.mxu0 %v916
  %2345 = vmatprep.subr.mxu0 %v913
  %2346 = vmatpush2.msra.mxu0 %v912
  %2347 = vmatprep.mubr.f32.mxu0 %v21
  %2348 = vmatmul.mubr.f32.gmra.mxu0 %v20
  %v2349 = vpop.f32.mrf.mxu0
  %v2350 = vadd.f32 %v2135, %v2349
  %v2351 = vpop.f32.mrf.mxu0
  %v2352 = vadd.f32 %v2137, %v2351
  %2353 = vmatprep.mubr.f32.mxu0 %v39
  %2354 = vmatmul.mubr.f32.gmra.mxu0 %v38
  %v2355 = vpop.f32.mrf.mxu0
  %v2356 = vadd.f32 %v2141, %v2355
  %v2357 = vpop.f32.mrf.mxu0
  %v2358 = vadd.f32 %v2143, %v2357
  %2359 = vmatprep.mubr.f32.mxu0 %v57
  %2360 = vmatmul.mubr.f32.gmra.mxu0 %v56
  %v2361 = vpop.f32.mrf.mxu0
  %v2362 = vadd.f32 %v2147, %v2361
  %v2363 = vpop.f32.mrf.mxu0
  %v2364 = vadd.f32 %v2149, %v2363
  %2365 = vmatprep.mubr.f32.mxu0 %v75
  %2366 = vmatmul.mubr.f32.gmra.mxu0 %v74
  %v2367 = vpop.f32.mrf.mxu0
  %v2368 = vadd.f32 %v2153, %v2367
  %v2369 = vpop.f32.mrf.mxu0
  %v2370 = vadd.f32 %v2155, %v2369
  %2371 = vmatprep.mubr.f32.mxu0 %v93
  %2372 = vmatmul.mubr.f32.gmra.mxu0 %v92
  %v2373 = vpop.f32.mrf.mxu0
  %v2374 = vadd.f32 %v2159, %v2373
  %v2375 = vpop.f32.mrf.mxu0
  %v2376 = vadd.f32 %v2161, %v2375
  %2377 = vmatprep.mubr.f32.mxu0 %v111
  %2378 = vmatmul.mubr.f32.gmra.mxu0 %v110
  %v2379 = vpop.f32.mrf.mxu0
  %v2380 = vadd.f32 %v2165, %v2379
  %v2381 = vpop.f32.mrf.mxu0
  %v2382 = vadd.f32 %v2167, %v2381
  %2383 = vmatprep.mubr.f32.mxu0 %v129
  %2384 = vmatmul.mubr.f32.gmra.mxu0 %v128
  %v2385 = vpop.f32.mrf.mxu0
  %v2386 = vadd.f32 %v2171, %v2385
  %v2387 = vpop.f32.mrf.mxu0
  %v2388 = vadd.f32 %v2173, %v2387
  %2389 = vmatprep.mubr.f32.mxu0 %v147
  %2390 = vmatmul.mubr.f32.gmra.mxu0 %v146
  %v2391 = vpop.f32.mrf.mxu0
  %v2392 = vadd.f32 %v2177, %v2391
  %v2393 = vpop.f32.mrf.mxu0
  %v2394 = vadd.f32 %v2179, %v2393
  %2395 = vmatprep.mubr.f32.mxu0 %v165
  %2396 = vmatmul.mubr.f32.gmra.mxu0 %v164
  %v2397 = vpop.f32.mrf.mxu0
  %v2398 = vadd.f32 %v2183, %v2397
  %v2399 = vpop.f32.mrf.mxu0
  %v2400 = vadd.f32 %v2185, %v2399
  %2401 = vmatprep.mubr.f32.mxu0 %v183
  %2402 = vmatmul.mubr.f32.gmra.mxu0 %v182
  %v2403 = vpop.f32.mrf.mxu0
  %v2404 = vadd.f32 %v2189, %v2403
  %v2405 = vpop.f32.mrf.mxu0
  %v2406 = vadd.f32 %v2191, %v2405
  %2407 = vmatprep.mubr.f32.mxu0 %v201
  %2408 = vmatmul.mubr.f32.gmra.mxu0 %v200
  %v2409 = vpop.f32.mrf.mxu0
  %v2410 = vadd.f32 %v2195, %v2409
  %v2411 = vpop.f32.mrf.mxu0
  %v2412 = vadd.f32 %v2197, %v2411
  %2413 = vmatprep.mubr.f32.mxu0 %v219
  %2414 = vmatmul.mubr.f32.gmra.mxu0 %v218
  %v2415 = vpop.f32.mrf.mxu0
  %v2416 = vadd.f32 %v2201, %v2415
  %v2417 = vpop.f32.mrf.mxu0
  %v2418 = vadd.f32 %v2203, %v2417
  %2419 = vmatprep.mubr.f32.mxu0 %v237
  %2420 = vmatmul.mubr.f32.gmra.mxu0 %v236
  %v2421 = vpop.f32.mrf.mxu0
  %v2422 = vadd.f32 %v2207, %v2421
  %v2423 = vpop.f32.mrf.mxu0
  %v2424 = vadd.f32 %v2209, %v2423
  %2425 = vmatprep.mubr.f32.mxu0 %v255
  %2426 = vmatmul.mubr.f32.gmra.mxu0 %v254
  %v2427 = vpop.f32.mrf.mxu0
  %v2428 = vadd.f32 %v2213, %v2427
  %v2429 = vpop.f32.mrf.mxu0
  %v2430 = vadd.f32 %v2215, %v2429
  %2431 = vmatprep.mubr.f32.mxu0 %v273
  %2432 = vmatmul.mubr.f32.gmra.mxu0 %v272
  %v2433 = vpop.f32.mrf.mxu0
  %v2434 = vadd.f32 %v2219, %v2433
  %v2435 = vpop.f32.mrf.mxu0
  %v2436 = vadd.f32 %v2221, %v2435
  %2437 = vmatprep.mubr.f32.mxu0 %v291
  %2438 = vmatmul.mubr.f32.gmra.mxu0 %v290
  %v2439 = vpop.f32.mrf.mxu0
  %v2440 = vadd.f32 %v2225, %v2439
  %v2441 = vpop.f32.mrf.mxu0
  %v2442 = vadd.f32 %v2227, %v2441
  %2443 = vmatprep.mubr.f32.mxu0 %v309
  %2444 = vmatmul.mubr.f32.gmra.mxu0 %v308
  %v2445 = vpop.f32.mrf.mxu0
  %v2446 = vadd.f32 %v2231, %v2445
  %v2447 = vpop.f32.mrf.mxu0
  %v2448 = vadd.f32 %v2233, %v2447
  %2449 = vmatprep.mubr.f32.mxu0 %v327
  %2450 = vmatmul.mubr.f32.gmra.mxu0 %v326
  %v2451 = vpop.f32.mrf.mxu0
  %v2452 = vadd.f32 %v2237, %v2451
  %v2453 = vpop.f32.mrf.mxu0
  %v2454 = vadd.f32 %v2239, %v2453
  %2455 = vmatprep.mubr.f32.mxu0 %v345
  %2456 = vmatmul.mubr.f32.gmra.mxu0 %v344
  %v2457 = vpop.f32.mrf.mxu0
  %v2458 = vadd.f32 %v2243, %v2457
  %v2459 = vpop.f32.mrf.mxu0
  %v2460 = vadd.f32 %v2245, %v2459
  %2461 = vmatprep.mubr.f32.mxu0 %v363
  %2462 = vmatmul.mubr.f32.gmra.mxu0 %v362
  %v2463 = vpop.f32.mrf.mxu0
  %v2464 = vadd.f32 %v2249, %v2463
  %v2465 = vpop.f32.mrf.mxu0
  %v2466 = vadd.f32 %v2251, %v2465
  %2467 = vmatprep.mubr.f32.mxu0 %v381
  %2468 = vmatmul.mubr.f32.gmra.mxu0 %v380
  %v2469 = vpop.f32.mrf.mxu0
  %v2470 = vadd.f32 %v2255, %v2469
  %v2471 = vpop.f32.mrf.mxu0
  %v2472 = vadd.f32 %v2257, %v2471
  %2473 = vmatprep.mubr.f32.mxu0 %v399
  %2474 = vmatmul.mubr.f32.gmra.mxu0 %v398
  %v2475 = vpop.f32.mrf.mxu0
  %v2476 = vadd.f32 %v2261, %v2475
  %v2477 = vpop.f32.mrf.mxu0
  %v2478 = vadd.f32 %v2263, %v2477
  %2479 = vmatprep.mubr.f32.mxu0 %v417
  %2480 = vmatmul.mubr.f32.gmra.mxu0 %v416
  %v2481 = vpop.f32.mrf.mxu0
  %v2482 = vadd.f32 %v2267, %v2481
  %v2483 = vpop.f32.mrf.mxu0
  %v2484 = vadd.f32 %v2269, %v2483
  %2485 = vmatprep.mubr.f32.mxu0 %v435
  %2486 = vmatmul.mubr.f32.gmra.mxu0 %v434
  %v2487 = vpop.f32.mrf.mxu0
  %v2488 = vadd.f32 %v2273, %v2487
  %v2489 = vpop.f32.mrf.mxu0
  %v2490 = vadd.f32 %v2275, %v2489
  %2491 = vmatprep.mubr.f32.mxu0 %v453
  %2492 = vmatmul.mubr.f32.gmra.mxu0 %v452
  %v2493 = vpop.f32.mrf.mxu0
  %v2494 = vadd.f32 %v2279, %v2493
  %v2495 = vpop.f32.mrf.mxu0
  %v2496 = vadd.f32 %v2281, %v2495
  %2497 = vdwg.mxu0
  %2498 = vmatprep.subr.mxu0 %v1037
  %2499 = vmatpush1.msra.mxu0 %v1036
  %2500 = vmatprep.subr.mxu0 %v1033
  %2501 = vmatpush1.msra.mxu0 %v1032
  %2502 = vmatprep.subr.mxu0 %v1029
  %2503 = vmatpush1.msra.mxu0 %v1028
  %2504 = vmatprep.subr.mxu0 %v1025
  %2505 = vmatpush1.msra.mxu0 %v1024
  %2506 = vmatprep.subr.mxu0 %v1021
  %2507 = vmatpush1.msra.mxu0 %v1020
  %2508 = vmatprep.subr.mxu0 %v1017
  %2509 = vmatpush1.msra.mxu0 %v1016
  %2510 = vmatprep.subr.mxu0 %v1013
  %2511 = vmatpush1.msra.mxu0 %v1012
  %2512 = vmatprep.subr.mxu0 %v1009
  %2513 = vmatpush1.msra.mxu0 %v1008
  %2514 = vmatprep.subr.mxu0 %v1005
  %2515 = vmatpush1.msra.mxu0 %v1004
  %2516 = vmatprep.subr.mxu0 %v1001
  %2517 = vmatpush1.msra.mxu0 %v1000
  %2518 = vmatprep.subr.mxu0 %v997
  %2519 = vmatpush1.msra.mxu0 %v996
  %2520 = vmatprep.subr.mxu0 %v993
  %2521 = vmatpush1.msra.mxu0 %v992
  %2522 = vmatprep.subr.mxu0 %v989
  %2523 = vmatpush1.msra.mxu0 %v988
  %2524 = vmatprep.subr.mxu0 %v985
  %2525 = vmatpush1.msra.mxu0 %v984
  %2526 = vmatprep.subr.mxu0 %v981
  %2527 = vmatpush1.msra.mxu0 %v980
  %2528 = vmatprep.subr.mxu0 %v977
  %2529 = vmatpush1.msra.mxu0 %v976
  %2530 = vmatprep.subr.mxu0 %v1101
  %2531 = vmatpush2.msra.mxu0 %v1100
  %2532 = vmatprep.subr.mxu0 %v1097
  %2533 = vmatpush2.msra.mxu0 %v1096
  %2534 = vmatprep.subr.mxu0 %v1093
  %2535 = vmatpush2.msra.mxu0 %v1092
  %2536 = vmatprep.subr.mxu0 %v1089
  %2537 = vmatpush2.msra.mxu0 %v1088
  %2538 = vmatprep.subr.mxu0 %v1085
  %2539 = vmatpush2.msra.mxu0 %v1084
  %2540 = vmatprep.subr.mxu0 %v1081
  %2541 = vmatpush2.msra.mxu0 %v1080
  %2542 = vmatprep.subr.mxu0 %v1077
  %2543 = vmatpush2.msra.mxu0 %v1076
  %2544 = vmatprep.subr.mxu0 %v1073
  %2545 = vmatpush2.msra.mxu0 %v1072
  %2546 = vmatprep.subr.mxu0 %v1069
  %2547 = vmatpush2.msra.mxu0 %v1068
  %2548 = vmatprep.subr.mxu0 %v1065
  %2549 = vmatpush2.msra.mxu0 %v1064
  %2550 = vmatprep.subr.mxu0 %v1061
  %2551 = vmatpush2.msra.mxu0 %v1060
  %2552 = vmatprep.subr.mxu0 %v1057
  %2553 = vmatpush2.msra.mxu0 %v1056
  %2554 = vmatprep.subr.mxu0 %v1053
  %2555 = vmatpush2.msra.mxu0 %v1052
  %2556 = vmatprep.subr.mxu0 %v1049
  %2557 = vmatpush2.msra.mxu0 %v1048
  %2558 = vmatprep.subr.mxu0 %v1045
  %2559 = vmatpush2.msra.mxu0 %v1044
  %2560 = vmatprep.subr.mxu0 %v1041
  %2561 = vmatpush2.msra.mxu0 %v1040
  %2562 = vmatprep.mubr.f32.mxu0 %v23
  %2563 = vmatmul.mubr.f32.gmra.mxu0 %v22
  %v2564 = vpop.f32.mrf.mxu0
  %v2565 = vadd.f32 %v2350, %v2564
  %v2566 = vpop.f32.mrf.mxu0
  %v2567 = vadd.f32 %v2352, %v2566
  %2568 = vmatprep.mubr.f32.mxu0 %v41
  %2569 = vmatmul.mubr.f32.gmra.mxu0 %v40
  %v2570 = vpop.f32.mrf.mxu0
  %v2571 = vadd.f32 %v2356, %v2570
  %v2572 = vpop.f32.mrf.mxu0
  %v2573 = vadd.f32 %v2358, %v2572
  %2574 = vmatprep.mubr.f32.mxu0 %v59
  %2575 = vmatmul.mubr.f32.gmra.mxu0 %v58
  %v2576 = vpop.f32.mrf.mxu0
  %v2577 = vadd.f32 %v2362, %v2576
  %v2578 = vpop.f32.mrf.mxu0
  %v2579 = vadd.f32 %v2364, %v2578
  %2580 = vmatprep.mubr.f32.mxu0 %v77
  %2581 = vmatmul.mubr.f32.gmra.mxu0 %v76
  %v2582 = vpop.f32.mrf.mxu0
  %v2583 = vadd.f32 %v2368, %v2582
  %v2584 = vpop.f32.mrf.mxu0
  %v2585 = vadd.f32 %v2370, %v2584
  %2586 = vmatprep.mubr.f32.mxu0 %v95
  %2587 = vmatmul.mubr.f32.gmra.mxu0 %v94
  %v2588 = vpop.f32.mrf.mxu0
  %v2589 = vadd.f32 %v2374, %v2588
  %v2590 = vpop.f32.mrf.mxu0
  %v2591 = vadd.f32 %v2376, %v2590
  %2592 = vmatprep.mubr.f32.mxu0 %v113
  %2593 = vmatmul.mubr.f32.gmra.mxu0 %v112
  %v2594 = vpop.f32.mrf.mxu0
  %v2595 = vadd.f32 %v2380, %v2594
  %v2596 = vpop.f32.mrf.mxu0
  %v2597 = vadd.f32 %v2382, %v2596
  %2598 = vmatprep.mubr.f32.mxu0 %v131
  %2599 = vmatmul.mubr.f32.gmra.mxu0 %v130
  %v2600 = vpop.f32.mrf.mxu0
  %v2601 = vadd.f32 %v2386, %v2600
  %v2602 = vpop.f32.mrf.mxu0
  %v2603 = vadd.f32 %v2388, %v2602
  %2604 = vmatprep.mubr.f32.mxu0 %v149
  %2605 = vmatmul.mubr.f32.gmra.mxu0 %v148
  %v2606 = vpop.f32.mrf.mxu0
  %v2607 = vadd.f32 %v2392, %v2606
  %v2608 = vpop.f32.mrf.mxu0
  %v2609 = vadd.f32 %v2394, %v2608
  %2610 = vmatprep.mubr.f32.mxu0 %v167
  %2611 = vmatmul.mubr.f32.gmra.mxu0 %v166
  %v2612 = vpop.f32.mrf.mxu0
  %v2613 = vadd.f32 %v2398, %v2612
  %v2614 = vpop.f32.mrf.mxu0
  %v2615 = vadd.f32 %v2400, %v2614
  %2616 = vmatprep.mubr.f32.mxu0 %v185
  %2617 = vmatmul.mubr.f32.gmra.mxu0 %v184
  %v2618 = vpop.f32.mrf.mxu0
  %v2619 = vadd.f32 %v2404, %v2618
  %v2620 = vpop.f32.mrf.mxu0
  %v2621 = vadd.f32 %v2406, %v2620
  %2622 = vmatprep.mubr.f32.mxu0 %v203
  %2623 = vmatmul.mubr.f32.gmra.mxu0 %v202
  %v2624 = vpop.f32.mrf.mxu0
  %v2625 = vadd.f32 %v2410, %v2624
  %v2626 = vpop.f32.mrf.mxu0
  %v2627 = vadd.f32 %v2412, %v2626
  %2628 = vmatprep.mubr.f32.mxu0 %v221
  %2629 = vmatmul.mubr.f32.gmra.mxu0 %v220
  %v2630 = vpop.f32.mrf.mxu0
  %v2631 = vadd.f32 %v2416, %v2630
  %v2632 = vpop.f32.mrf.mxu0
  %v2633 = vadd.f32 %v2418, %v2632
  %2634 = vmatprep.mubr.f32.mxu0 %v239
  %2635 = vmatmul.mubr.f32.gmra.mxu0 %v238
  %v2636 = vpop.f32.mrf.mxu0
  %v2637 = vadd.f32 %v2422, %v2636
  %v2638 = vpop.f32.mrf.mxu0
  %v2639 = vadd.f32 %v2424, %v2638
  %2640 = vmatprep.mubr.f32.mxu0 %v257
  %2641 = vmatmul.mubr.f32.gmra.mxu0 %v256
  %v2642 = vpop.f32.mrf.mxu0
  %v2643 = vadd.f32 %v2428, %v2642
  %v2644 = vpop.f32.mrf.mxu0
  %v2645 = vadd.f32 %v2430, %v2644
  %2646 = vmatprep.mubr.f32.mxu0 %v275
  %2647 = vmatmul.mubr.f32.gmra.mxu0 %v274
  %v2648 = vpop.f32.mrf.mxu0
  %v2649 = vadd.f32 %v2434, %v2648
  %v2650 = vpop.f32.mrf.mxu0
  %v2651 = vadd.f32 %v2436, %v2650
  %2652 = vmatprep.mubr.f32.mxu0 %v293
  %2653 = vmatmul.mubr.f32.gmra.mxu0 %v292
  %v2654 = vpop.f32.mrf.mxu0
  %v2655 = vadd.f32 %v2440, %v2654
  %v2656 = vpop.f32.mrf.mxu0
  %v2657 = vadd.f32 %v2442, %v2656
  %2658 = vmatprep.mubr.f32.mxu0 %v311
  %2659 = vmatmul.mubr.f32.gmra.mxu0 %v310
  %v2660 = vpop.f32.mrf.mxu0
  %v2661 = vadd.f32 %v2446, %v2660
  %v2662 = vpop.f32.mrf.mxu0
  %v2663 = vadd.f32 %v2448, %v2662
  %2664 = vmatprep.mubr.f32.mxu0 %v329
  %2665 = vmatmul.mubr.f32.gmra.mxu0 %v328
  %v2666 = vpop.f32.mrf.mxu0
  %v2667 = vadd.f32 %v2452, %v2666
  %v2668 = vpop.f32.mrf.mxu0
  %v2669 = vadd.f32 %v2454, %v2668
  %2670 = vmatprep.mubr.f32.mxu0 %v347
  %2671 = vmatmul.mubr.f32.gmra.mxu0 %v346
  %v2672 = vpop.f32.mrf.mxu0
  %v2673 = vadd.f32 %v2458, %v2672
  %v2674 = vpop.f32.mrf.mxu0
  %v2675 = vadd.f32 %v2460, %v2674
  %2676 = vmatprep.mubr.f32.mxu0 %v365
  %2677 = vmatmul.mubr.f32.gmra.mxu0 %v364
  %v2678 = vpop.f32.mrf.mxu0
  %v2679 = vadd.f32 %v2464, %v2678
  %v2680 = vpop.f32.mrf.mxu0
  %v2681 = vadd.f32 %v2466, %v2680
  %2682 = vmatprep.mubr.f32.mxu0 %v383
  %2683 = vmatmul.mubr.f32.gmra.mxu0 %v382
  %v2684 = vpop.f32.mrf.mxu0
  %v2685 = vadd.f32 %v2470, %v2684
  %v2686 = vpop.f32.mrf.mxu0
  %v2687 = vadd.f32 %v2472, %v2686
  %2688 = vmatprep.mubr.f32.mxu0 %v401
  %2689 = vmatmul.mubr.f32.gmra.mxu0 %v400
  %v2690 = vpop.f32.mrf.mxu0
  %v2691 = vadd.f32 %v2476, %v2690
  %v2692 = vpop.f32.mrf.mxu0
  %v2693 = vadd.f32 %v2478, %v2692
  %2694 = vmatprep.mubr.f32.mxu0 %v419
  %2695 = vmatmul.mubr.f32.gmra.mxu0 %v418
  %v2696 = vpop.f32.mrf.mxu0
  %v2697 = vadd.f32 %v2482, %v2696
  %v2698 = vpop.f32.mrf.mxu0
  %v2699 = vadd.f32 %v2484, %v2698
  %2700 = vmatprep.mubr.f32.mxu0 %v437
  %2701 = vmatmul.mubr.f32.gmra.mxu0 %v436
  %v2702 = vpop.f32.mrf.mxu0
  %v2703 = vadd.f32 %v2488, %v2702
  %v2704 = vpop.f32.mrf.mxu0
  %v2705 = vadd.f32 %v2490, %v2704
  %2706 = vmatprep.mubr.f32.mxu0 %v455
  %2707 = vmatmul.mubr.f32.gmra.mxu0 %v454
  %v2708 = vpop.f32.mrf.mxu0
  %v2709 = vadd.f32 %v2494, %v2708
  %v2710 = vpop.f32.mrf.mxu0
  %v2711 = vadd.f32 %v2496, %v2710
  %2712 = vdwg.mxu0
  %2713 = vmatprep.subr.mxu0 %v1165
  %2714 = vmatpush1.msra.mxu0 %v1164
  %2715 = vmatprep.subr.mxu0 %v1161
  %2716 = vmatpush1.msra.mxu0 %v1160
  %2717 = vmatprep.subr.mxu0 %v1157
  %2718 = vmatpush1.msra.mxu0 %v1156
  %2719 = vmatprep.subr.mxu0 %v1153
  %2720 = vmatpush1.msra.mxu0 %v1152
  %2721 = vmatprep.subr.mxu0 %v1149
  %2722 = vmatpush1.msra.mxu0 %v1148
  %2723 = vmatprep.subr.mxu0 %v1145
  %2724 = vmatpush1.msra.mxu0 %v1144
  %2725 = vmatprep.subr.mxu0 %v1141
  %2726 = vmatpush1.msra.mxu0 %v1140
  %2727 = vmatprep.subr.mxu0 %v1137
  %2728 = vmatpush1.msra.mxu0 %v1136
  %2729 = vmatprep.subr.mxu0 %v1133
  %2730 = vmatpush1.msra.mxu0 %v1132
  %2731 = vmatprep.subr.mxu0 %v1129
  %2732 = vmatpush1.msra.mxu0 %v1128
  %2733 = vmatprep.subr.mxu0 %v1125
  %2734 = vmatpush1.msra.mxu0 %v1124
  %2735 = vmatprep.subr.mxu0 %v1121
  %2736 = vmatpush1.msra.mxu0 %v1120
  %2737 = vmatprep.subr.mxu0 %v1117
  %2738 = vmatpush1.msra.mxu0 %v1116
  %2739 = vmatprep.subr.mxu0 %v1113
  %2740 = vmatpush1.msra.mxu0 %v1112
  %2741 = vmatprep.subr.mxu0 %v1109
  %2742 = vmatpush1.msra.mxu0 %v1108
  %2743 = vmatprep.subr.mxu0 %v1105
  %2744 = vmatpush1.msra.mxu0 %v1104
  %2745 = vmatprep.subr.mxu0 %v1229
  %2746 = vmatpush2.msra.mxu0 %v1228
  %2747 = vmatprep.subr.mxu0 %v1225
  %2748 = vmatpush2.msra.mxu0 %v1224
  %2749 = vmatprep.subr.mxu0 %v1221
  %2750 = vmatpush2.msra.mxu0 %v1220
  %2751 = vmatprep.subr.mxu0 %v1217
  %2752 = vmatpush2.msra.mxu0 %v1216
  %2753 = vmatprep.subr.mxu0 %v1213
  %2754 = vmatpush2.msra.mxu0 %v1212
  %2755 = vmatprep.subr.mxu0 %v1209
  %2756 = vmatpush2.msra.mxu0 %v1208
  %2757 = vmatprep.subr.mxu0 %v1205
  %2758 = vmatpush2.msra.mxu0 %v1204
  %2759 = vmatprep.subr.mxu0 %v1201
  %2760 = vmatpush2.msra.mxu0 %v1200
  %2761 = vmatprep.subr.mxu0 %v1197
  %2762 = vmatpush2.msra.mxu0 %v1196
  %2763 = vmatprep.subr.mxu0 %v1193
  %2764 = vmatpush2.msra.mxu0 %v1192
  %2765 = vmatprep.subr.mxu0 %v1189
  %2766 = vmatpush2.msra.mxu0 %v1188
  %2767 = vmatprep.subr.mxu0 %v1185
  %2768 = vmatpush2.msra.mxu0 %v1184
  %2769 = vmatprep.subr.mxu0 %v1181
  %2770 = vmatpush2.msra.mxu0 %v1180
  %2771 = vmatprep.subr.mxu0 %v1177
  %2772 = vmatpush2.msra.mxu0 %v1176
  %2773 = vmatprep.subr.mxu0 %v1173
  %2774 = vmatpush2.msra.mxu0 %v1172
  %2775 = vmatprep.subr.mxu0 %v1169
  %2776 = vmatpush2.msra.mxu0 %v1168
  %2777 = vmatprep.mubr.f32.mxu0 %v25
  %2778 = vmatmul.mubr.f32.gmra.mxu0 %v24
  %v2779 = vpop.f32.mrf.mxu0
  %v2780 = vadd.f32 %v2565, %v2779
  %v2781 = vpop.f32.mrf.mxu0
  %v2782 = vadd.f32 %v2567, %v2781
  %2783 = vmatprep.mubr.f32.mxu0 %v43
  %2784 = vmatmul.mubr.f32.gmra.mxu0 %v42
  %v2785 = vpop.f32.mrf.mxu0
  %v2786 = vadd.f32 %v2571, %v2785
  %v2787 = vpop.f32.mrf.mxu0
  %v2788 = vadd.f32 %v2573, %v2787
  %2789 = vmatprep.mubr.f32.mxu0 %v61
  %2790 = vmatmul.mubr.f32.gmra.mxu0 %v60
  %v2791 = vpop.f32.mrf.mxu0
  %v2792 = vadd.f32 %v2577, %v2791
  %v2793 = vpop.f32.mrf.mxu0
  %v2794 = vadd.f32 %v2579, %v2793
  %2795 = vmatprep.mubr.f32.mxu0 %v79
  %2796 = vmatmul.mubr.f32.gmra.mxu0 %v78
  %v2797 = vpop.f32.mrf.mxu0
  %v2798 = vadd.f32 %v2583, %v2797
  %v2799 = vpop.f32.mrf.mxu0
  %v2800 = vadd.f32 %v2585, %v2799
  %2801 = vmatprep.mubr.f32.mxu0 %v97
  %2802 = vmatmul.mubr.f32.gmra.mxu0 %v96
  %v2803 = vpop.f32.mrf.mxu0
  %v2804 = vadd.f32 %v2589, %v2803
  %v2805 = vpop.f32.mrf.mxu0
  %v2806 = vadd.f32 %v2591, %v2805
  %2807 = vmatprep.mubr.f32.mxu0 %v115
  %2808 = vmatmul.mubr.f32.gmra.mxu0 %v114
  %v2809 = vpop.f32.mrf.mxu0
  %v2810 = vadd.f32 %v2595, %v2809
  %v2811 = vpop.f32.mrf.mxu0
  %v2812 = vadd.f32 %v2597, %v2811
  %2813 = vmatprep.mubr.f32.mxu0 %v133
  %2814 = vmatmul.mubr.f32.gmra.mxu0 %v132
  %v2815 = vpop.f32.mrf.mxu0
  %v2816 = vadd.f32 %v2601, %v2815
  %v2817 = vpop.f32.mrf.mxu0
  %v2818 = vadd.f32 %v2603, %v2817
  %2819 = vmatprep.mubr.f32.mxu0 %v151
  %2820 = vmatmul.mubr.f32.gmra.mxu0 %v150
  %v2821 = vpop.f32.mrf.mxu0
  %v2822 = vadd.f32 %v2607, %v2821
  %v2823 = vpop.f32.mrf.mxu0
  %v2824 = vadd.f32 %v2609, %v2823
  %2825 = vmatprep.mubr.f32.mxu0 %v169
  %2826 = vmatmul.mubr.f32.gmra.mxu0 %v168
  %v2827 = vpop.f32.mrf.mxu0
  %v2828 = vadd.f32 %v2613, %v2827
  %v2829 = vpop.f32.mrf.mxu0
  %v2830 = vadd.f32 %v2615, %v2829
  %2831 = vmatprep.mubr.f32.mxu0 %v187
  %2832 = vmatmul.mubr.f32.gmra.mxu0 %v186
  %v2833 = vpop.f32.mrf.mxu0
  %v2834 = vadd.f32 %v2619, %v2833
  %v2835 = vpop.f32.mrf.mxu0
  %v2836 = vadd.f32 %v2621, %v2835
  %2837 = vmatprep.mubr.f32.mxu0 %v205
  %2838 = vmatmul.mubr.f32.gmra.mxu0 %v204
  %v2839 = vpop.f32.mrf.mxu0
  %v2840 = vadd.f32 %v2625, %v2839
  %v2841 = vpop.f32.mrf.mxu0
  %v2842 = vadd.f32 %v2627, %v2841
  %2843 = vmatprep.mubr.f32.mxu0 %v223
  %2844 = vmatmul.mubr.f32.gmra.mxu0 %v222
  %v2845 = vpop.f32.mrf.mxu0
  %v2846 = vadd.f32 %v2631, %v2845
  %v2847 = vpop.f32.mrf.mxu0
  %v2848 = vadd.f32 %v2633, %v2847
  %2849 = vmatprep.mubr.f32.mxu0 %v241
  %2850 = vmatmul.mubr.f32.gmra.mxu0 %v240
  %v2851 = vpop.f32.mrf.mxu0
  %v2852 = vadd.f32 %v2637, %v2851
  %v2853 = vpop.f32.mrf.mxu0
  %v2854 = vadd.f32 %v2639, %v2853
  %2855 = vmatprep.mubr.f32.mxu0 %v259
  %2856 = vmatmul.mubr.f32.gmra.mxu0 %v258
  %v2857 = vpop.f32.mrf.mxu0
  %v2858 = vadd.f32 %v2643, %v2857
  %v2859 = vpop.f32.mrf.mxu0
  %v2860 = vadd.f32 %v2645, %v2859
  %2861 = vmatprep.mubr.f32.mxu0 %v277
  %2862 = vmatmul.mubr.f32.gmra.mxu0 %v276
  %v2863 = vpop.f32.mrf.mxu0
  %v2864 = vadd.f32 %v2649, %v2863
  %v2865 = vpop.f32.mrf.mxu0
  %v2866 = vadd.f32 %v2651, %v2865
  %2867 = vmatprep.mubr.f32.mxu0 %v295
  %2868 = vmatmul.mubr.f32.gmra.mxu0 %v294
  %v2869 = vpop.f32.mrf.mxu0
  %v2870 = vadd.f32 %v2655, %v2869
  %v2871 = vpop.f32.mrf.mxu0
  %v2872 = vadd.f32 %v2657, %v2871
  %2873 = vmatprep.mubr.f32.mxu0 %v313
  %2874 = vmatmul.mubr.f32.gmra.mxu0 %v312
  %v2875 = vpop.f32.mrf.mxu0
  %v2876 = vadd.f32 %v2661, %v2875
  %v2877 = vpop.f32.mrf.mxu0
  %v2878 = vadd.f32 %v2663, %v2877
  %2879 = vmatprep.mubr.f32.mxu0 %v331
  %2880 = vmatmul.mubr.f32.gmra.mxu0 %v330
  %v2881 = vpop.f32.mrf.mxu0
  %v2882 = vadd.f32 %v2667, %v2881
  %v2883 = vpop.f32.mrf.mxu0
  %v2884 = vadd.f32 %v2669, %v2883
  %2885 = vmatprep.mubr.f32.mxu0 %v349
  %2886 = vmatmul.mubr.f32.gmra.mxu0 %v348
  %v2887 = vpop.f32.mrf.mxu0
  %v2888 = vadd.f32 %v2673, %v2887
  %v2889 = vpop.f32.mrf.mxu0
  %v2890 = vadd.f32 %v2675, %v2889
  %2891 = vmatprep.mubr.f32.mxu0 %v367
  %2892 = vmatmul.mubr.f32.gmra.mxu0 %v366
  %v2893 = vpop.f32.mrf.mxu0
  %v2894 = vadd.f32 %v2679, %v2893
  %v2895 = vpop.f32.mrf.mxu0
  %v2896 = vadd.f32 %v2681, %v2895
  %2897 = vmatprep.mubr.f32.mxu0 %v385
  %2898 = vmatmul.mubr.f32.gmra.mxu0 %v384
  %v2899 = vpop.f32.mrf.mxu0
  %v2900 = vadd.f32 %v2685, %v2899
  %v2901 = vpop.f32.mrf.mxu0
  %v2902 = vadd.f32 %v2687, %v2901
  %2903 = vmatprep.mubr.f32.mxu0 %v403
  %2904 = vmatmul.mubr.f32.gmra.mxu0 %v402
  %v2905 = vpop.f32.mrf.mxu0
  %v2906 = vadd.f32 %v2691, %v2905
  %v2907 = vpop.f32.mrf.mxu0
  %v2908 = vadd.f32 %v2693, %v2907
  %2909 = vmatprep.mubr.f32.mxu0 %v421
  %2910 = vmatmul.mubr.f32.gmra.mxu0 %v420
  %v2911 = vpop.f32.mrf.mxu0
  %v2912 = vadd.f32 %v2697, %v2911
  %v2913 = vpop.f32.mrf.mxu0
  %v2914 = vadd.f32 %v2699, %v2913
  %2915 = vmatprep.mubr.f32.mxu0 %v439
  %2916 = vmatmul.mubr.f32.gmra.mxu0 %v438
  %v2917 = vpop.f32.mrf.mxu0
  %v2918 = vadd.f32 %v2703, %v2917
  %v2919 = vpop.f32.mrf.mxu0
  %v2920 = vadd.f32 %v2705, %v2919
  %2921 = vmatprep.mubr.f32.mxu0 %v457
  %2922 = vmatmul.mubr.f32.gmra.mxu0 %v456
  %v2923 = vpop.f32.mrf.mxu0
  %v2924 = vadd.f32 %v2709, %v2923
  %v2925 = vpop.f32.mrf.mxu0
  %v2926 = vadd.f32 %v2711, %v2925
  %2927 = vdwg.mxu0
  %2928 = vmatprep.subr.mxu0 %v1293
  %2929 = vmatpush1.msra.mxu0 %v1292
  %2930 = vmatprep.subr.mxu0 %v1289
  %2931 = vmatpush1.msra.mxu0 %v1288
  %2932 = vmatprep.subr.mxu0 %v1285
  %2933 = vmatpush1.msra.mxu0 %v1284
  %2934 = vmatprep.subr.mxu0 %v1281
  %2935 = vmatpush1.msra.mxu0 %v1280
  %2936 = vmatprep.subr.mxu0 %v1277
  %2937 = vmatpush1.msra.mxu0 %v1276
  %2938 = vmatprep.subr.mxu0 %v1273
  %2939 = vmatpush1.msra.mxu0 %v1272
  %2940 = vmatprep.subr.mxu0 %v1269
  %2941 = vmatpush1.msra.mxu0 %v1268
  %2942 = vmatprep.subr.mxu0 %v1265
  %2943 = vmatpush1.msra.mxu0 %v1264
  %2944 = vmatprep.subr.mxu0 %v1261
  %2945 = vmatpush1.msra.mxu0 %v1260
  %2946 = vmatprep.subr.mxu0 %v1257
  %2947 = vmatpush1.msra.mxu0 %v1256
  %2948 = vmatprep.subr.mxu0 %v1253
  %2949 = vmatpush1.msra.mxu0 %v1252
  %2950 = vmatprep.subr.mxu0 %v1249
  %2951 = vmatpush1.msra.mxu0 %v1248
  %2952 = vmatprep.subr.mxu0 %v1245
  %2953 = vmatpush1.msra.mxu0 %v1244
  %2954 = vmatprep.subr.mxu0 %v1241
  %2955 = vmatpush1.msra.mxu0 %v1240
  %2956 = vmatprep.subr.mxu0 %v1237
  %2957 = vmatpush1.msra.mxu0 %v1236
  %2958 = vmatprep.subr.mxu0 %v1233
  %2959 = vmatpush1.msra.mxu0 %v1232
  %2960 = vmatprep.subr.mxu0 %v1357
  %2961 = vmatpush2.msra.mxu0 %v1356
  %2962 = vmatprep.subr.mxu0 %v1353
  %2963 = vmatpush2.msra.mxu0 %v1352
  %2964 = vmatprep.subr.mxu0 %v1349
  %2965 = vmatpush2.msra.mxu0 %v1348
  %2966 = vmatprep.subr.mxu0 %v1345
  %2967 = vmatpush2.msra.mxu0 %v1344
  %2968 = vmatprep.subr.mxu0 %v1341
  %2969 = vmatpush2.msra.mxu0 %v1340
  %2970 = vmatprep.subr.mxu0 %v1337
  %2971 = vmatpush2.msra.mxu0 %v1336
  %2972 = vmatprep.subr.mxu0 %v1333
  %2973 = vmatpush2.msra.mxu0 %v1332
  %2974 = vmatprep.subr.mxu0 %v1329
  %2975 = vmatpush2.msra.mxu0 %v1328
  %2976 = vmatprep.subr.mxu0 %v1325
  %2977 = vmatpush2.msra.mxu0 %v1324
  %2978 = vmatprep.subr.mxu0 %v1321
  %2979 = vmatpush2.msra.mxu0 %v1320
  %2980 = vmatprep.subr.mxu0 %v1317
  %2981 = vmatpush2.msra.mxu0 %v1316
  %2982 = vmatprep.subr.mxu0 %v1313
  %2983 = vmatpush2.msra.mxu0 %v1312
  %2984 = vmatprep.subr.mxu0 %v1309
  %2985 = vmatpush2.msra.mxu0 %v1308
  %2986 = vmatprep.subr.mxu0 %v1305
  %2987 = vmatpush2.msra.mxu0 %v1304
  %2988 = vmatprep.subr.mxu0 %v1301
  %2989 = vmatpush2.msra.mxu0 %v1300
  %2990 = vmatprep.subr.mxu0 %v1297
  %2991 = vmatpush2.msra.mxu0 %v1296
  %2992 = vmatprep.mubr.f32.mxu0 %v27
  %2993 = vmatmul.mubr.f32.gmra.mxu0 %v26
  %v2994 = vpop.f32.mrf.mxu0
  %v2995 = vadd.f32 %v2780, %v2994
  %v2996 = vpop.f32.mrf.mxu0
  %v2997 = vadd.f32 %v2782, %v2996
  %2998 = vmatprep.mubr.f32.mxu0 %v45
  %2999 = vmatmul.mubr.f32.gmra.mxu0 %v44
  %v3000 = vpop.f32.mrf.mxu0
  %v3001 = vadd.f32 %v2786, %v3000
  %v3002 = vpop.f32.mrf.mxu0
  %v3003 = vadd.f32 %v2788, %v3002
  %3004 = vmatprep.mubr.f32.mxu0 %v63
  %3005 = vmatmul.mubr.f32.gmra.mxu0 %v62
  %v3006 = vpop.f32.mrf.mxu0
  %v3007 = vadd.f32 %v2792, %v3006
  %v3008 = vpop.f32.mrf.mxu0
  %v3009 = vadd.f32 %v2794, %v3008
  %3010 = vmatprep.mubr.f32.mxu0 %v81
  %3011 = vmatmul.mubr.f32.gmra.mxu0 %v80
  %v3012 = vpop.f32.mrf.mxu0
  %v3013 = vadd.f32 %v2798, %v3012
  %v3014 = vpop.f32.mrf.mxu0
  %v3015 = vadd.f32 %v2800, %v3014
  %3016 = vmatprep.mubr.f32.mxu0 %v99
  %3017 = vmatmul.mubr.f32.gmra.mxu0 %v98
  %v3018 = vpop.f32.mrf.mxu0
  %v3019 = vadd.f32 %v2804, %v3018
  %v3020 = vpop.f32.mrf.mxu0
  %v3021 = vadd.f32 %v2806, %v3020
  %3022 = vmatprep.mubr.f32.mxu0 %v117
  %3023 = vmatmul.mubr.f32.gmra.mxu0 %v116
  %v3024 = vpop.f32.mrf.mxu0
  %v3025 = vadd.f32 %v2810, %v3024
  %v3026 = vpop.f32.mrf.mxu0
  %v3027 = vadd.f32 %v2812, %v3026
  %3028 = vmatprep.mubr.f32.mxu0 %v135
  %3029 = vmatmul.mubr.f32.gmra.mxu0 %v134
  %v3030 = vpop.f32.mrf.mxu0
  %v3031 = vadd.f32 %v2816, %v3030
  %v3032 = vpop.f32.mrf.mxu0
  %v3033 = vadd.f32 %v2818, %v3032
  %3034 = vmatprep.mubr.f32.mxu0 %v153
  %3035 = vmatmul.mubr.f32.gmra.mxu0 %v152
  %v3036 = vpop.f32.mrf.mxu0
  %v3037 = vadd.f32 %v2822, %v3036
  %v3038 = vpop.f32.mrf.mxu0
  %v3039 = vadd.f32 %v2824, %v3038
  %3040 = vmatprep.mubr.f32.mxu0 %v171
  %3041 = vmatmul.mubr.f32.gmra.mxu0 %v170
  %v3042 = vpop.f32.mrf.mxu0
  %v3043 = vadd.f32 %v2828, %v3042
  %v3044 = vpop.f32.mrf.mxu0
  %v3045 = vadd.f32 %v2830, %v3044
  %3046 = vmatprep.mubr.f32.mxu0 %v189
  %3047 = vmatmul.mubr.f32.gmra.mxu0 %v188
  %v3048 = vpop.f32.mrf.mxu0
  %v3049 = vadd.f32 %v2834, %v3048
  %v3050 = vpop.f32.mrf.mxu0
  %v3051 = vadd.f32 %v2836, %v3050
  %3052 = vmatprep.mubr.f32.mxu0 %v207
  %3053 = vmatmul.mubr.f32.gmra.mxu0 %v206
  %v3054 = vpop.f32.mrf.mxu0
  %v3055 = vadd.f32 %v2840, %v3054
  %v3056 = vpop.f32.mrf.mxu0
  %v3057 = vadd.f32 %v2842, %v3056
  %3058 = vmatprep.mubr.f32.mxu0 %v225
  %3059 = vmatmul.mubr.f32.gmra.mxu0 %v224
  %v3060 = vpop.f32.mrf.mxu0
  %v3061 = vadd.f32 %v2846, %v3060
  %v3062 = vpop.f32.mrf.mxu0
  %v3063 = vadd.f32 %v2848, %v3062
  %3064 = vmatprep.mubr.f32.mxu0 %v243
  %3065 = vmatmul.mubr.f32.gmra.mxu0 %v242
  %v3066 = vpop.f32.mrf.mxu0
  %v3067 = vadd.f32 %v2852, %v3066
  %v3068 = vpop.f32.mrf.mxu0
  %v3069 = vadd.f32 %v2854, %v3068
  %3070 = vmatprep.mubr.f32.mxu0 %v261
  %3071 = vmatmul.mubr.f32.gmra.mxu0 %v260
  %v3072 = vpop.f32.mrf.mxu0
  %v3073 = vadd.f32 %v2858, %v3072
  %v3074 = vpop.f32.mrf.mxu0
  %v3075 = vadd.f32 %v2860, %v3074
  %3076 = vmatprep.mubr.f32.mxu0 %v279
  %3077 = vmatmul.mubr.f32.gmra.mxu0 %v278
  %v3078 = vpop.f32.mrf.mxu0
  %v3079 = vadd.f32 %v2864, %v3078
  %v3080 = vpop.f32.mrf.mxu0
  %v3081 = vadd.f32 %v2866, %v3080
  %3082 = vmatprep.mubr.f32.mxu0 %v297
  %3083 = vmatmul.mubr.f32.gmra.mxu0 %v296
  %v3084 = vpop.f32.mrf.mxu0
  %v3085 = vadd.f32 %v2870, %v3084
  %v3086 = vpop.f32.mrf.mxu0
  %v3087 = vadd.f32 %v2872, %v3086
  %3088 = vmatprep.mubr.f32.mxu0 %v315
  %3089 = vmatmul.mubr.f32.gmra.mxu0 %v314
  %v3090 = vpop.f32.mrf.mxu0
  %v3091 = vadd.f32 %v2876, %v3090
  %v3092 = vpop.f32.mrf.mxu0
  %v3093 = vadd.f32 %v2878, %v3092
  %3094 = vmatprep.mubr.f32.mxu0 %v333
  %3095 = vmatmul.mubr.f32.gmra.mxu0 %v332
  %v3096 = vpop.f32.mrf.mxu0
  %v3097 = vadd.f32 %v2882, %v3096
  %v3098 = vpop.f32.mrf.mxu0
  %v3099 = vadd.f32 %v2884, %v3098
  %3100 = vmatprep.mubr.f32.mxu0 %v351
  %3101 = vmatmul.mubr.f32.gmra.mxu0 %v350
  %v3102 = vpop.f32.mrf.mxu0
  %v3103 = vadd.f32 %v2888, %v3102
  %v3104 = vpop.f32.mrf.mxu0
  %v3105 = vadd.f32 %v2890, %v3104
  %3106 = vmatprep.mubr.f32.mxu0 %v369
  %3107 = vmatmul.mubr.f32.gmra.mxu0 %v368
  %v3108 = vpop.f32.mrf.mxu0
  %v3109 = vadd.f32 %v2894, %v3108
  %v3110 = vpop.f32.mrf.mxu0
  %v3111 = vadd.f32 %v2896, %v3110
  %3112 = vmatprep.mubr.f32.mxu0 %v387
  %3113 = vmatmul.mubr.f32.gmra.mxu0 %v386
  %v3114 = vpop.f32.mrf.mxu0
  %v3115 = vadd.f32 %v2900, %v3114
  %v3116 = vpop.f32.mrf.mxu0
  %v3117 = vadd.f32 %v2902, %v3116
  %3118 = vmatprep.mubr.f32.mxu0 %v405
  %3119 = vmatmul.mubr.f32.gmra.mxu0 %v404
  %v3120 = vpop.f32.mrf.mxu0
  %v3121 = vadd.f32 %v2906, %v3120
  %v3122 = vpop.f32.mrf.mxu0
  %v3123 = vadd.f32 %v2908, %v3122
  %3124 = vmatprep.mubr.f32.mxu0 %v423
  %3125 = vmatmul.mubr.f32.gmra.mxu0 %v422
  %v3126 = vpop.f32.mrf.mxu0
  %v3127 = vadd.f32 %v2912, %v3126
  %v3128 = vpop.f32.mrf.mxu0
  %v3129 = vadd.f32 %v2914, %v3128
  %3130 = vmatprep.mubr.f32.mxu0 %v441
  %3131 = vmatmul.mubr.f32.gmra.mxu0 %v440
  %v3132 = vpop.f32.mrf.mxu0
  %v3133 = vadd.f32 %v2918, %v3132
  %v3134 = vpop.f32.mrf.mxu0
  %v3135 = vadd.f32 %v2920, %v3134
  %3136 = vmatprep.mubr.f32.mxu0 %v459
  %3137 = vmatmul.mubr.f32.gmra.mxu0 %v458
  %v3138 = vpop.f32.mrf.mxu0
  %v3139 = vadd.f32 %v2924, %v3138
  %v3140 = vpop.f32.mrf.mxu0
  %v3141 = vadd.f32 %v2926, %v3140
  %3142 = vdwg.mxu0
  %3143 = vmatprep.subr.mxu0 %v1421
  %3144 = vmatpush1.msra.mxu0 %v1420
  %3145 = vmatprep.subr.mxu0 %v1417
  %3146 = vmatpush1.msra.mxu0 %v1416
  %3147 = vmatprep.subr.mxu0 %v1413
  %3148 = vmatpush1.msra.mxu0 %v1412
  %3149 = vmatprep.subr.mxu0 %v1409
  %3150 = vmatpush1.msra.mxu0 %v1408
  %3151 = vmatprep.subr.mxu0 %v1405
  %3152 = vmatpush1.msra.mxu0 %v1404
  %3153 = vmatprep.subr.mxu0 %v1401
  %3154 = vmatpush1.msra.mxu0 %v1400
  %3155 = vmatprep.subr.mxu0 %v1397
  %3156 = vmatpush1.msra.mxu0 %v1396
  %3157 = vmatprep.subr.mxu0 %v1393
  %3158 = vmatpush1.msra.mxu0 %v1392
  %3159 = vmatprep.subr.mxu0 %v1389
  %3160 = vmatpush1.msra.mxu0 %v1388
  %3161 = vmatprep.subr.mxu0 %v1385
  %3162 = vmatpush1.msra.mxu0 %v1384
  %3163 = vmatprep.subr.mxu0 %v1381
  %3164 = vmatpush1.msra.mxu0 %v1380
  %3165 = vmatprep.subr.mxu0 %v1377
  %3166 = vmatpush1.msra.mxu0 %v1376
  %3167 = vmatprep.subr.mxu0 %v1373
  %3168 = vmatpush1.msra.mxu0 %v1372
  %3169 = vmatprep.subr.mxu0 %v1369
  %3170 = vmatpush1.msra.mxu0 %v1368
  %3171 = vmatprep.subr.mxu0 %v1365
  %3172 = vmatpush1.msra.mxu0 %v1364
  %3173 = vmatprep.subr.mxu0 %v1361
  %3174 = vmatpush1.msra.mxu0 %v1360
  %3175 = vmatprep.subr.mxu0 %v1485
  %3176 = vmatpush2.msra.mxu0 %v1484
  %3177 = vmatprep.subr.mxu0 %v1481
  %3178 = vmatpush2.msra.mxu0 %v1480
  %3179 = vmatprep.subr.mxu0 %v1477
  %3180 = vmatpush2.msra.mxu0 %v1476
  %3181 = vmatprep.subr.mxu0 %v1473
  %3182 = vmatpush2.msra.mxu0 %v1472
  %3183 = vmatprep.subr.mxu0 %v1469
  %3184 = vmatpush2.msra.mxu0 %v1468
  %3185 = vmatprep.subr.mxu0 %v1465
  %3186 = vmatpush2.msra.mxu0 %v1464
  %3187 = vmatprep.subr.mxu0 %v1461
  %3188 = vmatpush2.msra.mxu0 %v1460
  %3189 = vmatprep.subr.mxu0 %v1457
  %3190 = vmatpush2.msra.mxu0 %v1456
  %3191 = vmatprep.subr.mxu0 %v1453
  %3192 = vmatpush2.msra.mxu0 %v1452
  %3193 = vmatprep.subr.mxu0 %v1449
  %3194 = vmatpush2.msra.mxu0 %v1448
  %3195 = vmatprep.subr.mxu0 %v1445
  %3196 = vmatpush2.msra.mxu0 %v1444
  %3197 = vmatprep.subr.mxu0 %v1441
  %3198 = vmatpush2.msra.mxu0 %v1440
  %3199 = vmatprep.subr.mxu0 %v1437
  %3200 = vmatpush2.msra.mxu0 %v1436
  %3201 = vmatprep.subr.mxu0 %v1433
  %3202 = vmatpush2.msra.mxu0 %v1432
  %3203 = vmatprep.subr.mxu0 %v1429
  %3204 = vmatpush2.msra.mxu0 %v1428
  %3205 = vmatprep.subr.mxu0 %v1425
  %3206 = vmatpush2.msra.mxu0 %v1424
  %3207 = vmatprep.mubr.f32.mxu0 %v29
  %3208 = vmatmul.mubr.f32.gmra.mxu0 %v28
  %v3209 = vpop.f32.mrf.mxu0
  %v3210 = vadd.f32 %v2995, %v3209
  %v3211 = vpop.f32.mrf.mxu0
  %v3212 = vadd.f32 %v2997, %v3211
  %3213 = vmatprep.mubr.f32.mxu0 %v47
  %3214 = vmatmul.mubr.f32.gmra.mxu0 %v46
  %v3215 = vpop.f32.mrf.mxu0
  %v3216 = vadd.f32 %v3001, %v3215
  %v3217 = vpop.f32.mrf.mxu0
  %v3218 = vadd.f32 %v3003, %v3217
  %3219 = vmatprep.mubr.f32.mxu0 %v65
  %3220 = vmatmul.mubr.f32.gmra.mxu0 %v64
  %v3221 = vpop.f32.mrf.mxu0
  %v3222 = vadd.f32 %v3007, %v3221
  %v3223 = vpop.f32.mrf.mxu0
  %v3224 = vadd.f32 %v3009, %v3223
  %3225 = vmatprep.mubr.f32.mxu0 %v83
  %3226 = vmatmul.mubr.f32.gmra.mxu0 %v82
  %v3227 = vpop.f32.mrf.mxu0
  %v3228 = vadd.f32 %v3013, %v3227
  %v3229 = vpop.f32.mrf.mxu0
  %v3230 = vadd.f32 %v3015, %v3229
  %3231 = vmatprep.mubr.f32.mxu0 %v101
  %3232 = vmatmul.mubr.f32.gmra.mxu0 %v100
  %v3233 = vpop.f32.mrf.mxu0
  %v3234 = vadd.f32 %v3019, %v3233
  %v3235 = vpop.f32.mrf.mxu0
  %v3236 = vadd.f32 %v3021, %v3235
  %3237 = vmatprep.mubr.f32.mxu0 %v119
  %3238 = vmatmul.mubr.f32.gmra.mxu0 %v118
  %v3239 = vpop.f32.mrf.mxu0
  %v3240 = vadd.f32 %v3025, %v3239
  %v3241 = vpop.f32.mrf.mxu0
  %v3242 = vadd.f32 %v3027, %v3241
  %3243 = vmatprep.mubr.f32.mxu0 %v137
  %3244 = vmatmul.mubr.f32.gmra.mxu0 %v136
  %v3245 = vpop.f32.mrf.mxu0
  %v3246 = vadd.f32 %v3031, %v3245
  %v3247 = vpop.f32.mrf.mxu0
  %v3248 = vadd.f32 %v3033, %v3247
  %3249 = vmatprep.mubr.f32.mxu0 %v155
  %3250 = vmatmul.mubr.f32.gmra.mxu0 %v154
  %v3251 = vpop.f32.mrf.mxu0
  %v3252 = vadd.f32 %v3037, %v3251
  %v3253 = vpop.f32.mrf.mxu0
  %v3254 = vadd.f32 %v3039, %v3253
  %3255 = vmatprep.mubr.f32.mxu0 %v173
  %3256 = vmatmul.mubr.f32.gmra.mxu0 %v172
  %v3257 = vpop.f32.mrf.mxu0
  %v3258 = vadd.f32 %v3043, %v3257
  %v3259 = vpop.f32.mrf.mxu0
  %v3260 = vadd.f32 %v3045, %v3259
  %3261 = vmatprep.mubr.f32.mxu0 %v191
  %3262 = vmatmul.mubr.f32.gmra.mxu0 %v190
  %v3263 = vpop.f32.mrf.mxu0
  %v3264 = vadd.f32 %v3049, %v3263
  %v3265 = vpop.f32.mrf.mxu0
  %v3266 = vadd.f32 %v3051, %v3265
  %3267 = vmatprep.mubr.f32.mxu0 %v209
  %3268 = vmatmul.mubr.f32.gmra.mxu0 %v208
  %v3269 = vpop.f32.mrf.mxu0
  %v3270 = vadd.f32 %v3055, %v3269
  %v3271 = vpop.f32.mrf.mxu0
  %v3272 = vadd.f32 %v3057, %v3271
  %3273 = vmatprep.mubr.f32.mxu0 %v227
  %3274 = vmatmul.mubr.f32.gmra.mxu0 %v226
  %v3275 = vpop.f32.mrf.mxu0
  %v3276 = vadd.f32 %v3061, %v3275
  %v3277 = vpop.f32.mrf.mxu0
  %v3278 = vadd.f32 %v3063, %v3277
  %3279 = vmatprep.mubr.f32.mxu0 %v245
  %3280 = vmatmul.mubr.f32.gmra.mxu0 %v244
  %v3281 = vpop.f32.mrf.mxu0
  %v3282 = vadd.f32 %v3067, %v3281
  %v3283 = vpop.f32.mrf.mxu0
  %v3284 = vadd.f32 %v3069, %v3283
  %3285 = vmatprep.mubr.f32.mxu0 %v263
  %3286 = vmatmul.mubr.f32.gmra.mxu0 %v262
  %v3287 = vpop.f32.mrf.mxu0
  %v3288 = vadd.f32 %v3073, %v3287
  %v3289 = vpop.f32.mrf.mxu0
  %v3290 = vadd.f32 %v3075, %v3289
  %3291 = vmatprep.mubr.f32.mxu0 %v281
  %3292 = vmatmul.mubr.f32.gmra.mxu0 %v280
  %v3293 = vpop.f32.mrf.mxu0
  %v3294 = vadd.f32 %v3079, %v3293
  %v3295 = vpop.f32.mrf.mxu0
  %v3296 = vadd.f32 %v3081, %v3295
  %3297 = vmatprep.mubr.f32.mxu0 %v299
  %3298 = vmatmul.mubr.f32.gmra.mxu0 %v298
  %v3299 = vpop.f32.mrf.mxu0
  %v3300 = vadd.f32 %v3085, %v3299
  %v3301 = vpop.f32.mrf.mxu0
  %v3302 = vadd.f32 %v3087, %v3301
  %3303 = vmatprep.mubr.f32.mxu0 %v317
  %3304 = vmatmul.mubr.f32.gmra.mxu0 %v316
  %v3305 = vpop.f32.mrf.mxu0
  %v3306 = vadd.f32 %v3091, %v3305
  %v3307 = vpop.f32.mrf.mxu0
  %v3308 = vadd.f32 %v3093, %v3307
  %3309 = vmatprep.mubr.f32.mxu0 %v335
  %3310 = vmatmul.mubr.f32.gmra.mxu0 %v334
  %v3311 = vpop.f32.mrf.mxu0
  %v3312 = vadd.f32 %v3097, %v3311
  %v3313 = vpop.f32.mrf.mxu0
  %v3314 = vadd.f32 %v3099, %v3313
  %3315 = vmatprep.mubr.f32.mxu0 %v353
  %3316 = vmatmul.mubr.f32.gmra.mxu0 %v352
  %v3317 = vpop.f32.mrf.mxu0
  %v3318 = vadd.f32 %v3103, %v3317
  %v3319 = vpop.f32.mrf.mxu0
  %v3320 = vadd.f32 %v3105, %v3319
  %3321 = vmatprep.mubr.f32.mxu0 %v371
  %3322 = vmatmul.mubr.f32.gmra.mxu0 %v370
  %v3323 = vpop.f32.mrf.mxu0
  %v3324 = vadd.f32 %v3109, %v3323
  %v3325 = vpop.f32.mrf.mxu0
  %v3326 = vadd.f32 %v3111, %v3325
  %3327 = vmatprep.mubr.f32.mxu0 %v389
  %3328 = vmatmul.mubr.f32.gmra.mxu0 %v388
  %v3329 = vpop.f32.mrf.mxu0
  %v3330 = vadd.f32 %v3115, %v3329
  %v3331 = vpop.f32.mrf.mxu0
  %v3332 = vadd.f32 %v3117, %v3331
  %3333 = vmatprep.mubr.f32.mxu0 %v407
  %3334 = vmatmul.mubr.f32.gmra.mxu0 %v406
  %v3335 = vpop.f32.mrf.mxu0
  %v3336 = vadd.f32 %v3121, %v3335
  %v3337 = vpop.f32.mrf.mxu0
  %v3338 = vadd.f32 %v3123, %v3337
  %3339 = vmatprep.mubr.f32.mxu0 %v425
  %3340 = vmatmul.mubr.f32.gmra.mxu0 %v424
  %v3341 = vpop.f32.mrf.mxu0
  %v3342 = vadd.f32 %v3127, %v3341
  %v3343 = vpop.f32.mrf.mxu0
  %v3344 = vadd.f32 %v3129, %v3343
  %3345 = vmatprep.mubr.f32.mxu0 %v443
  %3346 = vmatmul.mubr.f32.gmra.mxu0 %v442
  %v3347 = vpop.f32.mrf.mxu0
  %v3348 = vadd.f32 %v3133, %v3347
  %v3349 = vpop.f32.mrf.mxu0
  %v3350 = vadd.f32 %v3135, %v3349
  %3351 = vmatprep.mubr.f32.mxu0 %v461
  %3352 = vmatmul.mubr.f32.gmra.mxu0 %v460
  %v3353 = vpop.f32.mrf.mxu0
  %v3354 = vadd.f32 %v3139, %v3353
  %v3355 = vpop.f32.mrf.mxu0
  %v3356 = vadd.f32 %v3141, %v3355
  %3357 = vdwg.mxu0
  %3358 = vmatprep.subr.mxu0 %v1549
  %3359 = vmatpush1.msra.mxu0 %v1548
  %3360 = vmatprep.subr.mxu0 %v1545
  %3361 = vmatpush1.msra.mxu0 %v1544
  %3362 = vmatprep.subr.mxu0 %v1541
  %3363 = vmatpush1.msra.mxu0 %v1540
  %3364 = vmatprep.subr.mxu0 %v1537
  %3365 = vmatpush1.msra.mxu0 %v1536
  %3366 = vmatprep.subr.mxu0 %v1533
  %3367 = vmatpush1.msra.mxu0 %v1532
  %3368 = vmatprep.subr.mxu0 %v1529
  %3369 = vmatpush1.msra.mxu0 %v1528
  %3370 = vmatprep.subr.mxu0 %v1525
  %3371 = vmatpush1.msra.mxu0 %v1524
  %3372 = vmatprep.subr.mxu0 %v1521
  %3373 = vmatpush1.msra.mxu0 %v1520
  %3374 = vmatprep.subr.mxu0 %v1517
  %3375 = vmatpush1.msra.mxu0 %v1516
  %3376 = vmatprep.subr.mxu0 %v1513
  %3377 = vmatpush1.msra.mxu0 %v1512
  %3378 = vmatprep.subr.mxu0 %v1509
  %3379 = vmatpush1.msra.mxu0 %v1508
  %3380 = vmatprep.subr.mxu0 %v1505
  %3381 = vmatpush1.msra.mxu0 %v1504
  %3382 = vmatprep.subr.mxu0 %v1501
  %3383 = vmatpush1.msra.mxu0 %v1500
  %3384 = vmatprep.subr.mxu0 %v1497
  %3385 = vmatpush1.msra.mxu0 %v1496
  %3386 = vmatprep.subr.mxu0 %v1493
  %3387 = vmatpush1.msra.mxu0 %v1492
  %3388 = vmatprep.subr.mxu0 %v1489
  %3389 = vmatpush1.msra.mxu0 %v1488
  %3390 = vmatprep.subr.mxu0 %v1613
  %3391 = vmatpush2.msra.mxu0 %v1612
  %3392 = vmatprep.subr.mxu0 %v1609
  %3393 = vmatpush2.msra.mxu0 %v1608
  %3394 = vmatprep.subr.mxu0 %v1605
  %3395 = vmatpush2.msra.mxu0 %v1604
  %3396 = vmatprep.subr.mxu0 %v1601
  %3397 = vmatpush2.msra.mxu0 %v1600
  %3398 = vmatprep.subr.mxu0 %v1597
  %3399 = vmatpush2.msra.mxu0 %v1596
  %3400 = vmatprep.subr.mxu0 %v1593
  %3401 = vmatpush2.msra.mxu0 %v1592
  %3402 = vmatprep.subr.mxu0 %v1589
  %3403 = vmatpush2.msra.mxu0 %v1588
  %3404 = vmatprep.subr.mxu0 %v1585
  %3405 = vmatpush2.msra.mxu0 %v1584
  %3406 = vmatprep.subr.mxu0 %v1581
  %3407 = vmatpush2.msra.mxu0 %v1580
  %3408 = vmatprep.subr.mxu0 %v1577
  %3409 = vmatpush2.msra.mxu0 %v1576
  %3410 = vmatprep.subr.mxu0 %v1573
  %3411 = vmatpush2.msra.mxu0 %v1572
  %3412 = vmatprep.subr.mxu0 %v1569
  %3413 = vmatpush2.msra.mxu0 %v1568
  %3414 = vmatprep.subr.mxu0 %v1565
  %3415 = vmatpush2.msra.mxu0 %v1564
  %3416 = vmatprep.subr.mxu0 %v1561
  %3417 = vmatpush2.msra.mxu0 %v1560
  %3418 = vmatprep.subr.mxu0 %v1557
  %3419 = vmatpush2.msra.mxu0 %v1556
  %3420 = vmatprep.subr.mxu0 %v1553
  %3421 = vmatpush2.msra.mxu0 %v1552
  %3422 = vmatprep.mubr.f32.mxu0 %v31
  %3423 = vmatmul.mubr.f32.gmra.mxu0 %v30
  %v3424 = vpop.f32.mrf.mxu0
  %v3425 = vadd.f32 %v3210, %v3424
  %v3426 = vpop.f32.mrf.mxu0
  %v3427 = vadd.f32 %v3212, %v3426
  %3428 = vmatprep.mubr.f32.mxu0 %v49
  %3429 = vmatmul.mubr.f32.gmra.mxu0 %v48
  %v3430 = vpop.f32.mrf.mxu0
  %v3431 = vadd.f32 %v3216, %v3430
  %v3432 = vpop.f32.mrf.mxu0
  %v3433 = vadd.f32 %v3218, %v3432
  %3434 = vmatprep.mubr.f32.mxu0 %v67
  %3435 = vmatmul.mubr.f32.gmra.mxu0 %v66
  %v3436 = vpop.f32.mrf.mxu0
  %v3437 = vadd.f32 %v3222, %v3436
  %v3438 = vpop.f32.mrf.mxu0
  %v3439 = vadd.f32 %v3224, %v3438
  %3440 = vmatprep.mubr.f32.mxu0 %v85
  %3441 = vmatmul.mubr.f32.gmra.mxu0 %v84
  %v3442 = vpop.f32.mrf.mxu0
  %v3443 = vadd.f32 %v3228, %v3442
  %v3444 = vpop.f32.mrf.mxu0
  %v3445 = vadd.f32 %v3230, %v3444
  %3446 = vmatprep.mubr.f32.mxu0 %v103
  %3447 = vmatmul.mubr.f32.gmra.mxu0 %v102
  %v3448 = vpop.f32.mrf.mxu0
  %v3449 = vadd.f32 %v3234, %v3448
  %v3450 = vpop.f32.mrf.mxu0
  %v3451 = vadd.f32 %v3236, %v3450
  %3452 = vmatprep.mubr.f32.mxu0 %v121
  %3453 = vmatmul.mubr.f32.gmra.mxu0 %v120
  %v3454 = vpop.f32.mrf.mxu0
  %v3455 = vadd.f32 %v3240, %v3454
  %v3456 = vpop.f32.mrf.mxu0
  %v3457 = vadd.f32 %v3242, %v3456
  %3458 = vmatprep.mubr.f32.mxu0 %v139
  %3459 = vmatmul.mubr.f32.gmra.mxu0 %v138
  %v3460 = vpop.f32.mrf.mxu0
  %v3461 = vadd.f32 %v3246, %v3460
  %v3462 = vpop.f32.mrf.mxu0
  %v3463 = vadd.f32 %v3248, %v3462
  %3464 = vmatprep.mubr.f32.mxu0 %v157
  %3465 = vmatmul.mubr.f32.gmra.mxu0 %v156
  %v3466 = vpop.f32.mrf.mxu0
  %v3467 = vadd.f32 %v3252, %v3466
  %v3468 = vpop.f32.mrf.mxu0
  %v3469 = vadd.f32 %v3254, %v3468
  %3470 = vmatprep.mubr.f32.mxu0 %v175
  %3471 = vmatmul.mubr.f32.gmra.mxu0 %v174
  %v3472 = vpop.f32.mrf.mxu0
  %v3473 = vadd.f32 %v3258, %v3472
  %v3474 = vpop.f32.mrf.mxu0
  %v3475 = vadd.f32 %v3260, %v3474
  %3476 = vmatprep.mubr.f32.mxu0 %v193
  %3477 = vmatmul.mubr.f32.gmra.mxu0 %v192
  %v3478 = vpop.f32.mrf.mxu0
  %v3479 = vadd.f32 %v3264, %v3478
  %v3480 = vpop.f32.mrf.mxu0
  %v3481 = vadd.f32 %v3266, %v3480
  %3482 = vmatprep.mubr.f32.mxu0 %v211
  %3483 = vmatmul.mubr.f32.gmra.mxu0 %v210
  %v3484 = vpop.f32.mrf.mxu0
  %v3485 = vadd.f32 %v3270, %v3484
  %v3486 = vpop.f32.mrf.mxu0
  %v3487 = vadd.f32 %v3272, %v3486
  %3488 = vmatprep.mubr.f32.mxu0 %v229
  %3489 = vmatmul.mubr.f32.gmra.mxu0 %v228
  %v3490 = vpop.f32.mrf.mxu0
  %v3491 = vadd.f32 %v3276, %v3490
  %v3492 = vpop.f32.mrf.mxu0
  %v3493 = vadd.f32 %v3278, %v3492
  %3494 = vmatprep.mubr.f32.mxu0 %v247
  %3495 = vmatmul.mubr.f32.gmra.mxu0 %v246
  %v3496 = vpop.f32.mrf.mxu0
  %v3497 = vadd.f32 %v3282, %v3496
  %v3498 = vpop.f32.mrf.mxu0
  %v3499 = vadd.f32 %v3284, %v3498
  %3500 = vmatprep.mubr.f32.mxu0 %v265
  %3501 = vmatmul.mubr.f32.gmra.mxu0 %v264
  %v3502 = vpop.f32.mrf.mxu0
  %v3503 = vadd.f32 %v3288, %v3502
  %v3504 = vpop.f32.mrf.mxu0
  %v3505 = vadd.f32 %v3290, %v3504
  %3506 = vmatprep.mubr.f32.mxu0 %v283
  %3507 = vmatmul.mubr.f32.gmra.mxu0 %v282
  %v3508 = vpop.f32.mrf.mxu0
  %v3509 = vadd.f32 %v3294, %v3508
  %v3510 = vpop.f32.mrf.mxu0
  %v3511 = vadd.f32 %v3296, %v3510
  %3512 = vmatprep.mubr.f32.mxu0 %v301
  %3513 = vmatmul.mubr.f32.gmra.mxu0 %v300
  %v3514 = vpop.f32.mrf.mxu0
  %v3515 = vadd.f32 %v3300, %v3514
  %v3516 = vpop.f32.mrf.mxu0
  %v3517 = vadd.f32 %v3302, %v3516
  %3518 = vmatprep.mubr.f32.mxu0 %v319
  %3519 = vmatmul.mubr.f32.gmra.mxu0 %v318
  %v3520 = vpop.f32.mrf.mxu0
  %v3521 = vadd.f32 %v3306, %v3520
  %v3522 = vpop.f32.mrf.mxu0
  %v3523 = vadd.f32 %v3308, %v3522
  %3524 = vmatprep.mubr.f32.mxu0 %v337
  %3525 = vmatmul.mubr.f32.gmra.mxu0 %v336
  %v3526 = vpop.f32.mrf.mxu0
  %v3527 = vadd.f32 %v3312, %v3526
  %v3528 = vpop.f32.mrf.mxu0
  %v3529 = vadd.f32 %v3314, %v3528
  %3530 = vmatprep.mubr.f32.mxu0 %v355
  %3531 = vmatmul.mubr.f32.gmra.mxu0 %v354
  %v3532 = vpop.f32.mrf.mxu0
  %v3533 = vadd.f32 %v3318, %v3532
  %v3534 = vpop.f32.mrf.mxu0
  %v3535 = vadd.f32 %v3320, %v3534
  %3536 = vmatprep.mubr.f32.mxu0 %v373
  %3537 = vmatmul.mubr.f32.gmra.mxu0 %v372
  %v3538 = vpop.f32.mrf.mxu0
  %v3539 = vadd.f32 %v3324, %v3538
  %v3540 = vpop.f32.mrf.mxu0
  %v3541 = vadd.f32 %v3326, %v3540
  %3542 = vmatprep.mubr.f32.mxu0 %v391
  %3543 = vmatmul.mubr.f32.gmra.mxu0 %v390
  %v3544 = vpop.f32.mrf.mxu0
  %v3545 = vadd.f32 %v3330, %v3544
  %v3546 = vpop.f32.mrf.mxu0
  %v3547 = vadd.f32 %v3332, %v3546
  %3548 = vmatprep.mubr.f32.mxu0 %v409
  %3549 = vmatmul.mubr.f32.gmra.mxu0 %v408
  %v3550 = vpop.f32.mrf.mxu0
  %v3551 = vadd.f32 %v3336, %v3550
  %v3552 = vpop.f32.mrf.mxu0
  %v3553 = vadd.f32 %v3338, %v3552
  %3554 = vmatprep.mubr.f32.mxu0 %v427
  %3555 = vmatmul.mubr.f32.gmra.mxu0 %v426
  %v3556 = vpop.f32.mrf.mxu0
  %v3557 = vadd.f32 %v3342, %v3556
  %v3558 = vpop.f32.mrf.mxu0
  %v3559 = vadd.f32 %v3344, %v3558
  %3560 = vmatprep.mubr.f32.mxu0 %v445
  %3561 = vmatmul.mubr.f32.gmra.mxu0 %v444
  %v3562 = vpop.f32.mrf.mxu0
  %v3563 = vadd.f32 %v3348, %v3562
  %v3564 = vpop.f32.mrf.mxu0
  %v3565 = vadd.f32 %v3350, %v3564
  %3566 = vmatprep.mubr.f32.mxu0 %v463
  %3567 = vmatmul.mubr.f32.gmra.mxu0 %v462
  %v3568 = vpop.f32.mrf.mxu0
  %v3569 = vadd.f32 %v3354, %v3568
  %v3570 = vpop.f32.mrf.mxu0
  %v3571 = vadd.f32 %v3356, %v3570
  %3572 = vdwg.mxu0
  %3573 = vmatprep.subr.mxu0 %v527
  %3574 = vmatpush1.msra.mxu0 %v526
  %3575 = vmatprep.subr.mxu0 %v523
  %3576 = vmatpush1.msra.mxu0 %v522
  %3577 = vmatprep.subr.mxu0 %v519
  %3578 = vmatpush1.msra.mxu0 %v518
  %3579 = vmatprep.subr.mxu0 %v515
  %3580 = vmatpush1.msra.mxu0 %v514
  %3581 = vmatprep.subr.mxu0 %v511
  %3582 = vmatpush1.msra.mxu0 %v510
  %3583 = vmatprep.subr.mxu0 %v507
  %3584 = vmatpush1.msra.mxu0 %v506
  %3585 = vmatprep.subr.mxu0 %v503
  %3586 = vmatpush1.msra.mxu0 %v502
  %3587 = vmatprep.subr.mxu0 %v499
  %3588 = vmatpush1.msra.mxu0 %v498
  %3589 = vmatprep.subr.mxu0 %v495
  %3590 = vmatpush1.msra.mxu0 %v494
  %3591 = vmatprep.subr.mxu0 %v491
  %3592 = vmatpush1.msra.mxu0 %v490
  %3593 = vmatprep.subr.mxu0 %v487
  %3594 = vmatpush1.msra.mxu0 %v486
  %3595 = vmatprep.subr.mxu0 %v483
  %3596 = vmatpush1.msra.mxu0 %v482
  %3597 = vmatprep.subr.mxu0 %v479
  %3598 = vmatpush1.msra.mxu0 %v478
  %3599 = vmatprep.subr.mxu0 %v475
  %3600 = vmatpush1.msra.mxu0 %v474
  %3601 = vmatprep.subr.mxu0 %v471
  %3602 = vmatpush1.msra.mxu0 %v470
  %3603 = vmatprep.subr.mxu0 %v467
  %3604 = vmatpush1.msra.mxu0 %v466
  %3605 = vmatprep.subr.mxu0 %v591
  %3606 = vmatpush2.msra.mxu0 %v590
  %3607 = vmatprep.subr.mxu0 %v587
  %3608 = vmatpush2.msra.mxu0 %v586
  %3609 = vmatprep.subr.mxu0 %v583
  %3610 = vmatpush2.msra.mxu0 %v582
  %3611 = vmatprep.subr.mxu0 %v579
  %3612 = vmatpush2.msra.mxu0 %v578
  %3613 = vmatprep.subr.mxu0 %v575
  %3614 = vmatpush2.msra.mxu0 %v574
  %3615 = vmatprep.subr.mxu0 %v571
  %3616 = vmatpush2.msra.mxu0 %v570
  %3617 = vmatprep.subr.mxu0 %v567
  %3618 = vmatpush2.msra.mxu0 %v566
  %3619 = vmatprep.subr.mxu0 %v563
  %3620 = vmatpush2.msra.mxu0 %v562
  %3621 = vmatprep.subr.mxu0 %v559
  %3622 = vmatpush2.msra.mxu0 %v558
  %3623 = vmatprep.subr.mxu0 %v555
  %3624 = vmatpush2.msra.mxu0 %v554
  %3625 = vmatprep.subr.mxu0 %v551
  %3626 = vmatpush2.msra.mxu0 %v550
  %3627 = vmatprep.subr.mxu0 %v547
  %3628 = vmatpush2.msra.mxu0 %v546
  %3629 = vmatprep.subr.mxu0 %v543
  %3630 = vmatpush2.msra.mxu0 %v542
  %3631 = vmatprep.subr.mxu0 %v539
  %3632 = vmatpush2.msra.mxu0 %v538
  %3633 = vmatprep.subr.mxu0 %v535
  %3634 = vmatpush2.msra.mxu0 %v534
  %3635 = vmatprep.subr.mxu0 %v531
  %3636 = vmatpush2.msra.mxu0 %v530
  %3637 = vmatprep.mubr.f32.mxu0 %v15
  %3638 = vmatmul.mubr.f32.gmra.mxu0 %v14
  %v3639 = vpop.f32.mrf.mxu0
  %v3640 = vadd.f32 %v1629, %v3639
  %v3641 = vpop.f32.mrf.mxu0
  %v3642 = vadd.f32 %v1633, %v3641
  %3643 = vmatprep.mubr.f32.mxu0 %v33
  %3644 = vmatmul.mubr.f32.gmra.mxu0 %v32
  %v3645 = vpop.f32.mrf.mxu0
  %v3646 = vadd.f32 %v1629, %v3645
  %v3647 = vpop.f32.mrf.mxu0
  %v3648 = vadd.f32 %v1633, %v3647
  %3649 = vmatprep.mubr.f32.mxu0 %v51
  %3650 = vmatmul.mubr.f32.gmra.mxu0 %v50
  %v3651 = vpop.f32.mrf.mxu0
  %v3652 = vadd.f32 %v1629, %v3651
  %v3653 = vpop.f32.mrf.mxu0
  %v3654 = vadd.f32 %v1633, %v3653
  %3655 = vmatprep.mubr.f32.mxu0 %v69
  %3656 = vmatmul.mubr.f32.gmra.mxu0 %v68
  %v3657 = vpop.f32.mrf.mxu0
  %v3658 = vadd.f32 %v1629, %v3657
  %v3659 = vpop.f32.mrf.mxu0
  %v3660 = vadd.f32 %v1633, %v3659
  %3661 = vmatprep.mubr.f32.mxu0 %v87
  %3662 = vmatmul.mubr.f32.gmra.mxu0 %v86
  %v3663 = vpop.f32.mrf.mxu0
  %v3664 = vadd.f32 %v1629, %v3663
  %v3665 = vpop.f32.mrf.mxu0
  %v3666 = vadd.f32 %v1633, %v3665
  %3667 = vmatprep.mubr.f32.mxu0 %v105
  %3668 = vmatmul.mubr.f32.gmra.mxu0 %v104
  %v3669 = vpop.f32.mrf.mxu0
  %v3670 = vadd.f32 %v1629, %v3669
  %v3671 = vpop.f32.mrf.mxu0
  %v3672 = vadd.f32 %v1633, %v3671
  %3673 = vmatprep.mubr.f32.mxu0 %v123
  %3674 = vmatmul.mubr.f32.gmra.mxu0 %v122
  %v3675 = vpop.f32.mrf.mxu0
  %v3676 = vadd.f32 %v1629, %v3675
  %v3677 = vpop.f32.mrf.mxu0
  %v3678 = vadd.f32 %v1633, %v3677
  %3679 = vmatprep.mubr.f32.mxu0 %v141
  %3680 = vmatmul.mubr.f32.gmra.mxu0 %v140
  %v3681 = vpop.f32.mrf.mxu0
  %v3682 = vadd.f32 %v1629, %v3681
  %v3683 = vpop.f32.mrf.mxu0
  %v3684 = vadd.f32 %v1633, %v3683
  %3685 = vmatprep.mubr.f32.mxu0 %v159
  %3686 = vmatmul.mubr.f32.gmra.mxu0 %v158
  %v3687 = vpop.f32.mrf.mxu0
  %v3688 = vadd.f32 %v1629, %v3687
  %v3689 = vpop.f32.mrf.mxu0
  %v3690 = vadd.f32 %v1633, %v3689
  %3691 = vmatprep.mubr.f32.mxu0 %v177
  %3692 = vmatmul.mubr.f32.gmra.mxu0 %v176
  %v3693 = vpop.f32.mrf.mxu0
  %v3694 = vadd.f32 %v1629, %v3693
  %v3695 = vpop.f32.mrf.mxu0
  %v3696 = vadd.f32 %v1633, %v3695
  %3697 = vmatprep.mubr.f32.mxu0 %v195
  %3698 = vmatmul.mubr.f32.gmra.mxu0 %v194
  %v3699 = vpop.f32.mrf.mxu0
  %v3700 = vadd.f32 %v1629, %v3699
  %v3701 = vpop.f32.mrf.mxu0
  %v3702 = vadd.f32 %v1633, %v3701
  %3703 = vmatprep.mubr.f32.mxu0 %v213
  %3704 = vmatmul.mubr.f32.gmra.mxu0 %v212
  %v3705 = vpop.f32.mrf.mxu0
  %v3706 = vadd.f32 %v1629, %v3705
  %v3707 = vpop.f32.mrf.mxu0
  %v3708 = vadd.f32 %v1633, %v3707
  %3709 = vmatprep.mubr.f32.mxu0 %v231
  %3710 = vmatmul.mubr.f32.gmra.mxu0 %v230
  %v3711 = vpop.f32.mrf.mxu0
  %v3712 = vadd.f32 %v1629, %v3711
  %v3713 = vpop.f32.mrf.mxu0
  %v3714 = vadd.f32 %v1633, %v3713
  %3715 = vmatprep.mubr.f32.mxu0 %v249
  %3716 = vmatmul.mubr.f32.gmra.mxu0 %v248
  %v3717 = vpop.f32.mrf.mxu0
  %v3718 = vadd.f32 %v1629, %v3717
  %v3719 = vpop.f32.mrf.mxu0
  %v3720 = vadd.f32 %v1633, %v3719
  %3721 = vmatprep.mubr.f32.mxu0 %v267
  %3722 = vmatmul.mubr.f32.gmra.mxu0 %v266
  %v3723 = vpop.f32.mrf.mxu0
  %v3724 = vadd.f32 %v1629, %v3723
  %v3725 = vpop.f32.mrf.mxu0
  %v3726 = vadd.f32 %v1633, %v3725
  %3727 = vmatprep.mubr.f32.mxu0 %v285
  %3728 = vmatmul.mubr.f32.gmra.mxu0 %v284
  %v3729 = vpop.f32.mrf.mxu0
  %v3730 = vadd.f32 %v1629, %v3729
  %v3731 = vpop.f32.mrf.mxu0
  %v3732 = vadd.f32 %v1633, %v3731
  %3733 = vmatprep.mubr.f32.mxu0 %v303
  %3734 = vmatmul.mubr.f32.gmra.mxu0 %v302
  %v3735 = vpop.f32.mrf.mxu0
  %v3736 = vadd.f32 %v1629, %v3735
  %v3737 = vpop.f32.mrf.mxu0
  %v3738 = vadd.f32 %v1633, %v3737
  %3739 = vmatprep.mubr.f32.mxu0 %v321
  %3740 = vmatmul.mubr.f32.gmra.mxu0 %v320
  %v3741 = vpop.f32.mrf.mxu0
  %v3742 = vadd.f32 %v1629, %v3741
  %v3743 = vpop.f32.mrf.mxu0
  %v3744 = vadd.f32 %v1633, %v3743
  %3745 = vmatprep.mubr.f32.mxu0 %v339
  %3746 = vmatmul.mubr.f32.gmra.mxu0 %v338
  %v3747 = vpop.f32.mrf.mxu0
  %v3748 = vadd.f32 %v1629, %v3747
  %v3749 = vpop.f32.mrf.mxu0
  %v3750 = vadd.f32 %v1633, %v3749
  %3751 = vmatprep.mubr.f32.mxu0 %v357
  %3752 = vmatmul.mubr.f32.gmra.mxu0 %v356
  %v3753 = vpop.f32.mrf.mxu0
  %v3754 = vadd.f32 %v1629, %v3753
  %v3755 = vpop.f32.mrf.mxu0
  %v3756 = vadd.f32 %v1633, %v3755
  %3757 = vmatprep.mubr.f32.mxu0 %v375
  %3758 = vmatmul.mubr.f32.gmra.mxu0 %v374
  %v3759 = vpop.f32.mrf.mxu0
  %v3760 = vadd.f32 %v1629, %v3759
  %v3761 = vpop.f32.mrf.mxu0
  %v3762 = vadd.f32 %v1633, %v3761
  %3763 = vmatprep.mubr.f32.mxu0 %v393
  %3764 = vmatmul.mubr.f32.gmra.mxu0 %v392
  %v3765 = vpop.f32.mrf.mxu0
  %v3766 = vadd.f32 %v1629, %v3765
  %v3767 = vpop.f32.mrf.mxu0
  %v3768 = vadd.f32 %v1633, %v3767
  %3769 = vmatprep.mubr.f32.mxu0 %v411
  %3770 = vmatmul.mubr.f32.gmra.mxu0 %v410
  %v3771 = vpop.f32.mrf.mxu0
  %v3772 = vadd.f32 %v1629, %v3771
  %v3773 = vpop.f32.mrf.mxu0
  %v3774 = vadd.f32 %v1633, %v3773
  %3775 = vmatprep.mubr.f32.mxu0 %v429
  %3776 = vmatmul.mubr.f32.gmra.mxu0 %v428
  %v3777 = vpop.f32.mrf.mxu0
  %v3778 = vadd.f32 %v1629, %v3777
  %v3779 = vpop.f32.mrf.mxu0
  %v3780 = vadd.f32 %v1633, %v3779
  %3781 = vmatprep.mubr.f32.mxu0 %v447
  %3782 = vmatmul.mubr.f32.gmra.mxu0 %v446
  %v3783 = vpop.f32.mrf.mxu0
  %v3784 = vadd.f32 %v1629, %v3783
  %v3785 = vpop.f32.mrf.mxu0
  %v3786 = vadd.f32 %v1633, %v3785
  %3787 = vdwg.mxu0
  %3788 = vmatprep.subr.mxu0 %v655
  %3789 = vmatpush1.msra.mxu0 %v654
  %3790 = vmatprep.subr.mxu0 %v651
  %3791 = vmatpush1.msra.mxu0 %v650
  %3792 = vmatprep.subr.mxu0 %v647
  %3793 = vmatpush1.msra.mxu0 %v646
  %3794 = vmatprep.subr.mxu0 %v643
  %3795 = vmatpush1.msra.mxu0 %v642
  %3796 = vmatprep.subr.mxu0 %v639
  %3797 = vmatpush1.msra.mxu0 %v638
  %3798 = vmatprep.subr.mxu0 %v635
  %3799 = vmatpush1.msra.mxu0 %v634
  %3800 = vmatprep.subr.mxu0 %v631
  %3801 = vmatpush1.msra.mxu0 %v630
  %3802 = vmatprep.subr.mxu0 %v627
  %3803 = vmatpush1.msra.mxu0 %v626
  %3804 = vmatprep.subr.mxu0 %v623
  %3805 = vmatpush1.msra.mxu0 %v622
  %3806 = vmatprep.subr.mxu0 %v619
  %3807 = vmatpush1.msra.mxu0 %v618
  %3808 = vmatprep.subr.mxu0 %v615
  %3809 = vmatpush1.msra.mxu0 %v614
  %3810 = vmatprep.subr.mxu0 %v611
  %3811 = vmatpush1.msra.mxu0 %v610
  %3812 = vmatprep.subr.mxu0 %v607
  %3813 = vmatpush1.msra.mxu0 %v606
  %3814 = vmatprep.subr.mxu0 %v603
  %3815 = vmatpush1.msra.mxu0 %v602
  %3816 = vmatprep.subr.mxu0 %v599
  %3817 = vmatpush1.msra.mxu0 %v598
  %3818 = vmatprep.subr.mxu0 %v595
  %3819 = vmatpush1.msra.mxu0 %v594
  %3820 = vmatprep.subr.mxu0 %v719
  %3821 = vmatpush2.msra.mxu0 %v718
  %3822 = vmatprep.subr.mxu0 %v715
  %3823 = vmatpush2.msra.mxu0 %v714
  %3824 = vmatprep.subr.mxu0 %v711
  %3825 = vmatpush2.msra.mxu0 %v710
  %3826 = vmatprep.subr.mxu0 %v707
  %3827 = vmatpush2.msra.mxu0 %v706
  %3828 = vmatprep.subr.mxu0 %v703
  %3829 = vmatpush2.msra.mxu0 %v702
  %3830 = vmatprep.subr.mxu0 %v699
  %3831 = vmatpush2.msra.mxu0 %v698
  %3832 = vmatprep.subr.mxu0 %v695
  %3833 = vmatpush2.msra.mxu0 %v694
  %3834 = vmatprep.subr.mxu0 %v691
  %3835 = vmatpush2.msra.mxu0 %v690
  %3836 = vmatprep.subr.mxu0 %v687
  %3837 = vmatpush2.msra.mxu0 %v686
  %3838 = vmatprep.subr.mxu0 %v683
  %3839 = vmatpush2.msra.mxu0 %v682
  %3840 = vmatprep.subr.mxu0 %v679
  %3841 = vmatpush2.msra.mxu0 %v678
  %3842 = vmatprep.subr.mxu0 %v675
  %3843 = vmatpush2.msra.mxu0 %v674
  %3844 = vmatprep.subr.mxu0 %v671
  %3845 = vmatpush2.msra.mxu0 %v670
  %3846 = vmatprep.subr.mxu0 %v667
  %3847 = vmatpush2.msra.mxu0 %v666
  %3848 = vmatprep.subr.mxu0 %v663
  %3849 = vmatpush2.msra.mxu0 %v662
  %3850 = vmatprep.subr.mxu0 %v659
  %3851 = vmatpush2.msra.mxu0 %v658
  %3852 = vmatprep.mubr.f32.mxu0 %v17
  %3853 = vmatmul.mubr.f32.gmra.mxu0 %v16
  %v3854 = vpop.f32.mrf.mxu0
  %v3855 = vadd.f32 %v3640, %v3854
  %v3856 = vpop.f32.mrf.mxu0
  %v3857 = vadd.f32 %v3642, %v3856
  %3858 = vmatprep.mubr.f32.mxu0 %v35
  %3859 = vmatmul.mubr.f32.gmra.mxu0 %v34
  %v3860 = vpop.f32.mrf.mxu0
  %v3861 = vadd.f32 %v3646, %v3860
  %v3862 = vpop.f32.mrf.mxu0
  %v3863 = vadd.f32 %v3648, %v3862
  %3864 = vmatprep.mubr.f32.mxu0 %v53
  %3865 = vmatmul.mubr.f32.gmra.mxu0 %v52
  %v3866 = vpop.f32.mrf.mxu0
  %v3867 = vadd.f32 %v3652, %v3866
  %v3868 = vpop.f32.mrf.mxu0
  %v3869 = vadd.f32 %v3654, %v3868
  %3870 = vmatprep.mubr.f32.mxu0 %v71
  %3871 = vmatmul.mubr.f32.gmra.mxu0 %v70
  %v3872 = vpop.f32.mrf.mxu0
  %v3873 = vadd.f32 %v3658, %v3872
  %v3874 = vpop.f32.mrf.mxu0
  %v3875 = vadd.f32 %v3660, %v3874
  %3876 = vmatprep.mubr.f32.mxu0 %v89
  %3877 = vmatmul.mubr.f32.gmra.mxu0 %v88
  %v3878 = vpop.f32.mrf.mxu0
  %v3879 = vadd.f32 %v3664, %v3878
  %v3880 = vpop.f32.mrf.mxu0
  %v3881 = vadd.f32 %v3666, %v3880
  %3882 = vmatprep.mubr.f32.mxu0 %v107
  %3883 = vmatmul.mubr.f32.gmra.mxu0 %v106
  %v3884 = vpop.f32.mrf.mxu0
  %v3885 = vadd.f32 %v3670, %v3884
  %v3886 = vpop.f32.mrf.mxu0
  %v3887 = vadd.f32 %v3672, %v3886
  %3888 = vmatprep.mubr.f32.mxu0 %v125
  %3889 = vmatmul.mubr.f32.gmra.mxu0 %v124
  %v3890 = vpop.f32.mrf.mxu0
  %v3891 = vadd.f32 %v3676, %v3890
  %v3892 = vpop.f32.mrf.mxu0
  %v3893 = vadd.f32 %v3678, %v3892
  %3894 = vmatprep.mubr.f32.mxu0 %v143
  %3895 = vmatmul.mubr.f32.gmra.mxu0 %v142
  %v3896 = vpop.f32.mrf.mxu0
  %v3897 = vadd.f32 %v3682, %v3896
  %v3898 = vpop.f32.mrf.mxu0
  %v3899 = vadd.f32 %v3684, %v3898
  %3900 = vmatprep.mubr.f32.mxu0 %v161
  %3901 = vmatmul.mubr.f32.gmra.mxu0 %v160
  %v3902 = vpop.f32.mrf.mxu0
  %v3903 = vadd.f32 %v3688, %v3902
  %v3904 = vpop.f32.mrf.mxu0
  %v3905 = vadd.f32 %v3690, %v3904
  %3906 = vmatprep.mubr.f32.mxu0 %v179
  %3907 = vmatmul.mubr.f32.gmra.mxu0 %v178
  %v3908 = vpop.f32.mrf.mxu0
  %v3909 = vadd.f32 %v3694, %v3908
  %v3910 = vpop.f32.mrf.mxu0
  %v3911 = vadd.f32 %v3696, %v3910
  %3912 = vmatprep.mubr.f32.mxu0 %v197
  %3913 = vmatmul.mubr.f32.gmra.mxu0 %v196
  %v3914 = vpop.f32.mrf.mxu0
  %v3915 = vadd.f32 %v3700, %v3914
  %v3916 = vpop.f32.mrf.mxu0
  %v3917 = vadd.f32 %v3702, %v3916
  %3918 = vmatprep.mubr.f32.mxu0 %v215
  %3919 = vmatmul.mubr.f32.gmra.mxu0 %v214
  %v3920 = vpop.f32.mrf.mxu0
  %v3921 = vadd.f32 %v3706, %v3920
  %v3922 = vpop.f32.mrf.mxu0
  %v3923 = vadd.f32 %v3708, %v3922
  %3924 = vmatprep.mubr.f32.mxu0 %v233
  %3925 = vmatmul.mubr.f32.gmra.mxu0 %v232
  %v3926 = vpop.f32.mrf.mxu0
  %v3927 = vadd.f32 %v3712, %v3926
  %v3928 = vpop.f32.mrf.mxu0
  %v3929 = vadd.f32 %v3714, %v3928
  %3930 = vmatprep.mubr.f32.mxu0 %v251
  %3931 = vmatmul.mubr.f32.gmra.mxu0 %v250
  %v3932 = vpop.f32.mrf.mxu0
  %v3933 = vadd.f32 %v3718, %v3932
  %v3934 = vpop.f32.mrf.mxu0
  %v3935 = vadd.f32 %v3720, %v3934
  %3936 = vmatprep.mubr.f32.mxu0 %v269
  %3937 = vmatmul.mubr.f32.gmra.mxu0 %v268
  %v3938 = vpop.f32.mrf.mxu0
  %v3939 = vadd.f32 %v3724, %v3938
  %v3940 = vpop.f32.mrf.mxu0
  %v3941 = vadd.f32 %v3726, %v3940
  %3942 = vmatprep.mubr.f32.mxu0 %v287
  %3943 = vmatmul.mubr.f32.gmra.mxu0 %v286
  %v3944 = vpop.f32.mrf.mxu0
  %v3945 = vadd.f32 %v3730, %v3944
  %v3946 = vpop.f32.mrf.mxu0
  %v3947 = vadd.f32 %v3732, %v3946
  %3948 = vmatprep.mubr.f32.mxu0 %v305
  %3949 = vmatmul.mubr.f32.gmra.mxu0 %v304
  %v3950 = vpop.f32.mrf.mxu0
  %v3951 = vadd.f32 %v3736, %v3950
  %v3952 = vpop.f32.mrf.mxu0
  %v3953 = vadd.f32 %v3738, %v3952
  %3954 = vmatprep.mubr.f32.mxu0 %v323
  %3955 = vmatmul.mubr.f32.gmra.mxu0 %v322
  %v3956 = vpop.f32.mrf.mxu0
  %v3957 = vadd.f32 %v3742, %v3956
  %v3958 = vpop.f32.mrf.mxu0
  %v3959 = vadd.f32 %v3744, %v3958
  %3960 = vmatprep.mubr.f32.mxu0 %v341
  %3961 = vmatmul.mubr.f32.gmra.mxu0 %v340
  %v3962 = vpop.f32.mrf.mxu0
  %v3963 = vadd.f32 %v3748, %v3962
  %v3964 = vpop.f32.mrf.mxu0
  %v3965 = vadd.f32 %v3750, %v3964
  %3966 = vmatprep.mubr.f32.mxu0 %v359
  %3967 = vmatmul.mubr.f32.gmra.mxu0 %v358
  %v3968 = vpop.f32.mrf.mxu0
  %v3969 = vadd.f32 %v3754, %v3968
  %v3970 = vpop.f32.mrf.mxu0
  %v3971 = vadd.f32 %v3756, %v3970
  %3972 = vmatprep.mubr.f32.mxu0 %v377
  %3973 = vmatmul.mubr.f32.gmra.mxu0 %v376
  %v3974 = vpop.f32.mrf.mxu0
  %v3975 = vadd.f32 %v3760, %v3974
  %v3976 = vpop.f32.mrf.mxu0
  %v3977 = vadd.f32 %v3762, %v3976
  %3978 = vmatprep.mubr.f32.mxu0 %v395
  %3979 = vmatmul.mubr.f32.gmra.mxu0 %v394
  %v3980 = vpop.f32.mrf.mxu0
  %v3981 = vadd.f32 %v3766, %v3980
  %v3982 = vpop.f32.mrf.mxu0
  %v3983 = vadd.f32 %v3768, %v3982
  %3984 = vmatprep.mubr.f32.mxu0 %v413
  %3985 = vmatmul.mubr.f32.gmra.mxu0 %v412
  %v3986 = vpop.f32.mrf.mxu0
  %v3987 = vadd.f32 %v3772, %v3986
  %v3988 = vpop.f32.mrf.mxu0
  %v3989 = vadd.f32 %v3774, %v3988
  %3990 = vmatprep.mubr.f32.mxu0 %v431
  %3991 = vmatmul.mubr.f32.gmra.mxu0 %v430
  %v3992 = vpop.f32.mrf.mxu0
  %v3993 = vadd.f32 %v3778, %v3992
  %v3994 = vpop.f32.mrf.mxu0
  %v3995 = vadd.f32 %v3780, %v3994
  %3996 = vmatprep.mubr.f32.mxu0 %v449
  %3997 = vmatmul.mubr.f32.gmra.mxu0 %v448
  %v3998 = vpop.f32.mrf.mxu0
  %v3999 = vadd.f32 %v3784, %v3998
  %v4000 = vpop.f32.mrf.mxu0
  %v4001 = vadd.f32 %v3786, %v4000
  %4002 = vdwg.mxu0
  %4003 = vmatprep.subr.mxu0 %v783
  %4004 = vmatpush1.msra.mxu0 %v782
  %4005 = vmatprep.subr.mxu0 %v779
  %4006 = vmatpush1.msra.mxu0 %v778
  %4007 = vmatprep.subr.mxu0 %v775
  %4008 = vmatpush1.msra.mxu0 %v774
  %4009 = vmatprep.subr.mxu0 %v771
  %4010 = vmatpush1.msra.mxu0 %v770
  %4011 = vmatprep.subr.mxu0 %v767
  %4012 = vmatpush1.msra.mxu0 %v766
  %4013 = vmatprep.subr.mxu0 %v763
  %4014 = vmatpush1.msra.mxu0 %v762
  %4015 = vmatprep.subr.mxu0 %v759
  %4016 = vmatpush1.msra.mxu0 %v758
  %4017 = vmatprep.subr.mxu0 %v755
  %4018 = vmatpush1.msra.mxu0 %v754
  %4019 = vmatprep.subr.mxu0 %v751
  %4020 = vmatpush1.msra.mxu0 %v750
  %4021 = vmatprep.subr.mxu0 %v747
  %4022 = vmatpush1.msra.mxu0 %v746
  %4023 = vmatprep.subr.mxu0 %v743
  %4024 = vmatpush1.msra.mxu0 %v742
  %4025 = vmatprep.subr.mxu0 %v739
  %4026 = vmatpush1.msra.mxu0 %v738
  %4027 = vmatprep.subr.mxu0 %v735
  %4028 = vmatpush1.msra.mxu0 %v734
  %4029 = vmatprep.subr.mxu0 %v731
  %4030 = vmatpush1.msra.mxu0 %v730
  %4031 = vmatprep.subr.mxu0 %v727
  %4032 = vmatpush1.msra.mxu0 %v726
  %4033 = vmatprep.subr.mxu0 %v723
  %4034 = vmatpush1.msra.mxu0 %v722
  %4035 = vmatprep.subr.mxu0 %v847
  %4036 = vmatpush2.msra.mxu0 %v846
  %4037 = vmatprep.subr.mxu0 %v843
  %4038 = vmatpush2.msra.mxu0 %v842
  %4039 = vmatprep.subr.mxu0 %v839
  %4040 = vmatpush2.msra.mxu0 %v838
  %4041 = vmatprep.subr.mxu0 %v835
  %4042 = vmatpush2.msra.mxu0 %v834
  %4043 = vmatprep.subr.mxu0 %v831
  %4044 = vmatpush2.msra.mxu0 %v830
  %4045 = vmatprep.subr.mxu0 %v827
  %4046 = vmatpush2.msra.mxu0 %v826
  %4047 = vmatprep.subr.mxu0 %v823
  %4048 = vmatpush2.msra.mxu0 %v822
  %4049 = vmatprep.subr.mxu0 %v819
  %4050 = vmatpush2.msra.mxu0 %v818
  %4051 = vmatprep.subr.mxu0 %v815
  %4052 = vmatpush2.msra.mxu0 %v814
  %4053 = vmatprep.subr.mxu0 %v811
  %4054 = vmatpush2.msra.mxu0 %v810
  %4055 = vmatprep.subr.mxu0 %v807
  %4056 = vmatpush2.msra.mxu0 %v806
  %4057 = vmatprep.subr.mxu0 %v803
  %4058 = vmatpush2.msra.mxu0 %v802
  %4059 = vmatprep.subr.mxu0 %v799
  %4060 = vmatpush2.msra.mxu0 %v798
  %4061 = vmatprep.subr.mxu0 %v795
  %4062 = vmatpush2.msra.mxu0 %v794
  %4063 = vmatprep.subr.mxu0 %v791
  %4064 = vmatpush2.msra.mxu0 %v790
  %4065 = vmatprep.subr.mxu0 %v787
  %4066 = vmatpush2.msra.mxu0 %v786
  %4067 = vmatprep.mubr.f32.mxu0 %v19
  %4068 = vmatmul.mubr.f32.gmra.mxu0 %v18
  %v4069 = vpop.f32.mrf.mxu0
  %v4070 = vadd.f32 %v3855, %v4069
  %v4071 = vpop.f32.mrf.mxu0
  %v4072 = vadd.f32 %v3857, %v4071
  %4073 = vmatprep.mubr.f32.mxu0 %v37
  %4074 = vmatmul.mubr.f32.gmra.mxu0 %v36
  %v4075 = vpop.f32.mrf.mxu0
  %v4076 = vadd.f32 %v3861, %v4075
  %v4077 = vpop.f32.mrf.mxu0
  %v4078 = vadd.f32 %v3863, %v4077
  %4079 = vmatprep.mubr.f32.mxu0 %v55
  %4080 = vmatmul.mubr.f32.gmra.mxu0 %v54
  %v4081 = vpop.f32.mrf.mxu0
  %v4082 = vadd.f32 %v3867, %v4081
  %v4083 = vpop.f32.mrf.mxu0
  %v4084 = vadd.f32 %v3869, %v4083
  %4085 = vmatprep.mubr.f32.mxu0 %v73
  %4086 = vmatmul.mubr.f32.gmra.mxu0 %v72
  %v4087 = vpop.f32.mrf.mxu0
  %v4088 = vadd.f32 %v3873, %v4087
  %v4089 = vpop.f32.mrf.mxu0
  %v4090 = vadd.f32 %v3875, %v4089
  %4091 = vmatprep.mubr.f32.mxu0 %v91
  %4092 = vmatmul.mubr.f32.gmra.mxu0 %v90
  %v4093 = vpop.f32.mrf.mxu0
  %v4094 = vadd.f32 %v3879, %v4093
  %v4095 = vpop.f32.mrf.mxu0
  %v4096 = vadd.f32 %v3881, %v4095
  %4097 = vmatprep.mubr.f32.mxu0 %v109
  %4098 = vmatmul.mubr.f32.gmra.mxu0 %v108
  %v4099 = vpop.f32.mrf.mxu0
  %v4100 = vadd.f32 %v3885, %v4099
  %v4101 = vpop.f32.mrf.mxu0
  %v4102 = vadd.f32 %v3887, %v4101
  %4103 = vmatprep.mubr.f32.mxu0 %v127
  %4104 = vmatmul.mubr.f32.gmra.mxu0 %v126
  %v4105 = vpop.f32.mrf.mxu0
  %v4106 = vadd.f32 %v3891, %v4105
  %v4107 = vpop.f32.mrf.mxu0
  %v4108 = vadd.f32 %v3893, %v4107
  %4109 = vmatprep.mubr.f32.mxu0 %v145
  %4110 = vmatmul.mubr.f32.gmra.mxu0 %v144
  %v4111 = vpop.f32.mrf.mxu0
  %v4112 = vadd.f32 %v3897, %v4111
  %v4113 = vpop.f32.mrf.mxu0
  %v4114 = vadd.f32 %v3899, %v4113
  %4115 = vmatprep.mubr.f32.mxu0 %v163
  %4116 = vmatmul.mubr.f32.gmra.mxu0 %v162
  %v4117 = vpop.f32.mrf.mxu0
  %v4118 = vadd.f32 %v3903, %v4117
  %v4119 = vpop.f32.mrf.mxu0
  %v4120 = vadd.f32 %v3905, %v4119
  %4121 = vmatprep.mubr.f32.mxu0 %v181
  %4122 = vmatmul.mubr.f32.gmra.mxu0 %v180
  %v4123 = vpop.f32.mrf.mxu0
  %v4124 = vadd.f32 %v3909, %v4123
  %v4125 = vpop.f32.mrf.mxu0
  %v4126 = vadd.f32 %v3911, %v4125
  %4127 = vmatprep.mubr.f32.mxu0 %v199
  %4128 = vmatmul.mubr.f32.gmra.mxu0 %v198
  %v4129 = vpop.f32.mrf.mxu0
  %v4130 = vadd.f32 %v3915, %v4129
  %v4131 = vpop.f32.mrf.mxu0
  %v4132 = vadd.f32 %v3917, %v4131
  %4133 = vmatprep.mubr.f32.mxu0 %v217
  %4134 = vmatmul.mubr.f32.gmra.mxu0 %v216
  %v4135 = vpop.f32.mrf.mxu0
  %v4136 = vadd.f32 %v3921, %v4135
  %v4137 = vpop.f32.mrf.mxu0
  %v4138 = vadd.f32 %v3923, %v4137
  %4139 = vmatprep.mubr.f32.mxu0 %v235
  %4140 = vmatmul.mubr.f32.gmra.mxu0 %v234
  %v4141 = vpop.f32.mrf.mxu0
  %v4142 = vadd.f32 %v3927, %v4141
  %v4143 = vpop.f32.mrf.mxu0
  %v4144 = vadd.f32 %v3929, %v4143
  %4145 = vmatprep.mubr.f32.mxu0 %v253
  %4146 = vmatmul.mubr.f32.gmra.mxu0 %v252
  %v4147 = vpop.f32.mrf.mxu0
  %v4148 = vadd.f32 %v3933, %v4147
  %v4149 = vpop.f32.mrf.mxu0
  %v4150 = vadd.f32 %v3935, %v4149
  %4151 = vmatprep.mubr.f32.mxu0 %v271
  %4152 = vmatmul.mubr.f32.gmra.mxu0 %v270
  %v4153 = vpop.f32.mrf.mxu0
  %v4154 = vadd.f32 %v3939, %v4153
  %v4155 = vpop.f32.mrf.mxu0
  %v4156 = vadd.f32 %v3941, %v4155
  %4157 = vmatprep.mubr.f32.mxu0 %v289
  %4158 = vmatmul.mubr.f32.gmra.mxu0 %v288
  %v4159 = vpop.f32.mrf.mxu0
  %v4160 = vadd.f32 %v3945, %v4159
  %v4161 = vpop.f32.mrf.mxu0
  %v4162 = vadd.f32 %v3947, %v4161
  %4163 = vmatprep.mubr.f32.mxu0 %v307
  %4164 = vmatmul.mubr.f32.gmra.mxu0 %v306
  %v4165 = vpop.f32.mrf.mxu0
  %v4166 = vadd.f32 %v3951, %v4165
  %v4167 = vpop.f32.mrf.mxu0
  %v4168 = vadd.f32 %v3953, %v4167
  %4169 = vmatprep.mubr.f32.mxu0 %v325
  %4170 = vmatmul.mubr.f32.gmra.mxu0 %v324
  %v4171 = vpop.f32.mrf.mxu0
  %v4172 = vadd.f32 %v3957, %v4171
  %v4173 = vpop.f32.mrf.mxu0
  %v4174 = vadd.f32 %v3959, %v4173
  %4175 = vmatprep.mubr.f32.mxu0 %v343
  %4176 = vmatmul.mubr.f32.gmra.mxu0 %v342
  %v4177 = vpop.f32.mrf.mxu0
  %v4178 = vadd.f32 %v3963, %v4177
  %v4179 = vpop.f32.mrf.mxu0
  %v4180 = vadd.f32 %v3965, %v4179
  %4181 = vmatprep.mubr.f32.mxu0 %v361
  %4182 = vmatmul.mubr.f32.gmra.mxu0 %v360
  %v4183 = vpop.f32.mrf.mxu0
  %v4184 = vadd.f32 %v3969, %v4183
  %v4185 = vpop.f32.mrf.mxu0
  %v4186 = vadd.f32 %v3971, %v4185
  %4187 = vmatprep.mubr.f32.mxu0 %v379
  %4188 = vmatmul.mubr.f32.gmra.mxu0 %v378
  %v4189 = vpop.f32.mrf.mxu0
  %v4190 = vadd.f32 %v3975, %v4189
  %v4191 = vpop.f32.mrf.mxu0
  %v4192 = vadd.f32 %v3977, %v4191
  %4193 = vmatprep.mubr.f32.mxu0 %v397
  %4194 = vmatmul.mubr.f32.gmra.mxu0 %v396
  %v4195 = vpop.f32.mrf.mxu0
  %v4196 = vadd.f32 %v3981, %v4195
  %v4197 = vpop.f32.mrf.mxu0
  %v4198 = vadd.f32 %v3983, %v4197
  %4199 = vmatprep.mubr.f32.mxu0 %v415
  %4200 = vmatmul.mubr.f32.gmra.mxu0 %v414
  %v4201 = vpop.f32.mrf.mxu0
  %v4202 = vadd.f32 %v3987, %v4201
  %v4203 = vpop.f32.mrf.mxu0
  %v4204 = vadd.f32 %v3989, %v4203
  %4205 = vmatprep.mubr.f32.mxu0 %v433
  %4206 = vmatmul.mubr.f32.gmra.mxu0 %v432
  %v4207 = vpop.f32.mrf.mxu0
  %v4208 = vadd.f32 %v3993, %v4207
  %v4209 = vpop.f32.mrf.mxu0
  %v4210 = vadd.f32 %v3995, %v4209
  %4211 = vmatprep.mubr.f32.mxu0 %v451
  %4212 = vmatmul.mubr.f32.gmra.mxu0 %v450
  %v4213 = vpop.f32.mrf.mxu0
  %v4214 = vadd.f32 %v3999, %v4213
  %v4215 = vpop.f32.mrf.mxu0
  %v4216 = vadd.f32 %v4001, %v4215
  %4217 = vdwg.mxu0
  %4218 = vmatprep.subr.mxu0 %v911
  %4219 = vmatpush1.msra.mxu0 %v910
  %4220 = vmatprep.subr.mxu0 %v907
  %4221 = vmatpush1.msra.mxu0 %v906
  %4222 = vmatprep.subr.mxu0 %v903
  %4223 = vmatpush1.msra.mxu0 %v902
  %4224 = vmatprep.subr.mxu0 %v899
  %4225 = vmatpush1.msra.mxu0 %v898
  %4226 = vmatprep.subr.mxu0 %v895
  %4227 = vmatpush1.msra.mxu0 %v894
  %4228 = vmatprep.subr.mxu0 %v891
  %4229 = vmatpush1.msra.mxu0 %v890
  %4230 = vmatprep.subr.mxu0 %v887
  %4231 = vmatpush1.msra.mxu0 %v886
  %4232 = vmatprep.subr.mxu0 %v883
  %4233 = vmatpush1.msra.mxu0 %v882
  %4234 = vmatprep.subr.mxu0 %v879
  %4235 = vmatpush1.msra.mxu0 %v878
  %4236 = vmatprep.subr.mxu0 %v875
  %4237 = vmatpush1.msra.mxu0 %v874
  %4238 = vmatprep.subr.mxu0 %v871
  %4239 = vmatpush1.msra.mxu0 %v870
  %4240 = vmatprep.subr.mxu0 %v867
  %4241 = vmatpush1.msra.mxu0 %v866
  %4242 = vmatprep.subr.mxu0 %v863
  %4243 = vmatpush1.msra.mxu0 %v862
  %4244 = vmatprep.subr.mxu0 %v859
  %4245 = vmatpush1.msra.mxu0 %v858
  %4246 = vmatprep.subr.mxu0 %v855
  %4247 = vmatpush1.msra.mxu0 %v854
  %4248 = vmatprep.subr.mxu0 %v851
  %4249 = vmatpush1.msra.mxu0 %v850
  %4250 = vmatprep.subr.mxu0 %v975
  %4251 = vmatpush2.msra.mxu0 %v974
  %4252 = vmatprep.subr.mxu0 %v971
  %4253 = vmatpush2.msra.mxu0 %v970
  %4254 = vmatprep.subr.mxu0 %v967
  %4255 = vmatpush2.msra.mxu0 %v966
  %4256 = vmatprep.subr.mxu0 %v963
  %4257 = vmatpush2.msra.mxu0 %v962
  %4258 = vmatprep.subr.mxu0 %v959
  %4259 = vmatpush2.msra.mxu0 %v958
  %4260 = vmatprep.subr.mxu0 %v955
  %4261 = vmatpush2.msra.mxu0 %v954
  %4262 = vmatprep.subr.mxu0 %v951
  %4263 = vmatpush2.msra.mxu0 %v950
  %4264 = vmatprep.subr.mxu0 %v947
  %4265 = vmatpush2.msra.mxu0 %v946
  %4266 = vmatprep.subr.mxu0 %v943
  %4267 = vmatpush2.msra.mxu0 %v942
  %4268 = vmatprep.subr.mxu0 %v939
  %4269 = vmatpush2.msra.mxu0 %v938
  %4270 = vmatprep.subr.mxu0 %v935
  %4271 = vmatpush2.msra.mxu0 %v934
  %4272 = vmatprep.subr.mxu0 %v931
  %4273 = vmatpush2.msra.mxu0 %v930
  %4274 = vmatprep.subr.mxu0 %v927
  %4275 = vmatpush2.msra.mxu0 %v926
  %4276 = vmatprep.subr.mxu0 %v923
  %4277 = vmatpush2.msra.mxu0 %v922
  %4278 = vmatprep.subr.mxu0 %v919
  %4279 = vmatpush2.msra.mxu0 %v918
  %4280 = vmatprep.subr.mxu0 %v915
  %4281 = vmatpush2.msra.mxu0 %v914
  %4282 = vmatprep.mubr.f32.mxu0 %v21
  %4283 = vmatmul.mubr.f32.gmra.mxu0 %v20
  %v4284 = vpop.f32.mrf.mxu0
  %v4285 = vadd.f32 %v4070, %v4284
  %v4286 = vpop.f32.mrf.mxu0
  %v4287 = vadd.f32 %v4072, %v4286
  %4288 = vmatprep.mubr.f32.mxu0 %v39
  %4289 = vmatmul.mubr.f32.gmra.mxu0 %v38
  %v4290 = vpop.f32.mrf.mxu0
  %v4291 = vadd.f32 %v4076, %v4290
  %v4292 = vpop.f32.mrf.mxu0
  %v4293 = vadd.f32 %v4078, %v4292
  %4294 = vmatprep.mubr.f32.mxu0 %v57
  %4295 = vmatmul.mubr.f32.gmra.mxu0 %v56
  %v4296 = vpop.f32.mrf.mxu0
  %v4297 = vadd.f32 %v4082, %v4296
  %v4298 = vpop.f32.mrf.mxu0
  %v4299 = vadd.f32 %v4084, %v4298
  %4300 = vmatprep.mubr.f32.mxu0 %v75
  %4301 = vmatmul.mubr.f32.gmra.mxu0 %v74
  %v4302 = vpop.f32.mrf.mxu0
  %v4303 = vadd.f32 %v4088, %v4302
  %v4304 = vpop.f32.mrf.mxu0
  %v4305 = vadd.f32 %v4090, %v4304
  %4306 = vmatprep.mubr.f32.mxu0 %v93
  %4307 = vmatmul.mubr.f32.gmra.mxu0 %v92
  %v4308 = vpop.f32.mrf.mxu0
  %v4309 = vadd.f32 %v4094, %v4308
  %v4310 = vpop.f32.mrf.mxu0
  %v4311 = vadd.f32 %v4096, %v4310
  %4312 = vmatprep.mubr.f32.mxu0 %v111
  %4313 = vmatmul.mubr.f32.gmra.mxu0 %v110
  %v4314 = vpop.f32.mrf.mxu0
  %v4315 = vadd.f32 %v4100, %v4314
  %v4316 = vpop.f32.mrf.mxu0
  %v4317 = vadd.f32 %v4102, %v4316
  %4318 = vmatprep.mubr.f32.mxu0 %v129
  %4319 = vmatmul.mubr.f32.gmra.mxu0 %v128
  %v4320 = vpop.f32.mrf.mxu0
  %v4321 = vadd.f32 %v4106, %v4320
  %v4322 = vpop.f32.mrf.mxu0
  %v4323 = vadd.f32 %v4108, %v4322
  %4324 = vmatprep.mubr.f32.mxu0 %v147
  %4325 = vmatmul.mubr.f32.gmra.mxu0 %v146
  %v4326 = vpop.f32.mrf.mxu0
  %v4327 = vadd.f32 %v4112, %v4326
  %v4328 = vpop.f32.mrf.mxu0
  %v4329 = vadd.f32 %v4114, %v4328
  %4330 = vmatprep.mubr.f32.mxu0 %v165
  %4331 = vmatmul.mubr.f32.gmra.mxu0 %v164
  %v4332 = vpop.f32.mrf.mxu0
  %v4333 = vadd.f32 %v4118, %v4332
  %v4334 = vpop.f32.mrf.mxu0
  %v4335 = vadd.f32 %v4120, %v4334
  %4336 = vmatprep.mubr.f32.mxu0 %v183
  %4337 = vmatmul.mubr.f32.gmra.mxu0 %v182
  %v4338 = vpop.f32.mrf.mxu0
  %v4339 = vadd.f32 %v4124, %v4338
  %v4340 = vpop.f32.mrf.mxu0
  %v4341 = vadd.f32 %v4126, %v4340
  %4342 = vmatprep.mubr.f32.mxu0 %v201
  %4343 = vmatmul.mubr.f32.gmra.mxu0 %v200
  %v4344 = vpop.f32.mrf.mxu0
  %v4345 = vadd.f32 %v4130, %v4344
  %v4346 = vpop.f32.mrf.mxu0
  %v4347 = vadd.f32 %v4132, %v4346
  %4348 = vmatprep.mubr.f32.mxu0 %v219
  %4349 = vmatmul.mubr.f32.gmra.mxu0 %v218
  %v4350 = vpop.f32.mrf.mxu0
  %v4351 = vadd.f32 %v4136, %v4350
  %v4352 = vpop.f32.mrf.mxu0
  %v4353 = vadd.f32 %v4138, %v4352
  %4354 = vmatprep.mubr.f32.mxu0 %v237
  %4355 = vmatmul.mubr.f32.gmra.mxu0 %v236
  %v4356 = vpop.f32.mrf.mxu0
  %v4357 = vadd.f32 %v4142, %v4356
  %v4358 = vpop.f32.mrf.mxu0
  %v4359 = vadd.f32 %v4144, %v4358
  %4360 = vmatprep.mubr.f32.mxu0 %v255
  %4361 = vmatmul.mubr.f32.gmra.mxu0 %v254
  %v4362 = vpop.f32.mrf.mxu0
  %v4363 = vadd.f32 %v4148, %v4362
  %v4364 = vpop.f32.mrf.mxu0
  %v4365 = vadd.f32 %v4150, %v4364
  %4366 = vmatprep.mubr.f32.mxu0 %v273
  %4367 = vmatmul.mubr.f32.gmra.mxu0 %v272
  %v4368 = vpop.f32.mrf.mxu0
  %v4369 = vadd.f32 %v4154, %v4368
  %v4370 = vpop.f32.mrf.mxu0
  %v4371 = vadd.f32 %v4156, %v4370
  %4372 = vmatprep.mubr.f32.mxu0 %v291
  %4373 = vmatmul.mubr.f32.gmra.mxu0 %v290
  %v4374 = vpop.f32.mrf.mxu0
  %v4375 = vadd.f32 %v4160, %v4374
  %v4376 = vpop.f32.mrf.mxu0
  %v4377 = vadd.f32 %v4162, %v4376
  %4378 = vmatprep.mubr.f32.mxu0 %v309
  %4379 = vmatmul.mubr.f32.gmra.mxu0 %v308
  %v4380 = vpop.f32.mrf.mxu0
  %v4381 = vadd.f32 %v4166, %v4380
  %v4382 = vpop.f32.mrf.mxu0
  %v4383 = vadd.f32 %v4168, %v4382
  %4384 = vmatprep.mubr.f32.mxu0 %v327
  %4385 = vmatmul.mubr.f32.gmra.mxu0 %v326
  %v4386 = vpop.f32.mrf.mxu0
  %v4387 = vadd.f32 %v4172, %v4386
  %v4388 = vpop.f32.mrf.mxu0
  %v4389 = vadd.f32 %v4174, %v4388
  %4390 = vmatprep.mubr.f32.mxu0 %v345
  %4391 = vmatmul.mubr.f32.gmra.mxu0 %v344
  %v4392 = vpop.f32.mrf.mxu0
  %v4393 = vadd.f32 %v4178, %v4392
  %v4394 = vpop.f32.mrf.mxu0
  %v4395 = vadd.f32 %v4180, %v4394
  %4396 = vmatprep.mubr.f32.mxu0 %v363
  %4397 = vmatmul.mubr.f32.gmra.mxu0 %v362
  %v4398 = vpop.f32.mrf.mxu0
  %v4399 = vadd.f32 %v4184, %v4398
  %v4400 = vpop.f32.mrf.mxu0
  %v4401 = vadd.f32 %v4186, %v4400
  %4402 = vmatprep.mubr.f32.mxu0 %v381
  %4403 = vmatmul.mubr.f32.gmra.mxu0 %v380
  %v4404 = vpop.f32.mrf.mxu0
  %v4405 = vadd.f32 %v4190, %v4404
  %v4406 = vpop.f32.mrf.mxu0
  %v4407 = vadd.f32 %v4192, %v4406
  %4408 = vmatprep.mubr.f32.mxu0 %v399
  %4409 = vmatmul.mubr.f32.gmra.mxu0 %v398
  %v4410 = vpop.f32.mrf.mxu0
  %v4411 = vadd.f32 %v4196, %v4410
  %v4412 = vpop.f32.mrf.mxu0
  %v4413 = vadd.f32 %v4198, %v4412
  %4414 = vmatprep.mubr.f32.mxu0 %v417
  %4415 = vmatmul.mubr.f32.gmra.mxu0 %v416
  %v4416 = vpop.f32.mrf.mxu0
  %v4417 = vadd.f32 %v4202, %v4416
  %v4418 = vpop.f32.mrf.mxu0
  %v4419 = vadd.f32 %v4204, %v4418
  %4420 = vmatprep.mubr.f32.mxu0 %v435
  %4421 = vmatmul.mubr.f32.gmra.mxu0 %v434
  %v4422 = vpop.f32.mrf.mxu0
  %v4423 = vadd.f32 %v4208, %v4422
  %v4424 = vpop.f32.mrf.mxu0
  %v4425 = vadd.f32 %v4210, %v4424
  %4426 = vmatprep.mubr.f32.mxu0 %v453
  %4427 = vmatmul.mubr.f32.gmra.mxu0 %v452
  %v4428 = vpop.f32.mrf.mxu0
  %v4429 = vadd.f32 %v4214, %v4428
  %v4430 = vpop.f32.mrf.mxu0
  %v4431 = vadd.f32 %v4216, %v4430
  %4432 = vdwg.mxu0
  %4433 = vmatprep.subr.mxu0 %v1039
  %4434 = vmatpush1.msra.mxu0 %v1038
  %4435 = vmatprep.subr.mxu0 %v1035
  %4436 = vmatpush1.msra.mxu0 %v1034
  %4437 = vmatprep.subr.mxu0 %v1031
  %4438 = vmatpush1.msra.mxu0 %v1030
  %4439 = vmatprep.subr.mxu0 %v1027
  %4440 = vmatpush1.msra.mxu0 %v1026
  %4441 = vmatprep.subr.mxu0 %v1023
  %4442 = vmatpush1.msra.mxu0 %v1022
  %4443 = vmatprep.subr.mxu0 %v1019
  %4444 = vmatpush1.msra.mxu0 %v1018
  %4445 = vmatprep.subr.mxu0 %v1015
  %4446 = vmatpush1.msra.mxu0 %v1014
  %4447 = vmatprep.subr.mxu0 %v1011
  %4448 = vmatpush1.msra.mxu0 %v1010
  %4449 = vmatprep.subr.mxu0 %v1007
  %4450 = vmatpush1.msra.mxu0 %v1006
  %4451 = vmatprep.subr.mxu0 %v1003
  %4452 = vmatpush1.msra.mxu0 %v1002
  %4453 = vmatprep.subr.mxu0 %v999
  %4454 = vmatpush1.msra.mxu0 %v998
  %4455 = vmatprep.subr.mxu0 %v995
  %4456 = vmatpush1.msra.mxu0 %v994
  %4457 = vmatprep.subr.mxu0 %v991
  %4458 = vmatpush1.msra.mxu0 %v990
  %4459 = vmatprep.subr.mxu0 %v987
  %4460 = vmatpush1.msra.mxu0 %v986
  %4461 = vmatprep.subr.mxu0 %v983
  %4462 = vmatpush1.msra.mxu0 %v982
  %4463 = vmatprep.subr.mxu0 %v979
  %4464 = vmatpush1.msra.mxu0 %v978
  %4465 = vmatprep.subr.mxu0 %v1103
  %4466 = vmatpush2.msra.mxu0 %v1102
  %4467 = vmatprep.subr.mxu0 %v1099
  %4468 = vmatpush2.msra.mxu0 %v1098
  %4469 = vmatprep.subr.mxu0 %v1095
  %4470 = vmatpush2.msra.mxu0 %v1094
  %4471 = vmatprep.subr.mxu0 %v1091
  %4472 = vmatpush2.msra.mxu0 %v1090
  %4473 = vmatprep.subr.mxu0 %v1087
  %4474 = vmatpush2.msra.mxu0 %v1086
  %4475 = vmatprep.subr.mxu0 %v1083
  %4476 = vmatpush2.msra.mxu0 %v1082
  %4477 = vmatprep.subr.mxu0 %v1079
  %4478 = vmatpush2.msra.mxu0 %v1078
  %4479 = vmatprep.subr.mxu0 %v1075
  %4480 = vmatpush2.msra.mxu0 %v1074
  %4481 = vmatprep.subr.mxu0 %v1071
  %4482 = vmatpush2.msra.mxu0 %v1070
  %4483 = vmatprep.subr.mxu0 %v1067
  %4484 = vmatpush2.msra.mxu0 %v1066
  %4485 = vmatprep.subr.mxu0 %v1063
  %4486 = vmatpush2.msra.mxu0 %v1062
  %4487 = vmatprep.subr.mxu0 %v1059
  %4488 = vmatpush2.msra.mxu0 %v1058
  %4489 = vmatprep.subr.mxu0 %v1055
  %4490 = vmatpush2.msra.mxu0 %v1054
  %4491 = vmatprep.subr.mxu0 %v1051
  %4492 = vmatpush2.msra.mxu0 %v1050
  %4493 = vmatprep.subr.mxu0 %v1047
  %4494 = vmatpush2.msra.mxu0 %v1046
  %4495 = vmatprep.subr.mxu0 %v1043
  %4496 = vmatpush2.msra.mxu0 %v1042
  %4497 = vmatprep.mubr.f32.mxu0 %v23
  %4498 = vmatmul.mubr.f32.gmra.mxu0 %v22
  %v4499 = vpop.f32.mrf.mxu0
  %v4500 = vadd.f32 %v4285, %v4499
  %v4501 = vpop.f32.mrf.mxu0
  %v4502 = vadd.f32 %v4287, %v4501
  %4503 = vmatprep.mubr.f32.mxu0 %v41
  %4504 = vmatmul.mubr.f32.gmra.mxu0 %v40
  %v4505 = vpop.f32.mrf.mxu0
  %v4506 = vadd.f32 %v4291, %v4505
  %v4507 = vpop.f32.mrf.mxu0
  %v4508 = vadd.f32 %v4293, %v4507
  %4509 = vmatprep.mubr.f32.mxu0 %v59
  %4510 = vmatmul.mubr.f32.gmra.mxu0 %v58
  %v4511 = vpop.f32.mrf.mxu0
  %v4512 = vadd.f32 %v4297, %v4511
  %v4513 = vpop.f32.mrf.mxu0
  %v4514 = vadd.f32 %v4299, %v4513
  %4515 = vmatprep.mubr.f32.mxu0 %v77
  %4516 = vmatmul.mubr.f32.gmra.mxu0 %v76
  %v4517 = vpop.f32.mrf.mxu0
  %v4518 = vadd.f32 %v4303, %v4517
  %v4519 = vpop.f32.mrf.mxu0
  %v4520 = vadd.f32 %v4305, %v4519
  %4521 = vmatprep.mubr.f32.mxu0 %v95
  %4522 = vmatmul.mubr.f32.gmra.mxu0 %v94
  %v4523 = vpop.f32.mrf.mxu0
  %v4524 = vadd.f32 %v4309, %v4523
  %v4525 = vpop.f32.mrf.mxu0
  %v4526 = vadd.f32 %v4311, %v4525
  %4527 = vmatprep.mubr.f32.mxu0 %v113
  %4528 = vmatmul.mubr.f32.gmra.mxu0 %v112
  %v4529 = vpop.f32.mrf.mxu0
  %v4530 = vadd.f32 %v4315, %v4529
  %v4531 = vpop.f32.mrf.mxu0
  %v4532 = vadd.f32 %v4317, %v4531
  %4533 = vmatprep.mubr.f32.mxu0 %v131
  %4534 = vmatmul.mubr.f32.gmra.mxu0 %v130
  %v4535 = vpop.f32.mrf.mxu0
  %v4536 = vadd.f32 %v4321, %v4535
  %v4537 = vpop.f32.mrf.mxu0
  %v4538 = vadd.f32 %v4323, %v4537
  %4539 = vmatprep.mubr.f32.mxu0 %v149
  %4540 = vmatmul.mubr.f32.gmra.mxu0 %v148
  %v4541 = vpop.f32.mrf.mxu0
  %v4542 = vadd.f32 %v4327, %v4541
  %v4543 = vpop.f32.mrf.mxu0
  %v4544 = vadd.f32 %v4329, %v4543
  %4545 = vmatprep.mubr.f32.mxu0 %v167
  %4546 = vmatmul.mubr.f32.gmra.mxu0 %v166
  %v4547 = vpop.f32.mrf.mxu0
  %v4548 = vadd.f32 %v4333, %v4547
  %v4549 = vpop.f32.mrf.mxu0
  %v4550 = vadd.f32 %v4335, %v4549
  %4551 = vmatprep.mubr.f32.mxu0 %v185
  %4552 = vmatmul.mubr.f32.gmra.mxu0 %v184
  %v4553 = vpop.f32.mrf.mxu0
  %v4554 = vadd.f32 %v4339, %v4553
  %v4555 = vpop.f32.mrf.mxu0
  %v4556 = vadd.f32 %v4341, %v4555
  %4557 = vmatprep.mubr.f32.mxu0 %v203
  %4558 = vmatmul.mubr.f32.gmra.mxu0 %v202
  %v4559 = vpop.f32.mrf.mxu0
  %v4560 = vadd.f32 %v4345, %v4559
  %v4561 = vpop.f32.mrf.mxu0
  %v4562 = vadd.f32 %v4347, %v4561
  %4563 = vmatprep.mubr.f32.mxu0 %v221
  %4564 = vmatmul.mubr.f32.gmra.mxu0 %v220
  %v4565 = vpop.f32.mrf.mxu0
  %v4566 = vadd.f32 %v4351, %v4565
  %v4567 = vpop.f32.mrf.mxu0
  %v4568 = vadd.f32 %v4353, %v4567
  %4569 = vmatprep.mubr.f32.mxu0 %v239
  %4570 = vmatmul.mubr.f32.gmra.mxu0 %v238
  %v4571 = vpop.f32.mrf.mxu0
  %v4572 = vadd.f32 %v4357, %v4571
  %v4573 = vpop.f32.mrf.mxu0
  %v4574 = vadd.f32 %v4359, %v4573
  %4575 = vmatprep.mubr.f32.mxu0 %v257
  %4576 = vmatmul.mubr.f32.gmra.mxu0 %v256
  %v4577 = vpop.f32.mrf.mxu0
  %v4578 = vadd.f32 %v4363, %v4577
  %v4579 = vpop.f32.mrf.mxu0
  %v4580 = vadd.f32 %v4365, %v4579
  %4581 = vmatprep.mubr.f32.mxu0 %v275
  %4582 = vmatmul.mubr.f32.gmra.mxu0 %v274
  %v4583 = vpop.f32.mrf.mxu0
  %v4584 = vadd.f32 %v4369, %v4583
  %v4585 = vpop.f32.mrf.mxu0
  %v4586 = vadd.f32 %v4371, %v4585
  %4587 = vmatprep.mubr.f32.mxu0 %v293
  %4588 = vmatmul.mubr.f32.gmra.mxu0 %v292
  %v4589 = vpop.f32.mrf.mxu0
  %v4590 = vadd.f32 %v4375, %v4589
  %v4591 = vpop.f32.mrf.mxu0
  %v4592 = vadd.f32 %v4377, %v4591
  %4593 = vmatprep.mubr.f32.mxu0 %v311
  %4594 = vmatmul.mubr.f32.gmra.mxu0 %v310
  %v4595 = vpop.f32.mrf.mxu0
  %v4596 = vadd.f32 %v4381, %v4595
  %v4597 = vpop.f32.mrf.mxu0
  %v4598 = vadd.f32 %v4383, %v4597
  %4599 = vmatprep.mubr.f32.mxu0 %v329
  %4600 = vmatmul.mubr.f32.gmra.mxu0 %v328
  %v4601 = vpop.f32.mrf.mxu0
  %v4602 = vadd.f32 %v4387, %v4601
  %v4603 = vpop.f32.mrf.mxu0
  %v4604 = vadd.f32 %v4389, %v4603
  %4605 = vmatprep.mubr.f32.mxu0 %v347
  %4606 = vmatmul.mubr.f32.gmra.mxu0 %v346
  %v4607 = vpop.f32.mrf.mxu0
  %v4608 = vadd.f32 %v4393, %v4607
  %v4609 = vpop.f32.mrf.mxu0
  %v4610 = vadd.f32 %v4395, %v4609
  %4611 = vmatprep.mubr.f32.mxu0 %v365
  %4612 = vmatmul.mubr.f32.gmra.mxu0 %v364
  %v4613 = vpop.f32.mrf.mxu0
  %v4614 = vadd.f32 %v4399, %v4613
  %v4615 = vpop.f32.mrf.mxu0
  %v4616 = vadd.f32 %v4401, %v4615
  %4617 = vmatprep.mubr.f32.mxu0 %v383
  %4618 = vmatmul.mubr.f32.gmra.mxu0 %v382
  %v4619 = vpop.f32.mrf.mxu0
  %v4620 = vadd.f32 %v4405, %v4619
  %v4621 = vpop.f32.mrf.mxu0
  %v4622 = vadd.f32 %v4407, %v4621
  %4623 = vmatprep.mubr.f32.mxu0 %v401
  %4624 = vmatmul.mubr.f32.gmra.mxu0 %v400
  %v4625 = vpop.f32.mrf.mxu0
  %v4626 = vadd.f32 %v4411, %v4625
  %v4627 = vpop.f32.mrf.mxu0
  %v4628 = vadd.f32 %v4413, %v4627
  %4629 = vmatprep.mubr.f32.mxu0 %v419
  %4630 = vmatmul.mubr.f32.gmra.mxu0 %v418
  %v4631 = vpop.f32.mrf.mxu0
  %v4632 = vadd.f32 %v4417, %v4631
  %v4633 = vpop.f32.mrf.mxu0
  %v4634 = vadd.f32 %v4419, %v4633
  %4635 = vmatprep.mubr.f32.mxu0 %v437
  %4636 = vmatmul.mubr.f32.gmra.mxu0 %v436
  %v4637 = vpop.f32.mrf.mxu0
  %v4638 = vadd.f32 %v4423, %v4637
  %v4639 = vpop.f32.mrf.mxu0
  %v4640 = vadd.f32 %v4425, %v4639
  %4641 = vmatprep.mubr.f32.mxu0 %v455
  %4642 = vmatmul.mubr.f32.gmra.mxu0 %v454
  %v4643 = vpop.f32.mrf.mxu0
  %v4644 = vadd.f32 %v4429, %v4643
  %v4645 = vpop.f32.mrf.mxu0
  %v4646 = vadd.f32 %v4431, %v4645
  %4647 = vdwg.mxu0
  %4648 = vmatprep.subr.mxu0 %v1167
  %4649 = vmatpush1.msra.mxu0 %v1166
  %4650 = vmatprep.subr.mxu0 %v1163
  %4651 = vmatpush1.msra.mxu0 %v1162
  %4652 = vmatprep.subr.mxu0 %v1159
  %4653 = vmatpush1.msra.mxu0 %v1158
  %4654 = vmatprep.subr.mxu0 %v1155
  %4655 = vmatpush1.msra.mxu0 %v1154
  %4656 = vmatprep.subr.mxu0 %v1151
  %4657 = vmatpush1.msra.mxu0 %v1150
  %4658 = vmatprep.subr.mxu0 %v1147
  %4659 = vmatpush1.msra.mxu0 %v1146
  %4660 = vmatprep.subr.mxu0 %v1143
  %4661 = vmatpush1.msra.mxu0 %v1142
  %4662 = vmatprep.subr.mxu0 %v1139
  %4663 = vmatpush1.msra.mxu0 %v1138
  %4664 = vmatprep.subr.mxu0 %v1135
  %4665 = vmatpush1.msra.mxu0 %v1134
  %4666 = vmatprep.subr.mxu0 %v1131
  %4667 = vmatpush1.msra.mxu0 %v1130
  %4668 = vmatprep.subr.mxu0 %v1127
  %4669 = vmatpush1.msra.mxu0 %v1126
  %4670 = vmatprep.subr.mxu0 %v1123
  %4671 = vmatpush1.msra.mxu0 %v1122
  %4672 = vmatprep.subr.mxu0 %v1119
  %4673 = vmatpush1.msra.mxu0 %v1118
  %4674 = vmatprep.subr.mxu0 %v1115
  %4675 = vmatpush1.msra.mxu0 %v1114
  %4676 = vmatprep.subr.mxu0 %v1111
  %4677 = vmatpush1.msra.mxu0 %v1110
  %4678 = vmatprep.subr.mxu0 %v1107
  %4679 = vmatpush1.msra.mxu0 %v1106
  %4680 = vmatprep.subr.mxu0 %v1231
  %4681 = vmatpush2.msra.mxu0 %v1230
  %4682 = vmatprep.subr.mxu0 %v1227
  %4683 = vmatpush2.msra.mxu0 %v1226
  %4684 = vmatprep.subr.mxu0 %v1223
  %4685 = vmatpush2.msra.mxu0 %v1222
  %4686 = vmatprep.subr.mxu0 %v1219
  %4687 = vmatpush2.msra.mxu0 %v1218
  %4688 = vmatprep.subr.mxu0 %v1215
  %4689 = vmatpush2.msra.mxu0 %v1214
  %4690 = vmatprep.subr.mxu0 %v1211
  %4691 = vmatpush2.msra.mxu0 %v1210
  %4692 = vmatprep.subr.mxu0 %v1207
  %4693 = vmatpush2.msra.mxu0 %v1206
  %4694 = vmatprep.subr.mxu0 %v1203
  %4695 = vmatpush2.msra.mxu0 %v1202
  %4696 = vmatprep.subr.mxu0 %v1199
  %4697 = vmatpush2.msra.mxu0 %v1198
  %4698 = vmatprep.subr.mxu0 %v1195
  %4699 = vmatpush2.msra.mxu0 %v1194
  %4700 = vmatprep.subr.mxu0 %v1191
  %4701 = vmatpush2.msra.mxu0 %v1190
  %4702 = vmatprep.subr.mxu0 %v1187
  %4703 = vmatpush2.msra.mxu0 %v1186
  %4704 = vmatprep.subr.mxu0 %v1183
  %4705 = vmatpush2.msra.mxu0 %v1182
  %4706 = vmatprep.subr.mxu0 %v1179
  %4707 = vmatpush2.msra.mxu0 %v1178
  %4708 = vmatprep.subr.mxu0 %v1175
  %4709 = vmatpush2.msra.mxu0 %v1174
  %4710 = vmatprep.subr.mxu0 %v1171
  %4711 = vmatpush2.msra.mxu0 %v1170
  %4712 = vmatprep.mubr.f32.mxu0 %v25
  %4713 = vmatmul.mubr.f32.gmra.mxu0 %v24
  %v4714 = vpop.f32.mrf.mxu0
  %v4715 = vadd.f32 %v4500, %v4714
  %v4716 = vpop.f32.mrf.mxu0
  %v4717 = vadd.f32 %v4502, %v4716
  %4718 = vmatprep.mubr.f32.mxu0 %v43
  %4719 = vmatmul.mubr.f32.gmra.mxu0 %v42
  %v4720 = vpop.f32.mrf.mxu0
  %v4721 = vadd.f32 %v4506, %v4720
  %v4722 = vpop.f32.mrf.mxu0
  %v4723 = vadd.f32 %v4508, %v4722
  %4724 = vmatprep.mubr.f32.mxu0 %v61
  %4725 = vmatmul.mubr.f32.gmra.mxu0 %v60
  %v4726 = vpop.f32.mrf.mxu0
  %v4727 = vadd.f32 %v4512, %v4726
  %v4728 = vpop.f32.mrf.mxu0
  %v4729 = vadd.f32 %v4514, %v4728
  %4730 = vmatprep.mubr.f32.mxu0 %v79
  %4731 = vmatmul.mubr.f32.gmra.mxu0 %v78
  %v4732 = vpop.f32.mrf.mxu0
  %v4733 = vadd.f32 %v4518, %v4732
  %v4734 = vpop.f32.mrf.mxu0
  %v4735 = vadd.f32 %v4520, %v4734
  %4736 = vmatprep.mubr.f32.mxu0 %v97
  %4737 = vmatmul.mubr.f32.gmra.mxu0 %v96
  %v4738 = vpop.f32.mrf.mxu0
  %v4739 = vadd.f32 %v4524, %v4738
  %v4740 = vpop.f32.mrf.mxu0
  %v4741 = vadd.f32 %v4526, %v4740
  %4742 = vmatprep.mubr.f32.mxu0 %v115
  %4743 = vmatmul.mubr.f32.gmra.mxu0 %v114
  %v4744 = vpop.f32.mrf.mxu0
  %v4745 = vadd.f32 %v4530, %v4744
  %v4746 = vpop.f32.mrf.mxu0
  %v4747 = vadd.f32 %v4532, %v4746
  %4748 = vmatprep.mubr.f32.mxu0 %v133
  %4749 = vmatmul.mubr.f32.gmra.mxu0 %v132
  %v4750 = vpop.f32.mrf.mxu0
  %v4751 = vadd.f32 %v4536, %v4750
  %v4752 = vpop.f32.mrf.mxu0
  %v4753 = vadd.f32 %v4538, %v4752
  %4754 = vmatprep.mubr.f32.mxu0 %v151
  %4755 = vmatmul.mubr.f32.gmra.mxu0 %v150
  %v4756 = vpop.f32.mrf.mxu0
  %v4757 = vadd.f32 %v4542, %v4756
  %v4758 = vpop.f32.mrf.mxu0
  %v4759 = vadd.f32 %v4544, %v4758
  %4760 = vmatprep.mubr.f32.mxu0 %v169
  %4761 = vmatmul.mubr.f32.gmra.mxu0 %v168
  %v4762 = vpop.f32.mrf.mxu0
  %v4763 = vadd.f32 %v4548, %v4762
  %v4764 = vpop.f32.mrf.mxu0
  %v4765 = vadd.f32 %v4550, %v4764
  %4766 = vmatprep.mubr.f32.mxu0 %v187
  %4767 = vmatmul.mubr.f32.gmra.mxu0 %v186
  %v4768 = vpop.f32.mrf.mxu0
  %v4769 = vadd.f32 %v4554, %v4768
  %v4770 = vpop.f32.mrf.mxu0
  %v4771 = vadd.f32 %v4556, %v4770
  %4772 = vmatprep.mubr.f32.mxu0 %v205
  %4773 = vmatmul.mubr.f32.gmra.mxu0 %v204
  %v4774 = vpop.f32.mrf.mxu0
  %v4775 = vadd.f32 %v4560, %v4774
  %v4776 = vpop.f32.mrf.mxu0
  %v4777 = vadd.f32 %v4562, %v4776
  %4778 = vmatprep.mubr.f32.mxu0 %v223
  %4779 = vmatmul.mubr.f32.gmra.mxu0 %v222
  %v4780 = vpop.f32.mrf.mxu0
  %v4781 = vadd.f32 %v4566, %v4780
  %v4782 = vpop.f32.mrf.mxu0
  %v4783 = vadd.f32 %v4568, %v4782
  %4784 = vmatprep.mubr.f32.mxu0 %v241
  %4785 = vmatmul.mubr.f32.gmra.mxu0 %v240
  %v4786 = vpop.f32.mrf.mxu0
  %v4787 = vadd.f32 %v4572, %v4786
  %v4788 = vpop.f32.mrf.mxu0
  %v4789 = vadd.f32 %v4574, %v4788
  %4790 = vmatprep.mubr.f32.mxu0 %v259
  %4791 = vmatmul.mubr.f32.gmra.mxu0 %v258
  %v4792 = vpop.f32.mrf.mxu0
  %v4793 = vadd.f32 %v4578, %v4792
  %v4794 = vpop.f32.mrf.mxu0
  %v4795 = vadd.f32 %v4580, %v4794
  %4796 = vmatprep.mubr.f32.mxu0 %v277
  %4797 = vmatmul.mubr.f32.gmra.mxu0 %v276
  %v4798 = vpop.f32.mrf.mxu0
  %v4799 = vadd.f32 %v4584, %v4798
  %v4800 = vpop.f32.mrf.mxu0
  %v4801 = vadd.f32 %v4586, %v4800
  %4802 = vmatprep.mubr.f32.mxu0 %v295
  %4803 = vmatmul.mubr.f32.gmra.mxu0 %v294
  %v4804 = vpop.f32.mrf.mxu0
  %v4805 = vadd.f32 %v4590, %v4804
  %v4806 = vpop.f32.mrf.mxu0
  %v4807 = vadd.f32 %v4592, %v4806
  %4808 = vmatprep.mubr.f32.mxu0 %v313
  %4809 = vmatmul.mubr.f32.gmra.mxu0 %v312
  %v4810 = vpop.f32.mrf.mxu0
  %v4811 = vadd.f32 %v4596, %v4810
  %v4812 = vpop.f32.mrf.mxu0
  %v4813 = vadd.f32 %v4598, %v4812
  %4814 = vmatprep.mubr.f32.mxu0 %v331
  %4815 = vmatmul.mubr.f32.gmra.mxu0 %v330
  %v4816 = vpop.f32.mrf.mxu0
  %v4817 = vadd.f32 %v4602, %v4816
  %v4818 = vpop.f32.mrf.mxu0
  %v4819 = vadd.f32 %v4604, %v4818
  %4820 = vmatprep.mubr.f32.mxu0 %v349
  %4821 = vmatmul.mubr.f32.gmra.mxu0 %v348
  %v4822 = vpop.f32.mrf.mxu0
  %v4823 = vadd.f32 %v4608, %v4822
  %v4824 = vpop.f32.mrf.mxu0
  %v4825 = vadd.f32 %v4610, %v4824
  %4826 = vmatprep.mubr.f32.mxu0 %v367
  %4827 = vmatmul.mubr.f32.gmra.mxu0 %v366
  %v4828 = vpop.f32.mrf.mxu0
  %v4829 = vadd.f32 %v4614, %v4828
  %v4830 = vpop.f32.mrf.mxu0
  %v4831 = vadd.f32 %v4616, %v4830
  %4832 = vmatprep.mubr.f32.mxu0 %v385
  %4833 = vmatmul.mubr.f32.gmra.mxu0 %v384
  %v4834 = vpop.f32.mrf.mxu0
  %v4835 = vadd.f32 %v4620, %v4834
  %v4836 = vpop.f32.mrf.mxu0
  %v4837 = vadd.f32 %v4622, %v4836
  %4838 = vmatprep.mubr.f32.mxu0 %v403
  %4839 = vmatmul.mubr.f32.gmra.mxu0 %v402
  %v4840 = vpop.f32.mrf.mxu0
  %v4841 = vadd.f32 %v4626, %v4840
  %v4842 = vpop.f32.mrf.mxu0
  %v4843 = vadd.f32 %v4628, %v4842
  %4844 = vmatprep.mubr.f32.mxu0 %v421
  %4845 = vmatmul.mubr.f32.gmra.mxu0 %v420
  %v4846 = vpop.f32.mrf.mxu0
  %v4847 = vadd.f32 %v4632, %v4846
  %v4848 = vpop.f32.mrf.mxu0
  %v4849 = vadd.f32 %v4634, %v4848
  %4850 = vmatprep.mubr.f32.mxu0 %v439
  %4851 = vmatmul.mubr.f32.gmra.mxu0 %v438
  %v4852 = vpop.f32.mrf.mxu0
  %v4853 = vadd.f32 %v4638, %v4852
  %v4854 = vpop.f32.mrf.mxu0
  %v4855 = vadd.f32 %v4640, %v4854
  %4856 = vmatprep.mubr.f32.mxu0 %v457
  %4857 = vmatmul.mubr.f32.gmra.mxu0 %v456
  %v4858 = vpop.f32.mrf.mxu0
  %v4859 = vadd.f32 %v4644, %v4858
  %v4860 = vpop.f32.mrf.mxu0
  %v4861 = vadd.f32 %v4646, %v4860
  %4862 = vdwg.mxu0
  %4863 = vmatprep.subr.mxu0 %v1295
  %4864 = vmatpush1.msra.mxu0 %v1294
  %4865 = vmatprep.subr.mxu0 %v1291
  %4866 = vmatpush1.msra.mxu0 %v1290
  %4867 = vmatprep.subr.mxu0 %v1287
  %4868 = vmatpush1.msra.mxu0 %v1286
  %4869 = vmatprep.subr.mxu0 %v1283
  %4870 = vmatpush1.msra.mxu0 %v1282
  %4871 = vmatprep.subr.mxu0 %v1279
  %4872 = vmatpush1.msra.mxu0 %v1278
  %4873 = vmatprep.subr.mxu0 %v1275
  %4874 = vmatpush1.msra.mxu0 %v1274
  %4875 = vmatprep.subr.mxu0 %v1271
  %4876 = vmatpush1.msra.mxu0 %v1270
  %4877 = vmatprep.subr.mxu0 %v1267
  %4878 = vmatpush1.msra.mxu0 %v1266
  %4879 = vmatprep.subr.mxu0 %v1263
  %4880 = vmatpush1.msra.mxu0 %v1262
  %4881 = vmatprep.subr.mxu0 %v1259
  %4882 = vmatpush1.msra.mxu0 %v1258
  %4883 = vmatprep.subr.mxu0 %v1255
  %4884 = vmatpush1.msra.mxu0 %v1254
  %4885 = vmatprep.subr.mxu0 %v1251
  %4886 = vmatpush1.msra.mxu0 %v1250
  %4887 = vmatprep.subr.mxu0 %v1247
  %4888 = vmatpush1.msra.mxu0 %v1246
  %4889 = vmatprep.subr.mxu0 %v1243
  %4890 = vmatpush1.msra.mxu0 %v1242
  %4891 = vmatprep.subr.mxu0 %v1239
  %4892 = vmatpush1.msra.mxu0 %v1238
  %4893 = vmatprep.subr.mxu0 %v1235
  %4894 = vmatpush1.msra.mxu0 %v1234
  %4895 = vmatprep.subr.mxu0 %v1359
  %4896 = vmatpush2.msra.mxu0 %v1358
  %4897 = vmatprep.subr.mxu0 %v1355
  %4898 = vmatpush2.msra.mxu0 %v1354
  %4899 = vmatprep.subr.mxu0 %v1351
  %4900 = vmatpush2.msra.mxu0 %v1350
  %4901 = vmatprep.subr.mxu0 %v1347
  %4902 = vmatpush2.msra.mxu0 %v1346
  %4903 = vmatprep.subr.mxu0 %v1343
  %4904 = vmatpush2.msra.mxu0 %v1342
  %4905 = vmatprep.subr.mxu0 %v1339
  %4906 = vmatpush2.msra.mxu0 %v1338
  %4907 = vmatprep.subr.mxu0 %v1335
  %4908 = vmatpush2.msra.mxu0 %v1334
  %4909 = vmatprep.subr.mxu0 %v1331
  %4910 = vmatpush2.msra.mxu0 %v1330
  %4911 = vmatprep.subr.mxu0 %v1327
  %4912 = vmatpush2.msra.mxu0 %v1326
  %4913 = vmatprep.subr.mxu0 %v1323
  %4914 = vmatpush2.msra.mxu0 %v1322
  %4915 = vmatprep.subr.mxu0 %v1319
  %4916 = vmatpush2.msra.mxu0 %v1318
  %4917 = vmatprep.subr.mxu0 %v1315
  %4918 = vmatpush2.msra.mxu0 %v1314
  %4919 = vmatprep.subr.mxu0 %v1311
  %4920 = vmatpush2.msra.mxu0 %v1310
  %4921 = vmatprep.subr.mxu0 %v1307
  %4922 = vmatpush2.msra.mxu0 %v1306
  %4923 = vmatprep.subr.mxu0 %v1303
  %4924 = vmatpush2.msra.mxu0 %v1302
  %4925 = vmatprep.subr.mxu0 %v1299
  %4926 = vmatpush2.msra.mxu0 %v1298
  %4927 = vmatprep.mubr.f32.mxu0 %v27
  %4928 = vmatmul.mubr.f32.gmra.mxu0 %v26
  %v4929 = vpop.f32.mrf.mxu0
  %v4930 = vadd.f32 %v4715, %v4929
  %v4931 = vpop.f32.mrf.mxu0
  %v4932 = vadd.f32 %v4717, %v4931
  %4933 = vmatprep.mubr.f32.mxu0 %v45
  %4934 = vmatmul.mubr.f32.gmra.mxu0 %v44
  %v4935 = vpop.f32.mrf.mxu0
  %v4936 = vadd.f32 %v4721, %v4935
  %v4937 = vpop.f32.mrf.mxu0
  %v4938 = vadd.f32 %v4723, %v4937
  %4939 = vmatprep.mubr.f32.mxu0 %v63
  %4940 = vmatmul.mubr.f32.gmra.mxu0 %v62
  %v4941 = vpop.f32.mrf.mxu0
  %v4942 = vadd.f32 %v4727, %v4941
  %v4943 = vpop.f32.mrf.mxu0
  %v4944 = vadd.f32 %v4729, %v4943
  %4945 = vmatprep.mubr.f32.mxu0 %v81
  %4946 = vmatmul.mubr.f32.gmra.mxu0 %v80
  %v4947 = vpop.f32.mrf.mxu0
  %v4948 = vadd.f32 %v4733, %v4947
  %v4949 = vpop.f32.mrf.mxu0
  %v4950 = vadd.f32 %v4735, %v4949
  %4951 = vmatprep.mubr.f32.mxu0 %v99
  %4952 = vmatmul.mubr.f32.gmra.mxu0 %v98
  %v4953 = vpop.f32.mrf.mxu0
  %v4954 = vadd.f32 %v4739, %v4953
  %v4955 = vpop.f32.mrf.mxu0
  %v4956 = vadd.f32 %v4741, %v4955
  %4957 = vmatprep.mubr.f32.mxu0 %v117
  %4958 = vmatmul.mubr.f32.gmra.mxu0 %v116
  %v4959 = vpop.f32.mrf.mxu0
  %v4960 = vadd.f32 %v4745, %v4959
  %v4961 = vpop.f32.mrf.mxu0
  %v4962 = vadd.f32 %v4747, %v4961
  %4963 = vmatprep.mubr.f32.mxu0 %v135
  %4964 = vmatmul.mubr.f32.gmra.mxu0 %v134
  %v4965 = vpop.f32.mrf.mxu0
  %v4966 = vadd.f32 %v4751, %v4965
  %v4967 = vpop.f32.mrf.mxu0
  %v4968 = vadd.f32 %v4753, %v4967
  %4969 = vmatprep.mubr.f32.mxu0 %v153
  %4970 = vmatmul.mubr.f32.gmra.mxu0 %v152
  %v4971 = vpop.f32.mrf.mxu0
  %v4972 = vadd.f32 %v4757, %v4971
  %v4973 = vpop.f32.mrf.mxu0
  %v4974 = vadd.f32 %v4759, %v4973
  %4975 = vmatprep.mubr.f32.mxu0 %v171
  %4976 = vmatmul.mubr.f32.gmra.mxu0 %v170
  %v4977 = vpop.f32.mrf.mxu0
  %v4978 = vadd.f32 %v4763, %v4977
  %v4979 = vpop.f32.mrf.mxu0
  %v4980 = vadd.f32 %v4765, %v4979
  %4981 = vmatprep.mubr.f32.mxu0 %v189
  %4982 = vmatmul.mubr.f32.gmra.mxu0 %v188
  %v4983 = vpop.f32.mrf.mxu0
  %v4984 = vadd.f32 %v4769, %v4983
  %v4985 = vpop.f32.mrf.mxu0
  %v4986 = vadd.f32 %v4771, %v4985
  %4987 = vmatprep.mubr.f32.mxu0 %v207
  %4988 = vmatmul.mubr.f32.gmra.mxu0 %v206
  %v4989 = vpop.f32.mrf.mxu0
  %v4990 = vadd.f32 %v4775, %v4989
  %v4991 = vpop.f32.mrf.mxu0
  %v4992 = vadd.f32 %v4777, %v4991
  %4993 = vmatprep.mubr.f32.mxu0 %v225
  %4994 = vmatmul.mubr.f32.gmra.mxu0 %v224
  %v4995 = vpop.f32.mrf.mxu0
  %v4996 = vadd.f32 %v4781, %v4995
  %v4997 = vpop.f32.mrf.mxu0
  %v4998 = vadd.f32 %v4783, %v4997
  %4999 = vmatprep.mubr.f32.mxu0 %v243
  %5000 = vmatmul.mubr.f32.gmra.mxu0 %v242
  %v5001 = vpop.f32.mrf.mxu0
  %v5002 = vadd.f32 %v4787, %v5001
  %v5003 = vpop.f32.mrf.mxu0
  %v5004 = vadd.f32 %v4789, %v5003
  %5005 = vmatprep.mubr.f32.mxu0 %v261
  %5006 = vmatmul.mubr.f32.gmra.mxu0 %v260
  %v5007 = vpop.f32.mrf.mxu0
  %v5008 = vadd.f32 %v4793, %v5007
  %v5009 = vpop.f32.mrf.mxu0
  %v5010 = vadd.f32 %v4795, %v5009
  %5011 = vmatprep.mubr.f32.mxu0 %v279
  %5012 = vmatmul.mubr.f32.gmra.mxu0 %v278
  %v5013 = vpop.f32.mrf.mxu0
  %v5014 = vadd.f32 %v4799, %v5013
  %v5015 = vpop.f32.mrf.mxu0
  %v5016 = vadd.f32 %v4801, %v5015
  %5017 = vmatprep.mubr.f32.mxu0 %v297
  %5018 = vmatmul.mubr.f32.gmra.mxu0 %v296
  %v5019 = vpop.f32.mrf.mxu0
  %v5020 = vadd.f32 %v4805, %v5019
  %v5021 = vpop.f32.mrf.mxu0
  %v5022 = vadd.f32 %v4807, %v5021
  %5023 = vmatprep.mubr.f32.mxu0 %v315
  %5024 = vmatmul.mubr.f32.gmra.mxu0 %v314
  %v5025 = vpop.f32.mrf.mxu0
  %v5026 = vadd.f32 %v4811, %v5025
  %v5027 = vpop.f32.mrf.mxu0
  %v5028 = vadd.f32 %v4813, %v5027
  %5029 = vmatprep.mubr.f32.mxu0 %v333
  %5030 = vmatmul.mubr.f32.gmra.mxu0 %v332
  %v5031 = vpop.f32.mrf.mxu0
  %v5032 = vadd.f32 %v4817, %v5031
  %v5033 = vpop.f32.mrf.mxu0
  %v5034 = vadd.f32 %v4819, %v5033
  %5035 = vmatprep.mubr.f32.mxu0 %v351
  %5036 = vmatmul.mubr.f32.gmra.mxu0 %v350
  %v5037 = vpop.f32.mrf.mxu0
  %v5038 = vadd.f32 %v4823, %v5037
  %v5039 = vpop.f32.mrf.mxu0
  %v5040 = vadd.f32 %v4825, %v5039
  %5041 = vmatprep.mubr.f32.mxu0 %v369
  %5042 = vmatmul.mubr.f32.gmra.mxu0 %v368
  %v5043 = vpop.f32.mrf.mxu0
  %v5044 = vadd.f32 %v4829, %v5043
  %v5045 = vpop.f32.mrf.mxu0
  %v5046 = vadd.f32 %v4831, %v5045
  %5047 = vmatprep.mubr.f32.mxu0 %v387
  %5048 = vmatmul.mubr.f32.gmra.mxu0 %v386
  %v5049 = vpop.f32.mrf.mxu0
  %v5050 = vadd.f32 %v4835, %v5049
  %v5051 = vpop.f32.mrf.mxu0
  %v5052 = vadd.f32 %v4837, %v5051
  %5053 = vmatprep.mubr.f32.mxu0 %v405
  %5054 = vmatmul.mubr.f32.gmra.mxu0 %v404
  %v5055 = vpop.f32.mrf.mxu0
  %v5056 = vadd.f32 %v4841, %v5055
  %v5057 = vpop.f32.mrf.mxu0
  %v5058 = vadd.f32 %v4843, %v5057
  %5059 = vmatprep.mubr.f32.mxu0 %v423
  %5060 = vmatmul.mubr.f32.gmra.mxu0 %v422
  %v5061 = vpop.f32.mrf.mxu0
  %v5062 = vadd.f32 %v4847, %v5061
  %v5063 = vpop.f32.mrf.mxu0
  %v5064 = vadd.f32 %v4849, %v5063
  %5065 = vmatprep.mubr.f32.mxu0 %v441
  %5066 = vmatmul.mubr.f32.gmra.mxu0 %v440
  %v5067 = vpop.f32.mrf.mxu0
  %v5068 = vadd.f32 %v4853, %v5067
  %v5069 = vpop.f32.mrf.mxu0
  %v5070 = vadd.f32 %v4855, %v5069
  %5071 = vmatprep.mubr.f32.mxu0 %v459
  %5072 = vmatmul.mubr.f32.gmra.mxu0 %v458
  %v5073 = vpop.f32.mrf.mxu0
  %v5074 = vadd.f32 %v4859, %v5073
  %v5075 = vpop.f32.mrf.mxu0
  %v5076 = vadd.f32 %v4861, %v5075
  %5077 = vdwg.mxu0
  %5078 = vmatprep.subr.mxu0 %v1423
  %5079 = vmatpush1.msra.mxu0 %v1422
  %5080 = vmatprep.subr.mxu0 %v1419
  %5081 = vmatpush1.msra.mxu0 %v1418
  %5082 = vmatprep.subr.mxu0 %v1415
  %5083 = vmatpush1.msra.mxu0 %v1414
  %5084 = vmatprep.subr.mxu0 %v1411
  %5085 = vmatpush1.msra.mxu0 %v1410
  %5086 = vmatprep.subr.mxu0 %v1407
  %5087 = vmatpush1.msra.mxu0 %v1406
  %5088 = vmatprep.subr.mxu0 %v1403
  %5089 = vmatpush1.msra.mxu0 %v1402
  %5090 = vmatprep.subr.mxu0 %v1399
  %5091 = vmatpush1.msra.mxu0 %v1398
  %5092 = vmatprep.subr.mxu0 %v1395
  %5093 = vmatpush1.msra.mxu0 %v1394
  %5094 = vmatprep.subr.mxu0 %v1391
  %5095 = vmatpush1.msra.mxu0 %v1390
  %5096 = vmatprep.subr.mxu0 %v1387
  %5097 = vmatpush1.msra.mxu0 %v1386
  %5098 = vmatprep.subr.mxu0 %v1383
  %5099 = vmatpush1.msra.mxu0 %v1382
  %5100 = vmatprep.subr.mxu0 %v1379
  %5101 = vmatpush1.msra.mxu0 %v1378
  %5102 = vmatprep.subr.mxu0 %v1375
  %5103 = vmatpush1.msra.mxu0 %v1374
  %5104 = vmatprep.subr.mxu0 %v1371
  %5105 = vmatpush1.msra.mxu0 %v1370
  %5106 = vmatprep.subr.mxu0 %v1367
  %5107 = vmatpush1.msra.mxu0 %v1366
  %5108 = vmatprep.subr.mxu0 %v1363
  %5109 = vmatpush1.msra.mxu0 %v1362
  %5110 = vmatprep.subr.mxu0 %v1487
  %5111 = vmatpush2.msra.mxu0 %v1486
  %5112 = vmatprep.subr.mxu0 %v1483
  %5113 = vmatpush2.msra.mxu0 %v1482
  %5114 = vmatprep.subr.mxu0 %v1479
  %5115 = vmatpush2.msra.mxu0 %v1478
  %5116 = vmatprep.subr.mxu0 %v1475
  %5117 = vmatpush2.msra.mxu0 %v1474
  %5118 = vmatprep.subr.mxu0 %v1471
  %5119 = vmatpush2.msra.mxu0 %v1470
  %5120 = vmatprep.subr.mxu0 %v1467
  %5121 = vmatpush2.msra.mxu0 %v1466
  %5122 = vmatprep.subr.mxu0 %v1463
  %5123 = vmatpush2.msra.mxu0 %v1462
  %5124 = vmatprep.subr.mxu0 %v1459
  %5125 = vmatpush2.msra.mxu0 %v1458
  %5126 = vmatprep.subr.mxu0 %v1455
  %5127 = vmatpush2.msra.mxu0 %v1454
  %5128 = vmatprep.subr.mxu0 %v1451
  %5129 = vmatpush2.msra.mxu0 %v1450
  %5130 = vmatprep.subr.mxu0 %v1447
  %5131 = vmatpush2.msra.mxu0 %v1446
  %5132 = vmatprep.subr.mxu0 %v1443
  %5133 = vmatpush2.msra.mxu0 %v1442
  %5134 = vmatprep.subr.mxu0 %v1439
  %5135 = vmatpush2.msra.mxu0 %v1438
  %5136 = vmatprep.subr.mxu0 %v1435
  %5137 = vmatpush2.msra.mxu0 %v1434
  %5138 = vmatprep.subr.mxu0 %v1431
  %5139 = vmatpush2.msra.mxu0 %v1430
  %5140 = vmatprep.subr.mxu0 %v1427
  %5141 = vmatpush2.msra.mxu0 %v1426
  %5142 = vmatprep.mubr.f32.mxu0 %v29
  %5143 = vmatmul.mubr.f32.gmra.mxu0 %v28
  %v5144 = vpop.f32.mrf.mxu0
  %v5145 = vadd.f32 %v4930, %v5144
  %v5146 = vpop.f32.mrf.mxu0
  %v5147 = vadd.f32 %v4932, %v5146
  %5148 = vmatprep.mubr.f32.mxu0 %v47
  %5149 = vmatmul.mubr.f32.gmra.mxu0 %v46
  %v5150 = vpop.f32.mrf.mxu0
  %v5151 = vadd.f32 %v4936, %v5150
  %v5152 = vpop.f32.mrf.mxu0
  %v5153 = vadd.f32 %v4938, %v5152
  %5154 = vmatprep.mubr.f32.mxu0 %v65
  %5155 = vmatmul.mubr.f32.gmra.mxu0 %v64
  %v5156 = vpop.f32.mrf.mxu0
  %v5157 = vadd.f32 %v4942, %v5156
  %v5158 = vpop.f32.mrf.mxu0
  %v5159 = vadd.f32 %v4944, %v5158
  %5160 = vmatprep.mubr.f32.mxu0 %v83
  %5161 = vmatmul.mubr.f32.gmra.mxu0 %v82
  %v5162 = vpop.f32.mrf.mxu0
  %v5163 = vadd.f32 %v4948, %v5162
  %v5164 = vpop.f32.mrf.mxu0
  %v5165 = vadd.f32 %v4950, %v5164
  %5166 = vmatprep.mubr.f32.mxu0 %v101
  %5167 = vmatmul.mubr.f32.gmra.mxu0 %v100
  %v5168 = vpop.f32.mrf.mxu0
  %v5169 = vadd.f32 %v4954, %v5168
  %v5170 = vpop.f32.mrf.mxu0
  %v5171 = vadd.f32 %v4956, %v5170
  %5172 = vmatprep.mubr.f32.mxu0 %v119
  %5173 = vmatmul.mubr.f32.gmra.mxu0 %v118
  %v5174 = vpop.f32.mrf.mxu0
  %v5175 = vadd.f32 %v4960, %v5174
  %v5176 = vpop.f32.mrf.mxu0
  %v5177 = vadd.f32 %v4962, %v5176
  %5178 = vmatprep.mubr.f32.mxu0 %v137
  %5179 = vmatmul.mubr.f32.gmra.mxu0 %v136
  %v5180 = vpop.f32.mrf.mxu0
  %v5181 = vadd.f32 %v4966, %v5180
  %v5182 = vpop.f32.mrf.mxu0
  %v5183 = vadd.f32 %v4968, %v5182
  %5184 = vmatprep.mubr.f32.mxu0 %v155
  %5185 = vmatmul.mubr.f32.gmra.mxu0 %v154
  %v5186 = vpop.f32.mrf.mxu0
  %v5187 = vadd.f32 %v4972, %v5186
  %v5188 = vpop.f32.mrf.mxu0
  %v5189 = vadd.f32 %v4974, %v5188
  %5190 = vmatprep.mubr.f32.mxu0 %v173
  %5191 = vmatmul.mubr.f32.gmra.mxu0 %v172
  %v5192 = vpop.f32.mrf.mxu0
  %v5193 = vadd.f32 %v4978, %v5192
  %v5194 = vpop.f32.mrf.mxu0
  %v5195 = vadd.f32 %v4980, %v5194
  %5196 = vmatprep.mubr.f32.mxu0 %v191
  %5197 = vmatmul.mubr.f32.gmra.mxu0 %v190
  %v5198 = vpop.f32.mrf.mxu0
  %v5199 = vadd.f32 %v4984, %v5198
  %v5200 = vpop.f32.mrf.mxu0
  %v5201 = vadd.f32 %v4986, %v5200
  %5202 = vmatprep.mubr.f32.mxu0 %v209
  %5203 = vmatmul.mubr.f32.gmra.mxu0 %v208
  %v5204 = vpop.f32.mrf.mxu0
  %v5205 = vadd.f32 %v4990, %v5204
  %v5206 = vpop.f32.mrf.mxu0
  %v5207 = vadd.f32 %v4992, %v5206
  %5208 = vmatprep.mubr.f32.mxu0 %v227
  %5209 = vmatmul.mubr.f32.gmra.mxu0 %v226
  %v5210 = vpop.f32.mrf.mxu0
  %v5211 = vadd.f32 %v4996, %v5210
  %v5212 = vpop.f32.mrf.mxu0
  %v5213 = vadd.f32 %v4998, %v5212
  %5214 = vmatprep.mubr.f32.mxu0 %v245
  %5215 = vmatmul.mubr.f32.gmra.mxu0 %v244
  %v5216 = vpop.f32.mrf.mxu0
  %v5217 = vadd.f32 %v5002, %v5216
  %v5218 = vpop.f32.mrf.mxu0
  %v5219 = vadd.f32 %v5004, %v5218
  %5220 = vmatprep.mubr.f32.mxu0 %v263
  %5221 = vmatmul.mubr.f32.gmra.mxu0 %v262
  %v5222 = vpop.f32.mrf.mxu0
  %v5223 = vadd.f32 %v5008, %v5222
  %v5224 = vpop.f32.mrf.mxu0
  %v5225 = vadd.f32 %v5010, %v5224
  %5226 = vmatprep.mubr.f32.mxu0 %v281
  %5227 = vmatmul.mubr.f32.gmra.mxu0 %v280
  %v5228 = vpop.f32.mrf.mxu0
  %v5229 = vadd.f32 %v5014, %v5228
  %v5230 = vpop.f32.mrf.mxu0
  %v5231 = vadd.f32 %v5016, %v5230
  %5232 = vmatprep.mubr.f32.mxu0 %v299
  %5233 = vmatmul.mubr.f32.gmra.mxu0 %v298
  %v5234 = vpop.f32.mrf.mxu0
  %v5235 = vadd.f32 %v5020, %v5234
  %v5236 = vpop.f32.mrf.mxu0
  %v5237 = vadd.f32 %v5022, %v5236
  %5238 = vmatprep.mubr.f32.mxu0 %v317
  %5239 = vmatmul.mubr.f32.gmra.mxu0 %v316
  %v5240 = vpop.f32.mrf.mxu0
  %v5241 = vadd.f32 %v5026, %v5240
  %v5242 = vpop.f32.mrf.mxu0
  %v5243 = vadd.f32 %v5028, %v5242
  %5244 = vmatprep.mubr.f32.mxu0 %v335
  %5245 = vmatmul.mubr.f32.gmra.mxu0 %v334
  %v5246 = vpop.f32.mrf.mxu0
  %v5247 = vadd.f32 %v5032, %v5246
  %v5248 = vpop.f32.mrf.mxu0
  %v5249 = vadd.f32 %v5034, %v5248
  %5250 = vmatprep.mubr.f32.mxu0 %v353
  %5251 = vmatmul.mubr.f32.gmra.mxu0 %v352
  %v5252 = vpop.f32.mrf.mxu0
  %v5253 = vadd.f32 %v5038, %v5252
  %v5254 = vpop.f32.mrf.mxu0
  %v5255 = vadd.f32 %v5040, %v5254
  %5256 = vmatprep.mubr.f32.mxu0 %v371
  %5257 = vmatmul.mubr.f32.gmra.mxu0 %v370
  %v5258 = vpop.f32.mrf.mxu0
  %v5259 = vadd.f32 %v5044, %v5258
  %v5260 = vpop.f32.mrf.mxu0
  %v5261 = vadd.f32 %v5046, %v5260
  %5262 = vmatprep.mubr.f32.mxu0 %v389
  %5263 = vmatmul.mubr.f32.gmra.mxu0 %v388
  %v5264 = vpop.f32.mrf.mxu0
  %v5265 = vadd.f32 %v5050, %v5264
  %v5266 = vpop.f32.mrf.mxu0
  %v5267 = vadd.f32 %v5052, %v5266
  %5268 = vmatprep.mubr.f32.mxu0 %v407
  %5269 = vmatmul.mubr.f32.gmra.mxu0 %v406
  %v5270 = vpop.f32.mrf.mxu0
  %v5271 = vadd.f32 %v5056, %v5270
  %v5272 = vpop.f32.mrf.mxu0
  %v5273 = vadd.f32 %v5058, %v5272
  %5274 = vmatprep.mubr.f32.mxu0 %v425
  %5275 = vmatmul.mubr.f32.gmra.mxu0 %v424
  %v5276 = vpop.f32.mrf.mxu0
  %v5277 = vadd.f32 %v5062, %v5276
  %v5278 = vpop.f32.mrf.mxu0
  %v5279 = vadd.f32 %v5064, %v5278
  %5280 = vmatprep.mubr.f32.mxu0 %v443
  %5281 = vmatmul.mubr.f32.gmra.mxu0 %v442
  %v5282 = vpop.f32.mrf.mxu0
  %v5283 = vadd.f32 %v5068, %v5282
  %v5284 = vpop.f32.mrf.mxu0
  %v5285 = vadd.f32 %v5070, %v5284
  %5286 = vmatprep.mubr.f32.mxu0 %v461
  %5287 = vmatmul.mubr.f32.gmra.mxu0 %v460
  %v5288 = vpop.f32.mrf.mxu0
  %v5289 = vadd.f32 %v5074, %v5288
  %v5290 = vpop.f32.mrf.mxu0
  %v5291 = vadd.f32 %v5076, %v5290
  %5292 = vdwg.mxu0
  %5293 = vmatprep.subr.mxu0 %v1551
  %5294 = vmatpush1.msra.mxu0 %v1550
  %5295 = vmatprep.subr.mxu0 %v1547
  %5296 = vmatpush1.msra.mxu0 %v1546
  %5297 = vmatprep.subr.mxu0 %v1543
  %5298 = vmatpush1.msra.mxu0 %v1542
  %5299 = vmatprep.subr.mxu0 %v1539
  %5300 = vmatpush1.msra.mxu0 %v1538
  %5301 = vmatprep.subr.mxu0 %v1535
  %5302 = vmatpush1.msra.mxu0 %v1534
  %5303 = vmatprep.subr.mxu0 %v1531
  %5304 = vmatpush1.msra.mxu0 %v1530
  %5305 = vmatprep.subr.mxu0 %v1527
  %5306 = vmatpush1.msra.mxu0 %v1526
  %5307 = vmatprep.subr.mxu0 %v1523
  %5308 = vmatpush1.msra.mxu0 %v1522
  %5309 = vmatprep.subr.mxu0 %v1519
  %5310 = vmatpush1.msra.mxu0 %v1518
  %5311 = vmatprep.subr.mxu0 %v1515
  %5312 = vmatpush1.msra.mxu0 %v1514
  %5313 = vmatprep.subr.mxu0 %v1511
  %5314 = vmatpush1.msra.mxu0 %v1510
  %5315 = vmatprep.subr.mxu0 %v1507
  %5316 = vmatpush1.msra.mxu0 %v1506
  %5317 = vmatprep.subr.mxu0 %v1503
  %5318 = vmatpush1.msra.mxu0 %v1502
  %5319 = vmatprep.subr.mxu0 %v1499
  %5320 = vmatpush1.msra.mxu0 %v1498
  %5321 = vmatprep.subr.mxu0 %v1495
  %5322 = vmatpush1.msra.mxu0 %v1494
  %5323 = vmatprep.subr.mxu0 %v1491
  %5324 = vmatpush1.msra.mxu0 %v1490
  %5325 = vmatprep.subr.mxu0 %v1615
  %5326 = vmatpush2.msra.mxu0 %v1614
  %5327 = vmatprep.subr.mxu0 %v1611
  %5328 = vmatpush2.msra.mxu0 %v1610
  %5329 = vmatprep.subr.mxu0 %v1607
  %5330 = vmatpush2.msra.mxu0 %v1606
  %5331 = vmatprep.subr.mxu0 %v1603
  %5332 = vmatpush2.msra.mxu0 %v1602
  %5333 = vmatprep.subr.mxu0 %v1599
  %5334 = vmatpush2.msra.mxu0 %v1598
  %5335 = vmatprep.subr.mxu0 %v1595
  %5336 = vmatpush2.msra.mxu0 %v1594
  %5337 = vmatprep.subr.mxu0 %v1591
  %5338 = vmatpush2.msra.mxu0 %v1590
  %5339 = vmatprep.subr.mxu0 %v1587
  %5340 = vmatpush2.msra.mxu0 %v1586
  %5341 = vmatprep.subr.mxu0 %v1583
  %5342 = vmatpush2.msra.mxu0 %v1582
  %5343 = vmatprep.subr.mxu0 %v1579
  %5344 = vmatpush2.msra.mxu0 %v1578
  %5345 = vmatprep.subr.mxu0 %v1575
  %5346 = vmatpush2.msra.mxu0 %v1574
  %5347 = vmatprep.subr.mxu0 %v1571
  %5348 = vmatpush2.msra.mxu0 %v1570
  %5349 = vmatprep.subr.mxu0 %v1567
  %5350 = vmatpush2.msra.mxu0 %v1566
  %5351 = vmatprep.subr.mxu0 %v1563
  %5352 = vmatpush2.msra.mxu0 %v1562
  %5353 = vmatprep.subr.mxu0 %v1559
  %5354 = vmatpush2.msra.mxu0 %v1558
  %5355 = vmatprep.subr.mxu0 %v1555
  %5356 = vmatpush2.msra.mxu0 %v1554
  %5357 = vmatprep.mubr.f32.mxu0 %v31
  %5358 = vmatmul.mubr.f32.gmra.mxu0 %v30
  %v5359 = vpop.f32.mrf.mxu0
  %v5360 = vadd.f32 %v5145, %v5359
  %v5361 = vpop.f32.mrf.mxu0
  %v5362 = vadd.f32 %v5147, %v5361
  %5363 = vmatprep.mubr.f32.mxu0 %v49
  %5364 = vmatmul.mubr.f32.gmra.mxu0 %v48
  %v5365 = vpop.f32.mrf.mxu0
  %v5366 = vadd.f32 %v5151, %v5365
  %v5367 = vpop.f32.mrf.mxu0
  %v5368 = vadd.f32 %v5153, %v5367
  %5369 = vmatprep.mubr.f32.mxu0 %v67
  %5370 = vmatmul.mubr.f32.gmra.mxu0 %v66
  %v5371 = vpop.f32.mrf.mxu0
  %v5372 = vadd.f32 %v5157, %v5371
  %v5373 = vpop.f32.mrf.mxu0
  %v5374 = vadd.f32 %v5159, %v5373
  %5375 = vmatprep.mubr.f32.mxu0 %v85
  %5376 = vmatmul.mubr.f32.gmra.mxu0 %v84
  %v5377 = vpop.f32.mrf.mxu0
  %v5378 = vadd.f32 %v5163, %v5377
  %v5379 = vpop.f32.mrf.mxu0
  %v5380 = vadd.f32 %v5165, %v5379
  %5381 = vmatprep.mubr.f32.mxu0 %v103
  %5382 = vmatmul.mubr.f32.gmra.mxu0 %v102
  %v5383 = vpop.f32.mrf.mxu0
  %v5384 = vadd.f32 %v5169, %v5383
  %v5385 = vpop.f32.mrf.mxu0
  %v5386 = vadd.f32 %v5171, %v5385
  %5387 = vmatprep.mubr.f32.mxu0 %v121
  %5388 = vmatmul.mubr.f32.gmra.mxu0 %v120
  %v5389 = vpop.f32.mrf.mxu0
  %v5390 = vadd.f32 %v5175, %v5389
  %v5391 = vpop.f32.mrf.mxu0
  %v5392 = vadd.f32 %v5177, %v5391
  %5393 = vmatprep.mubr.f32.mxu0 %v139
  %5394 = vmatmul.mubr.f32.gmra.mxu0 %v138
  %v5395 = vpop.f32.mrf.mxu0
  %v5396 = vadd.f32 %v5181, %v5395
  %v5397 = vpop.f32.mrf.mxu0
  %v5398 = vadd.f32 %v5183, %v5397
  %5399 = vmatprep.mubr.f32.mxu0 %v157
  %5400 = vmatmul.mubr.f32.gmra.mxu0 %v156
  %v5401 = vpop.f32.mrf.mxu0
  %v5402 = vadd.f32 %v5187, %v5401
  %v5403 = vpop.f32.mrf.mxu0
  %v5404 = vadd.f32 %v5189, %v5403
  %5405 = vmatprep.mubr.f32.mxu0 %v175
  %5406 = vmatmul.mubr.f32.gmra.mxu0 %v174
  %v5407 = vpop.f32.mrf.mxu0
  %v5408 = vadd.f32 %v5193, %v5407
  %v5409 = vpop.f32.mrf.mxu0
  %v5410 = vadd.f32 %v5195, %v5409
  %5411 = vmatprep.mubr.f32.mxu0 %v193
  %5412 = vmatmul.mubr.f32.gmra.mxu0 %v192
  %v5413 = vpop.f32.mrf.mxu0
  %v5414 = vadd.f32 %v5199, %v5413
  %v5415 = vpop.f32.mrf.mxu0
  %v5416 = vadd.f32 %v5201, %v5415
  %5417 = vmatprep.mubr.f32.mxu0 %v211
  %5418 = vmatmul.mubr.f32.gmra.mxu0 %v210
  %v5419 = vpop.f32.mrf.mxu0
  %v5420 = vadd.f32 %v5205, %v5419
  %v5421 = vpop.f32.mrf.mxu0
  %v5422 = vadd.f32 %v5207, %v5421
  %5423 = vmatprep.mubr.f32.mxu0 %v229
  %5424 = vmatmul.mubr.f32.gmra.mxu0 %v228
  %v5425 = vpop.f32.mrf.mxu0
  %v5426 = vadd.f32 %v5211, %v5425
  %v5427 = vpop.f32.mrf.mxu0
  %v5428 = vadd.f32 %v5213, %v5427
  %5429 = vmatprep.mubr.f32.mxu0 %v247
  %5430 = vmatmul.mubr.f32.gmra.mxu0 %v246
  %v5431 = vpop.f32.mrf.mxu0
  %v5432 = vadd.f32 %v5217, %v5431
  %v5433 = vpop.f32.mrf.mxu0
  %v5434 = vadd.f32 %v5219, %v5433
  %5435 = vmatprep.mubr.f32.mxu0 %v265
  %5436 = vmatmul.mubr.f32.gmra.mxu0 %v264
  %v5437 = vpop.f32.mrf.mxu0
  %v5438 = vadd.f32 %v5223, %v5437
  %v5439 = vpop.f32.mrf.mxu0
  %v5440 = vadd.f32 %v5225, %v5439
  %5441 = vmatprep.mubr.f32.mxu0 %v283
  %5442 = vmatmul.mubr.f32.gmra.mxu0 %v282
  %v5443 = vpop.f32.mrf.mxu0
  %v5444 = vadd.f32 %v5229, %v5443
  %v5445 = vpop.f32.mrf.mxu0
  %v5446 = vadd.f32 %v5231, %v5445
  %5447 = vmatprep.mubr.f32.mxu0 %v301
  %5448 = vmatmul.mubr.f32.gmra.mxu0 %v300
  %v5449 = vpop.f32.mrf.mxu0
  %v5450 = vadd.f32 %v5235, %v5449
  %v5451 = vpop.f32.mrf.mxu0
  %v5452 = vadd.f32 %v5237, %v5451
  %5453 = vmatprep.mubr.f32.mxu0 %v319
  %5454 = vmatmul.mubr.f32.gmra.mxu0 %v318
  %v5455 = vpop.f32.mrf.mxu0
  %v5456 = vadd.f32 %v5241, %v5455
  %v5457 = vpop.f32.mrf.mxu0
  %v5458 = vadd.f32 %v5243, %v5457
  %5459 = vmatprep.mubr.f32.mxu0 %v337
  %5460 = vmatmul.mubr.f32.gmra.mxu0 %v336
  %v5461 = vpop.f32.mrf.mxu0
  %v5462 = vadd.f32 %v5247, %v5461
  %v5463 = vpop.f32.mrf.mxu0
  %v5464 = vadd.f32 %v5249, %v5463
  %5465 = vmatprep.mubr.f32.mxu0 %v355
  %5466 = vmatmul.mubr.f32.gmra.mxu0 %v354
  %v5467 = vpop.f32.mrf.mxu0
  %v5468 = vadd.f32 %v5253, %v5467
  %v5469 = vpop.f32.mrf.mxu0
  %v5470 = vadd.f32 %v5255, %v5469
  %5471 = vmatprep.mubr.f32.mxu0 %v373
  %5472 = vmatmul.mubr.f32.gmra.mxu0 %v372
  %v5473 = vpop.f32.mrf.mxu0
  %v5474 = vadd.f32 %v5259, %v5473
  %v5475 = vpop.f32.mrf.mxu0
  %v5476 = vadd.f32 %v5261, %v5475
  %5477 = vmatprep.mubr.f32.mxu0 %v391
  %5478 = vmatmul.mubr.f32.gmra.mxu0 %v390
  %v5479 = vpop.f32.mrf.mxu0
  %v5480 = vadd.f32 %v5265, %v5479
  %v5481 = vpop.f32.mrf.mxu0
  %v5482 = vadd.f32 %v5267, %v5481
  %5483 = vmatprep.mubr.f32.mxu0 %v409
  %5484 = vmatmul.mubr.f32.gmra.mxu0 %v408
  %v5485 = vpop.f32.mrf.mxu0
  %v5486 = vadd.f32 %v5271, %v5485
  %v5487 = vpop.f32.mrf.mxu0
  %v5488 = vadd.f32 %v5273, %v5487
  %5489 = vmatprep.mubr.f32.mxu0 %v427
  %5490 = vmatmul.mubr.f32.gmra.mxu0 %v426
  %v5491 = vpop.f32.mrf.mxu0
  %v5492 = vadd.f32 %v5277, %v5491
  %v5493 = vpop.f32.mrf.mxu0
  %v5494 = vadd.f32 %v5279, %v5493
  %5495 = vmatprep.mubr.f32.mxu0 %v445
  %5496 = vmatmul.mubr.f32.gmra.mxu0 %v444
  %v5497 = vpop.f32.mrf.mxu0
  %v5498 = vadd.f32 %v5283, %v5497
  %v5499 = vpop.f32.mrf.mxu0
  %v5500 = vadd.f32 %v5285, %v5499
  %5501 = vmatprep.mubr.f32.mxu0 %v463
  %5502 = vmatmul.mubr.f32.gmra.mxu0 %v462
  %v5503 = vpop.f32.mrf.mxu0
  %v5504 = vadd.f32 %v5289, %v5503
  %v5505 = vpop.f32.mrf.mxu0
  %v5506 = vadd.f32 %v5291, %v5505
  %5507 = vdwg.mxu0
  %v5508 = vmax.f32 %v3425, 0.0
  %v5509 = vmax.f32 %v3427, 0.0
  %v5510 = vmax.f32 %v5360, 0.0
  %v5511 = vmax.f32 %v5362, 0.0
  %v5512 = vmax.f32 %v3431, 0.0
  %v5513 = vmax.f32 %v3433, 0.0
  %v5514 = vmax.f32 %v5366, 0.0
  %v5515 = vmax.f32 %v5368, 0.0
  %v5516 = vmax.f32 %v3437, 0.0
  %v5517 = vmax.f32 %v3439, 0.0
  %v5518 = vmax.f32 %v5372, 0.0
  %v5519 = vmax.f32 %v5374, 0.0
  %v5520 = vmax.f32 %v3443, 0.0
  %v5521 = vmax.f32 %v3445, 0.0
  %v5522 = vmax.f32 %v5378, 0.0
  %v5523 = vmax.f32 %v5380, 0.0
  %v5524 = vmax.f32 %v3449, 0.0
  %v5525 = vmax.f32 %v3451, 0.0
  %v5526 = vmax.f32 %v5384, 0.0
  %v5527 = vmax.f32 %v5386, 0.0
  %v5528 = vmax.f32 %v3455, 0.0
  %v5529 = vmax.f32 %v3457, 0.0
  %v5530 = vmax.f32 %v5390, 0.0
  %v5531 = vmax.f32 %v5392, 0.0
  %v5532 = vmax.f32 %v3461, 0.0
  %v5533 = vmax.f32 %v3463, 0.0
  %v5534 = vmax.f32 %v5396, 0.0
  %v5535 = vmax.f32 %v5398, 0.0
  %v5536 = vmax.f32 %v3467, 0.0
  %v5537 = vmax.f32 %v3469, 0.0
  %v5538 = vmax.f32 %v5402, 0.0
  %v5539 = vmax.f32 %v5404, 0.0
  %v5540 = vmax.f32 %v3473, 0.0
  %v5541 = vmax.f32 %v3475, 0.0
  %v5542 = vmax.f32 %v5408, 0.0
  %v5543 = vmax.f32 %v5410, 0.0
  %v5544 = vmax.f32 %v3479, 0.0
  %v5545 = vmax.f32 %v3481, 0.0
  %v5546 = vmax.f32 %v5414, 0.0
  %v5547 = vmax.f32 %v5416, 0.0
  %v5548 = vmax.f32 %v3485, 0.0
  %v5549 = vmax.f32 %v3487, 0.0
  %v5550 = vmax.f32 %v5420, 0.0
  %v5551 = vmax.f32 %v5422, 0.0
  %v5552 = vmax.f32 %v3491, 0.0
  %v5553 = vmax.f32 %v3493, 0.0
  %v5554 = vmax.f32 %v5426, 0.0
  %v5555 = vmax.f32 %v5428, 0.0
  %v5556 = vmax.f32 %v3497, 0.0
  %v5557 = vmax.f32 %v3499, 0.0
  %v5558 = vmax.f32 %v5432, 0.0
  %v5559 = vmax.f32 %v5434, 0.0
  %v5560 = vmax.f32 %v3503, 0.0
  %v5561 = vmax.f32 %v3505, 0.0
  %v5562 = vmax.f32 %v5438, 0.0
  %v5563 = vmax.f32 %v5440, 0.0
  %v5564 = vmax.f32 %v3509, 0.0
  %v5565 = vmax.f32 %v3511, 0.0
  %v5566 = vmax.f32 %v5444, 0.0
  %v5567 = vmax.f32 %v5446, 0.0
  %v5568 = vmax.f32 %v3515, 0.0
  %v5569 = vmax.f32 %v3517, 0.0
  %v5570 = vmax.f32 %v5450, 0.0
  %v5571 = vmax.f32 %v5452, 0.0
  %v5572 = vmax.f32 %v3521, 0.0
  %v5573 = vmax.f32 %v3523, 0.0
  %v5574 = vmax.f32 %v5456, 0.0
  %v5575 = vmax.f32 %v5458, 0.0
  %v5576 = vmax.f32 %v3527, 0.0
  %v5577 = vmax.f32 %v3529, 0.0
  %v5578 = vmax.f32 %v5462, 0.0
  %v5579 = vmax.f32 %v5464, 0.0
  %v5580 = vmax.f32 %v3533, 0.0
  %v5581 = vmax.f32 %v3535, 0.0
  %v5582 = vmax.f32 %v5468, 0.0
  %v5583 = vmax.f32 %v5470, 0.0
  %v5584 = vmax.f32 %v3539, 0.0
  %v5585 = vmax.f32 %v3541, 0.0
  %v5586 = vmax.f32 %v5474, 0.0
  %v5587 = vmax.f32 %v5476, 0.0
  %v5588 = vmax.f32 %v3545, 0.0
  %v5589 = vmax.f32 %v3547, 0.0
  %v5590 = vmax.f32 %v5480, 0.0
  %v5591 = vmax.f32 %v5482, 0.0
  %v5592 = vmax.f32 %v3551, 0.0
  %v5593 = vmax.f32 %v3553, 0.0
  %v5594 = vmax.f32 %v5486, 0.0
  %v5595 = vmax.f32 %v5488, 0.0
  %v5596 = vmax.f32 %v3557, 0.0
  %v5597 = vmax.f32 %v3559, 0.0
  %v5598 = vmax.f32 %v5492, 0.0
  %v5599 = vmax.f32 %v5494, 0.0
  %v5600 = vmax.f32 %v3563, 0.0
  %v5601 = vmax.f32 %v3565, 0.0
  %v5602 = vmax.f32 %v5498, 0.0
  %v5603 = vmax.f32 %v5500, 0.0
  %v5604 = vmax.f32 %v3569, 0.0
  %v5605 = vmax.f32 %v3571, 0.0
  %v5606 = vmax.f32 %v5504, 0.0
  %v5607 = vmax.f32 %v5506, 0.0
  %5608 = vst [vmem:[%s3] sm:$0xff] %v5508
  %5609 = vst [vmem:[%s3 + $0x8] sm:$0xff] %v5509
  %5610 = vst [vmem:[%s3 + $0x10] sm:$0xff] %v5510
  %5611 = vst [vmem:[%s3 + $0x18] sm:$0xff] %v5511
  %5612 = vst [vmem:[%s3 + $0x20] sm:$0xff] %v5512
  %5613 = vst [vmem:[%s3 + $0x28] sm:$0xff] %v5513
  %5614 = vst [vmem:[%s3 + $0x30] sm:$0xff] %v5514
  %5615 = vst [vmem:[%s3 + $0x38] sm:$0xff] %v5515
  %5616 = vst [vmem:[%s3 + $0x40] sm:$0xff] %v5516
  %5617 = vst [vmem:[%s3 + $0x48] sm:$0xff] %v5517
  %5618 = vst [vmem:[%s3 + $0x50] sm:$0xff] %v5518
  %5619 = vst [vmem:[%s3 + $0x58] sm:$0xff] %v5519
  %5620 = vst [vmem:[%s3 + $0x60] sm:$0xff] %v5520
  %5621 = vst [vmem:[%s3 + $0x68] sm:$0xff] %v5521
  %5622 = vst [vmem:[%s3 + $0x70] sm:$0xff] %v5522
  %5623 = vst [vmem:[%s3 + $0x78] sm:$0xff] %v5523
  %5624 = vst [vmem:[%s3 + $0x80] sm:$0xff] %v5524
  %5625 = vst [vmem:[%s3 + $0x88] sm:$0xff] %v5525
  %5626 = vst [vmem:[%s3 + $0x90] sm:$0xff] %v5526
  %5627 = vst [vmem:[%s3 + $0x98] sm:$0xff] %v5527
  %5628 = vst [vmem:[%s3 + $0xa0] sm:$0xff] %v5528
  %5629 = vst [vmem:[%s3 + $0xa8] sm:$0xff] %v5529
  %5630 = vst [vmem:[%s3 + $0xb0] sm:$0xff] %v5530
  %5631 = vst [vmem:[%s3 + $0xb8] sm:$0xff] %v5531
  %5632 = vst [vmem:[%s3 + $0xc0] sm:$0xff] %v5532
  %5633 = vst [vmem:[%s3 + $0xc8] sm:$0xff] %v5533
  %5634 = vst [vmem:[%s3 + $0xd0] sm:$0xff] %v5534
  %5635 = vst [vmem:[%s3 + $0xd8] sm:$0xff] %v5535
  %5636 = vst [vmem:[%s3 + $0xe0] sm:$0xff] %v5536
  %5637 = vst [vmem:[%s3 + $0xe8] sm:$0xff] %v5537
  %5638 = vst [vmem:[%s3 + $0xf0] sm:$0xff] %v5538
  %5639 = vst [vmem:[%s3 + $0xf8] sm:$0xff] %v5539
  %5640 = vst [vmem:[%s3 + $0x100] sm:$0xff] %v5540
  %5641 = vst [vmem:[%s3 + $0x108] sm:$0xff] %v5541
  %5642 = vst [vmem:[%s3 + $0x110] sm:$0xff] %v5542
  %5643 = vst [vmem:[%s3 + $0x118] sm:$0xff] %v5543
  %5644 = vst [vmem:[%s3 + $0x120] sm:$0xff] %v5544
  %5645 = vst [vmem:[%s3 + $0x128] sm:$0xff] %v5545
  %5646 = vst [vmem:[%s3 + $0x130] sm:$0xff] %v5546
  %5647 = vst [vmem:[%s3 + $0x138] sm:$0xff] %v5547
  %5648 = vst [vmem:[%s3 + $0x140] sm:$0xff] %v5548
  %5649 = vst [vmem:[%s3 + $0x148] sm:$0xff] %v5549
  %5650 = vst [vmem:[%s3 + $0x150] sm:$0xff] %v5550
  %5651 = vst [vmem:[%s3 + $0x158] sm:$0xff] %v5551
  %5652 = vst [vmem:[%s3 + $0x160] sm:$0xff] %v5552
  %5653 = vst [vmem:[%s3 + $0x168] sm:$0xff] %v5553
  %5654 = vst [vmem:[%s3 + $0x170] sm:$0xff] %v5554
  %5655 = vst [vmem:[%s3 + $0x178] sm:$0xff] %v5555
  %5656 = vst [vmem:[%s3 + $0x180] sm:$0xff] %v5556
  %5657 = vst [vmem:[%s3 + $0x188] sm:$0xff] %v5557
  %5658 = vst [vmem:[%s3 + $0x190] sm:$0xff] %v5558
  %5659 = vst [vmem:[%s3 + $0x198] sm:$0xff] %v5559
  %5660 = vst [vmem:[%s3 + $0x1a0] sm:$0xff] %v5560
  %5661 = vst [vmem:[%s3 + $0x1a8] sm:$0xff] %v5561
  %5662 = vst [vmem:[%s3 + $0x1b0] sm:$0xff] %v5562
  %5663 = vst [vmem:[%s3 + $0x1b8] sm:$0xff] %v5563
  %5664 = vst [vmem:[%s3 + $0x1c0] sm:$0xff] %v5564
  %5665 = vst [vmem:[%s3 + $0x1c8] sm:$0xff] %v5565
  %5666 = vst [vmem:[%s3 + $0x1d0] sm:$0xff] %v5566
  %5667 = vst [vmem:[%s3 + $0x1d8] sm:$0xff] %v5567
  %5668 = vst [vmem:[%s3 + $0x1e0] sm:$0xff] %v5568
  %5669 = vst [vmem:[%s3 + $0x1e8] sm:$0xff] %v5569
  %5670 = vst [vmem:[%s3 + $0x1f0] sm:$0xff] %v5570
  %5671 = vst [vmem:[%s3 + $0x1f8] sm:$0xff] %v5571
  %5672 = vst [vmem:[%s3 + $0x200] sm:$0xff] %v5572
  %5673 = vst [vmem:[%s3 + $0x208] sm:$0xff] %v5573
  %5674 = vst [vmem:[%s3 + $0x210] sm:$0xff] %v5574
  %5675 = vst [vmem:[%s3 + $0x218] sm:$0xff] %v5575
  %5676 = vst [vmem:[%s3 + $0x220] sm:$0xff] %v5576
  %5677 = vst [vmem:[%s3 + $0x228] sm:$0xff] %v5577
  %5678 = vst [vmem:[%s3 + $0x230] sm:$0xff] %v5578
  %5679 = vst [vmem:[%s3 + $0x238] sm:$0xff] %v5579
  %5680 = vst [vmem:[%s3 + $0x240] sm:$0xff] %v5580
  %5681 = vst [vmem:[%s3 + $0x248] sm:$0xff] %v5581
  %5682 = vst [vmem:[%s3 + $0x250] sm:$0xff] %v5582
  %5683 = vst [vmem:[%s3 + $0x258] sm:$0xff] %v5583
  %5684 = vst [vmem:[%s3 + $0x260] sm:$0xff] %v5584
  %5685 = vst [vmem:[%s3 + $0x268] sm:$0xff] %v5585
  %5686 = vst [vmem:[%s3 + $0x270] sm:$0xff] %v5586
  %5687 = vst [vmem:[%s3 + $0x278] sm:$0xff] %v5587
  %5688 = vst [vmem:[%s3 + $0x280] sm:$0xff] %v5588
  %5689 = vst [vmem:[%s3 + $0x288] sm:$0xff] %v5589
  %5690 = vst [vmem:[%s3 + $0x290] sm:$0xff] %v5590
  %5691 = vst [vmem:[%s3 + $0x298] sm:$0xff] %v5591
  %5692 = vst [vmem:[%s3 + $0x2a0] sm:$0xff] %v5592
  %5693 = vst [vmem:[%s3 + $0x2a8] sm:$0xff] %v5593
  %5694 = vst [vmem:[%s3 + $0x2b0] sm:$0xff] %v5594
  %5695 = vst [vmem:[%s3 + $0x2b8] sm:$0xff] %v5595
  %5696 = vst [vmem:[%s3 + $0x2c0] sm:$0xff] %v5596
  %5697 = vst [vmem:[%s3 + $0x2c8] sm:$0xff] %v5597
  %5698 = vst [vmem:[%s3 + $0x2d0] sm:$0xff] %v5598
  %5699 = vst [vmem:[%s3 + $0x2d8] sm:$0xff] %v5599
  %5700 = vst [vmem:[%s3 + $0x2e0] sm:$0xff] %v5600
  %5701 = vst [vmem:[%s3 + $0x2e8] sm:$0xff] %v5601
  %5702 = vst [vmem:[%s3 + $0x2f0] sm:$0xff] %v5602
  %5703 = vst [vmem:[%s3 + $0x2f8] sm:$0xff] %v5603
  %5704 = vst [vmem:[%s3 + $0x300] sm:$0xff] %v5604
  %5705 = vst [vmem:[%s3 + $0x308] sm:$0xff] %v5605
  %5706 = vst [vmem:[%s3 + $0x310] sm:$0xff] %v5606
  %5707 = vst [vmem:[%s3 + $0x318] sm:$0xff] %v5607
  // Predicated region
  $region14: #{auxiliary_convolutions.9} parent=0 // pred_check
    _
  $region15: #{auxiliary_convolutions.9} parent=0 // pred_check_branch
    %5709 = sbr.rel (0) target = $region17
  $region16: #{auxiliary_convolutions.9} parent=0 // pred_region
    _
  $region17: #{auxiliary_convolutions.9} parent=0 // pred_fallthru
    _
  // Predicated region
  $region18: #{auxiliary_convolutions.9} parent=0 // pred_check
    _
  $region19: #{auxiliary_convolutions.9} parent=0 // pred_check_branch
    %5711 = sbr.rel (0) target = $region21
  $region20: #{auxiliary_convolutions.9} parent=0 // pred_region
    _
  $region21: #{auxiliary_convolutions.9} parent=0 // pred_fallthru
    _

// kernel: auxiliary_convolutions.14
$region0: #{auxiliary_convolutions.14}
  #allocation0 [shape = 'u32[]', space=smem, size = 0x4, offset = 0x4, fixed_abs, tag = 'smem constant byte address 0x4 - core index']
  #allocation1 [shape = 'u32[144,128]{1,0:T(1,128)}', space=vmem, size = 0x12000, scoped, tag = 'internal scratch']
  %s0 = inlined_call_operand.vmem [shape: f32[24,256], index: 0, kind: input, shape index: {}]
  %s1 = inlined_call_operand.vmem [shape: f32[256,128], index: 1, kind: input, shape index: {}]
  %s2 = inlined_call_operand.vmem [shape: f32[1,128], index: 2, kind: input, shape index: {}]
  %s3 = inlined_call_operand.vmem [shape: f32[24,128], index: 3, kind: output, shape index: {}]
  %s4 = sld [smem:[#allocation0]]
  $region22: #{auxiliary_convolutions.14} parent=0
    _
  %s6 = ssub.s32 1, %s4
  %s7 = scalar_select 0, %s6, %s4
  // Predicated region
  $region2: #{auxiliary_convolutions.14} parent=0 // pred_check
    _
  $region3: #{auxiliary_convolutions.14} parent=0 // pred_check_branch
    %9 = sbr.rel (0) target = $region5
  $region4: #{auxiliary_convolutions.14} parent=0 // pred_region
    _
  $region5: #{auxiliary_convolutions.14} parent=0 // pred_fallthru
    _
  // Predicated region
  $region6: #{auxiliary_convolutions.14} parent=0 // pred_check
    _
  $region7: #{auxiliary_convolutions.14} parent=0 // pred_check_branch
    %11 = sbr.rel (0) target = $region9
  $region8: #{auxiliary_convolutions.14} parent=0 // pred_region
    _
  $region9: #{auxiliary_convolutions.14} parent=0 // pred_fallthru
    _
  // Predicated region
  $region10: #{auxiliary_convolutions.14} parent=0 // pred_check
    _
  $region11: #{auxiliary_convolutions.14} parent=0 // pred_check_branch
    %13 = sbr.rel (0) target = $region13
  $region12: #{auxiliary_convolutions.14} parent=0 // pred_region
    _
  $region13: #{auxiliary_convolutions.14} parent=0 // pred_fallthru
    _
  %v14 = vld [vmem:[%s0] sm:$0xff]
  %v15 = vld [vmem:[%s0 + $0x8] sm:$0xff]
  %v16 = vld [vmem:[%s0 + $0x10] sm:$0xff]
  %v17 = vld [vmem:[%s0 + $0x18] sm:$0xff]
  %v18 = vld [vmem:[%s0 + $0x20] sm:$0xff]
  %v19 = vld [vmem:[%s0 + $0x28] sm:$0xff]
  %v20 = vld [vmem:[%s1] sm:$0xff]
  %v21 = vld [vmem:[%s1 + $0x8] sm:$0xff]
  %v22 = vld [vmem:[%s1 + $0x10] sm:$0xff]
  %v23 = vld [vmem:[%s1 + $0x18] sm:$0xff]
  %v24 = vld [vmem:[%s1 + $0x20] sm:$0xff]
  %v25 = vld [vmem:[%s1 + $0x28] sm:$0xff]
  %v26 = vld [vmem:[%s1 + $0x30] sm:$0xff]
  %v27 = vld [vmem:[%s1 + $0x38] sm:$0xff]
  %v28 = vld [vmem:[%s1 + $0x40] sm:$0xff]
  %v29 = vld [vmem:[%s1 + $0x48] sm:$0xff]
  %v30 = vld [vmem:[%s1 + $0x50] sm:$0xff]
  %v31 = vld [vmem:[%s1 + $0x58] sm:$0xff]
  %v32 = vld [vmem:[%s1 + $0x60] sm:$0xff]
  %v33 = vld [vmem:[%s1 + $0x68] sm:$0xff]
  %v34 = vld [vmem:[%s1 + $0x70] sm:$0xff]
  %v35 = vld [vmem:[%s1 + $0x78] sm:$0xff]
  %v36 = vld [vmem:[%s1 + $0x80] sm:$0xff]
  %v37 = vld [vmem:[%s1 + $0x88] sm:$0xff]
  %v38 = vld [vmem:[%s1 + $0x90] sm:$0xff]
  %v39 = vld [vmem:[%s1 + $0x98] sm:$0xff]
  %v40 = vld [vmem:[%s1 + $0xa0] sm:$0xff]
  %v41 = vld [vmem:[%s1 + $0xa8] sm:$0xff]
  %v42 = vld [vmem:[%s1 + $0xb0] sm:$0xff]
  %v43 = vld [vmem:[%s1 + $0xb8] sm:$0xff]
  %v44 = vld [vmem:[%s1 + $0xc0] sm:$0xff]
  %v45 = vld [vmem:[%s1 + $0xc8] sm:$0xff]
  %v46 = vld [vmem:[%s1 + $0xd0] sm:$0xff]
  %v47 = vld [vmem:[%s1 + $0xd8] sm:$0xff]
  %v48 = vld [vmem:[%s1 + $0xe0] sm:$0xff]
  %v49 = vld [vmem:[%s1 + $0xe8] sm:$0xff]
  %v50 = vld [vmem:[%s1 + $0xf0] sm:$0xff]
  %v51 = vld [vmem:[%s1 + $0xf8] sm:$0xff]
  %v52 = vld [vmem:[%s2] sm:$0x1]
  %v54 = vlaneseq
  %v55 = vshrl.u32 %v54, 7
  %v56 = vsub.s32 0, %v55
  %v57 = vrot.slane %v52, %v56
  %59 = vmatprep.subr.mxu0 0.0
  %60 = vmatpush1.msra.mxu0 %v35
  %61 = vmatprep.subr.mxu0 0.0
  %62 = vmatpush1.msra.mxu0 %v34
  %63 = vmatprep.subr.mxu0 0.0
  %64 = vmatpush1.msra.mxu0 %v33
  %65 = vmatprep.subr.mxu0 0.0
  %66 = vmatpush1.msra.mxu0 %v32
  %67 = vmatprep.subr.mxu0 0.0
  %68 = vmatpush1.msra.mxu0 %v31
  %69 = vmatprep.subr.mxu0 0.0
  %70 = vmatpush1.msra.mxu0 %v30
  %71 = vmatprep.subr.mxu0 0.0
  %72 = vmatpush1.msra.mxu0 %v29
  %73 = vmatprep.subr.mxu0 0.0
  %74 = vmatpush1.msra.mxu0 %v28
  %75 = vmatprep.subr.mxu0 0.0
  %76 = vmatpush1.msra.mxu0 %v27
  %77 = vmatprep.subr.mxu0 0.0
  %78 = vmatpush1.msra.mxu0 %v26
  %79 = vmatprep.subr.mxu0 0.0
  %80 = vmatpush1.msra.mxu0 %v25
  %81 = vmatprep.subr.mxu0 0.0
  %82 = vmatpush1.msra.mxu0 %v24
  %83 = vmatprep.subr.mxu0 0.0
  %84 = vmatpush1.msra.mxu0 %v23
  %85 = vmatprep.subr.mxu0 0.0
  %86 = vmatpush1.msra.mxu0 %v22
  %87 = vmatprep.subr.mxu0 0.0
  %88 = vmatpush1.msra.mxu0 %v21
  %89 = vmatprep.subr.mxu0 0.0
  %90 = vmatpush1.msra.mxu0 %v20
  %91 = vmatprep.subr.mxu0 0.0
  %92 = vmatpush2.msra.mxu0 %v51
  %93 = vmatprep.subr.mxu0 0.0
  %94 = vmatpush2.msra.mxu0 %v50
  %95 = vmatprep.subr.mxu0 0.0
  %96 = vmatpush2.msra.mxu0 %v49
  %97 = vmatprep.subr.mxu0 0.0
  %98 = vmatpush2.msra.mxu0 %v48
  %99 = vmatprep.subr.mxu0 0.0
  %100 = vmatpush2.msra.mxu0 %v47
  %101 = vmatprep.subr.mxu0 0.0
  %102 = vmatpush2.msra.mxu0 %v46
  %103 = vmatprep.subr.mxu0 0.0
  %104 = vmatpush2.msra.mxu0 %v45
  %105 = vmatprep.subr.mxu0 0.0
  %106 = vmatpush2.msra.mxu0 %v44
  %107 = vmatprep.subr.mxu0 0.0
  %108 = vmatpush2.msra.mxu0 %v43
  %109 = vmatprep.subr.mxu0 0.0
  %110 = vmatpush2.msra.mxu0 %v42
  %111 = vmatprep.subr.mxu0 0.0
  %112 = vmatpush2.msra.mxu0 %v41
  %113 = vmatprep.subr.mxu0 0.0
  %114 = vmatpush2.msra.mxu0 %v40
  %115 = vmatprep.subr.mxu0 0.0
  %116 = vmatpush2.msra.mxu0 %v39
  %117 = vmatprep.subr.mxu0 0.0
  %118 = vmatpush2.msra.mxu0 %v38
  %119 = vmatprep.subr.mxu0 0.0
  %120 = vmatpush2.msra.mxu0 %v37
  %121 = vmatprep.subr.mxu0 0.0
  %122 = vmatpush2.msra.mxu0 %v36
  %123 = vmatprep.mubr.f32.mxu0 %v15
  %124 = vmatmul.mubr.f32.gmra.mxu0 %v14
  %v125 = vpop.f32.mrf.mxu0
  %v126 = vadd.f32 %v57, %v125
  %v127 = vpop.f32.mrf.mxu0
  %128 = vmatprep.mubr.f32.mxu0 %v17
  %129 = vmatmul.mubr.f32.gmra.mxu0 %v16
  %v130 = vpop.f32.mrf.mxu0
  %v131 = vadd.f32 %v57, %v130
  %v132 = vpop.f32.mrf.mxu0
  %133 = vmatprep.mubr.f32.mxu0 %v19
  %134 = vmatmul.mubr.f32.gmra.mxu0 %v18
  %v135 = vpop.f32.mrf.mxu0
  %v136 = vadd.f32 %v57, %v135
  %v137 = vpop.f32.mrf.mxu0
  %138 = vdwg.mxu0
  %v139 = vmax.f32 %v126, 0.0
  %v140 = vmax.f32 %v131, 0.0
  %v141 = vmax.f32 %v136, 0.0
  %142 = vst [vmem:[%s3] sm:$0xff] %v139
  %143 = vst [vmem:[%s3 + $0x8] sm:$0xff] %v140
  %144 = vst [vmem:[%s3 + $0x10] sm:$0xff] %v141
  // Predicated region
  $region14: #{auxiliary_convolutions.14} parent=0 // pred_check
    _
  $region15: #{auxiliary_convolutions.14} parent=0 // pred_check_branch
    %146 = sbr.rel (0) target = $region17
  $region16: #{auxiliary_convolutions.14} parent=0 // pred_region
    _
  $region17: #{auxiliary_convolutions.14} parent=0 // pred_fallthru
    _
  // Predicated region
  $region18: #{auxiliary_convolutions.14} parent=0 // pred_check
    _
  $region19: #{auxiliary_convolutions.14} parent=0 // pred_check_branch
    %148 = sbr.rel (0) target = $region21
  $region20: #{auxiliary_convolutions.14} parent=0 // pred_region
    _
  $region21: #{auxiliary_convolutions.14} parent=0 // pred_fallthru
    _

// kernel: auxiliary_convolutions.13
$region0: #{auxiliary_convolutions.13}
  #allocation0 [shape = 'u32[]', space=smem, size = 0x4, offset = 0x4, fixed_abs, tag = 'smem constant byte address 0x4 - core index']
  #allocation1 [shape = 'u32[144,128]{1,0:T(1,128)}', space=vmem, size = 0x12000, scoped, tag = 'internal scratch']
  %s0 = inlined_call_operand.vmem [shape: f32[24,1152], index: 0, kind: input, shape index: {}]
  %s1 = inlined_call_operand.vmem [shape: f32[1152,256], index: 1, kind: input, shape index: {}]
  %s2 = inlined_call_operand.vmem [shape: f32[1,256], index: 2, kind: input, shape index: {}]
  %s3 = inlined_call_operand.vmem [shape: f32[24,256], index: 3, kind: output, shape index: {}]
  %s4 = sld [smem:[#allocation0]]
  $region22: #{auxiliary_convolutions.13} parent=0
    _
  %s6 = ssub.s32 1, %s4
  %s7 = scalar_select 0, %s6, %s4
  // Predicated region
  $region2: #{auxiliary_convolutions.13} parent=0 // pred_check
    _
  $region3: #{auxiliary_convolutions.13} parent=0 // pred_check_branch
    %9 = sbr.rel (0) target = $region5
  $region4: #{auxiliary_convolutions.13} parent=0 // pred_region
    _
  $region5: #{auxiliary_convolutions.13} parent=0 // pred_fallthru
    _
  // Predicated region
  $region6: #{auxiliary_convolutions.13} parent=0 // pred_check
    _
  $region7: #{auxiliary_convolutions.13} parent=0 // pred_check_branch
    %11 = sbr.rel (0) target = $region9
  $region8: #{auxiliary_convolutions.13} parent=0 // pred_region
    _
  $region9: #{auxiliary_convolutions.13} parent=0 // pred_fallthru
    _
  // Predicated region
  $region10: #{auxiliary_convolutions.13} parent=0 // pred_check
    _
  $region11: #{auxiliary_convolutions.13} parent=0 // pred_check_branch
    %13 = sbr.rel (0) target = $region13
  $region12: #{auxiliary_convolutions.13} parent=0 // pred_region
    _
  $region13: #{auxiliary_convolutions.13} parent=0 // pred_fallthru
    _
  %v14 = vld [vmem:[%s0] sm:$0xff]
  %v15 = vld [vmem:[%s0 + $0x8] sm:$0xff]
  %v16 = vld [vmem:[%s0 + $0x10] sm:$0xff]
  %v17 = vld [vmem:[%s0 + $0x18] sm:$0xff]
  %v18 = vld [vmem:[%s0 + $0x20] sm:$0xff]
  %v19 = vld [vmem:[%s0 + $0x28] sm:$0xff]
  %v20 = vld [vmem:[%s0 + $0x30] sm:$0xff]
  %v21 = vld [vmem:[%s0 + $0x38] sm:$0xff]
  %v22 = vld [vmem:[%s0 + $0x40] sm:$0xff]
  %v23 = vld [vmem:[%s0 + $0x48] sm:$0xff]
  %v24 = vld [vmem:[%s0 + $0x50] sm:$0xff]
  %v25 = vld [vmem:[%s0 + $0x58] sm:$0xff]
  %v26 = vld [vmem:[%s0 + $0x60] sm:$0xff]
  %v27 = vld [vmem:[%s0 + $0x68] sm:$0xff]
  %v28 = vld [vmem:[%s0 + $0x70] sm:$0xff]
  %v29 = vld [vmem:[%s0 + $0x78] sm:$0xff]
  %v30 = vld [vmem:[%s0 + $0x80] sm:$0xff]
  %v31 = vld [vmem:[%s0 + $0x88] sm:$0xff]
  %v32 = vld [vmem:[%s0 + $0x90] sm:$0xff]
  %v33 = vld [vmem:[%s0 + $0x98] sm:$0xff]
  %v34 = vld [vmem:[%s0 + $0xa0] sm:$0xff]
  %v35 = vld [vmem:[%s0 + $0xa8] sm:$0xff]
  %v36 = vld [vmem:[%s0 + $0xb0] sm:$0xff]
  %v37 = vld [vmem:[%s0 + $0xb8] sm:$0xff]
  %v38 = vld [vmem:[%s0 + $0xc0] sm:$0xff]
  %v39 = vld [vmem:[%s0 + $0xc8] sm:$0xff]
  %v40 = vld [vmem:[%s0 + $0xd0] sm:$0xff]
  %v41 = vld [vmem:[%s1] sm:$0xff]
  %v42 = vld [vmem:[%s1 + $0x8] sm:$0xff]
  %v43 = vld [vmem:[%s1 + $0x10] sm:$0xff]
  %v44 = vld [vmem:[%s1 + $0x18] sm:$0xff]
  %v45 = vld [vmem:[%s1 + $0x20] sm:$0xff]
  %v46 = vld [vmem:[%s1 + $0x28] sm:$0xff]
  %v47 = vld [vmem:[%s1 + $0x30] sm:$0xff]
  %v48 = vld [vmem:[%s1 + $0x38] sm:$0xff]
  %v49 = vld [vmem:[%s1 + $0x40] sm:$0xff]
  %v50 = vld [vmem:[%s1 + $0x48] sm:$0xff]
  %v51 = vld [vmem:[%s1 + $0x50] sm:$0xff]
  %v52 = vld [vmem:[%s1 + $0x58] sm:$0xff]
  %v53 = vld [vmem:[%s1 + $0x60] sm:$0xff]
  %v54 = vld [vmem:[%s1 + $0x68] sm:$0xff]
  %v55 = vld [vmem:[%s1 + $0x70] sm:$0xff]
  %v56 = vld [vmem:[%s1 + $0x78] sm:$0xff]
  %v57 = vld [vmem:[%s1 + $0x80] sm:$0xff]
  %v58 = vld [vmem:[%s1 + $0x88] sm:$0xff]
  %v59 = vld [vmem:[%s1 + $0x90] sm:$0xff]
  %v60 = vld [vmem:[%s1 + $0x98] sm:$0xff]
  %v61 = vld [vmem:[%s1 + $0xa0] sm:$0xff]
  %v62 = vld [vmem:[%s1 + $0xa8] sm:$0xff]
  %v63 = vld [vmem:[%s1 + $0xb0] sm:$0xff]
  %v64 = vld [vmem:[%s1 + $0xb8] sm:$0xff]
  %v65 = vld [vmem:[%s1 + $0xc0] sm:$0xff]
  %v66 = vld [vmem:[%s1 + $0xc8] sm:$0xff]
  %v67 = vld [vmem:[%s1 + $0xd0] sm:$0xff]
  %v68 = vld [vmem:[%s1 + $0xd8] sm:$0xff]
  %v69 = vld [vmem:[%s1 + $0xe0] sm:$0xff]
  %v70 = vld [vmem:[%s1 + $0xe8] sm:$0xff]
  %v71 = vld [vmem:[%s1 + $0xf0] sm:$0xff]
  %v72 = vld [vmem:[%s1 + $0xf8] sm:$0xff]
  %v73 = vld [vmem:[%s1 + $0x100] sm:$0xff]
  %v74 = vld [vmem:[%s1 + $0x108] sm:$0xff]
  %v75 = vld [vmem:[%s1 + $0x110] sm:$0xff]
  %v76 = vld [vmem:[%s1 + $0x118] sm:$0xff]
  %v77 = vld [vmem:[%s1 + $0x120] sm:$0xff]
  %v78 = vld [vmem:[%s1 + $0x128] sm:$0xff]
  %v79 = vld [vmem:[%s1 + $0x130] sm:$0xff]
  %v80 = vld [vmem:[%s1 + $0x138] sm:$0xff]
  %v81 = vld [vmem:[%s1 + $0x140] sm:$0xff]
  %v82 = vld [vmem:[%s1 + $0x148] sm:$0xff]
  %v83 = vld [vmem:[%s1 + $0x150] sm:$0xff]
  %v84 = vld [vmem:[%s1 + $0x158] sm:$0xff]
  %v85 = vld [vmem:[%s1 + $0x160] sm:$0xff]
  %v86 = vld [vmem:[%s1 + $0x168] sm:$0xff]
  %v87 = vld [vmem:[%s1 + $0x170] sm:$0xff]
  %v88 = vld [vmem:[%s1 + $0x178] sm:$0xff]
  %v89 = vld [vmem:[%s1 + $0x180] sm:$0xff]
  %v90 = vld [vmem:[%s1 + $0x188] sm:$0xff]
  %v91 = vld [vmem:[%s1 + $0x190] sm:$0xff]
  %v92 = vld [vmem:[%s1 + $0x198] sm:$0xff]
  %v93 = vld [vmem:[%s1 + $0x1a0] sm:$0xff]
  %v94 = vld [vmem:[%s1 + $0x1a8] sm:$0xff]
  %v95 = vld [vmem:[%s1 + $0x1b0] sm:$0xff]
  %v96 = vld [vmem:[%s1 + $0x1b8] sm:$0xff]
  %v97 = vld [vmem:[%s1 + $0x1c0] sm:$0xff]
  %v98 = vld [vmem:[%s1 + $0x1c8] sm:$0xff]
  %v99 = vld [vmem:[%s1 + $0x1d0] sm:$0xff]
  %v100 = vld [vmem:[%s1 + $0x1d8] sm:$0xff]
  %v101 = vld [vmem:[%s1 + $0x1e0] sm:$0xff]
  %v102 = vld [vmem:[%s1 + $0x1e8] sm:$0xff]
  %v103 = vld [vmem:[%s1 + $0x1f0] sm:$0xff]
  %v104 = vld [vmem:[%s1 + $0x1f8] sm:$0xff]
  %v105 = vld [vmem:[%s1 + $0x200] sm:$0xff]
  %v106 = vld [vmem:[%s1 + $0x208] sm:$0xff]
  %v107 = vld [vmem:[%s1 + $0x210] sm:$0xff]
  %v108 = vld [vmem:[%s1 + $0x218] sm:$0xff]
  %v109 = vld [vmem:[%s1 + $0x220] sm:$0xff]
  %v110 = vld [vmem:[%s1 + $0x228] sm:$0xff]
  %v111 = vld [vmem:[%s1 + $0x230] sm:$0xff]
  %v112 = vld [vmem:[%s1 + $0x238] sm:$0xff]
  %v113 = vld [vmem:[%s1 + $0x240] sm:$0xff]
  %v114 = vld [vmem:[%s1 + $0x248] sm:$0xff]
  %v115 = vld [vmem:[%s1 + $0x250] sm:$0xff]
  %v116 = vld [vmem:[%s1 + $0x258] sm:$0xff]
  %v117 = vld [vmem:[%s1 + $0x260] sm:$0xff]
  %v118 = vld [vmem:[%s1 + $0x268] sm:$0xff]
  %v119 = vld [vmem:[%s1 + $0x270] sm:$0xff]
  %v120 = vld [vmem:[%s1 + $0x278] sm:$0xff]
  %v121 = vld [vmem:[%s1 + $0x280] sm:$0xff]
  %v122 = vld [vmem:[%s1 + $0x288] sm:$0xff]
  %v123 = vld [vmem:[%s1 + $0x290] sm:$0xff]
  %v124 = vld [vmem:[%s1 + $0x298] sm:$0xff]
  %v125 = vld [vmem:[%s1 + $0x2a0] sm:$0xff]
  %v126 = vld [vmem:[%s1 + $0x2a8] sm:$0xff]
  %v127 = vld [vmem:[%s1 + $0x2b0] sm:$0xff]
  %v128 = vld [vmem:[%s1 + $0x2b8] sm:$0xff]
  %v129 = vld [vmem:[%s1 + $0x2c0] sm:$0xff]
  %v130 = vld [vmem:[%s1 + $0x2c8] sm:$0xff]
  %v131 = vld [vmem:[%s1 + $0x2d0] sm:$0xff]
  %v132 = vld [vmem:[%s1 + $0x2d8] sm:$0xff]
  %v133 = vld [vmem:[%s1 + $0x2e0] sm:$0xff]
  %v134 = vld [vmem:[%s1 + $0x2e8] sm:$0xff]
  %v135 = vld [vmem:[%s1 + $0x2f0] sm:$0xff]
  %v136 = vld [vmem:[%s1 + $0x2f8] sm:$0xff]
  %v137 = vld [vmem:[%s1 + $0x300] sm:$0xff]
  %v138 = vld [vmem:[%s1 + $0x308] sm:$0xff]
  %v139 = vld [vmem:[%s1 + $0x310] sm:$0xff]
  %v140 = vld [vmem:[%s1 + $0x318] sm:$0xff]
  %v141 = vld [vmem:[%s1 + $0x320] sm:$0xff]
  %v142 = vld [vmem:[%s1 + $0x328] sm:$0xff]
  %v143 = vld [vmem:[%s1 + $0x330] sm:$0xff]
  %v144 = vld [vmem:[%s1 + $0x338] sm:$0xff]
  %v145 = vld [vmem:[%s1 + $0x340] sm:$0xff]
  %v146 = vld [vmem:[%s1 + $0x348] sm:$0xff]
  %v147 = vld [vmem:[%s1 + $0x350] sm:$0xff]
  %v148 = vld [vmem:[%s1 + $0x358] sm:$0xff]
  %v149 = vld [vmem:[%s1 + $0x360] sm:$0xff]
  %v150 = vld [vmem:[%s1 + $0x368] sm:$0xff]
  %v151 = vld [vmem:[%s1 + $0x370] sm:$0xff]
  %v152 = vld [vmem:[%s1 + $0x378] sm:$0xff]
  %v153 = vld [vmem:[%s1 + $0x380] sm:$0xff]
  %v154 = vld [vmem:[%s1 + $0x388] sm:$0xff]
  %v155 = vld [vmem:[%s1 + $0x390] sm:$0xff]
  %v156 = vld [vmem:[%s1 + $0x398] sm:$0xff]
  %v157 = vld [vmem:[%s1 + $0x3a0] sm:$0xff]
  %v158 = vld [vmem:[%s1 + $0x3a8] sm:$0xff]
  %v159 = vld [vmem:[%s1 + $0x3b0] sm:$0xff]
  %v160 = vld [vmem:[%s1 + $0x3b8] sm:$0xff]
  %v161 = vld [vmem:[%s1 + $0x3c0] sm:$0xff]
  %v162 = vld [vmem:[%s1 + $0x3c8] sm:$0xff]
  %v163 = vld [vmem:[%s1 + $0x3d0] sm:$0xff]
  %v164 = vld [vmem:[%s1 + $0x3d8] sm:$0xff]
  %v165 = vld [vmem:[%s1 + $0x3e0] sm:$0xff]
  %v166 = vld [vmem:[%s1 + $0x3e8] sm:$0xff]
  %v167 = vld [vmem:[%s1 + $0x3f0] sm:$0xff]
  %v168 = vld [vmem:[%s1 + $0x3f8] sm:$0xff]
  %v169 = vld [vmem:[%s1 + $0x400] sm:$0xff]
  %v170 = vld [vmem:[%s1 + $0x408] sm:$0xff]
  %v171 = vld [vmem:[%s1 + $0x410] sm:$0xff]
  %v172 = vld [vmem:[%s1 + $0x418] sm:$0xff]
  %v173 = vld [vmem:[%s1 + $0x420] sm:$0xff]
  %v174 = vld [vmem:[%s1 + $0x428] sm:$0xff]
  %v175 = vld [vmem:[%s1 + $0x430] sm:$0xff]
  %v176 = vld [vmem:[%s1 + $0x438] sm:$0xff]
  %v177 = vld [vmem:[%s1 + $0x440] sm:$0xff]
  %v178 = vld [vmem:[%s1 + $0x448] sm:$0xff]
  %v179 = vld [vmem:[%s1 + $0x450] sm:$0xff]
  %v180 = vld [vmem:[%s1 + $0x458] sm:$0xff]
  %v181 = vld [vmem:[%s1 + $0x460] sm:$0xff]
  %v182 = vld [vmem:[%s1 + $0x468] sm:$0xff]
  %v183 = vld [vmem:[%s1 + $0x470] sm:$0xff]
  %v184 = vld [vmem:[%s1 + $0x478] sm:$0xff]
  %v185 = vld [vmem:[%s1 + $0x480] sm:$0xff]
  %v186 = vld [vmem:[%s1 + $0x488] sm:$0xff]
  %v187 = vld [vmem:[%s1 + $0x490] sm:$0xff]
  %v188 = vld [vmem:[%s1 + $0x498] sm:$0xff]
  %v189 = vld [vmem:[%s1 + $0x4a0] sm:$0xff]
  %v190 = vld [vmem:[%s1 + $0x4a8] sm:$0xff]
  %v191 = vld [vmem:[%s1 + $0x4b0] sm:$0xff]
  %v192 = vld [vmem:[%s1 + $0x4b8] sm:$0xff]
  %v193 = vld [vmem:[%s1 + $0x4c0] sm:$0xff]
  %v194 = vld [vmem:[%s1 + $0x4c8] sm:$0xff]
  %v195 = vld [vmem:[%s1 + $0x4d0] sm:$0xff]
  %v196 = vld [vmem:[%s1 + $0x4d8] sm:$0xff]
  %v197 = vld [vmem:[%s1 + $0x4e0] sm:$0xff]
  %v198 = vld [vmem:[%s1 + $0x4e8] sm:$0xff]
  %v199 = vld [vmem:[%s1 + $0x4f0] sm:$0xff]
  %v200 = vld [vmem:[%s1 + $0x4f8] sm:$0xff]
  %v201 = vld [vmem:[%s1 + $0x500] sm:$0xff]
  %v202 = vld [vmem:[%s1 + $0x508] sm:$0xff]
  %v203 = vld [vmem:[%s1 + $0x510] sm:$0xff]
  %v204 = vld [vmem:[%s1 + $0x518] sm:$0xff]
  %v205 = vld [vmem:[%s1 + $0x520] sm:$0xff]
  %v206 = vld [vmem:[%s1 + $0x528] sm:$0xff]
  %v207 = vld [vmem:[%s1 + $0x530] sm:$0xff]
  %v208 = vld [vmem:[%s1 + $0x538] sm:$0xff]
  %v209 = vld [vmem:[%s1 + $0x540] sm:$0xff]
  %v210 = vld [vmem:[%s1 + $0x548] sm:$0xff]
  %v211 = vld [vmem:[%s1 + $0x550] sm:$0xff]
  %v212 = vld [vmem:[%s1 + $0x558] sm:$0xff]
  %v213 = vld [vmem:[%s1 + $0x560] sm:$0xff]
  %v214 = vld [vmem:[%s1 + $0x568] sm:$0xff]
  %v215 = vld [vmem:[%s1 + $0x570] sm:$0xff]
  %v216 = vld [vmem:[%s1 + $0x578] sm:$0xff]
  %v217 = vld [vmem:[%s1 + $0x580] sm:$0xff]
  %v218 = vld [vmem:[%s1 + $0x588] sm:$0xff]
  %v219 = vld [vmem:[%s1 + $0x590] sm:$0xff]
  %v220 = vld [vmem:[%s1 + $0x598] sm:$0xff]
  %v221 = vld [vmem:[%s1 + $0x5a0] sm:$0xff]
  %v222 = vld [vmem:[%s1 + $0x5a8] sm:$0xff]
  %v223 = vld [vmem:[%s1 + $0x5b0] sm:$0xff]
  %v224 = vld [vmem:[%s1 + $0x5b8] sm:$0xff]
  %v225 = vld [vmem:[%s1 + $0x5c0] sm:$0xff]
  %v226 = vld [vmem:[%s1 + $0x5c8] sm:$0xff]
  %v227 = vld [vmem:[%s1 + $0x5d0] sm:$0xff]
  %v228 = vld [vmem:[%s1 + $0x5d8] sm:$0xff]
  %v229 = vld [vmem:[%s1 + $0x5e0] sm:$0xff]
  %v230 = vld [vmem:[%s1 + $0x5e8] sm:$0xff]
  %v231 = vld [vmem:[%s1 + $0x5f0] sm:$0xff]
  %v232 = vld [vmem:[%s1 + $0x5f8] sm:$0xff]
  %v233 = vld [vmem:[%s1 + $0x600] sm:$0xff]
  %v234 = vld [vmem:[%s1 + $0x608] sm:$0xff]
  %v235 = vld [vmem:[%s1 + $0x610] sm:$0xff]
  %v236 = vld [vmem:[%s1 + $0x618] sm:$0xff]
  %v237 = vld [vmem:[%s1 + $0x620] sm:$0xff]
  %v238 = vld [vmem:[%s1 + $0x628] sm:$0xff]
  %v239 = vld [vmem:[%s1 + $0x630] sm:$0xff]
  %v240 = vld [vmem:[%s1 + $0x638] sm:$0xff]
  %v241 = vld [vmem:[%s1 + $0x640] sm:$0xff]
  %v242 = vld [vmem:[%s1 + $0x648] sm:$0xff]
  %v243 = vld [vmem:[%s1 + $0x650] sm:$0xff]
  %v244 = vld [vmem:[%s1 + $0x658] sm:$0xff]
  %v245 = vld [vmem:[%s1 + $0x660] sm:$0xff]
  %v246 = vld [vmem:[%s1 + $0x668] sm:$0xff]
  %v247 = vld [vmem:[%s1 + $0x670] sm:$0xff]
  %v248 = vld [vmem:[%s1 + $0x678] sm:$0xff]
  %v249 = vld [vmem:[%s1 + $0x680] sm:$0xff]
  %v250 = vld [vmem:[%s1 + $0x688] sm:$0xff]
  %v251 = vld [vmem:[%s1 + $0x690] sm:$0xff]
  %v252 = vld [vmem:[%s1 + $0x698] sm:$0xff]
  %v253 = vld [vmem:[%s1 + $0x6a0] sm:$0xff]
  %v254 = vld [vmem:[%s1 + $0x6a8] sm:$0xff]
  %v255 = vld [vmem:[%s1 + $0x6b0] sm:$0xff]
  %v256 = vld [vmem:[%s1 + $0x6b8] sm:$0xff]
  %v257 = vld [vmem:[%s1 + $0x6c0] sm:$0xff]
  %v258 = vld [vmem:[%s1 + $0x6c8] sm:$0xff]
  %v259 = vld [vmem:[%s1 + $0x6d0] sm:$0xff]
  %v260 = vld [vmem:[%s1 + $0x6d8] sm:$0xff]
  %v261 = vld [vmem:[%s1 + $0x6e0] sm:$0xff]
  %v262 = vld [vmem:[%s1 + $0x6e8] sm:$0xff]
  %v263 = vld [vmem:[%s1 + $0x6f0] sm:$0xff]
  %v264 = vld [vmem:[%s1 + $0x6f8] sm:$0xff]
  %v265 = vld [vmem:[%s1 + $0x700] sm:$0xff]
  %v266 = vld [vmem:[%s1 + $0x708] sm:$0xff]
  %v267 = vld [vmem:[%s1 + $0x710] sm:$0xff]
  %v268 = vld [vmem:[%s1 + $0x718] sm:$0xff]
  %v269 = vld [vmem:[%s1 + $0x720] sm:$0xff]
  %v270 = vld [vmem:[%s1 + $0x728] sm:$0xff]
  %v271 = vld [vmem:[%s1 + $0x730] sm:$0xff]
  %v272 = vld [vmem:[%s1 + $0x738] sm:$0xff]
  %v273 = vld [vmem:[%s1 + $0x740] sm:$0xff]
  %v274 = vld [vmem:[%s1 + $0x748] sm:$0xff]
  %v275 = vld [vmem:[%s1 + $0x750] sm:$0xff]
  %v276 = vld [vmem:[%s1 + $0x758] sm:$0xff]
  %v277 = vld [vmem:[%s1 + $0x760] sm:$0xff]
  %v278 = vld [vmem:[%s1 + $0x768] sm:$0xff]
  %v279 = vld [vmem:[%s1 + $0x770] sm:$0xff]
  %v280 = vld [vmem:[%s1 + $0x778] sm:$0xff]
  %v281 = vld [vmem:[%s1 + $0x780] sm:$0xff]
  %v282 = vld [vmem:[%s1 + $0x788] sm:$0xff]
  %v283 = vld [vmem:[%s1 + $0x790] sm:$0xff]
  %v284 = vld [vmem:[%s1 + $0x798] sm:$0xff]
  %v285 = vld [vmem:[%s1 + $0x7a0] sm:$0xff]
  %v286 = vld [vmem:[%s1 + $0x7a8] sm:$0xff]
  %v287 = vld [vmem:[%s1 + $0x7b0] sm:$0xff]
  %v288 = vld [vmem:[%s1 + $0x7b8] sm:$0xff]
  %v289 = vld [vmem:[%s1 + $0x7c0] sm:$0xff]
  %v290 = vld [vmem:[%s1 + $0x7c8] sm:$0xff]
  %v291 = vld [vmem:[%s1 + $0x7d0] sm:$0xff]
  %v292 = vld [vmem:[%s1 + $0x7d8] sm:$0xff]
  %v293 = vld [vmem:[%s1 + $0x7e0] sm:$0xff]
  %v294 = vld [vmem:[%s1 + $0x7e8] sm:$0xff]
  %v295 = vld [vmem:[%s1 + $0x7f0] sm:$0xff]
  %v296 = vld [vmem:[%s1 + $0x7f8] sm:$0xff]
  %v297 = vld [vmem:[%s1 + $0x800] sm:$0xff]
  %v298 = vld [vmem:[%s1 + $0x808] sm:$0xff]
  %v299 = vld [vmem:[%s1 + $0x810] sm:$0xff]
  %v300 = vld [vmem:[%s1 + $0x818] sm:$0xff]
  %v301 = vld [vmem:[%s1 + $0x820] sm:$0xff]
  %v302 = vld [vmem:[%s1 + $0x828] sm:$0xff]
  %v303 = vld [vmem:[%s1 + $0x830] sm:$0xff]
  %v304 = vld [vmem:[%s1 + $0x838] sm:$0xff]
  %v305 = vld [vmem:[%s1 + $0x840] sm:$0xff]
  %v306 = vld [vmem:[%s1 + $0x848] sm:$0xff]
  %v307 = vld [vmem:[%s1 + $0x850] sm:$0xff]
  %v308 = vld [vmem:[%s1 + $0x858] sm:$0xff]
  %v309 = vld [vmem:[%s1 + $0x860] sm:$0xff]
  %v310 = vld [vmem:[%s1 + $0x868] sm:$0xff]
  %v311 = vld [vmem:[%s1 + $0x870] sm:$0xff]
  %v312 = vld [vmem:[%s1 + $0x878] sm:$0xff]
  %v313 = vld [vmem:[%s1 + $0x880] sm:$0xff]
  %v314 = vld [vmem:[%s1 + $0x888] sm:$0xff]
  %v315 = vld [vmem:[%s1 + $0x890] sm:$0xff]
  %v316 = vld [vmem:[%s1 + $0x898] sm:$0xff]
  %v317 = vld [vmem:[%s1 + $0x8a0] sm:$0xff]
  %v318 = vld [vmem:[%s1 + $0x8a8] sm:$0xff]
  %v319 = vld [vmem:[%s1 + $0x8b0] sm:$0xff]
  %v320 = vld [vmem:[%s1 + $0x8b8] sm:$0xff]
  %v321 = vld [vmem:[%s1 + $0x8c0] sm:$0xff]
  %v322 = vld [vmem:[%s1 + $0x8c8] sm:$0xff]
  %v323 = vld [vmem:[%s1 + $0x8d0] sm:$0xff]
  %v324 = vld [vmem:[%s1 + $0x8d8] sm:$0xff]
  %v325 = vld [vmem:[%s1 + $0x8e0] sm:$0xff]
  %v326 = vld [vmem:[%s1 + $0x8e8] sm:$0xff]
  %v327 = vld [vmem:[%s1 + $0x8f0] sm:$0xff]
  %v328 = vld [vmem:[%s1 + $0x8f8] sm:$0xff]
  %v329 = vld [vmem:[%s2] sm:$0x3]
  %v331 = vlaneseq
  %v332 = vshrl.u32 %v331, 7
  %v333 = vsub.s32 0, %v332
  %v334 = vrot.slane %v329, %v333
  %v335 = vlaneseq
  %v336 = vshrl.u32 %v335, 7
  %v337 = vsub.s32 1, %v336
  %v338 = vrot.slane %v329, %v337
  %341 = vmatprep.subr.mxu0 %v72
  %342 = vmatpush1.msra.mxu0 %v71
  %343 = vmatprep.subr.mxu0 %v70
  %344 = vmatpush1.msra.mxu0 %v69
  %345 = vmatprep.subr.mxu0 %v68
  %346 = vmatpush1.msra.mxu0 %v67
  %347 = vmatprep.subr.mxu0 %v66
  %348 = vmatpush1.msra.mxu0 %v65
  %349 = vmatprep.subr.mxu0 %v64
  %350 = vmatpush1.msra.mxu0 %v63
  %351 = vmatprep.subr.mxu0 %v62
  %352 = vmatpush1.msra.mxu0 %v61
  %353 = vmatprep.subr.mxu0 %v60
  %354 = vmatpush1.msra.mxu0 %v59
  %355 = vmatprep.subr.mxu0 %v58
  %356 = vmatpush1.msra.mxu0 %v57
  %357 = vmatprep.subr.mxu0 %v56
  %358 = vmatpush1.msra.mxu0 %v55
  %359 = vmatprep.subr.mxu0 %v54
  %360 = vmatpush1.msra.mxu0 %v53
  %361 = vmatprep.subr.mxu0 %v52
  %362 = vmatpush1.msra.mxu0 %v51
  %363 = vmatprep.subr.mxu0 %v50
  %364 = vmatpush1.msra.mxu0 %v49
  %365 = vmatprep.subr.mxu0 %v48
  %366 = vmatpush1.msra.mxu0 %v47
  %367 = vmatprep.subr.mxu0 %v46
  %368 = vmatpush1.msra.mxu0 %v45
  %369 = vmatprep.subr.mxu0 %v44
  %370 = vmatpush1.msra.mxu0 %v43
  %371 = vmatprep.subr.mxu0 %v42
  %372 = vmatpush1.msra.mxu0 %v41
  %373 = vmatprep.subr.mxu0 %v104
  %374 = vmatpush2.msra.mxu0 %v103
  %375 = vmatprep.subr.mxu0 %v102
  %376 = vmatpush2.msra.mxu0 %v101
  %377 = vmatprep.subr.mxu0 %v100
  %378 = vmatpush2.msra.mxu0 %v99
  %379 = vmatprep.subr.mxu0 %v98
  %380 = vmatpush2.msra.mxu0 %v97
  %381 = vmatprep.subr.mxu0 %v96
  %382 = vmatpush2.msra.mxu0 %v95
  %383 = vmatprep.subr.mxu0 %v94
  %384 = vmatpush2.msra.mxu0 %v93
  %385 = vmatprep.subr.mxu0 %v92
  %386 = vmatpush2.msra.mxu0 %v91
  %387 = vmatprep.subr.mxu0 %v90
  %388 = vmatpush2.msra.mxu0 %v89
  %389 = vmatprep.subr.mxu0 %v88
  %390 = vmatpush2.msra.mxu0 %v87
  %391 = vmatprep.subr.mxu0 %v86
  %392 = vmatpush2.msra.mxu0 %v85
  %393 = vmatprep.subr.mxu0 %v84
  %394 = vmatpush2.msra.mxu0 %v83
  %395 = vmatprep.subr.mxu0 %v82
  %396 = vmatpush2.msra.mxu0 %v81
  %397 = vmatprep.subr.mxu0 %v80
  %398 = vmatpush2.msra.mxu0 %v79
  %399 = vmatprep.subr.mxu0 %v78
  %400 = vmatpush2.msra.mxu0 %v77
  %401 = vmatprep.subr.mxu0 %v76
  %402 = vmatpush2.msra.mxu0 %v75
  %403 = vmatprep.subr.mxu0 %v74
  %404 = vmatpush2.msra.mxu0 %v73
  %405 = vmatprep.mubr.f32.mxu0 %v15
  %406 = vmatmul.mubr.f32.gmra.mxu0 %v14
  %v407 = vpop.f32.mrf.mxu0
  %v408 = vadd.f32 %v334, %v407
  %v409 = vpop.f32.mrf.mxu0
  %v410 = vadd.f32 %v338, %v409
  %411 = vmatprep.mubr.f32.mxu0 %v24
  %412 = vmatmul.mubr.f32.gmra.mxu0 %v23
  %v413 = vpop.f32.mrf.mxu0
  %v414 = vadd.f32 %v334, %v413
  %v415 = vpop.f32.mrf.mxu0
  %v416 = vadd.f32 %v338, %v415
  %417 = vmatprep.mubr.f32.mxu0 %v33
  %418 = vmatmul.mubr.f32.gmra.mxu0 %v32
  %v419 = vpop.f32.mrf.mxu0
  %v420 = vadd.f32 %v334, %v419
  %v421 = vpop.f32.mrf.mxu0
  %v422 = vadd.f32 %v338, %v421
  %423 = vdwg.mxu0
  %424 = vmatprep.subr.mxu0 %v136
  %425 = vmatpush1.msra.mxu0 %v135
  %426 = vmatprep.subr.mxu0 %v134
  %427 = vmatpush1.msra.mxu0 %v133
  %428 = vmatprep.subr.mxu0 %v132
  %429 = vmatpush1.msra.mxu0 %v131
  %430 = vmatprep.subr.mxu0 %v130
  %431 = vmatpush1.msra.mxu0 %v129
  %432 = vmatprep.subr.mxu0 %v128
  %433 = vmatpush1.msra.mxu0 %v127
  %434 = vmatprep.subr.mxu0 %v126
  %435 = vmatpush1.msra.mxu0 %v125
  %436 = vmatprep.subr.mxu0 %v124
  %437 = vmatpush1.msra.mxu0 %v123
  %438 = vmatprep.subr.mxu0 %v122
  %439 = vmatpush1.msra.mxu0 %v121
  %440 = vmatprep.subr.mxu0 %v120
  %441 = vmatpush1.msra.mxu0 %v119
  %442 = vmatprep.subr.mxu0 %v118
  %443 = vmatpush1.msra.mxu0 %v117
  %444 = vmatprep.subr.mxu0 %v116
  %445 = vmatpush1.msra.mxu0 %v115
  %446 = vmatprep.subr.mxu0 %v114
  %447 = vmatpush1.msra.mxu0 %v113
  %448 = vmatprep.subr.mxu0 %v112
  %449 = vmatpush1.msra.mxu0 %v111
  %450 = vmatprep.subr.mxu0 %v110
  %451 = vmatpush1.msra.mxu0 %v109
  %452 = vmatprep.subr.mxu0 %v108
  %453 = vmatpush1.msra.mxu0 %v107
  %454 = vmatprep.subr.mxu0 %v106
  %455 = vmatpush1.msra.mxu0 %v105
  %456 = vmatprep.subr.mxu0 %v168
  %457 = vmatpush2.msra.mxu0 %v167
  %458 = vmatprep.subr.mxu0 %v166
  %459 = vmatpush2.msra.mxu0 %v165
  %460 = vmatprep.subr.mxu0 %v164
  %461 = vmatpush2.msra.mxu0 %v163
  %462 = vmatprep.subr.mxu0 %v162
  %463 = vmatpush2.msra.mxu0 %v161
  %464 = vmatprep.subr.mxu0 %v160
  %465 = vmatpush2.msra.mxu0 %v159
  %466 = vmatprep.subr.mxu0 %v158
  %467 = vmatpush2.msra.mxu0 %v157
  %468 = vmatprep.subr.mxu0 %v156
  %469 = vmatpush2.msra.mxu0 %v155
  %470 = vmatprep.subr.mxu0 %v154
  %471 = vmatpush2.msra.mxu0 %v153
  %472 = vmatprep.subr.mxu0 %v152
  %473 = vmatpush2.msra.mxu0 %v151
  %474 = vmatprep.subr.mxu0 %v150
  %475 = vmatpush2.msra.mxu0 %v149
  %476 = vmatprep.subr.mxu0 %v148
  %477 = vmatpush2.msra.mxu0 %v147
  %478 = vmatprep.subr.mxu0 %v146
  %479 = vmatpush2.msra.mxu0 %v145
  %480 = vmatprep.subr.mxu0 %v144
  %481 = vmatpush2.msra.mxu0 %v143
  %482 = vmatprep.subr.mxu0 %v142
  %483 = vmatpush2.msra.mxu0 %v141
  %484 = vmatprep.subr.mxu0 %v140
  %485 = vmatpush2.msra.mxu0 %v139
  %486 = vmatprep.subr.mxu0 %v138
  %487 = vmatpush2.msra.mxu0 %v137
  %488 = vmatprep.mubr.f32.mxu0 %v17
  %489 = vmatmul.mubr.f32.gmra.mxu0 %v16
  %v490 = vpop.f32.mrf.mxu0
  %v491 = vadd.f32 %v408, %v490
  %v492 = vpop.f32.mrf.mxu0
  %v493 = vadd.f32 %v410, %v492
  %494 = vmatprep.mubr.f32.mxu0 %v26
  %495 = vmatmul.mubr.f32.gmra.mxu0 %v25
  %v496 = vpop.f32.mrf.mxu0
  %v497 = vadd.f32 %v414, %v496
  %v498 = vpop.f32.mrf.mxu0
  %v499 = vadd.f32 %v416, %v498
  %500 = vmatprep.mubr.f32.mxu0 %v35
  %501 = vmatmul.mubr.f32.gmra.mxu0 %v34
  %v502 = vpop.f32.mrf.mxu0
  %v503 = vadd.f32 %v420, %v502
  %v504 = vpop.f32.mrf.mxu0
  %v505 = vadd.f32 %v422, %v504
  %506 = vdwg.mxu0
  %507 = vmatprep.subr.mxu0 %v200
  %508 = vmatpush1.msra.mxu0 %v199
  %509 = vmatprep.subr.mxu0 %v198
  %510 = vmatpush1.msra.mxu0 %v197
  %511 = vmatprep.subr.mxu0 %v196
  %512 = vmatpush1.msra.mxu0 %v195
  %513 = vmatprep.subr.mxu0 %v194
  %514 = vmatpush1.msra.mxu0 %v193
  %515 = vmatprep.subr.mxu0 %v192
  %516 = vmatpush1.msra.mxu0 %v191
  %517 = vmatprep.subr.mxu0 %v190
  %518 = vmatpush1.msra.mxu0 %v189
  %519 = vmatprep.subr.mxu0 %v188
  %520 = vmatpush1.msra.mxu0 %v187
  %521 = vmatprep.subr.mxu0 %v186
  %522 = vmatpush1.msra.mxu0 %v185
  %523 = vmatprep.subr.mxu0 %v184
  %524 = vmatpush1.msra.mxu0 %v183
  %525 = vmatprep.subr.mxu0 %v182
  %526 = vmatpush1.msra.mxu0 %v181
  %527 = vmatprep.subr.mxu0 %v180
  %528 = vmatpush1.msra.mxu0 %v179
  %529 = vmatprep.subr.mxu0 %v178
  %530 = vmatpush1.msra.mxu0 %v177
  %531 = vmatprep.subr.mxu0 %v176
  %532 = vmatpush1.msra.mxu0 %v175
  %533 = vmatprep.subr.mxu0 %v174
  %534 = vmatpush1.msra.mxu0 %v173
  %535 = vmatprep.subr.mxu0 %v172
  %536 = vmatpush1.msra.mxu0 %v171
  %537 = vmatprep.subr.mxu0 %v170
  %538 = vmatpush1.msra.mxu0 %v169
  %539 = vmatprep.subr.mxu0 %v232
  %540 = vmatpush2.msra.mxu0 %v231
  %541 = vmatprep.subr.mxu0 %v230
  %542 = vmatpush2.msra.mxu0 %v229
  %543 = vmatprep.subr.mxu0 %v228
  %544 = vmatpush2.msra.mxu0 %v227
  %545 = vmatprep.subr.mxu0 %v226
  %546 = vmatpush2.msra.mxu0 %v225
  %547 = vmatprep.subr.mxu0 %v224
  %548 = vmatpush2.msra.mxu0 %v223
  %549 = vmatprep.subr.mxu0 %v222
  %550 = vmatpush2.msra.mxu0 %v221
  %551 = vmatprep.subr.mxu0 %v220
  %552 = vmatpush2.msra.mxu0 %v219
  %553 = vmatprep.subr.mxu0 %v218
  %554 = vmatpush2.msra.mxu0 %v217
  %555 = vmatprep.subr.mxu0 %v216
  %556 = vmatpush2.msra.mxu0 %v215
  %557 = vmatprep.subr.mxu0 %v214
  %558 = vmatpush2.msra.mxu0 %v213
  %559 = vmatprep.subr.mxu0 %v212
  %560 = vmatpush2.msra.mxu0 %v211
  %561 = vmatprep.subr.mxu0 %v210
  %562 = vmatpush2.msra.mxu0 %v209
  %563 = vmatprep.subr.mxu0 %v208
  %564 = vmatpush2.msra.mxu0 %v207
  %565 = vmatprep.subr.mxu0 %v206
  %566 = vmatpush2.msra.mxu0 %v205
  %567 = vmatprep.subr.mxu0 %v204
  %568 = vmatpush2.msra.mxu0 %v203
  %569 = vmatprep.subr.mxu0 %v202
  %570 = vmatpush2.msra.mxu0 %v201
  %571 = vmatprep.mubr.f32.mxu0 %v19
  %572 = vmatmul.mubr.f32.gmra.mxu0 %v18
  %v573 = vpop.f32.mrf.mxu0
  %v574 = vadd.f32 %v491, %v573
  %v575 = vpop.f32.mrf.mxu0
  %v576 = vadd.f32 %v493, %v575
  %577 = vmatprep.mubr.f32.mxu0 %v28
  %578 = vmatmul.mubr.f32.gmra.mxu0 %v27
  %v579 = vpop.f32.mrf.mxu0
  %v580 = vadd.f32 %v497, %v579
  %v581 = vpop.f32.mrf.mxu0
  %v582 = vadd.f32 %v499, %v581
  %583 = vmatprep.mubr.f32.mxu0 %v37
  %584 = vmatmul.mubr.f32.gmra.mxu0 %v36
  %v585 = vpop.f32.mrf.mxu0
  %v586 = vadd.f32 %v503, %v585
  %v587 = vpop.f32.mrf.mxu0
  %v588 = vadd.f32 %v505, %v587
  %589 = vdwg.mxu0
  %590 = vmatprep.subr.mxu0 %v264
  %591 = vmatpush1.msra.mxu0 %v263
  %592 = vmatprep.subr.mxu0 %v262
  %593 = vmatpush1.msra.mxu0 %v261
  %594 = vmatprep.subr.mxu0 %v260
  %595 = vmatpush1.msra.mxu0 %v259
  %596 = vmatprep.subr.mxu0 %v258
  %597 = vmatpush1.msra.mxu0 %v257
  %598 = vmatprep.subr.mxu0 %v256
  %599 = vmatpush1.msra.mxu0 %v255
  %600 = vmatprep.subr.mxu0 %v254
  %601 = vmatpush1.msra.mxu0 %v253
  %602 = vmatprep.subr.mxu0 %v252
  %603 = vmatpush1.msra.mxu0 %v251
  %604 = vmatprep.subr.mxu0 %v250
  %605 = vmatpush1.msra.mxu0 %v249
  %606 = vmatprep.subr.mxu0 %v248
  %607 = vmatpush1.msra.mxu0 %v247
  %608 = vmatprep.subr.mxu0 %v246
  %609 = vmatpush1.msra.mxu0 %v245
  %610 = vmatprep.subr.mxu0 %v244
  %611 = vmatpush1.msra.mxu0 %v243
  %612 = vmatprep.subr.mxu0 %v242
  %613 = vmatpush1.msra.mxu0 %v241
  %614 = vmatprep.subr.mxu0 %v240
  %615 = vmatpush1.msra.mxu0 %v239
  %616 = vmatprep.subr.mxu0 %v238
  %617 = vmatpush1.msra.mxu0 %v237
  %618 = vmatprep.subr.mxu0 %v236
  %619 = vmatpush1.msra.mxu0 %v235
  %620 = vmatprep.subr.mxu0 %v234
  %621 = vmatpush1.msra.mxu0 %v233
  %622 = vmatprep.subr.mxu0 %v296
  %623 = vmatpush2.msra.mxu0 %v295
  %624 = vmatprep.subr.mxu0 %v294
  %625 = vmatpush2.msra.mxu0 %v293
  %626 = vmatprep.subr.mxu0 %v292
  %627 = vmatpush2.msra.mxu0 %v291
  %628 = vmatprep.subr.mxu0 %v290
  %629 = vmatpush2.msra.mxu0 %v289
  %630 = vmatprep.subr.mxu0 %v288
  %631 = vmatpush2.msra.mxu0 %v287
  %632 = vmatprep.subr.mxu0 %v286
  %633 = vmatpush2.msra.mxu0 %v285
  %634 = vmatprep.subr.mxu0 %v284
  %635 = vmatpush2.msra.mxu0 %v283
  %636 = vmatprep.subr.mxu0 %v282
  %637 = vmatpush2.msra.mxu0 %v281
  %638 = vmatprep.subr.mxu0 %v280
  %639 = vmatpush2.msra.mxu0 %v279
  %640 = vmatprep.subr.mxu0 %v278
  %641 = vmatpush2.msra.mxu0 %v277
  %642 = vmatprep.subr.mxu0 %v276
  %643 = vmatpush2.msra.mxu0 %v275
  %644 = vmatprep.subr.mxu0 %v274
  %645 = vmatpush2.msra.mxu0 %v273
  %646 = vmatprep.subr.mxu0 %v272
  %647 = vmatpush2.msra.mxu0 %v271
  %648 = vmatprep.subr.mxu0 %v270
  %649 = vmatpush2.msra.mxu0 %v269
  %650 = vmatprep.subr.mxu0 %v268
  %651 = vmatpush2.msra.mxu0 %v267
  %652 = vmatprep.subr.mxu0 %v266
  %653 = vmatpush2.msra.mxu0 %v265
  %654 = vmatprep.mubr.f32.mxu0 %v21
  %655 = vmatmul.mubr.f32.gmra.mxu0 %v20
  %v656 = vpop.f32.mrf.mxu0
  %v657 = vadd.f32 %v574, %v656
  %v658 = vpop.f32.mrf.mxu0
  %v659 = vadd.f32 %v576, %v658
  %660 = vmatprep.mubr.f32.mxu0 %v30
  %661 = vmatmul.mubr.f32.gmra.mxu0 %v29
  %v662 = vpop.f32.mrf.mxu0
  %v663 = vadd.f32 %v580, %v662
  %v664 = vpop.f32.mrf.mxu0
  %v665 = vadd.f32 %v582, %v664
  %666 = vmatprep.mubr.f32.mxu0 %v39
  %667 = vmatmul.mubr.f32.gmra.mxu0 %v38
  %v668 = vpop.f32.mrf.mxu0
  %v669 = vadd.f32 %v586, %v668
  %v670 = vpop.f32.mrf.mxu0
  %v671 = vadd.f32 %v588, %v670
  %672 = vdwg.mxu0
  %673 = vmatprep.subr.mxu0 %v328
  %674 = vmatpush1.msra.mxu0 %v327
  %675 = vmatprep.subr.mxu0 %v326
  %676 = vmatpush1.msra.mxu0 %v325
  %677 = vmatprep.subr.mxu0 %v324
  %678 = vmatpush1.msra.mxu0 %v323
  %679 = vmatprep.subr.mxu0 %v322
  %680 = vmatpush1.msra.mxu0 %v321
  %681 = vmatprep.subr.mxu0 %v320
  %682 = vmatpush1.msra.mxu0 %v319
  %683 = vmatprep.subr.mxu0 %v318
  %684 = vmatpush1.msra.mxu0 %v317
  %685 = vmatprep.subr.mxu0 %v316
  %686 = vmatpush1.msra.mxu0 %v315
  %687 = vmatprep.subr.mxu0 %v314
  %688 = vmatpush1.msra.mxu0 %v313
  %689 = vmatprep.subr.mxu0 %v312
  %690 = vmatpush1.msra.mxu0 %v311
  %691 = vmatprep.subr.mxu0 %v310
  %692 = vmatpush1.msra.mxu0 %v309
  %693 = vmatprep.subr.mxu0 %v308
  %694 = vmatpush1.msra.mxu0 %v307
  %695 = vmatprep.subr.mxu0 %v306
  %696 = vmatpush1.msra.mxu0 %v305
  %697 = vmatprep.subr.mxu0 %v304
  %698 = vmatpush1.msra.mxu0 %v303
  %699 = vmatprep.subr.mxu0 %v302
  %700 = vmatpush1.msra.mxu0 %v301
  %701 = vmatprep.subr.mxu0 %v300
  %702 = vmatpush1.msra.mxu0 %v299
  %703 = vmatprep.subr.mxu0 %v298
  %704 = vmatpush1.msra.mxu0 %v297
  %705 = vmatprep.subr.mxu0 0.0
  %706 = vmatpush2.msra.mxu0 0.0
  %707 = vmatprep.subr.mxu0 0.0
  %708 = vmatpush2.msra.mxu0 0.0
  %709 = vmatprep.subr.mxu0 0.0
  %710 = vmatpush2.msra.mxu0 0.0
  %711 = vmatprep.subr.mxu0 0.0
  %712 = vmatpush2.msra.mxu0 0.0
  %713 = vmatprep.subr.mxu0 0.0
  %714 = vmatpush2.msra.mxu0 0.0
  %715 = vmatprep.subr.mxu0 0.0
  %716 = vmatpush2.msra.mxu0 0.0
  %717 = vmatprep.subr.mxu0 0.0
  %718 = vmatpush2.msra.mxu0 0.0
  %719 = vmatprep.subr.mxu0 0.0
  %720 = vmatpush2.msra.mxu0 0.0
  %721 = vmatprep.subr.mxu0 0.0
  %722 = vmatpush2.msra.mxu0 0.0
  %723 = vmatprep.subr.mxu0 0.0
  %724 = vmatpush2.msra.mxu0 0.0
  %725 = vmatprep.subr.mxu0 0.0
  %726 = vmatpush2.msra.mxu0 0.0
  %727 = vmatprep.subr.mxu0 0.0
  %728 = vmatpush2.msra.mxu0 0.0
  %729 = vmatprep.subr.mxu0 0.0
  %730 = vmatpush2.msra.mxu0 0.0
  %731 = vmatprep.subr.mxu0 0.0
  %732 = vmatpush2.msra.mxu0 0.0
  %733 = vmatprep.subr.mxu0 0.0
  %734 = vmatpush2.msra.mxu0 0.0
  %735 = vmatprep.subr.mxu0 0.0
  %736 = vmatpush2.msra.mxu0 0.0
  %737 = vmatprep.mubr.f32.mxu0 0.0
  %738 = vmatmul.mubr.f32.gmra.mxu0 %v22
  %v739 = vpop.f32.mrf.mxu0
  %v740 = vadd.f32 %v657, %v739
  %v741 = vpop.f32.mrf.mxu0
  %v742 = vadd.f32 %v659, %v741
  %743 = vmatprep.mubr.f32.mxu0 0.0
  %744 = vmatmul.mubr.f32.gmra.mxu0 %v31
  %v745 = vpop.f32.mrf.mxu0
  %v746 = vadd.f32 %v663, %v745
  %v747 = vpop.f32.mrf.mxu0
  %v748 = vadd.f32 %v665, %v747
  %749 = vmatprep.mubr.f32.mxu0 0.0
  %750 = vmatmul.mubr.f32.gmra.mxu0 %v40
  %v751 = vpop.f32.mrf.mxu0
  %v752 = vadd.f32 %v669, %v751
  %v753 = vpop.f32.mrf.mxu0
  %v754 = vadd.f32 %v671, %v753
  %755 = vdwg.mxu0
  %v756 = vmax.f32 %v740, 0.0
  %v757 = vmax.f32 %v742, 0.0
  %v758 = vmax.f32 %v746, 0.0
  %v759 = vmax.f32 %v748, 0.0
  %v760 = vmax.f32 %v752, 0.0
  %v761 = vmax.f32 %v754, 0.0
  %762 = vst [vmem:[%s3] sm:$0xff] %v756
  %763 = vst [vmem:[%s3 + $0x8] sm:$0xff] %v757
  %764 = vst [vmem:[%s3 + $0x10] sm:$0xff] %v758
  %765 = vst [vmem:[%s3 + $0x18] sm:$0xff] %v759
  %766 = vst [vmem:[%s3 + $0x20] sm:$0xff] %v760
  %767 = vst [vmem:[%s3 + $0x28] sm:$0xff] %v761
  // Predicated region
  $region14: #{auxiliary_convolutions.13} parent=0 // pred_check
    _
  $region15: #{auxiliary_convolutions.13} parent=0 // pred_check_branch
    %769 = sbr.rel (0) target = $region17
  $region16: #{auxiliary_convolutions.13} parent=0 // pred_region
    _
  $region17: #{auxiliary_convolutions.13} parent=0 // pred_fallthru
    _
  // Predicated region
  $region18: #{auxiliary_convolutions.13} parent=0 // pred_check
    _
  $region19: #{auxiliary_convolutions.13} parent=0 // pred_check_branch
    %771 = sbr.rel (0) target = $region21
  $region20: #{auxiliary_convolutions.13} parent=0 // pred_region
    _
  $region21: #{auxiliary_convolutions.13} parent=0 // pred_fallthru
    _

// kernel: auxiliary_convolutions.15
$region0: #{auxiliary_convolutions.15}
  #allocation0 [shape = 'u32[]', space=smem, size = 0x4, offset = 0x4, fixed_abs, tag = 'smem constant byte address 0x4 - core index']
  #allocation1 [shape = 'u32[144,128]{1,0:T(1,128)}', space=vmem, size = 0x12000, scoped, tag = 'internal scratch']
  %s0 = inlined_call_operand.vmem [shape: f32[8,1152], index: 0, kind: input, shape index: {}]
  %s1 = inlined_call_operand.vmem [shape: f32[1152,256], index: 1, kind: input, shape index: {}]
  %s2 = inlined_call_operand.vmem [shape: f32[1,256], index: 2, kind: input, shape index: {}]
  %s3 = inlined_call_operand.vmem [shape: f32[8,256], index: 3, kind: output, shape index: {}]
  %s4 = sld [smem:[#allocation0]]
  $region22: #{auxiliary_convolutions.15} parent=0
    _
  %s6 = ssub.s32 1, %s4
  %s7 = scalar_select 0, %s6, %s4
  // Predicated region
  $region2: #{auxiliary_convolutions.15} parent=0 // pred_check
    _
  $region3: #{auxiliary_convolutions.15} parent=0 // pred_check_branch
    %9 = sbr.rel (0) target = $region5
  $region4: #{auxiliary_convolutions.15} parent=0 // pred_region
    _
  $region5: #{auxiliary_convolutions.15} parent=0 // pred_fallthru
    _
  // Predicated region
  $region6: #{auxiliary_convolutions.15} parent=0 // pred_check
    _
  $region7: #{auxiliary_convolutions.15} parent=0 // pred_check_branch
    %11 = sbr.rel (0) target = $region9
  $region8: #{auxiliary_convolutions.15} parent=0 // pred_region
    _
  $region9: #{auxiliary_convolutions.15} parent=0 // pred_fallthru
    _
  // Predicated region
  $region10: #{auxiliary_convolutions.15} parent=0 // pred_check
    _
  $region11: #{auxiliary_convolutions.15} parent=0 // pred_check_branch
    %13 = sbr.rel (0) target = $region13
  $region12: #{auxiliary_convolutions.15} parent=0 // pred_region
    _
  $region13: #{auxiliary_convolutions.15} parent=0 // pred_fallthru
    _
  %v14 = vld [vmem:[%s0] sm:$0xff]
  %v15 = vld [vmem:[%s0 + $0x8] sm:$0xff]
  %v16 = vld [vmem:[%s0 + $0x10] sm:$0xff]
  %v17 = vld [vmem:[%s0 + $0x18] sm:$0xff]
  %v18 = vld [vmem:[%s0 + $0x20] sm:$0xff]
  %v19 = vld [vmem:[%s0 + $0x28] sm:$0xff]
  %v20 = vld [vmem:[%s0 + $0x30] sm:$0xff]
  %v21 = vld [vmem:[%s0 + $0x38] sm:$0xff]
  %v22 = vld [vmem:[%s0 + $0x40] sm:$0xff]
  %v23 = vld [vmem:[%s1] sm:$0xff]
  %v24 = vld [vmem:[%s1 + $0x8] sm:$0xff]
  %v25 = vld [vmem:[%s1 + $0x10] sm:$0xff]
  %v26 = vld [vmem:[%s1 + $0x18] sm:$0xff]
  %v27 = vld [vmem:[%s1 + $0x20] sm:$0xff]
  %v28 = vld [vmem:[%s1 + $0x28] sm:$0xff]
  %v29 = vld [vmem:[%s1 + $0x30] sm:$0xff]
  %v30 = vld [vmem:[%s1 + $0x38] sm:$0xff]
  %v31 = vld [vmem:[%s1 + $0x40] sm:$0xff]
  %v32 = vld [vmem:[%s1 + $0x48] sm:$0xff]
  %v33 = vld [vmem:[%s1 + $0x50] sm:$0xff]
  %v34 = vld [vmem:[%s1 + $0x58] sm:$0xff]
  %v35 = vld [vmem:[%s1 + $0x60] sm:$0xff]
  %v36 = vld [vmem:[%s1 + $0x68] sm:$0xff]
  %v37 = vld [vmem:[%s1 + $0x70] sm:$0xff]
  %v38 = vld [vmem:[%s1 + $0x78] sm:$0xff]
  %v39 = vld [vmem:[%s1 + $0x80] sm:$0xff]
  %v40 = vld [vmem:[%s1 + $0x88] sm:$0xff]
  %v41 = vld [vmem:[%s1 + $0x90] sm:$0xff]
  %v42 = vld [vmem:[%s1 + $0x98] sm:$0xff]
  %v43 = vld [vmem:[%s1 + $0xa0] sm:$0xff]
  %v44 = vld [vmem:[%s1 + $0xa8] sm:$0xff]
  %v45 = vld [vmem:[%s1 + $0xb0] sm:$0xff]
  %v46 = vld [vmem:[%s1 + $0xb8] sm:$0xff]
  %v47 = vld [vmem:[%s1 + $0xc0] sm:$0xff]
  %v48 = vld [vmem:[%s1 + $0xc8] sm:$0xff]
  %v49 = vld [vmem:[%s1 + $0xd0] sm:$0xff]
  %v50 = vld [vmem:[%s1 + $0xd8] sm:$0xff]
  %v51 = vld [vmem:[%s1 + $0xe0] sm:$0xff]
  %v52 = vld [vmem:[%s1 + $0xe8] sm:$0xff]
  %v53 = vld [vmem:[%s1 + $0xf0] sm:$0xff]
  %v54 = vld [vmem:[%s1 + $0xf8] sm:$0xff]
  %v55 = vld [vmem:[%s1 + $0x100] sm:$0xff]
  %v56 = vld [vmem:[%s1 + $0x108] sm:$0xff]
  %v57 = vld [vmem:[%s1 + $0x110] sm:$0xff]
  %v58 = vld [vmem:[%s1 + $0x118] sm:$0xff]
  %v59 = vld [vmem:[%s1 + $0x120] sm:$0xff]
  %v60 = vld [vmem:[%s1 + $0x128] sm:$0xff]
  %v61 = vld [vmem:[%s1 + $0x130] sm:$0xff]
  %v62 = vld [vmem:[%s1 + $0x138] sm:$0xff]
  %v63 = vld [vmem:[%s1 + $0x140] sm:$0xff]
  %v64 = vld [vmem:[%s1 + $0x148] sm:$0xff]
  %v65 = vld [vmem:[%s1 + $0x150] sm:$0xff]
  %v66 = vld [vmem:[%s1 + $0x158] sm:$0xff]
  %v67 = vld [vmem:[%s1 + $0x160] sm:$0xff]
  %v68 = vld [vmem:[%s1 + $0x168] sm:$0xff]
  %v69 = vld [vmem:[%s1 + $0x170] sm:$0xff]
  %v70 = vld [vmem:[%s1 + $0x178] sm:$0xff]
  %v71 = vld [vmem:[%s1 + $0x180] sm:$0xff]
  %v72 = vld [vmem:[%s1 + $0x188] sm:$0xff]
  %v73 = vld [vmem:[%s1 + $0x190] sm:$0xff]
  %v74 = vld [vmem:[%s1 + $0x198] sm:$0xff]
  %v75 = vld [vmem:[%s1 + $0x1a0] sm:$0xff]
  %v76 = vld [vmem:[%s1 + $0x1a8] sm:$0xff]
  %v77 = vld [vmem:[%s1 + $0x1b0] sm:$0xff]
  %v78 = vld [vmem:[%s1 + $0x1b8] sm:$0xff]
  %v79 = vld [vmem:[%s1 + $0x1c0] sm:$0xff]
  %v80 = vld [vmem:[%s1 + $0x1c8] sm:$0xff]
  %v81 = vld [vmem:[%s1 + $0x1d0] sm:$0xff]
  %v82 = vld [vmem:[%s1 + $0x1d8] sm:$0xff]
  %v83 = vld [vmem:[%s1 + $0x1e0] sm:$0xff]
  %v84 = vld [vmem:[%s1 + $0x1e8] sm:$0xff]
  %v85 = vld [vmem:[%s1 + $0x1f0] sm:$0xff]
  %v86 = vld [vmem:[%s1 + $0x1f8] sm:$0xff]
  %v87 = vld [vmem:[%s1 + $0x200] sm:$0xff]
  %v88 = vld [vmem:[%s1 + $0x208] sm:$0xff]
  %v89 = vld [vmem:[%s1 + $0x210] sm:$0xff]
  %v90 = vld [vmem:[%s1 + $0x218] sm:$0xff]
  %v91 = vld [vmem:[%s1 + $0x220] sm:$0xff]
  %v92 = vld [vmem:[%s1 + $0x228] sm:$0xff]
  %v93 = vld [vmem:[%s1 + $0x230] sm:$0xff]
  %v94 = vld [vmem:[%s1 + $0x238] sm:$0xff]
  %v95 = vld [vmem:[%s1 + $0x240] sm:$0xff]
  %v96 = vld [vmem:[%s1 + $0x248] sm:$0xff]
  %v97 = vld [vmem:[%s1 + $0x250] sm:$0xff]
  %v98 = vld [vmem:[%s1 + $0x258] sm:$0xff]
  %v99 = vld [vmem:[%s1 + $0x260] sm:$0xff]
  %v100 = vld [vmem:[%s1 + $0x268] sm:$0xff]
  %v101 = vld [vmem:[%s1 + $0x270] sm:$0xff]
  %v102 = vld [vmem:[%s1 + $0x278] sm:$0xff]
  %v103 = vld [vmem:[%s1 + $0x280] sm:$0xff]
  %v104 = vld [vmem:[%s1 + $0x288] sm:$0xff]
  %v105 = vld [vmem:[%s1 + $0x290] sm:$0xff]
  %v106 = vld [vmem:[%s1 + $0x298] sm:$0xff]
  %v107 = vld [vmem:[%s1 + $0x2a0] sm:$0xff]
  %v108 = vld [vmem:[%s1 + $0x2a8] sm:$0xff]
  %v109 = vld [vmem:[%s1 + $0x2b0] sm:$0xff]
  %v110 = vld [vmem:[%s1 + $0x2b8] sm:$0xff]
  %v111 = vld [vmem:[%s1 + $0x2c0] sm:$0xff]
  %v112 = vld [vmem:[%s1 + $0x2c8] sm:$0xff]
  %v113 = vld [vmem:[%s1 + $0x2d0] sm:$0xff]
  %v114 = vld [vmem:[%s1 + $0x2d8] sm:$0xff]
  %v115 = vld [vmem:[%s1 + $0x2e0] sm:$0xff]
  %v116 = vld [vmem:[%s1 + $0x2e8] sm:$0xff]
  %v117 = vld [vmem:[%s1 + $0x2f0] sm:$0xff]
  %v118 = vld [vmem:[%s1 + $0x2f8] sm:$0xff]
  %v119 = vld [vmem:[%s1 + $0x300] sm:$0xff]
  %v120 = vld [vmem:[%s1 + $0x308] sm:$0xff]
  %v121 = vld [vmem:[%s1 + $0x310] sm:$0xff]
  %v122 = vld [vmem:[%s1 + $0x318] sm:$0xff]
  %v123 = vld [vmem:[%s1 + $0x320] sm:$0xff]
  %v124 = vld [vmem:[%s1 + $0x328] sm:$0xff]
  %v125 = vld [vmem:[%s1 + $0x330] sm:$0xff]
  %v126 = vld [vmem:[%s1 + $0x338] sm:$0xff]
  %v127 = vld [vmem:[%s1 + $0x340] sm:$0xff]
  %v128 = vld [vmem:[%s1 + $0x348] sm:$0xff]
  %v129 = vld [vmem:[%s1 + $0x350] sm:$0xff]
  %v130 = vld [vmem:[%s1 + $0x358] sm:$0xff]
  %v131 = vld [vmem:[%s1 + $0x360] sm:$0xff]
  %v132 = vld [vmem:[%s1 + $0x368] sm:$0xff]
  %v133 = vld [vmem:[%s1 + $0x370] sm:$0xff]
  %v134 = vld [vmem:[%s1 + $0x378] sm:$0xff]
  %v135 = vld [vmem:[%s1 + $0x380] sm:$0xff]
  %v136 = vld [vmem:[%s1 + $0x388] sm:$0xff]
  %v137 = vld [vmem:[%s1 + $0x390] sm:$0xff]
  %v138 = vld [vmem:[%s1 + $0x398] sm:$0xff]
  %v139 = vld [vmem:[%s1 + $0x3a0] sm:$0xff]
  %v140 = vld [vmem:[%s1 + $0x3a8] sm:$0xff]
  %v141 = vld [vmem:[%s1 + $0x3b0] sm:$0xff]
  %v142 = vld [vmem:[%s1 + $0x3b8] sm:$0xff]
  %v143 = vld [vmem:[%s1 + $0x3c0] sm:$0xff]
  %v144 = vld [vmem:[%s1 + $0x3c8] sm:$0xff]
  %v145 = vld [vmem:[%s1 + $0x3d0] sm:$0xff]
  %v146 = vld [vmem:[%s1 + $0x3d8] sm:$0xff]
  %v147 = vld [vmem:[%s1 + $0x3e0] sm:$0xff]
  %v148 = vld [vmem:[%s1 + $0x3e8] sm:$0xff]
  %v149 = vld [vmem:[%s1 + $0x3f0] sm:$0xff]
  %v150 = vld [vmem:[%s1 + $0x3f8] sm:$0xff]
  %v151 = vld [vmem:[%s1 + $0x400] sm:$0xff]
  %v152 = vld [vmem:[%s1 + $0x408] sm:$0xff]
  %v153 = vld [vmem:[%s1 + $0x410] sm:$0xff]
  %v154 = vld [vmem:[%s1 + $0x418] sm:$0xff]
  %v155 = vld [vmem:[%s1 + $0x420] sm:$0xff]
  %v156 = vld [vmem:[%s1 + $0x428] sm:$0xff]
  %v157 = vld [vmem:[%s1 + $0x430] sm:$0xff]
  %v158 = vld [vmem:[%s1 + $0x438] sm:$0xff]
  %v159 = vld [vmem:[%s1 + $0x440] sm:$0xff]
  %v160 = vld [vmem:[%s1 + $0x448] sm:$0xff]
  %v161 = vld [vmem:[%s1 + $0x450] sm:$0xff]
  %v162 = vld [vmem:[%s1 + $0x458] sm:$0xff]
  %v163 = vld [vmem:[%s1 + $0x460] sm:$0xff]
  %v164 = vld [vmem:[%s1 + $0x468] sm:$0xff]
  %v165 = vld [vmem:[%s1 + $0x470] sm:$0xff]
  %v166 = vld [vmem:[%s1 + $0x478] sm:$0xff]
  %v167 = vld [vmem:[%s1 + $0x480] sm:$0xff]
  %v168 = vld [vmem:[%s1 + $0x488] sm:$0xff]
  %v169 = vld [vmem:[%s1 + $0x490] sm:$0xff]
  %v170 = vld [vmem:[%s1 + $0x498] sm:$0xff]
  %v171 = vld [vmem:[%s1 + $0x4a0] sm:$0xff]
  %v172 = vld [vmem:[%s1 + $0x4a8] sm:$0xff]
  %v173 = vld [vmem:[%s1 + $0x4b0] sm:$0xff]
  %v174 = vld [vmem:[%s1 + $0x4b8] sm:$0xff]
  %v175 = vld [vmem:[%s1 + $0x4c0] sm:$0xff]
  %v176 = vld [vmem:[%s1 + $0x4c8] sm:$0xff]
  %v177 = vld [vmem:[%s1 + $0x4d0] sm:$0xff]
  %v178 = vld [vmem:[%s1 + $0x4d8] sm:$0xff]
  %v179 = vld [vmem:[%s1 + $0x4e0] sm:$0xff]
  %v180 = vld [vmem:[%s1 + $0x4e8] sm:$0xff]
  %v181 = vld [vmem:[%s1 + $0x4f0] sm:$0xff]
  %v182 = vld [vmem:[%s1 + $0x4f8] sm:$0xff]
  %v183 = vld [vmem:[%s1 + $0x500] sm:$0xff]
  %v184 = vld [vmem:[%s1 + $0x508] sm:$0xff]
  %v185 = vld [vmem:[%s1 + $0x510] sm:$0xff]
  %v186 = vld [vmem:[%s1 + $0x518] sm:$0xff]
  %v187 = vld [vmem:[%s1 + $0x520] sm:$0xff]
  %v188 = vld [vmem:[%s1 + $0x528] sm:$0xff]
  %v189 = vld [vmem:[%s1 + $0x530] sm:$0xff]
  %v190 = vld [vmem:[%s1 + $0x538] sm:$0xff]
  %v191 = vld [vmem:[%s1 + $0x540] sm:$0xff]
  %v192 = vld [vmem:[%s1 + $0x548] sm:$0xff]
  %v193 = vld [vmem:[%s1 + $0x550] sm:$0xff]
  %v194 = vld [vmem:[%s1 + $0x558] sm:$0xff]
  %v195 = vld [vmem:[%s1 + $0x560] sm:$0xff]
  %v196 = vld [vmem:[%s1 + $0x568] sm:$0xff]
  %v197 = vld [vmem:[%s1 + $0x570] sm:$0xff]
  %v198 = vld [vmem:[%s1 + $0x578] sm:$0xff]
  %v199 = vld [vmem:[%s1 + $0x580] sm:$0xff]
  %v200 = vld [vmem:[%s1 + $0x588] sm:$0xff]
  %v201 = vld [vmem:[%s1 + $0x590] sm:$0xff]
  %v202 = vld [vmem:[%s1 + $0x598] sm:$0xff]
  %v203 = vld [vmem:[%s1 + $0x5a0] sm:$0xff]
  %v204 = vld [vmem:[%s1 + $0x5a8] sm:$0xff]
  %v205 = vld [vmem:[%s1 + $0x5b0] sm:$0xff]
  %v206 = vld [vmem:[%s1 + $0x5b8] sm:$0xff]
  %v207 = vld [vmem:[%s1 + $0x5c0] sm:$0xff]
  %v208 = vld [vmem:[%s1 + $0x5c8] sm:$0xff]
  %v209 = vld [vmem:[%s1 + $0x5d0] sm:$0xff]
  %v210 = vld [vmem:[%s1 + $0x5d8] sm:$0xff]
  %v211 = vld [vmem:[%s1 + $0x5e0] sm:$0xff]
  %v212 = vld [vmem:[%s1 + $0x5e8] sm:$0xff]
  %v213 = vld [vmem:[%s1 + $0x5f0] sm:$0xff]
  %v214 = vld [vmem:[%s1 + $0x5f8] sm:$0xff]
  %v215 = vld [vmem:[%s1 + $0x600] sm:$0xff]
  %v216 = vld [vmem:[%s1 + $0x608] sm:$0xff]
  %v217 = vld [vmem:[%s1 + $0x610] sm:$0xff]
  %v218 = vld [vmem:[%s1 + $0x618] sm:$0xff]
  %v219 = vld [vmem:[%s1 + $0x620] sm:$0xff]
  %v220 = vld [vmem:[%s1 + $0x628] sm:$0xff]
  %v221 = vld [vmem:[%s1 + $0x630] sm:$0xff]
  %v222 = vld [vmem:[%s1 + $0x638] sm:$0xff]
  %v223 = vld [vmem:[%s1 + $0x640] sm:$0xff]
  %v224 = vld [vmem:[%s1 + $0x648] sm:$0xff]
  %v225 = vld [vmem:[%s1 + $0x650] sm:$0xff]
  %v226 = vld [vmem:[%s1 + $0x658] sm:$0xff]
  %v227 = vld [vmem:[%s1 + $0x660] sm:$0xff]
  %v228 = vld [vmem:[%s1 + $0x668] sm:$0xff]
  %v229 = vld [vmem:[%s1 + $0x670] sm:$0xff]
  %v230 = vld [vmem:[%s1 + $0x678] sm:$0xff]
  %v231 = vld [vmem:[%s1 + $0x680] sm:$0xff]
  %v232 = vld [vmem:[%s1 + $0x688] sm:$0xff]
  %v233 = vld [vmem:[%s1 + $0x690] sm:$0xff]
  %v234 = vld [vmem:[%s1 + $0x698] sm:$0xff]
  %v235 = vld [vmem:[%s1 + $0x6a0] sm:$0xff]
  %v236 = vld [vmem:[%s1 + $0x6a8] sm:$0xff]
  %v237 = vld [vmem:[%s1 + $0x6b0] sm:$0xff]
  %v238 = vld [vmem:[%s1 + $0x6b8] sm:$0xff]
  %v239 = vld [vmem:[%s1 + $0x6c0] sm:$0xff]
  %v240 = vld [vmem:[%s1 + $0x6c8] sm:$0xff]
  %v241 = vld [vmem:[%s1 + $0x6d0] sm:$0xff]
  %v242 = vld [vmem:[%s1 + $0x6d8] sm:$0xff]
  %v243 = vld [vmem:[%s1 + $0x6e0] sm:$0xff]
  %v244 = vld [vmem:[%s1 + $0x6e8] sm:$0xff]
  %v245 = vld [vmem:[%s1 + $0x6f0] sm:$0xff]
  %v246 = vld [vmem:[%s1 + $0x6f8] sm:$0xff]
  %v247 = vld [vmem:[%s1 + $0x700] sm:$0xff]
  %v248 = vld [vmem:[%s1 + $0x708] sm:$0xff]
  %v249 = vld [vmem:[%s1 + $0x710] sm:$0xff]
  %v250 = vld [vmem:[%s1 + $0x718] sm:$0xff]
  %v251 = vld [vmem:[%s1 + $0x720] sm:$0xff]
  %v252 = vld [vmem:[%s1 + $0x728] sm:$0xff]
  %v253 = vld [vmem:[%s1 + $0x730] sm:$0xff]
  %v254 = vld [vmem:[%s1 + $0x738] sm:$0xff]
  %v255 = vld [vmem:[%s1 + $0x740] sm:$0xff]
  %v256 = vld [vmem:[%s1 + $0x748] sm:$0xff]
  %v257 = vld [vmem:[%s1 + $0x750] sm:$0xff]
  %v258 = vld [vmem:[%s1 + $0x758] sm:$0xff]
  %v259 = vld [vmem:[%s1 + $0x760] sm:$0xff]
  %v260 = vld [vmem:[%s1 + $0x768] sm:$0xff]
  %v261 = vld [vmem:[%s1 + $0x770] sm:$0xff]
  %v262 = vld [vmem:[%s1 + $0x778] sm:$0xff]
  %v263 = vld [vmem:[%s1 + $0x780] sm:$0xff]
  %v264 = vld [vmem:[%s1 + $0x788] sm:$0xff]
  %v265 = vld [vmem:[%s1 + $0x790] sm:$0xff]
  %v266 = vld [vmem:[%s1 + $0x798] sm:$0xff]
  %v267 = vld [vmem:[%s1 + $0x7a0] sm:$0xff]
  %v268 = vld [vmem:[%s1 + $0x7a8] sm:$0xff]
  %v269 = vld [vmem:[%s1 + $0x7b0] sm:$0xff]
  %v270 = vld [vmem:[%s1 + $0x7b8] sm:$0xff]
  %v271 = vld [vmem:[%s1 + $0x7c0] sm:$0xff]
  %v272 = vld [vmem:[%s1 + $0x7c8] sm:$0xff]
  %v273 = vld [vmem:[%s1 + $0x7d0] sm:$0xff]
  %v274 = vld [vmem:[%s1 + $0x7d8] sm:$0xff]
  %v275 = vld [vmem:[%s1 + $0x7e0] sm:$0xff]
  %v276 = vld [vmem:[%s1 + $0x7e8] sm:$0xff]
  %v277 = vld [vmem:[%s1 + $0x7f0] sm:$0xff]
  %v278 = vld [vmem:[%s1 + $0x7f8] sm:$0xff]
  %v279 = vld [vmem:[%s1 + $0x800] sm:$0xff]
  %v280 = vld [vmem:[%s1 + $0x808] sm:$0xff]
  %v281 = vld [vmem:[%s1 + $0x810] sm:$0xff]
  %v282 = vld [vmem:[%s1 + $0x818] sm:$0xff]
  %v283 = vld [vmem:[%s1 + $0x820] sm:$0xff]
  %v284 = vld [vmem:[%s1 + $0x828] sm:$0xff]
  %v285 = vld [vmem:[%s1 + $0x830] sm:$0xff]
  %v286 = vld [vmem:[%s1 + $0x838] sm:$0xff]
  %v287 = vld [vmem:[%s1 + $0x840] sm:$0xff]
  %v288 = vld [vmem:[%s1 + $0x848] sm:$0xff]
  %v289 = vld [vmem:[%s1 + $0x850] sm:$0xff]
  %v290 = vld [vmem:[%s1 + $0x858] sm:$0xff]
  %v291 = vld [vmem:[%s1 + $0x860] sm:$0xff]
  %v292 = vld [vmem:[%s1 + $0x868] sm:$0xff]
  %v293 = vld [vmem:[%s1 + $0x870] sm:$0xff]
  %v294 = vld [vmem:[%s1 + $0x878] sm:$0xff]
  %v295 = vld [vmem:[%s1 + $0x880] sm:$0xff]
  %v296 = vld [vmem:[%s1 + $0x888] sm:$0xff]
  %v297 = vld [vmem:[%s1 + $0x890] sm:$0xff]
  %v298 = vld [vmem:[%s1 + $0x898] sm:$0xff]
  %v299 = vld [vmem:[%s1 + $0x8a0] sm:$0xff]
  %v300 = vld [vmem:[%s1 + $0x8a8] sm:$0xff]
  %v301 = vld [vmem:[%s1 + $0x8b0] sm:$0xff]
  %v302 = vld [vmem:[%s1 + $0x8b8] sm:$0xff]
  %v303 = vld [vmem:[%s1 + $0x8c0] sm:$0xff]
  %v304 = vld [vmem:[%s1 + $0x8c8] sm:$0xff]
  %v305 = vld [vmem:[%s1 + $0x8d0] sm:$0xff]
  %v306 = vld [vmem:[%s1 + $0x8d8] sm:$0xff]
  %v307 = vld [vmem:[%s1 + $0x8e0] sm:$0xff]
  %v308 = vld [vmem:[%s1 + $0x8e8] sm:$0xff]
  %v309 = vld [vmem:[%s1 + $0x8f0] sm:$0xff]
  %v310 = vld [vmem:[%s1 + $0x8f8] sm:$0xff]
  %v311 = vld [vmem:[%s2] sm:$0x3]
  %v313 = vlaneseq
  %v314 = vshrl.u32 %v313, 7
  %v315 = vsub.s32 0, %v314
  %v316 = vrot.slane %v311, %v315
  %v317 = vlaneseq
  %v318 = vshrl.u32 %v317, 7
  %v319 = vsub.s32 1, %v318
  %v320 = vrot.slane %v311, %v319
  %323 = vmatprep.subr.mxu0 %v54
  %324 = vmatpush1.msra.mxu0 %v53
  %325 = vmatprep.subr.mxu0 %v52
  %326 = vmatpush1.msra.mxu0 %v51
  %327 = vmatprep.subr.mxu0 %v50
  %328 = vmatpush1.msra.mxu0 %v49
  %329 = vmatprep.subr.mxu0 %v48
  %330 = vmatpush1.msra.mxu0 %v47
  %331 = vmatprep.subr.mxu0 %v46
  %332 = vmatpush1.msra.mxu0 %v45
  %333 = vmatprep.subr.mxu0 %v44
  %334 = vmatpush1.msra.mxu0 %v43
  %335 = vmatprep.subr.mxu0 %v42
  %336 = vmatpush1.msra.mxu0 %v41
  %337 = vmatprep.subr.mxu0 %v40
  %338 = vmatpush1.msra.mxu0 %v39
  %339 = vmatprep.subr.mxu0 %v38
  %340 = vmatpush1.msra.mxu0 %v37
  %341 = vmatprep.subr.mxu0 %v36
  %342 = vmatpush1.msra.mxu0 %v35
  %343 = vmatprep.subr.mxu0 %v34
  %344 = vmatpush1.msra.mxu0 %v33
  %345 = vmatprep.subr.mxu0 %v32
  %346 = vmatpush1.msra.mxu0 %v31
  %347 = vmatprep.subr.mxu0 %v30
  %348 = vmatpush1.msra.mxu0 %v29
  %349 = vmatprep.subr.mxu0 %v28
  %350 = vmatpush1.msra.mxu0 %v27
  %351 = vmatprep.subr.mxu0 %v26
  %352 = vmatpush1.msra.mxu0 %v25
  %353 = vmatprep.subr.mxu0 %v24
  %354 = vmatpush1.msra.mxu0 %v23
  %355 = vmatprep.subr.mxu0 %v86
  %356 = vmatpush2.msra.mxu0 %v85
  %357 = vmatprep.subr.mxu0 %v84
  %358 = vmatpush2.msra.mxu0 %v83
  %359 = vmatprep.subr.mxu0 %v82
  %360 = vmatpush2.msra.mxu0 %v81
  %361 = vmatprep.subr.mxu0 %v80
  %362 = vmatpush2.msra.mxu0 %v79
  %363 = vmatprep.subr.mxu0 %v78
  %364 = vmatpush2.msra.mxu0 %v77
  %365 = vmatprep.subr.mxu0 %v76
  %366 = vmatpush2.msra.mxu0 %v75
  %367 = vmatprep.subr.mxu0 %v74
  %368 = vmatpush2.msra.mxu0 %v73
  %369 = vmatprep.subr.mxu0 %v72
  %370 = vmatpush2.msra.mxu0 %v71
  %371 = vmatprep.subr.mxu0 %v70
  %372 = vmatpush2.msra.mxu0 %v69
  %373 = vmatprep.subr.mxu0 %v68
  %374 = vmatpush2.msra.mxu0 %v67
  %375 = vmatprep.subr.mxu0 %v66
  %376 = vmatpush2.msra.mxu0 %v65
  %377 = vmatprep.subr.mxu0 %v64
  %378 = vmatpush2.msra.mxu0 %v63
  %379 = vmatprep.subr.mxu0 %v62
  %380 = vmatpush2.msra.mxu0 %v61
  %381 = vmatprep.subr.mxu0 %v60
  %382 = vmatpush2.msra.mxu0 %v59
  %383 = vmatprep.subr.mxu0 %v58
  %384 = vmatpush2.msra.mxu0 %v57
  %385 = vmatprep.subr.mxu0 %v56
  %386 = vmatpush2.msra.mxu0 %v55
  %387 = vmatprep.mubr.f32.mxu0 %v15
  %388 = vmatmul.mubr.f32.gmra.mxu0 %v14
  %v389 = vpop.f32.mrf.mxu0
  %v390 = vadd.f32 %v316, %v389
  %v391 = vpop.f32.mrf.mxu0
  %v392 = vadd.f32 %v320, %v391
  %393 = vdwg.mxu0
  %394 = vmatprep.subr.mxu0 %v118
  %395 = vmatpush1.msra.mxu0 %v117
  %396 = vmatprep.subr.mxu0 %v116
  %397 = vmatpush1.msra.mxu0 %v115
  %398 = vmatprep.subr.mxu0 %v114
  %399 = vmatpush1.msra.mxu0 %v113
  %400 = vmatprep.subr.mxu0 %v112
  %401 = vmatpush1.msra.mxu0 %v111
  %402 = vmatprep.subr.mxu0 %v110
  %403 = vmatpush1.msra.mxu0 %v109
  %404 = vmatprep.subr.mxu0 %v108
  %405 = vmatpush1.msra.mxu0 %v107
  %406 = vmatprep.subr.mxu0 %v106
  %407 = vmatpush1.msra.mxu0 %v105
  %408 = vmatprep.subr.mxu0 %v104
  %409 = vmatpush1.msra.mxu0 %v103
  %410 = vmatprep.subr.mxu0 %v102
  %411 = vmatpush1.msra.mxu0 %v101
  %412 = vmatprep.subr.mxu0 %v100
  %413 = vmatpush1.msra.mxu0 %v99
  %414 = vmatprep.subr.mxu0 %v98
  %415 = vmatpush1.msra.mxu0 %v97
  %416 = vmatprep.subr.mxu0 %v96
  %417 = vmatpush1.msra.mxu0 %v95
  %418 = vmatprep.subr.mxu0 %v94
  %419 = vmatpush1.msra.mxu0 %v93
  %420 = vmatprep.subr.mxu0 %v92
  %421 = vmatpush1.msra.mxu0 %v91
  %422 = vmatprep.subr.mxu0 %v90
  %423 = vmatpush1.msra.mxu0 %v89
  %424 = vmatprep.subr.mxu0 %v88
  %425 = vmatpush1.msra.mxu0 %v87
  %426 = vmatprep.subr.mxu0 %v150
  %427 = vmatpush2.msra.mxu0 %v149
  %428 = vmatprep.subr.mxu0 %v148
  %429 = vmatpush2.msra.mxu0 %v147
  %430 = vmatprep.subr.mxu0 %v146
  %431 = vmatpush2.msra.mxu0 %v145
  %432 = vmatprep.subr.mxu0 %v144
  %433 = vmatpush2.msra.mxu0 %v143
  %434 = vmatprep.subr.mxu0 %v142
  %435 = vmatpush2.msra.mxu0 %v141
  %436 = vmatprep.subr.mxu0 %v140
  %437 = vmatpush2.msra.mxu0 %v139
  %438 = vmatprep.subr.mxu0 %v138
  %439 = vmatpush2.msra.mxu0 %v137
  %440 = vmatprep.subr.mxu0 %v136
  %441 = vmatpush2.msra.mxu0 %v135
  %442 = vmatprep.subr.mxu0 %v134
  %443 = vmatpush2.msra.mxu0 %v133
  %444 = vmatprep.subr.mxu0 %v132
  %445 = vmatpush2.msra.mxu0 %v131
  %446 = vmatprep.subr.mxu0 %v130
  %447 = vmatpush2.msra.mxu0 %v129
  %448 = vmatprep.subr.mxu0 %v128
  %449 = vmatpush2.msra.mxu0 %v127
  %450 = vmatprep.subr.mxu0 %v126
  %451 = vmatpush2.msra.mxu0 %v125
  %452 = vmatprep.subr.mxu0 %v124
  %453 = vmatpush2.msra.mxu0 %v123
  %454 = vmatprep.subr.mxu0 %v122
  %455 = vmatpush2.msra.mxu0 %v121
  %456 = vmatprep.subr.mxu0 %v120
  %457 = vmatpush2.msra.mxu0 %v119
  %458 = vmatprep.mubr.f32.mxu0 %v17
  %459 = vmatmul.mubr.f32.gmra.mxu0 %v16
  %v460 = vpop.f32.mrf.mxu0
  %v461 = vadd.f32 %v390, %v460
  %v462 = vpop.f32.mrf.mxu0
  %v463 = vadd.f32 %v392, %v462
  %464 = vdwg.mxu0
  %465 = vmatprep.subr.mxu0 %v182
  %466 = vmatpush1.msra.mxu0 %v181
  %467 = vmatprep.subr.mxu0 %v180
  %468 = vmatpush1.msra.mxu0 %v179
  %469 = vmatprep.subr.mxu0 %v178
  %470 = vmatpush1.msra.mxu0 %v177
  %471 = vmatprep.subr.mxu0 %v176
  %472 = vmatpush1.msra.mxu0 %v175
  %473 = vmatprep.subr.mxu0 %v174
  %474 = vmatpush1.msra.mxu0 %v173
  %475 = vmatprep.subr.mxu0 %v172
  %476 = vmatpush1.msra.mxu0 %v171
  %477 = vmatprep.subr.mxu0 %v170
  %478 = vmatpush1.msra.mxu0 %v169
  %479 = vmatprep.subr.mxu0 %v168
  %480 = vmatpush1.msra.mxu0 %v167
  %481 = vmatprep.subr.mxu0 %v166
  %482 = vmatpush1.msra.mxu0 %v165
  %483 = vmatprep.subr.mxu0 %v164
  %484 = vmatpush1.msra.mxu0 %v163
  %485 = vmatprep.subr.mxu0 %v162
  %486 = vmatpush1.msra.mxu0 %v161
  %487 = vmatprep.subr.mxu0 %v160
  %488 = vmatpush1.msra.mxu0 %v159
  %489 = vmatprep.subr.mxu0 %v158
  %490 = vmatpush1.msra.mxu0 %v157
  %491 = vmatprep.subr.mxu0 %v156
  %492 = vmatpush1.msra.mxu0 %v155
  %493 = vmatprep.subr.mxu0 %v154
  %494 = vmatpush1.msra.mxu0 %v153
  %495 = vmatprep.subr.mxu0 %v152
  %496 = vmatpush1.msra.mxu0 %v151
  %497 = vmatprep.subr.mxu0 %v214
  %498 = vmatpush2.msra.mxu0 %v213
  %499 = vmatprep.subr.mxu0 %v212
  %500 = vmatpush2.msra.mxu0 %v211
  %501 = vmatprep.subr.mxu0 %v210
  %502 = vmatpush2.msra.mxu0 %v209
  %503 = vmatprep.subr.mxu0 %v208
  %504 = vmatpush2.msra.mxu0 %v207
  %505 = vmatprep.subr.mxu0 %v206
  %506 = vmatpush2.msra.mxu0 %v205
  %507 = vmatprep.subr.mxu0 %v204
  %508 = vmatpush2.msra.mxu0 %v203
  %509 = vmatprep.subr.mxu0 %v202
  %510 = vmatpush2.msra.mxu0 %v201
  %511 = vmatprep.subr.mxu0 %v200
  %512 = vmatpush2.msra.mxu0 %v199
  %513 = vmatprep.subr.mxu0 %v198
  %514 = vmatpush2.msra.mxu0 %v197
  %515 = vmatprep.subr.mxu0 %v196
  %516 = vmatpush2.msra.mxu0 %v195
  %517 = vmatprep.subr.mxu0 %v194
  %518 = vmatpush2.msra.mxu0 %v193
  %519 = vmatprep.subr.mxu0 %v192
  %520 = vmatpush2.msra.mxu0 %v191
  %521 = vmatprep.subr.mxu0 %v190
  %522 = vmatpush2.msra.mxu0 %v189
  %523 = vmatprep.subr.mxu0 %v188
  %524 = vmatpush2.msra.mxu0 %v187
  %525 = vmatprep.subr.mxu0 %v186
  %526 = vmatpush2.msra.mxu0 %v185
  %527 = vmatprep.subr.mxu0 %v184
  %528 = vmatpush2.msra.mxu0 %v183
  %529 = vmatprep.mubr.f32.mxu0 %v19
  %530 = vmatmul.mubr.f32.gmra.mxu0 %v18
  %v531 = vpop.f32.mrf.mxu0
  %v532 = vadd.f32 %v461, %v531
  %v533 = vpop.f32.mrf.mxu0
  %v534 = vadd.f32 %v463, %v533
  %535 = vdwg.mxu0
  %536 = vmatprep.subr.mxu0 %v246
  %537 = vmatpush1.msra.mxu0 %v245
  %538 = vmatprep.subr.mxu0 %v244
  %539 = vmatpush1.msra.mxu0 %v243
  %540 = vmatprep.subr.mxu0 %v242
  %541 = vmatpush1.msra.mxu0 %v241
  %542 = vmatprep.subr.mxu0 %v240
  %543 = vmatpush1.msra.mxu0 %v239
  %544 = vmatprep.subr.mxu0 %v238
  %545 = vmatpush1.msra.mxu0 %v237
  %546 = vmatprep.subr.mxu0 %v236
  %547 = vmatpush1.msra.mxu0 %v235
  %548 = vmatprep.subr.mxu0 %v234
  %549 = vmatpush1.msra.mxu0 %v233
  %550 = vmatprep.subr.mxu0 %v232
  %551 = vmatpush1.msra.mxu0 %v231
  %552 = vmatprep.subr.mxu0 %v230
  %553 = vmatpush1.msra.mxu0 %v229
  %554 = vmatprep.subr.mxu0 %v228
  %555 = vmatpush1.msra.mxu0 %v227
  %556 = vmatprep.subr.mxu0 %v226
  %557 = vmatpush1.msra.mxu0 %v225
  %558 = vmatprep.subr.mxu0 %v224
  %559 = vmatpush1.msra.mxu0 %v223
  %560 = vmatprep.subr.mxu0 %v222
  %561 = vmatpush1.msra.mxu0 %v221
  %562 = vmatprep.subr.mxu0 %v220
  %563 = vmatpush1.msra.mxu0 %v219
  %564 = vmatprep.subr.mxu0 %v218
  %565 = vmatpush1.msra.mxu0 %v217
  %566 = vmatprep.subr.mxu0 %v216
  %567 = vmatpush1.msra.mxu0 %v215
  %568 = vmatprep.subr.mxu0 %v278
  %569 = vmatpush2.msra.mxu0 %v277
  %570 = vmatprep.subr.mxu0 %v276
  %571 = vmatpush2.msra.mxu0 %v275
  %572 = vmatprep.subr.mxu0 %v274
  %573 = vmatpush2.msra.mxu0 %v273
  %574 = vmatprep.subr.mxu0 %v272
  %575 = vmatpush2.msra.mxu0 %v271
  %576 = vmatprep.subr.mxu0 %v270
  %577 = vmatpush2.msra.mxu0 %v269
  %578 = vmatprep.subr.mxu0 %v268
  %579 = vmatpush2.msra.mxu0 %v267
  %580 = vmatprep.subr.mxu0 %v266
  %581 = vmatpush2.msra.mxu0 %v265
  %582 = vmatprep.subr.mxu0 %v264
  %583 = vmatpush2.msra.mxu0 %v263
  %584 = vmatprep.subr.mxu0 %v262
  %585 = vmatpush2.msra.mxu0 %v261
  %586 = vmatprep.subr.mxu0 %v260
  %587 = vmatpush2.msra.mxu0 %v259
  %588 = vmatprep.subr.mxu0 %v258
  %589 = vmatpush2.msra.mxu0 %v257
  %590 = vmatprep.subr.mxu0 %v256
  %591 = vmatpush2.msra.mxu0 %v255
  %592 = vmatprep.subr.mxu0 %v254
  %593 = vmatpush2.msra.mxu0 %v253
  %594 = vmatprep.subr.mxu0 %v252
  %595 = vmatpush2.msra.mxu0 %v251
  %596 = vmatprep.subr.mxu0 %v250
  %597 = vmatpush2.msra.mxu0 %v249
  %598 = vmatprep.subr.mxu0 %v248
  %599 = vmatpush2.msra.mxu0 %v247
  %600 = vmatprep.mubr.f32.mxu0 %v21
  %601 = vmatmul.mubr.f32.gmra.mxu0 %v20
  %v602 = vpop.f32.mrf.mxu0
  %v603 = vadd.f32 %v532, %v602
  %v604 = vpop.f32.mrf.mxu0
  %v605 = vadd.f32 %v534, %v604
  %606 = vdwg.mxu0
  %607 = vmatprep.subr.mxu0 %v310
  %608 = vmatpush1.msra.mxu0 %v309
  %609 = vmatprep.subr.mxu0 %v308
  %610 = vmatpush1.msra.mxu0 %v307
  %611 = vmatprep.subr.mxu0 %v306
  %612 = vmatpush1.msra.mxu0 %v305
  %613 = vmatprep.subr.mxu0 %v304
  %614 = vmatpush1.msra.mxu0 %v303
  %615 = vmatprep.subr.mxu0 %v302
  %616 = vmatpush1.msra.mxu0 %v301
  %617 = vmatprep.subr.mxu0 %v300
  %618 = vmatpush1.msra.mxu0 %v299
  %619 = vmatprep.subr.mxu0 %v298
  %620 = vmatpush1.msra.mxu0 %v297
  %621 = vmatprep.subr.mxu0 %v296
  %622 = vmatpush1.msra.mxu0 %v295
  %623 = vmatprep.subr.mxu0 %v294
  %624 = vmatpush1.msra.mxu0 %v293
  %625 = vmatprep.subr.mxu0 %v292
  %626 = vmatpush1.msra.mxu0 %v291
  %627 = vmatprep.subr.mxu0 %v290
  %628 = vmatpush1.msra.mxu0 %v289
  %629 = vmatprep.subr.mxu0 %v288
  %630 = vmatpush1.msra.mxu0 %v287
  %631 = vmatprep.subr.mxu0 %v286
  %632 = vmatpush1.msra.mxu0 %v285
  %633 = vmatprep.subr.mxu0 %v284
  %634 = vmatpush1.msra.mxu0 %v283
  %635 = vmatprep.subr.mxu0 %v282
  %636 = vmatpush1.msra.mxu0 %v281
  %637 = vmatprep.subr.mxu0 %v280
  %638 = vmatpush1.msra.mxu0 %v279
  %639 = vmatprep.subr.mxu0 0.0
  %640 = vmatpush2.msra.mxu0 0.0
  %641 = vmatprep.subr.mxu0 0.0
  %642 = vmatpush2.msra.mxu0 0.0
  %643 = vmatprep.subr.mxu0 0.0
  %644 = vmatpush2.msra.mxu0 0.0
  %645 = vmatprep.subr.mxu0 0.0
  %646 = vmatpush2.msra.mxu0 0.0
  %647 = vmatprep.subr.mxu0 0.0
  %648 = vmatpush2.msra.mxu0 0.0
  %649 = vmatprep.subr.mxu0 0.0
  %650 = vmatpush2.msra.mxu0 0.0
  %651 = vmatprep.subr.mxu0 0.0
  %652 = vmatpush2.msra.mxu0 0.0
  %653 = vmatprep.subr.mxu0 0.0
  %654 = vmatpush2.msra.mxu0 0.0
  %655 = vmatprep.subr.mxu0 0.0
  %656 = vmatpush2.msra.mxu0 0.0
  %657 = vmatprep.subr.mxu0 0.0
  %658 = vmatpush2.msra.mxu0 0.0
  %659 = vmatprep.subr.mxu0 0.0
  %660 = vmatpush2.msra.mxu0 0.0
  %661 = vmatprep.subr.mxu0 0.0
  %662 = vmatpush2.msra.mxu0 0.0
  %663 = vmatprep.subr.mxu0 0.0
  %664 = vmatpush2.msra.mxu0 0.0
  %665 = vmatprep.subr.mxu0 0.0
  %666 = vmatpush2.msra.mxu0 0.0
  %667 = vmatprep.subr.mxu0 0.0
  %668 = vmatpush2.msra.mxu0 0.0
  %669 = vmatprep.subr.mxu0 0.0
  %670 = vmatpush2.msra.mxu0 0.0
  %671 = vmatprep.mubr.f32.mxu0 0.0
  %672 = vmatmul.mubr.f32.gmra.mxu0 %v22
  %v673 = vpop.f32.mrf.mxu0
  %v674 = vadd.f32 %v603, %v673
  %v675 = vpop.f32.mrf.mxu0
  %v676 = vadd.f32 %v605, %v675
  %677 = vdwg.mxu0
  %v678 = vmax.f32 %v674, 0.0
  %v679 = vmax.f32 %v676, 0.0
  %680 = vst [vmem:[%s3] sm:$0xff] %v678
  %681 = vst [vmem:[%s3 + $0x8] sm:$0xff] %v679
  // Predicated region
  $region14: #{auxiliary_convolutions.15} parent=0 // pred_check
    _
  $region15: #{auxiliary_convolutions.15} parent=0 // pred_check_branch
    %683 = sbr.rel (0) target = $region17
  $region16: #{auxiliary_convolutions.15} parent=0 // pred_region
    _
  $region17: #{auxiliary_convolutions.15} parent=0 // pred_fallthru
    _
  // Predicated region
  $region18: #{auxiliary_convolutions.15} parent=0 // pred_check
    _
  $region19: #{auxiliary_convolutions.15} parent=0 // pred_check_branch
    %685 = sbr.rel (0) target = $region21
  $region20: #{auxiliary_convolutions.15} parent=0 // pred_region
    _
  $region21: #{auxiliary_convolutions.15} parent=0 // pred_fallthru
    _

</llo_original>
